<compile_context>
chip_gen: v6e
topology: v6e:2x2x1
jax: 0.10.0
libtpu: 0.0.40
codegen_flags: <defaults>
</compile_context>

<pallas_src>
import math
import functools

import jax
import jax.numpy as jnp
import numpy as np
from jax.experimental import pallas as pl
from jax.experimental.pallas import tpu as pltpu


_INV_SQRT2 = 0.7071067811865476


def _vmem_specs(n):
    return [pl.BlockSpec(memory_space=pltpu.MemorySpace.VMEM) for _ in range(n)]


def _layernorm(x, g, b, eps):
    mu = jnp.mean(x, axis=-1, keepdims=True)
    var = jnp.mean((x - mu) ** 2, axis=-1, keepdims=True)
    return (x - mu) * jax.lax.rsqrt(var + eps) * g + b


def _erf_approx(z):
    # Abramowitz & Stegun 7.1.26 (|err| <= 1.5e-7): only exp / mul / where,
    # all with guaranteed Mosaic lowerings.  Matches torch's erf GELU to ~1e-7.
    a1, a2, a3, a4, a5 = 0.254829592, -0.284496736, 1.421413741, -1.453152027, 1.061405429
    p = 0.3275911
    az = jnp.abs(z)
    t = 1.0 / (1.0 + p * az)
    poly = ((((a5 * t + a4) * t + a3) * t + a2) * t + a1) * t
    e = 1.0 - poly * jnp.exp(-az * az)
    return jnp.where(z >= 0, e, -e)


def _gelu_exact(x):
    # torch.nn.GELU default (erf-based)
    return 0.5 * x * (1.0 + _erf_approx(x * _INV_SQRT2))


def _mean_over_leading(x3):
    """Mean over the leading axis via a log2 tree of leading-slab adds."""
    n = x3.shape[0]
    inv = 1.0 / n
    acc = x3
    extra = None
    while n > 1:
        if n % 2:
            last = acc[n - 1]
            extra = last if extra is None else extra + last
            n -= 1
        half = n // 2
        acc = acc[:half] + acc[half:n]
        n = half
    out = acc[0]
    if extra is not None:
        out = out + extra
    return out * inv


# ----------------------------- fused ViT kernel -----------------------------

def _vit_kernel(pm_ref, pw_ref, pb_ref, lw_ref, lb_ref,
                ln1g_ref, ln1b_ref, wq_ref, bq_ref, wk_ref, bk_ref,
                wv_ref, bv_ref, wo_ref, bo_ref, ln2g_ref, ln2b_ref,
                w1_ref, b1_ref, w2_ref, b2_ref, gmix_ref, ng_ref, nb_ref,
                o_ref, *, depth, B, P, H, eps):
    E = lw_ref.shape[0]
    d = E // H
    scale = 1.0 / math.sqrt(d)
    M = P * B

    # --- patch embedding: Conv3d(stride=kernel=ps) as matmul, fused linear ---
    t = jnp.dot(pm_ref[...], pw_ref[...], preferred_element_type=jnp.float32) + pb_ref[...]
    x = jnp.dot(t, lw_ref[...], preferred_element_type=jnp.float32) + lb_ref[...]   # (M, E)

    gmix = gmix_ref[...]   # (E, E) block-diagonal head mixer

    for l in range(depth):   # depth=2: static unroll; all weights stay VMEM-resident
        # ------------------------- attention branch -------------------------
        xn = _layernorm(x, ln1g_ref[l], ln1b_ref[l], eps)
        q = jnp.dot(xn, wq_ref[l], preferred_element_type=jnp.float32) + bq_ref[l]
        k = jnp.dot(xn, wk_ref[l], preferred_element_type=jnp.float32) + bk_ref[l]
        v = jnp.dot(xn, wv_ref[l], preferred_element_type=jnp.float32) + bv_ref[l]

        # rows = (patch, batch); leading-dim regroup only (lane dim unchanged)
        q3 = (q * scale).reshape(P, B, E)
        k3 = k.reshape(P, B, E)
        v3 = v.reshape(P, B, E)

        # All heads at once: outer product over the sequence axis, then one
        # block-diagonal matmul sums q.k within each head and replicates the
        # score across that head's d lanes (no per-head loop / lane slices).
        prod = q3[:, :, None, :] * k3[:, None, :, :]                     # (P, B, B, E)
        s = jnp.dot(prod.reshape(M * B, E), gmix,
                    preferred_element_type=jnp.float32).reshape(P, B, B, E)

        # softmax over the source-sequence axis (axis=2, sublane reduction)
        s = s - jnp.max(s, axis=2, keepdims=True)
        es = jnp.exp(s)
        denom = jnp.sum(es, axis=2)                                      # (P, B, E)
        o3 = jnp.sum(es * v3[:, None, :, :], axis=2)                     # (P, B, E)
        attn = (o3 / denom).reshape(M, E)

        x = x + jnp.dot(attn, wo_ref[l], preferred_element_type=jnp.float32) + bo_ref[l]

        # ---------------------------- MLP branch -----------------------------
        # TODO(synk): nn.Dropout(p=0.1) layers are identity here (inference).
        xn2 = _layernorm(x, ln2g_ref[l], ln2b_ref[l], eps)
        h1 = _gelu_exact(jnp.dot(xn2, w1_ref[l], preferred_element_type=jnp.float32) + b1_ref[l])
        x = x + jnp.dot(h1, w2_ref[l], preferred_element_type=jnp.float32) + b2_ref[l]

    # --- final LayerNorm + AdaptiveAvgPool1d(1) over the patch axis ---
    xn = _layernorm(x, ng_ref[...], nb_ref[...], eps)
    o_ref[...] = _mean_over_leading(xn.reshape(P, B, E))                 # (B, E)


# ----------------------------- glue (plain JAX) ------------------------------

def extract_patches(x, ps):
    # x: (B, C, D, H, W) -> (B, P, C*ps^3); patch order (d, h, w), inner (C, kd, kh, kw)
    B, C, D, H, W = x.shape
    d, h, w = D // ps, H // ps, W // ps
    x = x.reshape(B, C, d, ps, h, ps, w, ps)
    x = jnp.transpose(x, (0, 2, 4, 6, 1, 3, 5, 7))
    return x.reshape(B, d * h * w, C * ps ** 3)


def vision_transformer(x, params, cfg):
    ps, E, H = cfg['patch_size'], cfg['emb_size'], cfg['num_heads']
    depth = cfg['depth']
    d = E // H
    B = x.shape[0]

    patches = extract_patches(x, ps)                          # (B, P, Kp)
    P = patches.shape[1]
    # Patch-major row layout (rows = patch*B + batch): reproduces feeding
    # (B, P, E) into nn.MultiheadAttention(batch_first=False) — the data-batch
    # axis is the attention sequence, per patch.
    pm = jnp.transpose(patches, (1, 0, 2)).reshape(P * B, -1)

    # Block-diagonal head mixer: gmix[e, e'] = 1 iff e, e' are in the same head.
    gmix = jnp.asarray(np.kron(np.eye(H, dtype=np.float32),
                               np.ones((d, d), dtype=np.float32)))

    kernel = functools.partial(_vit_kernel, depth=depth, B=B, P=P, H=H, eps=1e-5)
    return pl.pallas_call(
        kernel,
        out_shape=jax.ShapeDtypeStruct((B, E), jnp.float32),
        in_specs=_vmem_specs(24),
        out_specs=pl.BlockSpec(memory_space=pltpu.MemorySpace.VMEM),
    )(pm, params['proj_w'], params['proj_b'], params['pe_w'], params['pe_b'],
      params['ln1_g'], params['ln1_b'],
      params['wq'], params['bq'], params['wk'], params['bk'],
      params['wv'], params['bv'], params['wo'], params['bo'],
      params['ln2_g'], params['ln2_b'],
      params['w1'], params['b1'], params['w2'], params['b2'],
      gmix, params['norm_g'], params['norm_b'])


# ----------------------------- parameters ------------------------------------

def init_params(key, cfg):
    C, ps, E = cfg['in_channels'], cfg['patch_size'], cfg['emb_size']
    depth = cfg['depth']
    hidden = int(E * cfg['mlp_ratio'])
    Kp = C * ps ** 3

    def dense(k, fan_in, fan_out, batch=()):
        kw, kb = jax.random.split(k)
        w = jax.random.normal(kw, (*batch, fan_in, fan_out), jnp.float32) * 0.02
        b = jax.random.normal(kb, (*batch, 1, fan_out), jnp.float32) * 0.02
        return w, b

    k = jax.random.split(key, 8)
    p = {}
    p['proj_w'], p['proj_b'] = dense(k[0], Kp, E)            # Conv3d as matmul
    p['pe_w'], p['pe_b'] = dense(k[1], E, E)                 # PatchEmbedding.linear
    p['wq'], p['bq'] = dense(k[2], E, E, (depth,))           # attn in-proj (q/k/v split)
    p['wk'], p['bk'] = dense(k[3], E, E, (depth,))
    p['wv'], p['bv'] = dense(k[4], E, E, (depth,))
    p['wo'], p['bo'] = dense(k[5], E, E, (depth,))           # attn out-proj
    p['w1'], p['b1'] = dense(k[6], E, hidden, (depth,))      # MLP
    p['w2'], p['b2'] = dense(k[7], hidden, E, (depth,))
    p['ln1_g'] = jnp.ones((depth, 1, E), jnp.float32)
    p['ln1_b'] = jnp.zeros((depth, 1, E), jnp.float32)
    p['ln2_g'] = jnp.ones((depth, 1, E), jnp.float32)
    p['ln2_b'] = jnp.zeros((depth, 1, E), jnp.float32)
    p['norm_g'] = jnp.ones((1, E), jnp.float32)
    p['norm_b'] = jnp.zeros((1, E), jnp.float32)
    return p


# ----------------------------- pure-JAX reference ----------------------------

def reference_forward(x, params, cfg):
    ps, E, H = cfg['patch_size'], cfg['emb_size'], cfg['num_heads']
    depth = cfg['depth']
    d = E // H
    patches = extract_patches(x, ps)                          # (B, P, Kp)
    t = patches @ params['proj_w'] + params['proj_b']
    t = t @ params['pe_w'] + params['pe_b']                   # (B, P, E) == (L, N, E)

    def ln(a, g, b):
        mu = jnp.mean(a, -1, keepdims=True)
        var = jnp.mean((a - mu) ** 2, -1, keepdims=True)
        return (a - mu) / jnp.sqrt(var + 1e-5) * g + b

    L, N = t.shape[0], t.shape[1]
    for l in range(depth):
        xn = ln(t, params['ln1_g'][l], params['ln1_b'][l])
        q = xn @ params['wq'][l] + params['bq'][l]
        k = xn @ params['wk'][l] + params['bk'][l]
        v = xn @ params['wv'][l] + params['bv'][l]

        def sh(a):
            return jnp.transpose(a.reshape(L, N, H, d), (1, 2, 0, 3))  # (N,H,L,d)

        s = jnp.einsum('nhld,nhmd->nhlm', sh(q), sh(k)) / math.sqrt(d)
        p = jax.nn.softmax(s, axis=-1)
        o = jnp.einsum('nhlm,nhmd->nhld', p, sh(v))
        o = jnp.transpose(o, (2, 0, 1, 3)).reshape(L, N, E)
        t = t + (o @ params['wo'][l] + params['bo'][l])
        xn2 = ln(t, params['ln2_g'][l], params['ln2_b'][l])
        h1 = jax.nn.gelu(xn2 @ params['w1'][l] + params['b1'][l], approximate=False)
        t = t + (h1 @ params['w2'][l] + params['b2'][l])
    t = ln(t, params['norm_g'], params['norm_b'])
    return jnp.mean(t, axis=1)


# ----------------------------- main -------------------------------------------

if __name__ == "__main__":
    cfg = dict(in_channels=3, patch_size=4, emb_size=32, depth=2,
               num_heads=4, mlp_ratio=4.0, dropout_rate=0.1)

    key = jax.random.PRNGKey(0)
    kx, kp = jax.random.split(key)
    B, C, D, H, W = 8, cfg['in_channels'], 8, 8, 8
    x = jax.random.normal(kx, (B, C, D, H, W), jnp.float32)
    params = init_params(kp, cfg)

    fwd = jax.jit(functools.partial(vision_transformer, cfg=cfg))
    out = jax.block_until_ready(fwd(x, params))
    ref = jax.block_until_ready(reference_forward(x, params, cfg))

    assert out.shape == (B, cfg['emb_size'])
    np.testing.assert_allclose(np.asarray(out), np.asarray(ref), rtol=2e-3, atol=2e-3)
    print("KERNEL_OK")
</pallas_src>

<mosaic_0001>
module attributes {stable_mosaic.version = 11 : i64} {
  func.func @_vit_kernel(%arg0: memref<64x192xf32, #tpu.memory_space<vmem>>, %arg1: memref<192x32xf32, #tpu.memory_space<vmem>>, %arg2: memref<1x32xf32, #tpu.memory_space<vmem>>, %arg3: memref<32x32xf32, #tpu.memory_space<vmem>>, %arg4: memref<1x32xf32, #tpu.memory_space<vmem>>, %arg5: memref<2x1x32xf32, #tpu.memory_space<vmem>>, %arg6: memref<2x1x32xf32, #tpu.memory_space<vmem>>, %arg7: memref<2x32x32xf32, #tpu.memory_space<vmem>>, %arg8: memref<2x1x32xf32, #tpu.memory_space<vmem>>, %arg9: memref<2x32x32xf32, #tpu.memory_space<vmem>>, %arg10: memref<2x1x32xf32, #tpu.memory_space<vmem>>, %arg11: memref<2x32x32xf32, #tpu.memory_space<vmem>>, %arg12: memref<2x1x32xf32, #tpu.memory_space<vmem>>, %arg13: memref<2x32x32xf32, #tpu.memory_space<vmem>>, %arg14: memref<2x1x32xf32, #tpu.memory_space<vmem>>, %arg15: memref<2x1x32xf32, #tpu.memory_space<vmem>>, %arg16: memref<2x1x32xf32, #tpu.memory_space<vmem>>, %arg17: memref<2x32x128xf32, #tpu.memory_space<vmem>>, %arg18: memref<2x1x128xf32, #tpu.memory_space<vmem>>, %arg19: memref<2x128x32xf32, #tpu.memory_space<vmem>>, %arg20: memref<2x1x32xf32, #tpu.memory_space<vmem>>, %arg21: memref<32x32xf32, #tpu.memory_space<vmem>>, %arg22: memref<1x32xf32, #tpu.memory_space<vmem>>, %arg23: memref<1x32xf32, #tpu.memory_space<vmem>>, %arg24: memref<8x32xf32, #tpu.memory_space<vmem>>) attributes {dimension_semantics = [], scalar_prefetch = 0 : i64, scratch_operands = 0 : i64, tpu.core_type = #tpu.core_type<tc>} {
    %c0 = arith.constant 0 : index
    %c0_0 = arith.constant 0 : index
    %0 = vector.load %arg0[%c0, %c0_0] : memref<64x192xf32, #tpu.memory_space<vmem>>, vector<64x192xf32>
    %c0_1 = arith.constant 0 : index
    %c0_2 = arith.constant 0 : index
    %1 = vector.load %arg1[%c0_1, %c0_2] : memref<192x32xf32, #tpu.memory_space<vmem>>, vector<192x32xf32>
    %cst = arith.constant dense<0.000000e+00> : vector<64x32xf32>
    %2 = tpu.matmul %0, %1, %cst {dimension_numbers = #tpu.dot_dimension_numbers<[1], [0], [0], [1], [0, 0, 1, 1], [], []>} : vector<64x192xf32>, vector<192x32xf32>, vector<64x32xf32> -> vector<64x32xf32>
    %c0_3 = arith.constant 0 : index
    %c0_4 = arith.constant 0 : index
    %3 = vector.load %arg2[%c0_3, %c0_4] : memref<1x32xf32, #tpu.memory_space<vmem>>, vector<1x32xf32>
    %4 = vector.broadcast %3 : vector<1x32xf32> to vector<64x32xf32>
    %5 = arith.addf %2, %4 : vector<64x32xf32>
    %c0_5 = arith.constant 0 : index
    %c0_6 = arith.constant 0 : index
    %6 = vector.load %arg3[%c0_5, %c0_6] : memref<32x32xf32, #tpu.memory_space<vmem>>, vector<32x32xf32>
    %cst_7 = arith.constant dense<0.000000e+00> : vector<64x32xf32>
    %7 = tpu.matmul %5, %6, %cst_7 {dimension_numbers = #tpu.dot_dimension_numbers<[1], [0], [0], [1], [0, 0, 1, 1], [], []>} : vector<64x32xf32>, vector<32x32xf32>, vector<64x32xf32> -> vector<64x32xf32>
    %c0_8 = arith.constant 0 : index
    %c0_9 = arith.constant 0 : index
    %8 = vector.load %arg4[%c0_8, %c0_9] : memref<1x32xf32, #tpu.memory_space<vmem>>, vector<1x32xf32>
    %9 = vector.broadcast %8 : vector<1x32xf32> to vector<64x32xf32>
    %10 = arith.addf %7, %9 : vector<64x32xf32>
    %c0_10 = arith.constant 0 : index
    %c0_11 = arith.constant 0 : index
    %11 = vector.load %arg21[%c0_10, %c0_11] : memref<32x32xf32, #tpu.memory_space<vmem>>, vector<32x32xf32>
    %c0_12 = arith.constant 0 : index
    %c0_13 = arith.constant 0 : index
    %c0_14 = arith.constant 0 : index
    %12 = vector.load %arg5[%c0_12, %c0_13, %c0_14] : memref<2x1x32xf32, #tpu.memory_space<vmem>>, vector<1x1x32xf32>
    %13 = vector.shape_cast %12 : vector<1x1x32xf32> to vector<1x32xf32>
    %c0_15 = arith.constant 0 : index
    %c0_16 = arith.constant 0 : index
    %c0_17 = arith.constant 0 : index
    %14 = vector.load %arg6[%c0_15, %c0_16, %c0_17] : memref<2x1x32xf32, #tpu.memory_space<vmem>>, vector<1x1x32xf32>
    %15 = vector.shape_cast %14 : vector<1x1x32xf32> to vector<1x32xf32>
    %cst_18 = arith.constant dense<0.000000e+00> : vector<64xf32>
    %16 = vector.multi_reduction <add>, %10, %cst_18 [1] : vector<64x32xf32> to vector<64xf32>
    %17 = vector.shape_cast %16 : vector<64xf32> to vector<64x1xf32>
    %cst_19 = arith.constant 3.200000e+01 : f32
    %18 = vector.broadcast %cst_19 : f32 to vector<64x1xf32>
    %19 = arith.divf %17, %18 : vector<64x1xf32>
    %20 = vector.broadcast %19 : vector<64x1xf32> to vector<64x32xf32>
    %21 = arith.subf %10, %20 : vector<64x32xf32>
    %22 = arith.mulf %21, %21 : vector<64x32xf32>
    %cst_20 = arith.constant dense<0.000000e+00> : vector<64xf32>
    %23 = vector.multi_reduction <add>, %22, %cst_20 [1] : vector<64x32xf32> to vector<64xf32>
    %24 = vector.shape_cast %23 : vector<64xf32> to vector<64x1xf32>
    %cst_21 = arith.constant 3.200000e+01 : f32
    %25 = vector.broadcast %cst_21 : f32 to vector<64x1xf32>
    %26 = arith.divf %24, %25 : vector<64x1xf32>
    %27 = vector.broadcast %19 : vector<64x1xf32> to vector<64x32xf32>
    %28 = arith.subf %10, %27 : vector<64x32xf32>
    %cst_22 = arith.constant 9.99999974E-6 : f32
    %29 = vector.broadcast %cst_22 : f32 to vector<64x1xf32>
    %30 = arith.addf %26, %29 : vector<64x1xf32>
    %31 = math.rsqrt %30 : vector<64x1xf32>
    %32 = vector.broadcast %31 : vector<64x1xf32> to vector<64x32xf32>
    %33 = arith.mulf %28, %32 : vector<64x32xf32>
    %34 = vector.broadcast %13 : vector<1x32xf32> to vector<64x32xf32>
    %35 = arith.mulf %33, %34 : vector<64x32xf32>
    %36 = vector.broadcast %15 : vector<1x32xf32> to vector<64x32xf32>
    %37 = arith.addf %35, %36 : vector<64x32xf32>
    %c0_23 = arith.constant 0 : index
    %c0_24 = arith.constant 0 : index
    %c0_25 = arith.constant 0 : index
    %38 = vector.load %arg7[%c0_23, %c0_24, %c0_25] : memref<2x32x32xf32, #tpu.memory_space<vmem>>, vector<1x32x32xf32>
    %39 = vector.shape_cast %38 : vector<1x32x32xf32> to vector<32x32xf32>
    %cst_26 = arith.constant dense<0.000000e+00> : vector<64x32xf32>
    %40 = tpu.matmul %37, %39, %cst_26 {dimension_numbers = #tpu.dot_dimension_numbers<[1], [0], [0], [1], [0, 0, 1, 1], [], []>} : vector<64x32xf32>, vector<32x32xf32>, vector<64x32xf32> -> vector<64x32xf32>
    %c0_27 = arith.constant 0 : index
    %c0_28 = arith.constant 0 : index
    %c0_29 = arith.constant 0 : index
    %41 = vector.load %arg8[%c0_27, %c0_28, %c0_29] : memref<2x1x32xf32, #tpu.memory_space<vmem>>, vector<1x1x32xf32>
    %42 = vector.shape_cast %41 : vector<1x1x32xf32> to vector<1x32xf32>
    %43 = vector.broadcast %42 : vector<1x32xf32> to vector<64x32xf32>
    %44 = arith.addf %40, %43 : vector<64x32xf32>
    %c0_30 = arith.constant 0 : index
    %c0_31 = arith.constant 0 : index
    %c0_32 = arith.constant 0 : index
    %45 = vector.load %arg9[%c0_30, %c0_31, %c0_32] : memref<2x32x32xf32, #tpu.memory_space<vmem>>, vector<1x32x32xf32>
    %46 = vector.shape_cast %45 : vector<1x32x32xf32> to vector<32x32xf32>
    %cst_33 = arith.constant dense<0.000000e+00> : vector<64x32xf32>
    %47 = tpu.matmul %37, %46, %cst_33 {dimension_numbers = #tpu.dot_dimension_numbers<[1], [0], [0], [1], [0, 0, 1, 1], [], []>} : vector<64x32xf32>, vector<32x32xf32>, vector<64x32xf32> -> vector<64x32xf32>
    %c0_34 = arith.constant 0 : index
    %c0_35 = arith.constant 0 : index
    %c0_36 = arith.constant 0 : index
    %48 = vector.load %arg10[%c0_34, %c0_35, %c0_36] : memref<2x1x32xf32, #tpu.memory_space<vmem>>, vector<1x1x32xf32>
    %49 = vector.shape_cast %48 : vector<1x1x32xf32> to vector<1x32xf32>
    %50 = vector.broadcast %49 : vector<1x32xf32> to vector<64x32xf32>
    %51 = arith.addf %47, %50 : vector<64x32xf32>
    %c0_37 = arith.constant 0 : index
    %c0_38 = arith.constant 0 : index
    %c0_39 = arith.constant 0 : index
    %52 = vector.load %arg11[%c0_37, %c0_38, %c0_39] : memref<2x32x32xf32, #tpu.memory_space<vmem>>, vector<1x32x32xf32>
    %53 = vector.shape_cast %52 : vector<1x32x32xf32> to vector<32x32xf32>
    %cst_40 = arith.constant dense<0.000000e+00> : vector<64x32xf32>
    %54 = tpu.matmul %37, %53, %cst_40 {dimension_numbers = #tpu.dot_dimension_numbers<[1], [0], [0], [1], [0, 0, 1, 1], [], []>} : vector<64x32xf32>, vector<32x32xf32>, vector<64x32xf32> -> vector<64x32xf32>
    %c0_41 = arith.constant 0 : index
    %c0_42 = arith.constant 0 : index
    %c0_43 = arith.constant 0 : index
    %55 = vector.load %arg12[%c0_41, %c0_42, %c0_43] : memref<2x1x32xf32, #tpu.memory_space<vmem>>, vector<1x1x32xf32>
    %56 = vector.shape_cast %55 : vector<1x1x32xf32> to vector<1x32xf32>
    %57 = vector.broadcast %56 : vector<1x32xf32> to vector<64x32xf32>
    %58 = arith.addf %54, %57 : vector<64x32xf32>
    %cst_44 = arith.constant 0.353553385 : f32
    %59 = vector.broadcast %cst_44 : f32 to vector<64x32xf32>
    %60 = arith.mulf %44, %59 : vector<64x32xf32>
    %61 = vector.shape_cast %60 : vector<64x32xf32> to vector<8x8x32xf32>
    %62 = vector.shape_cast %51 : vector<64x32xf32> to vector<8x8x32xf32>
    %63 = vector.shape_cast %58 : vector<64x32xf32> to vector<8x8x32xf32>
    %64 = vector.shape_cast %61 : vector<8x8x32xf32> to vector<8x8x1x32xf32>
    %65 = vector.shape_cast %62 : vector<8x8x32xf32> to vector<8x1x8x32xf32>
    %66 = vector.broadcast %64 : vector<8x8x1x32xf32> to vector<8x8x8x32xf32>
    %67 = vector.broadcast %65 : vector<8x1x8x32xf32> to vector<8x8x8x32xf32>
    %68 = arith.mulf %66, %67 : vector<8x8x8x32xf32>
    %69 = vector.shape_cast %68 : vector<8x8x8x32xf32> to vector<512x32xf32>
    %cst_45 = arith.constant dense<0.000000e+00> : vector<512x32xf32>
    %70 = tpu.matmul %69, %11, %cst_45 {dimension_numbers = #tpu.dot_dimension_numbers<[1], [0], [0], [1], [0, 0, 1, 1], [], []>} : vector<512x32xf32>, vector<32x32xf32>, vector<512x32xf32> -> vector<512x32xf32>
    %71 = vector.shape_cast %70 : vector<512x32xf32> to vector<8x8x8x32xf32>
    %cst_46 = arith.constant dense<0xFF800000> : vector<8x8x32xf32>
    %72 = vector.multi_reduction <maximumf>, %71, %cst_46 [2] : vector<8x8x8x32xf32> to vector<8x8x32xf32>
    %73 = vector.shape_cast %72 : vector<8x8x32xf32> to vector<8x8x1x32xf32>
    %74 = vector.broadcast %73 : vector<8x8x1x32xf32> to vector<8x8x8x32xf32>
    %75 = arith.subf %71, %74 : vector<8x8x8x32xf32>
    %76 = math.exp %75 : vector<8x8x8x32xf32>
    %cst_47 = arith.constant dense<0.000000e+00> : vector<8x8x32xf32>
    %77 = vector.multi_reduction <add>, %76, %cst_47 [2] : vector<8x8x8x32xf32> to vector<8x8x32xf32>
    %78 = vector.shape_cast %63 : vector<8x8x32xf32> to vector<8x1x8x32xf32>
    %79 = vector.broadcast %78 : vector<8x1x8x32xf32> to vector<8x8x8x32xf32>
    %80 = arith.mulf %76, %79 : vector<8x8x8x32xf32>
    %cst_48 = arith.constant dense<0.000000e+00> : vector<8x8x32xf32>
    %81 = vector.multi_reduction <add>, %80, %cst_48 [2] : vector<8x8x8x32xf32> to vector<8x8x32xf32>
    %82 = arith.divf %81, %77 : vector<8x8x32xf32>
    %83 = vector.shape_cast %82 : vector<8x8x32xf32> to vector<64x32xf32>
    %c0_49 = arith.constant 0 : index
    %c0_50 = arith.constant 0 : index
    %c0_51 = arith.constant 0 : index
    %84 = vector.load %arg13[%c0_49, %c0_50, %c0_51] : memref<2x32x32xf32, #tpu.memory_space<vmem>>, vector<1x32x32xf32>
    %85 = vector.shape_cast %84 : vector<1x32x32xf32> to vector<32x32xf32>
    %cst_52 = arith.constant dense<0.000000e+00> : vector<64x32xf32>
    %86 = tpu.matmul %83, %85, %cst_52 {dimension_numbers = #tpu.dot_dimension_numbers<[1], [0], [0], [1], [0, 0, 1, 1], [], []>} : vector<64x32xf32>, vector<32x32xf32>, vector<64x32xf32> -> vector<64x32xf32>
    %87 = arith.addf %10, %86 : vector<64x32xf32>
    %c0_53 = arith.constant 0 : index
    %c0_54 = arith.constant 0 : index
    %c0_55 = arith.constant 0 : index
    %88 = vector.load %arg14[%c0_53, %c0_54, %c0_55] : memref<2x1x32xf32, #tpu.memory_space<vmem>>, vector<1x1x32xf32>
    %89 = vector.shape_cast %88 : vector<1x1x32xf32> to vector<1x32xf32>
    %90 = vector.broadcast %89 : vector<1x32xf32> to vector<64x32xf32>
    %91 = arith.addf %87, %90 : vector<64x32xf32>
    %c0_56 = arith.constant 0 : index
    %c0_57 = arith.constant 0 : index
    %c0_58 = arith.constant 0 : index
    %92 = vector.load %arg15[%c0_56, %c0_57, %c0_58] : memref<2x1x32xf32, #tpu.memory_space<vmem>>, vector<1x1x32xf32>
    %93 = vector.shape_cast %92 : vector<1x1x32xf32> to vector<1x32xf32>
    %c0_59 = arith.constant 0 : index
    %c0_60 = arith.constant 0 : index
    %c0_61 = arith.constant 0 : index
    %94 = vector.load %arg16[%c0_59, %c0_60, %c0_61] : memref<2x1x32xf32, #tpu.memory_space<vmem>>, vector<1x1x32xf32>
    %95 = vector.shape_cast %94 : vector<1x1x32xf32> to vector<1x32xf32>
    %cst_62 = arith.constant dense<0.000000e+00> : vector<64xf32>
    %96 = vector.multi_reduction <add>, %91, %cst_62 [1] : vector<64x32xf32> to vector<64xf32>
    %97 = vector.shape_cast %96 : vector<64xf32> to vector<64x1xf32>
    %cst_63 = arith.constant 3.200000e+01 : f32
    %98 = vector.broadcast %cst_63 : f32 to vector<64x1xf32>
    %99 = arith.divf %97, %98 : vector<64x1xf32>
    %100 = vector.broadcast %99 : vector<64x1xf32> to vector<64x32xf32>
    %101 = arith.subf %91, %100 : vector<64x32xf32>
    %102 = arith.mulf %101, %101 : vector<64x32xf32>
    %cst_64 = arith.constant dense<0.000000e+00> : vector<64xf32>
    %103 = vector.multi_reduction <add>, %102, %cst_64 [1] : vector<64x32xf32> to vector<64xf32>
    %104 = vector.shape_cast %103 : vector<64xf32> to vector<64x1xf32>
    %cst_65 = arith.constant 3.200000e+01 : f32
    %105 = vector.broadcast %cst_65 : f32 to vector<64x1xf32>
    %106 = arith.divf %104, %105 : vector<64x1xf32>
    %107 = vector.broadcast %99 : vector<64x1xf32> to vector<64x32xf32>
    %108 = arith.subf %91, %107 : vector<64x32xf32>
    %cst_66 = arith.constant 9.99999974E-6 : f32
    %109 = vector.broadcast %cst_66 : f32 to vector<64x1xf32>
    %110 = arith.addf %106, %109 : vector<64x1xf32>
    %111 = math.rsqrt %110 : vector<64x1xf32>
    %112 = vector.broadcast %111 : vector<64x1xf32> to vector<64x32xf32>
    %113 = arith.mulf %108, %112 : vector<64x32xf32>
    %114 = vector.broadcast %93 : vector<1x32xf32> to vector<64x32xf32>
    %115 = arith.mulf %113, %114 : vector<64x32xf32>
    %116 = vector.broadcast %95 : vector<1x32xf32> to vector<64x32xf32>
    %117 = arith.addf %115, %116 : vector<64x32xf32>
    %c0_67 = arith.constant 0 : index
    %c0_68 = arith.constant 0 : index
    %c0_69 = arith.constant 0 : index
    %118 = vector.load %arg17[%c0_67, %c0_68, %c0_69] : memref<2x32x128xf32, #tpu.memory_space<vmem>>, vector<1x32x128xf32>
    %119 = vector.shape_cast %118 : vector<1x32x128xf32> to vector<32x128xf32>
    %cst_70 = arith.constant dense<0.000000e+00> : vector<64x128xf32>
    %120 = tpu.matmul %117, %119, %cst_70 {dimension_numbers = #tpu.dot_dimension_numbers<[1], [0], [0], [1], [0, 0, 1, 1], [], []>} : vector<64x32xf32>, vector<32x128xf32>, vector<64x128xf32> -> vector<64x128xf32>
    %c0_71 = arith.constant 0 : index
    %c0_72 = arith.constant 0 : index
    %c0_73 = arith.constant 0 : index
    %121 = vector.load %arg18[%c0_71, %c0_72, %c0_73] : memref<2x1x128xf32, #tpu.memory_space<vmem>>, vector<1x1x128xf32>
    %122 = vector.shape_cast %121 : vector<1x1x128xf32> to vector<1x128xf32>
    %123 = vector.broadcast %122 : vector<1x128xf32> to vector<64x128xf32>
    %124 = arith.addf %120, %123 : vector<64x128xf32>
    %cst_74 = arith.constant 5.000000e-01 : f32
    %125 = vector.broadcast %cst_74 : f32 to vector<64x128xf32>
    %126 = arith.mulf %125, %124 : vector<64x128xf32>
    %cst_75 = arith.constant 0.707106769 : f32
    %127 = vector.broadcast %cst_75 : f32 to vector<64x128xf32>
    %128 = arith.mulf %124, %127 : vector<64x128xf32>
    %129 = math.absf %128 : vector<64x128xf32>
    %cst_76 = arith.constant 0.327591091 : f32
    %130 = vector.broadcast %cst_76 : f32 to vector<64x128xf32>
    %131 = arith.mulf %130, %129 : vector<64x128xf32>
    %cst_77 = arith.constant 1.000000e+00 : f32
    %132 = vector.broadcast %cst_77 : f32 to vector<64x128xf32>
    %133 = arith.addf %132, %131 : vector<64x128xf32>
    %cst_78 = arith.constant 1.000000e+00 : f32
    %134 = vector.broadcast %cst_78 : f32 to vector<64x128xf32>
    %135 = arith.divf %134, %133 : vector<64x128xf32>
    %cst_79 = arith.constant 1.06140542 : f32
    %136 = vector.broadcast %cst_79 : f32 to vector<64x128xf32>
    %137 = arith.mulf %136, %135 : vector<64x128xf32>
    %cst_80 = arith.constant -1.45315206 : f32
    %138 = vector.broadcast %cst_80 : f32 to vector<64x128xf32>
    %139 = arith.addf %137, %138 : vector<64x128xf32>
    %140 = arith.mulf %139, %135 : vector<64x128xf32>
    %cst_81 = arith.constant 1.42141378 : f32
    %141 = vector.broadcast %cst_81 : f32 to vector<64x128xf32>
    %142 = arith.addf %140, %141 : vector<64x128xf32>
    %143 = arith.mulf %142, %135 : vector<64x128xf32>
    %cst_82 = arith.constant -0.284496725 : f32
    %144 = vector.broadcast %cst_82 : f32 to vector<64x128xf32>
    %145 = arith.addf %143, %144 : vector<64x128xf32>
    %146 = arith.mulf %145, %135 : vector<64x128xf32>
    %cst_83 = arith.constant 0.254829586 : f32
    %147 = vector.broadcast %cst_83 : f32 to vector<64x128xf32>
    %148 = arith.addf %146, %147 : vector<64x128xf32>
    %149 = arith.mulf %148, %135 : vector<64x128xf32>
    %cst_84 = arith.constant 0.000000e+00 : f32
    %150 = vector.broadcast %cst_84 : f32 to vector<64x128xf32>
    %151 = arith.subf %150, %129 : vector<64x128xf32>
    %152 = arith.mulf %151, %129 : vector<64x128xf32>
    %153 = math.exp %152 : vector<64x128xf32>
    %154 = arith.mulf %149, %153 : vector<64x128xf32>
    %cst_85 = arith.constant 1.000000e+00 : f32
    %155 = vector.broadcast %cst_85 : f32 to vector<64x128xf32>
    %156 = arith.subf %155, %154 : vector<64x128xf32>
    %cst_86 = arith.constant 0.000000e+00 : f32
    %157 = vector.broadcast %cst_86 : f32 to vector<64x128xf32>
    %158 = arith.cmpf oge, %128, %157 : vector<64x128xf32>
    %cst_87 = arith.constant 0.000000e+00 : f32
    %159 = vector.broadcast %cst_87 : f32 to vector<64x128xf32>
    %160 = arith.subf %159, %156 : vector<64x128xf32>
    %161 = arith.select %158, %156, %160 : vector<64x128xi1>, vector<64x128xf32>
    %cst_88 = arith.constant 1.000000e+00 : f32
    %162 = vector.broadcast %cst_88 : f32 to vector<64x128xf32>
    %163 = arith.addf %162, %161 : vector<64x128xf32>
    %164 = arith.mulf %126, %163 : vector<64x128xf32>
    %c0_89 = arith.constant 0 : index
    %c0_90 = arith.constant 0 : index
    %c0_91 = arith.constant 0 : index
    %165 = vector.load %arg19[%c0_89, %c0_90, %c0_91] : memref<2x128x32xf32, #tpu.memory_space<vmem>>, vector<1x128x32xf32>
    %166 = vector.shape_cast %165 : vector<1x128x32xf32> to vector<128x32xf32>
    %cst_92 = arith.constant dense<0.000000e+00> : vector<64x32xf32>
    %167 = tpu.matmul %164, %166, %cst_92 {dimension_numbers = #tpu.dot_dimension_numbers<[1], [0], [0], [1], [0, 0, 1, 1], [], []>} : vector<64x128xf32>, vector<128x32xf32>, vector<64x32xf32> -> vector<64x32xf32>
    %168 = arith.addf %91, %167 : vector<64x32xf32>
    %c0_93 = arith.constant 0 : index
    %c0_94 = arith.constant 0 : index
    %c0_95 = arith.constant 0 : index
    %169 = vector.load %arg20[%c0_93, %c0_94, %c0_95] : memref<2x1x32xf32, #tpu.memory_space<vmem>>, vector<1x1x32xf32>
    %170 = vector.shape_cast %169 : vector<1x1x32xf32> to vector<1x32xf32>
    %171 = vector.broadcast %170 : vector<1x32xf32> to vector<64x32xf32>
    %172 = arith.addf %168, %171 : vector<64x32xf32>
    %c1 = arith.constant 1 : index
    %c0_96 = arith.constant 0 : index
    %c0_97 = arith.constant 0 : index
    %173 = vector.load %arg5[%c1, %c0_96, %c0_97] : memref<2x1x32xf32, #tpu.memory_space<vmem>>, vector<1x1x32xf32>
    %174 = vector.shape_cast %173 : vector<1x1x32xf32> to vector<1x32xf32>
    %c1_98 = arith.constant 1 : index
    %c0_99 = arith.constant 0 : index
    %c0_100 = arith.constant 0 : index
    %175 = vector.load %arg6[%c1_98, %c0_99, %c0_100] : memref<2x1x32xf32, #tpu.memory_space<vmem>>, vector<1x1x32xf32>
    %176 = vector.shape_cast %175 : vector<1x1x32xf32> to vector<1x32xf32>
    %cst_101 = arith.constant dense<0.000000e+00> : vector<64xf32>
    %177 = vector.multi_reduction <add>, %172, %cst_101 [1] : vector<64x32xf32> to vector<64xf32>
    %178 = vector.shape_cast %177 : vector<64xf32> to vector<64x1xf32>
    %cst_102 = arith.constant 3.200000e+01 : f32
    %179 = vector.broadcast %cst_102 : f32 to vector<64x1xf32>
    %180 = arith.divf %178, %179 : vector<64x1xf32>
    %181 = vector.broadcast %180 : vector<64x1xf32> to vector<64x32xf32>
    %182 = arith.subf %172, %181 : vector<64x32xf32>
    %183 = arith.mulf %182, %182 : vector<64x32xf32>
    %cst_103 = arith.constant dense<0.000000e+00> : vector<64xf32>
    %184 = vector.multi_reduction <add>, %183, %cst_103 [1] : vector<64x32xf32> to vector<64xf32>
    %185 = vector.shape_cast %184 : vector<64xf32> to vector<64x1xf32>
    %cst_104 = arith.constant 3.200000e+01 : f32
    %186 = vector.broadcast %cst_104 : f32 to vector<64x1xf32>
    %187 = arith.divf %185, %186 : vector<64x1xf32>
    %188 = vector.broadcast %180 : vector<64x1xf32> to vector<64x32xf32>
    %189 = arith.subf %172, %188 : vector<64x32xf32>
    %cst_105 = arith.constant 9.99999974E-6 : f32
    %190 = vector.broadcast %cst_105 : f32 to vector<64x1xf32>
    %191 = arith.addf %187, %190 : vector<64x1xf32>
    %192 = math.rsqrt %191 : vector<64x1xf32>
    %193 = vector.broadcast %192 : vector<64x1xf32> to vector<64x32xf32>
    %194 = arith.mulf %189, %193 : vector<64x32xf32>
    %195 = vector.broadcast %174 : vector<1x32xf32> to vector<64x32xf32>
    %196 = arith.mulf %194, %195 : vector<64x32xf32>
    %197 = vector.broadcast %176 : vector<1x32xf32> to vector<64x32xf32>
    %198 = arith.addf %196, %197 : vector<64x32xf32>
    %c1_106 = arith.constant 1 : index
    %c0_107 = arith.constant 0 : index
    %c0_108 = arith.constant 0 : index
    %199 = vector.load %arg7[%c1_106, %c0_107, %c0_108] : memref<2x32x32xf32, #tpu.memory_space<vmem>>, vector<1x32x32xf32>
    %200 = vector.shape_cast %199 : vector<1x32x32xf32> to vector<32x32xf32>
    %cst_109 = arith.constant dense<0.000000e+00> : vector<64x32xf32>
    %201 = tpu.matmul %198, %200, %cst_109 {dimension_numbers = #tpu.dot_dimension_numbers<[1], [0], [0], [1], [0, 0, 1, 1], [], []>} : vector<64x32xf32>, vector<32x32xf32>, vector<64x32xf32> -> vector<64x32xf32>
    %c1_110 = arith.constant 1 : index
    %c0_111 = arith.constant 0 : index
    %c0_112 = arith.constant 0 : index
    %202 = vector.load %arg8[%c1_110, %c0_111, %c0_112] : memref<2x1x32xf32, #tpu.memory_space<vmem>>, vector<1x1x32xf32>
    %203 = vector.shape_cast %202 : vector<1x1x32xf32> to vector<1x32xf32>
    %204 = vector.broadcast %203 : vector<1x32xf32> to vector<64x32xf32>
    %205 = arith.addf %201, %204 : vector<64x32xf32>
    %c1_113 = arith.constant 1 : index
    %c0_114 = arith.constant 0 : index
    %c0_115 = arith.constant 0 : index
    %206 = vector.load %arg9[%c1_113, %c0_114, %c0_115] : memref<2x32x32xf32, #tpu.memory_space<vmem>>, vector<1x32x32xf32>
    %207 = vector.shape_cast %206 : vector<1x32x32xf32> to vector<32x32xf32>
    %cst_116 = arith.constant dense<0.000000e+00> : vector<64x32xf32>
    %208 = tpu.matmul %198, %207, %cst_116 {dimension_numbers = #tpu.dot_dimension_numbers<[1], [0], [0], [1], [0, 0, 1, 1], [], []>} : vector<64x32xf32>, vector<32x32xf32>, vector<64x32xf32> -> vector<64x32xf32>
    %c1_117 = arith.constant 1 : index
    %c0_118 = arith.constant 0 : index
    %c0_119 = arith.constant 0 : index
    %209 = vector.load %arg10[%c1_117, %c0_118, %c0_119] : memref<2x1x32xf32, #tpu.memory_space<vmem>>, vector<1x1x32xf32>
    %210 = vector.shape_cast %209 : vector<1x1x32xf32> to vector<1x32xf32>
    %211 = vector.broadcast %210 : vector<1x32xf32> to vector<64x32xf32>
    %212 = arith.addf %208, %211 : vector<64x32xf32>
    %c1_120 = arith.constant 1 : index
    %c0_121 = arith.constant 0 : index
    %c0_122 = arith.constant 0 : index
    %213 = vector.load %arg11[%c1_120, %c0_121, %c0_122] : memref<2x32x32xf32, #tpu.memory_space<vmem>>, vector<1x32x32xf32>
    %214 = vector.shape_cast %213 : vector<1x32x32xf32> to vector<32x32xf32>
    %cst_123 = arith.constant dense<0.000000e+00> : vector<64x32xf32>
    %215 = tpu.matmul %198, %214, %cst_123 {dimension_numbers = #tpu.dot_dimension_numbers<[1], [0], [0], [1], [0, 0, 1, 1], [], []>} : vector<64x32xf32>, vector<32x32xf32>, vector<64x32xf32> -> vector<64x32xf32>
    %c1_124 = arith.constant 1 : index
    %c0_125 = arith.constant 0 : index
    %c0_126 = arith.constant 0 : index
    %216 = vector.load %arg12[%c1_124, %c0_125, %c0_126] : memref<2x1x32xf32, #tpu.memory_space<vmem>>, vector<1x1x32xf32>
    %217 = vector.shape_cast %216 : vector<1x1x32xf32> to vector<1x32xf32>
    %218 = vector.broadcast %217 : vector<1x32xf32> to vector<64x32xf32>
    %219 = arith.addf %215, %218 : vector<64x32xf32>
    %cst_127 = arith.constant 0.353553385 : f32
    %220 = vector.broadcast %cst_127 : f32 to vector<64x32xf32>
    %221 = arith.mulf %205, %220 : vector<64x32xf32>
    %222 = vector.shape_cast %221 : vector<64x32xf32> to vector<8x8x32xf32>
    %223 = vector.shape_cast %212 : vector<64x32xf32> to vector<8x8x32xf32>
    %224 = vector.shape_cast %219 : vector<64x32xf32> to vector<8x8x32xf32>
    %225 = vector.shape_cast %222 : vector<8x8x32xf32> to vector<8x8x1x32xf32>
    %226 = vector.shape_cast %223 : vector<8x8x32xf32> to vector<8x1x8x32xf32>
    %227 = vector.broadcast %225 : vector<8x8x1x32xf32> to vector<8x8x8x32xf32>
    %228 = vector.broadcast %226 : vector<8x1x8x32xf32> to vector<8x8x8x32xf32>
    %229 = arith.mulf %227, %228 : vector<8x8x8x32xf32>
    %230 = vector.shape_cast %229 : vector<8x8x8x32xf32> to vector<512x32xf32>
    %cst_128 = arith.constant dense<0.000000e+00> : vector<512x32xf32>
    %231 = tpu.matmul %230, %11, %cst_128 {dimension_numbers = #tpu.dot_dimension_numbers<[1], [0], [0], [1], [0, 0, 1, 1], [], []>} : vector<512x32xf32>, vector<32x32xf32>, vector<512x32xf32> -> vector<512x32xf32>
    %232 = vector.shape_cast %231 : vector<512x32xf32> to vector<8x8x8x32xf32>
    %cst_129 = arith.constant dense<0xFF800000> : vector<8x8x32xf32>
    %233 = vector.multi_reduction <maximumf>, %232, %cst_129 [2] : vector<8x8x8x32xf32> to vector<8x8x32xf32>
    %234 = vector.shape_cast %233 : vector<8x8x32xf32> to vector<8x8x1x32xf32>
    %235 = vector.broadcast %234 : vector<8x8x1x32xf32> to vector<8x8x8x32xf32>
    %236 = arith.subf %232, %235 : vector<8x8x8x32xf32>
    %237 = math.exp %236 : vector<8x8x8x32xf32>
    %cst_130 = arith.constant dense<0.000000e+00> : vector<8x8x32xf32>
    %238 = vector.multi_reduction <add>, %237, %cst_130 [2] : vector<8x8x8x32xf32> to vector<8x8x32xf32>
    %239 = vector.shape_cast %224 : vector<8x8x32xf32> to vector<8x1x8x32xf32>
    %240 = vector.broadcast %239 : vector<8x1x8x32xf32> to vector<8x8x8x32xf32>
    %241 = arith.mulf %237, %240 : vector<8x8x8x32xf32>
    %cst_131 = arith.constant dense<0.000000e+00> : vector<8x8x32xf32>
    %242 = vector.multi_reduction <add>, %241, %cst_131 [2] : vector<8x8x8x32xf32> to vector<8x8x32xf32>
    %243 = arith.divf %242, %238 : vector<8x8x32xf32>
    %244 = vector.shape_cast %243 : vector<8x8x32xf32> to vector<64x32xf32>
    %c1_132 = arith.constant 1 : index
    %c0_133 = arith.constant 0 : index
    %c0_134 = arith.constant 0 : index
    %245 = vector.load %arg13[%c1_132, %c0_133, %c0_134] : memref<2x32x32xf32, #tpu.memory_space<vmem>>, vector<1x32x32xf32>
    %246 = vector.shape_cast %245 : vector<1x32x32xf32> to vector<32x32xf32>
    %cst_135 = arith.constant dense<0.000000e+00> : vector<64x32xf32>
    %247 = tpu.matmul %244, %246, %cst_135 {dimension_numbers = #tpu.dot_dimension_numbers<[1], [0], [0], [1], [0, 0, 1, 1], [], []>} : vector<64x32xf32>, vector<32x32xf32>, vector<64x32xf32> -> vector<64x32xf32>
    %248 = arith.addf %172, %247 : vector<64x32xf32>
    %c1_136 = arith.constant 1 : index
    %c0_137 = arith.constant 0 : index
    %c0_138 = arith.constant 0 : index
    %249 = vector.load %arg14[%c1_136, %c0_137, %c0_138] : memref<2x1x32xf32, #tpu.memory_space<vmem>>, vector<1x1x32xf32>
    %250 = vector.shape_cast %249 : vector<1x1x32xf32> to vector<1x32xf32>
    %251 = vector.broadcast %250 : vector<1x32xf32> to vector<64x32xf32>
    %252 = arith.addf %248, %251 : vector<64x32xf32>
    %c1_139 = arith.constant 1 : index
    %c0_140 = arith.constant 0 : index
    %c0_141 = arith.constant 0 : index
    %253 = vector.load %arg15[%c1_139, %c0_140, %c0_141] : memref<2x1x32xf32, #tpu.memory_space<vmem>>, vector<1x1x32xf32>
    %254 = vector.shape_cast %253 : vector<1x1x32xf32> to vector<1x32xf32>
    %c1_142 = arith.constant 1 : index
    %c0_143 = arith.constant 0 : index
    %c0_144 = arith.constant 0 : index
    %255 = vector.load %arg16[%c1_142, %c0_143, %c0_144] : memref<2x1x32xf32, #tpu.memory_space<vmem>>, vector<1x1x32xf32>
    %256 = vector.shape_cast %255 : vector<1x1x32xf32> to vector<1x32xf32>
    %cst_145 = arith.constant dense<0.000000e+00> : vector<64xf32>
    %257 = vector.multi_reduction <add>, %252, %cst_145 [1] : vector<64x32xf32> to vector<64xf32>
    %258 = vector.shape_cast %257 : vector<64xf32> to vector<64x1xf32>
    %cst_146 = arith.constant 3.200000e+01 : f32
    %259 = vector.broadcast %cst_146 : f32 to vector<64x1xf32>
    %260 = arith.divf %258, %259 : vector<64x1xf32>
    %261 = vector.broadcast %260 : vector<64x1xf32> to vector<64x32xf32>
    %262 = arith.subf %252, %261 : vector<64x32xf32>
    %263 = arith.mulf %262, %262 : vector<64x32xf32>
    %cst_147 = arith.constant dense<0.000000e+00> : vector<64xf32>
    %264 = vector.multi_reduction <add>, %263, %cst_147 [1] : vector<64x32xf32> to vector<64xf32>
    %265 = vector.shape_cast %264 : vector<64xf32> to vector<64x1xf32>
    %cst_148 = arith.constant 3.200000e+01 : f32
    %266 = vector.broadcast %cst_148 : f32 to vector<64x1xf32>
    %267 = arith.divf %265, %266 : vector<64x1xf32>
    %268 = vector.broadcast %260 : vector<64x1xf32> to vector<64x32xf32>
    %269 = arith.subf %252, %268 : vector<64x32xf32>
    %cst_149 = arith.constant 9.99999974E-6 : f32
    %270 = vector.broadcast %cst_149 : f32 to vector<64x1xf32>
    %271 = arith.addf %267, %270 : vector<64x1xf32>
    %272 = math.rsqrt %271 : vector<64x1xf32>
    %273 = vector.broadcast %272 : vector<64x1xf32> to vector<64x32xf32>
    %274 = arith.mulf %269, %273 : vector<64x32xf32>
    %275 = vector.broadcast %254 : vector<1x32xf32> to vector<64x32xf32>
    %276 = arith.mulf %274, %275 : vector<64x32xf32>
    %277 = vector.broadcast %256 : vector<1x32xf32> to vector<64x32xf32>
    %278 = arith.addf %276, %277 : vector<64x32xf32>
    %c1_150 = arith.constant 1 : index
    %c0_151 = arith.constant 0 : index
    %c0_152 = arith.constant 0 : index
    %279 = vector.load %arg17[%c1_150, %c0_151, %c0_152] : memref<2x32x128xf32, #tpu.memory_space<vmem>>, vector<1x32x128xf32>
    %280 = vector.shape_cast %279 : vector<1x32x128xf32> to vector<32x128xf32>
    %cst_153 = arith.constant dense<0.000000e+00> : vector<64x128xf32>
    %281 = tpu.matmul %278, %280, %cst_153 {dimension_numbers = #tpu.dot_dimension_numbers<[1], [0], [0], [1], [0, 0, 1, 1], [], []>} : vector<64x32xf32>, vector<32x128xf32>, vector<64x128xf32> -> vector<64x128xf32>
    %c1_154 = arith.constant 1 : index
    %c0_155 = arith.constant 0 : index
    %c0_156 = arith.constant 0 : index
    %282 = vector.load %arg18[%c1_154, %c0_155, %c0_156] : memref<2x1x128xf32, #tpu.memory_space<vmem>>, vector<1x1x128xf32>
    %283 = vector.shape_cast %282 : vector<1x1x128xf32> to vector<1x128xf32>
    %284 = vector.broadcast %283 : vector<1x128xf32> to vector<64x128xf32>
    %285 = arith.addf %281, %284 : vector<64x128xf32>
    %cst_157 = arith.constant 5.000000e-01 : f32
    %286 = vector.broadcast %cst_157 : f32 to vector<64x128xf32>
    %287 = arith.mulf %286, %285 : vector<64x128xf32>
    %cst_158 = arith.constant 0.707106769 : f32
    %288 = vector.broadcast %cst_158 : f32 to vector<64x128xf32>
    %289 = arith.mulf %285, %288 : vector<64x128xf32>
    %290 = math.absf %289 : vector<64x128xf32>
    %cst_159 = arith.constant 0.327591091 : f32
    %291 = vector.broadcast %cst_159 : f32 to vector<64x128xf32>
    %292 = arith.mulf %291, %290 : vector<64x128xf32>
    %cst_160 = arith.constant 1.000000e+00 : f32
    %293 = vector.broadcast %cst_160 : f32 to vector<64x128xf32>
    %294 = arith.addf %293, %292 : vector<64x128xf32>
    %cst_161 = arith.constant 1.000000e+00 : f32
    %295 = vector.broadcast %cst_161 : f32 to vector<64x128xf32>
    %296 = arith.divf %295, %294 : vector<64x128xf32>
    %cst_162 = arith.constant 1.06140542 : f32
    %297 = vector.broadcast %cst_162 : f32 to vector<64x128xf32>
    %298 = arith.mulf %297, %296 : vector<64x128xf32>
    %cst_163 = arith.constant -1.45315206 : f32
    %299 = vector.broadcast %cst_163 : f32 to vector<64x128xf32>
    %300 = arith.addf %298, %299 : vector<64x128xf32>
    %301 = arith.mulf %300, %296 : vector<64x128xf32>
    %cst_164 = arith.constant 1.42141378 : f32
    %302 = vector.broadcast %cst_164 : f32 to vector<64x128xf32>
    %303 = arith.addf %301, %302 : vector<64x128xf32>
    %304 = arith.mulf %303, %296 : vector<64x128xf32>
    %cst_165 = arith.constant -0.284496725 : f32
    %305 = vector.broadcast %cst_165 : f32 to vector<64x128xf32>
    %306 = arith.addf %304, %305 : vector<64x128xf32>
    %307 = arith.mulf %306, %296 : vector<64x128xf32>
    %cst_166 = arith.constant 0.254829586 : f32
    %308 = vector.broadcast %cst_166 : f32 to vector<64x128xf32>
    %309 = arith.addf %307, %308 : vector<64x128xf32>
    %310 = arith.mulf %309, %296 : vector<64x128xf32>
    %cst_167 = arith.constant 0.000000e+00 : f32
    %311 = vector.broadcast %cst_167 : f32 to vector<64x128xf32>
    %312 = arith.subf %311, %290 : vector<64x128xf32>
    %313 = arith.mulf %312, %290 : vector<64x128xf32>
    %314 = math.exp %313 : vector<64x128xf32>
    %315 = arith.mulf %310, %314 : vector<64x128xf32>
    %cst_168 = arith.constant 1.000000e+00 : f32
    %316 = vector.broadcast %cst_168 : f32 to vector<64x128xf32>
    %317 = arith.subf %316, %315 : vector<64x128xf32>
    %cst_169 = arith.constant 0.000000e+00 : f32
    %318 = vector.broadcast %cst_169 : f32 to vector<64x128xf32>
    %319 = arith.cmpf oge, %289, %318 : vector<64x128xf32>
    %cst_170 = arith.constant 0.000000e+00 : f32
    %320 = vector.broadcast %cst_170 : f32 to vector<64x128xf32>
    %321 = arith.subf %320, %317 : vector<64x128xf32>
    %322 = arith.select %319, %317, %321 : vector<64x128xi1>, vector<64x128xf32>
    %cst_171 = arith.constant 1.000000e+00 : f32
    %323 = vector.broadcast %cst_171 : f32 to vector<64x128xf32>
    %324 = arith.addf %323, %322 : vector<64x128xf32>
    %325 = arith.mulf %287, %324 : vector<64x128xf32>
    %c1_172 = arith.constant 1 : index
    %c0_173 = arith.constant 0 : index
    %c0_174 = arith.constant 0 : index
    %326 = vector.load %arg19[%c1_172, %c0_173, %c0_174] : memref<2x128x32xf32, #tpu.memory_space<vmem>>, vector<1x128x32xf32>
    %327 = vector.shape_cast %326 : vector<1x128x32xf32> to vector<128x32xf32>
    %cst_175 = arith.constant dense<0.000000e+00> : vector<64x32xf32>
    %328 = tpu.matmul %325, %327, %cst_175 {dimension_numbers = #tpu.dot_dimension_numbers<[1], [0], [0], [1], [0, 0, 1, 1], [], []>} : vector<64x128xf32>, vector<128x32xf32>, vector<64x32xf32> -> vector<64x32xf32>
    %329 = arith.addf %252, %328 : vector<64x32xf32>
    %c1_176 = arith.constant 1 : index
    %c0_177 = arith.constant 0 : index
    %c0_178 = arith.constant 0 : index
    %330 = vector.load %arg20[%c1_176, %c0_177, %c0_178] : memref<2x1x32xf32, #tpu.memory_space<vmem>>, vector<1x1x32xf32>
    %331 = vector.shape_cast %330 : vector<1x1x32xf32> to vector<1x32xf32>
    %332 = vector.broadcast %331 : vector<1x32xf32> to vector<64x32xf32>
    %333 = arith.addf %329, %332 : vector<64x32xf32>
    %c0_179 = arith.constant 0 : index
    %c0_180 = arith.constant 0 : index
    %334 = vector.load %arg22[%c0_179, %c0_180] : memref<1x32xf32, #tpu.memory_space<vmem>>, vector<1x32xf32>
    %c0_181 = arith.constant 0 : index
    %c0_182 = arith.constant 0 : index
    %335 = vector.load %arg23[%c0_181, %c0_182] : memref<1x32xf32, #tpu.memory_space<vmem>>, vector<1x32xf32>
    %cst_183 = arith.constant dense<0.000000e+00> : vector<64xf32>
    %336 = vector.multi_reduction <add>, %333, %cst_183 [1] : vector<64x32xf32> to vector<64xf32>
    %337 = vector.shape_cast %336 : vector<64xf32> to vector<64x1xf32>
    %cst_184 = arith.constant 3.200000e+01 : f32
    %338 = vector.broadcast %cst_184 : f32 to vector<64x1xf32>
    %339 = arith.divf %337, %338 : vector<64x1xf32>
    %340 = vector.broadcast %339 : vector<64x1xf32> to vector<64x32xf32>
    %341 = arith.subf %333, %340 : vector<64x32xf32>
    %342 = arith.mulf %341, %341 : vector<64x32xf32>
    %cst_185 = arith.constant dense<0.000000e+00> : vector<64xf32>
    %343 = vector.multi_reduction <add>, %342, %cst_185 [1] : vector<64x32xf32> to vector<64xf32>
    %344 = vector.shape_cast %343 : vector<64xf32> to vector<64x1xf32>
    %cst_186 = arith.constant 3.200000e+01 : f32
    %345 = vector.broadcast %cst_186 : f32 to vector<64x1xf32>
    %346 = arith.divf %344, %345 : vector<64x1xf32>
    %347 = vector.broadcast %339 : vector<64x1xf32> to vector<64x32xf32>
    %348 = arith.subf %333, %347 : vector<64x32xf32>
    %cst_187 = arith.constant 9.99999974E-6 : f32
    %349 = vector.broadcast %cst_187 : f32 to vector<64x1xf32>
    %350 = arith.addf %346, %349 : vector<64x1xf32>
    %351 = math.rsqrt %350 : vector<64x1xf32>
    %352 = vector.broadcast %351 : vector<64x1xf32> to vector<64x32xf32>
    %353 = arith.mulf %348, %352 : vector<64x32xf32>
    %354 = vector.broadcast %334 : vector<1x32xf32> to vector<64x32xf32>
    %355 = arith.mulf %353, %354 : vector<64x32xf32>
    %356 = vector.broadcast %335 : vector<1x32xf32> to vector<64x32xf32>
    %357 = arith.addf %355, %356 : vector<64x32xf32>
    %358 = vector.shape_cast %357 : vector<64x32xf32> to vector<8x8x32xf32>
    %359 = vector.extract_strided_slice %358 {offsets = [0, 0, 0], sizes = [4, 8, 32], strides = [1, 1, 1]} : vector<8x8x32xf32> to vector<4x8x32xf32>
    %360 = vector.extract_strided_slice %358 {offsets = [4, 0, 0], sizes = [4, 8, 32], strides = [1, 1, 1]} : vector<8x8x32xf32> to vector<4x8x32xf32>
    %361 = arith.addf %359, %360 : vector<4x8x32xf32>
    %362 = vector.extract_strided_slice %361 {offsets = [0, 0, 0], sizes = [2, 8, 32], strides = [1, 1, 1]} : vector<4x8x32xf32> to vector<2x8x32xf32>
    %363 = vector.extract_strided_slice %361 {offsets = [2, 0, 0], sizes = [2, 8, 32], strides = [1, 1, 1]} : vector<4x8x32xf32> to vector<2x8x32xf32>
    %364 = arith.addf %362, %363 : vector<2x8x32xf32>
    %365 = vector.extract_strided_slice %364 {offsets = [0, 0, 0], sizes = [1, 8, 32], strides = [1, 1, 1]} : vector<2x8x32xf32> to vector<1x8x32xf32>
    %366 = vector.extract_strided_slice %364 {offsets = [1, 0, 0], sizes = [1, 8, 32], strides = [1, 1, 1]} : vector<2x8x32xf32> to vector<1x8x32xf32>
    %367 = arith.addf %365, %366 : vector<1x8x32xf32>
    %368 = vector.shape_cast %367 : vector<1x8x32xf32> to vector<8x32xf32>
    %cst_188 = arith.constant 1.250000e-01 : f32
    %369 = vector.broadcast %cst_188 : f32 to vector<8x32xf32>
    %370 = arith.mulf %368, %369 : vector<8x32xf32>
    %c0_189 = arith.constant 0 : index
    %c0_190 = arith.constant 0 : index
    %371 = vector.load %arg24[%c0_189, %c0_190] : memref<8x32xf32, #tpu.memory_space<vmem>>, vector<8x32xf32>
    tpu.vector_store %arg24[%c0_189, %c0_190], %370 {strides = array<i32>} : memref<8x32xf32, #tpu.memory_space<vmem>>, vector<8x32xf32>,
    return
  }
}

</mosaic_0001>

<llo_original>
// kernel: vision_transformer.1
$region0: #{vision_transformer.1}
  #allocation0 [shape = 'u32[]', space=smem, size = 0x4, offset = 0x4, fixed_abs, tag = 'smem constant byte address 0x4 - core index']
  #allocation1 [shape = 'u32[144,128]{1,0:T(1,128)}', space=vmem, size = 0x12000, scoped, tag = 'internal scratch']
  %s0 = inlined_call_operand.vmem [shape: f32[64,192], index: 0, kind: input, shape index: {}]
  %s1 = inlined_call_operand.vmem [shape: f32[192,32], index: 1, kind: input, shape index: {}]
  %s2 = inlined_call_operand.vmem [shape: f32[1,32], index: 2, kind: input, shape index: {}]
  %s3 = inlined_call_operand.vmem [shape: f32[32,32], index: 3, kind: input, shape index: {}]
  %s4 = inlined_call_operand.vmem [shape: f32[1,32], index: 4, kind: input, shape index: {}]
  %s5 = inlined_call_operand.vmem [shape: f32[2,1,32], index: 5, kind: input, shape index: {}]
  %s6 = inlined_call_operand.vmem [shape: f32[2,1,32], index: 6, kind: input, shape index: {}]
  %s7 = inlined_call_operand.vmem [shape: f32[2,32,32], index: 7, kind: input, shape index: {}]
  %s8 = inlined_call_operand.vmem [shape: f32[2,1,32], index: 8, kind: input, shape index: {}]
  %s9 = inlined_call_operand.vmem [shape: f32[2,32,32], index: 9, kind: input, shape index: {}]
  %s10 = inlined_call_operand.vmem [shape: f32[2,1,32], index: 10, kind: input, shape index: {}]
  %s11 = inlined_call_operand.vmem [shape: f32[2,32,32], index: 11, kind: input, shape index: {}]
  %s12 = inlined_call_operand.vmem [shape: f32[2,1,32], index: 12, kind: input, shape index: {}]
  %s13 = inlined_call_operand.vmem [shape: f32[2,32,32], index: 13, kind: input, shape index: {}]
  %s14 = inlined_call_operand.vmem [shape: f32[2,1,32], index: 14, kind: input, shape index: {}]
  %s15 = inlined_call_operand.vmem [shape: f32[2,1,32], index: 15, kind: input, shape index: {}]
  %s16 = inlined_call_operand.vmem [shape: f32[2,1,32], index: 16, kind: input, shape index: {}]
  %s17 = inlined_call_operand.vmem [shape: f32[2,32,128], index: 17, kind: input, shape index: {}]
  %s18 = inlined_call_operand.vmem [shape: f32[2,1,128], index: 18, kind: input, shape index: {}]
  %s19 = inlined_call_operand.vmem [shape: f32[2,128,32], index: 19, kind: input, shape index: {}]
  %s20 = inlined_call_operand.vmem [shape: f32[2,1,32], index: 20, kind: input, shape index: {}]
  %s21 = inlined_call_operand.vmem [shape: f32[32,32], index: 21, kind: input, shape index: {}]
  %s22 = inlined_call_operand.vmem [shape: f32[1,32], index: 22, kind: input, shape index: {}]
  %s23 = inlined_call_operand.vmem [shape: f32[1,32], index: 23, kind: input, shape index: {}]
  %s24 = inlined_call_operand.hbm [shape: f32[8,32], index: 24, kind: output, shape index: {}]
  %s25 = sld [smem:[#allocation0]]
  $region106: #{vision_transformer.1} parent=0
    _
  %s27 = ssub.s32 1, %s25
  %s28 = scalar_select 0, %s27, %s25
  $region1: #{vision_transformer.1} parent=0
    #allocation2 [shape = 'u8[4096]{0}', space=vmem, size = 0x1000, scoped, tag = 'output window, operand 0, single buffered']
    #allocation3 [shape = 's32[1]{0}', space=sflag, size = 0x4, scoped, tag = 'scoped memory for vision_transformer.1']
    %29 = vsyncpa [#allocation3], 0
    // Predicated region
    $region2: #{vision_transformer.1} parent=1 // pred_check
      _
    $region3: #{vision_transformer.1} parent=1 // pred_check_branch
      %31 = sbr.rel (0) target = $region5
    $region4: #{vision_transformer.1} parent=1 // pred_region
      _
    $region5: #{vision_transformer.1} parent=1 // pred_fallthru
      _
    // Predicated region
    $region6: #{vision_transformer.1} parent=1 // pred_check
      _
    $region7: #{vision_transformer.1} parent=1 // pred_check_branch
      %33 = sbr.rel (0) target = $region9
    $region8: #{vision_transformer.1} parent=1 // pred_region
      _
    $region9: #{vision_transformer.1} parent=1 // pred_fallthru
      _
    // Predicated region
    $region10: #{vision_transformer.1} parent=1 // pred_check
      _
    $region11: #{vision_transformer.1} parent=1 // pred_check_branch
      %35 = sbr.rel (0) target = $region13
    $region12: #{vision_transformer.1} parent=1 // pred_region
      _
    $region13: #{vision_transformer.1} parent=1 // pred_fallthru
      _
    // Predicated region
    $region14: #{vision_transformer.1} parent=1 // pred_check
      _
    $region15: #{vision_transformer.1} parent=1 // pred_check_branch
      %37 = sbr.rel (0) target = $region17
    $region16: #{vision_transformer.1} parent=1 // pred_region
      _
    $region17: #{vision_transformer.1} parent=1 // pred_fallthru
      _
    // Predicated region
    $region18: #{vision_transformer.1} parent=1 // pred_check
      _
    $region19: #{vision_transformer.1} parent=1 // pred_check_branch
      %39 = sbr.rel (0) target = $region21
    $region20: #{vision_transformer.1} parent=1 // pred_region
      _
    $region21: #{vision_transformer.1} parent=1 // pred_fallthru
      _
    // Predicated region
    $region22: #{vision_transformer.1} parent=1 // pred_check
      _
    $region23: #{vision_transformer.1} parent=1 // pred_check_branch
      %41 = sbr.rel (0) target = $region25
    $region24: #{vision_transformer.1} parent=1 // pred_region
      _
    $region25: #{vision_transformer.1} parent=1 // pred_fallthru
      _
    // Predicated region
    $region26: #{vision_transformer.1} parent=1 // pred_check
      _
    $region27: #{vision_transformer.1} parent=1 // pred_check_branch
      %43 = sbr.rel (0) target = $region29
    $region28: #{vision_transformer.1} parent=1 // pred_region
      _
    $region29: #{vision_transformer.1} parent=1 // pred_fallthru
      _
    // Predicated region
    $region30: #{vision_transformer.1} parent=1 // pred_check
      _
    $region31: #{vision_transformer.1} parent=1 // pred_check_branch
      %45 = sbr.rel (0) target = $region33
    $region32: #{vision_transformer.1} parent=1 // pred_region
      _
    $region33: #{vision_transformer.1} parent=1 // pred_fallthru
      _
    // Predicated region
    $region34: #{vision_transformer.1} parent=1 // pred_check
      _
    $region35: #{vision_transformer.1} parent=1 // pred_check_branch
      %47 = sbr.rel (0) target = $region37
    $region36: #{vision_transformer.1} parent=1 // pred_region
      _
    $region37: #{vision_transformer.1} parent=1 // pred_fallthru
      _
    // Predicated region
    $region38: #{vision_transformer.1} parent=1 // pred_check
      _
    $region39: #{vision_transformer.1} parent=1 // pred_check_branch
      %49 = sbr.rel (0) target = $region41
    $region40: #{vision_transformer.1} parent=1 // pred_region
      _
    $region41: #{vision_transformer.1} parent=1 // pred_fallthru
      _
    // Predicated region
    $region42: #{vision_transformer.1} parent=1 // pred_check
      _
    $region43: #{vision_transformer.1} parent=1 // pred_check_branch
      %51 = sbr.rel (0) target = $region45
    $region44: #{vision_transformer.1} parent=1 // pred_region
      _
    $region45: #{vision_transformer.1} parent=1 // pred_fallthru
      _
    // Predicated region
    $region46: #{vision_transformer.1} parent=1 // pred_check
      _
    $region47: #{vision_transformer.1} parent=1 // pred_check_branch
      %53 = sbr.rel (0) target = $region49
    $region48: #{vision_transformer.1} parent=1 // pred_region
      _
    $region49: #{vision_transformer.1} parent=1 // pred_fallthru
      _
    // Predicated region
    $region50: #{vision_transformer.1} parent=1 // pred_check
      _
    $region51: #{vision_transformer.1} parent=1 // pred_check_branch
      %55 = sbr.rel (0) target = $region53
    $region52: #{vision_transformer.1} parent=1 // pred_region
      _
    $region53: #{vision_transformer.1} parent=1 // pred_fallthru
      _
    // Predicated region
    $region54: #{vision_transformer.1} parent=1 // pred_check
      _
    $region55: #{vision_transformer.1} parent=1 // pred_check_branch
      %57 = sbr.rel (0) target = $region57
    $region56: #{vision_transformer.1} parent=1 // pred_region
      _
    $region57: #{vision_transformer.1} parent=1 // pred_fallthru
      _
    // Predicated region
    $region58: #{vision_transformer.1} parent=1 // pred_check
      _
    $region59: #{vision_transformer.1} parent=1 // pred_check_branch
      %59 = sbr.rel (0) target = $region61
    $region60: #{vision_transformer.1} parent=1 // pred_region
      _
    $region61: #{vision_transformer.1} parent=1 // pred_fallthru
      _
    // Predicated region
    $region62: #{vision_transformer.1} parent=1 // pred_check
      _
    $region63: #{vision_transformer.1} parent=1 // pred_check_branch
      %61 = sbr.rel (0) target = $region65
    $region64: #{vision_transformer.1} parent=1 // pred_region
      _
    $region65: #{vision_transformer.1} parent=1 // pred_fallthru
      _
    // Predicated region
    $region66: #{vision_transformer.1} parent=1 // pred_check
      _
    $region67: #{vision_transformer.1} parent=1 // pred_check_branch
      %63 = sbr.rel (0) target = $region69
    $region68: #{vision_transformer.1} parent=1 // pred_region
      _
    $region69: #{vision_transformer.1} parent=1 // pred_fallthru
      _
    // Predicated region
    $region70: #{vision_transformer.1} parent=1 // pred_check
      _
    $region71: #{vision_transformer.1} parent=1 // pred_check_branch
      %65 = sbr.rel (0) target = $region73
    $region72: #{vision_transformer.1} parent=1 // pred_region
      _
    $region73: #{vision_transformer.1} parent=1 // pred_fallthru
      _
    // Predicated region
    $region74: #{vision_transformer.1} parent=1 // pred_check
      _
    $region75: #{vision_transformer.1} parent=1 // pred_check_branch
      %67 = sbr.rel (0) target = $region77
    $region76: #{vision_transformer.1} parent=1 // pred_region
      _
    $region77: #{vision_transformer.1} parent=1 // pred_fallthru
      _
    // Predicated region
    $region78: #{vision_transformer.1} parent=1 // pred_check
      _
    $region79: #{vision_transformer.1} parent=1 // pred_check_branch
      %69 = sbr.rel (0) target = $region81
    $region80: #{vision_transformer.1} parent=1 // pred_region
      _
    $region81: #{vision_transformer.1} parent=1 // pred_fallthru
      _
    // Predicated region
    $region82: #{vision_transformer.1} parent=1 // pred_check
      _
    $region83: #{vision_transformer.1} parent=1 // pred_check_branch
      %71 = sbr.rel (0) target = $region85
    $region84: #{vision_transformer.1} parent=1 // pred_region
      _
    $region85: #{vision_transformer.1} parent=1 // pred_fallthru
      _
    // Predicated region
    $region86: #{vision_transformer.1} parent=1 // pred_check
      _
    $region87: #{vision_transformer.1} parent=1 // pred_check_branch
      %73 = sbr.rel (0) target = $region89
    $region88: #{vision_transformer.1} parent=1 // pred_region
      _
    $region89: #{vision_transformer.1} parent=1 // pred_fallthru
      _
    // Predicated region
    $region90: #{vision_transformer.1} parent=1 // pred_check
      _
    $region91: #{vision_transformer.1} parent=1 // pred_check_branch
      %75 = sbr.rel (0) target = $region93
    $region92: #{vision_transformer.1} parent=1 // pred_region
      _
    $region93: #{vision_transformer.1} parent=1 // pred_fallthru
      _
    // Predicated region
    $region94: #{vision_transformer.1} parent=1 // pred_check
      _
    $region95: #{vision_transformer.1} parent=1 // pred_check_branch
      %77 = sbr.rel (0) target = $region97
    $region96: #{vision_transformer.1} parent=1 // pred_region
      _
    $region97: #{vision_transformer.1} parent=1 // pred_fallthru
      _
    %v78 = vld [vmem:[%s0] sm:$0xff]
    %v79 = vld [vmem:[%s0 + $0x8] sm:$0xff]
    %v80 = vld [vmem:[%s0 + $0x10] sm:$0xff]
    %v81 = vld [vmem:[%s0 + $0x18] sm:$0xff]
    %v82 = vld [vmem:[%s0 + $0x20] sm:$0xff]
    %v83 = vld [vmem:[%s0 + $0x28] sm:$0xff]
    %v84 = vld [vmem:[%s0 + $0x30] sm:$0xff]
    %v85 = vld [vmem:[%s0 + $0x38] sm:$0xff]
    %v86 = vld [vmem:[%s0 + $0x40] sm:$0xff]
    %v87 = vld [vmem:[%s0 + $0x48] sm:$0xff]
    %v88 = vld [vmem:[%s0 + $0x50] sm:$0xff]
    %v89 = vld [vmem:[%s0 + $0x58] sm:$0xff]
    %v90 = vld [vmem:[%s0 + $0x60] sm:$0xff]
    %v91 = vld [vmem:[%s0 + $0x68] sm:$0xff]
    %v92 = vld [vmem:[%s0 + $0x70] sm:$0xff]
    %v93 = vld [vmem:[%s0 + $0x78] sm:$0xff]
    %v94 = vld [vmem:[%s1] sm:$0xff]
    %v95 = vld [vmem:[%s1 + $0x8] sm:$0xff]
    %v96 = vld [vmem:[%s1 + $0x10] sm:$0xff]
    %v97 = vld [vmem:[%s1 + $0x18] sm:$0xff]
    %v98 = vld [vmem:[%s1 + $0x20] sm:$0xff]
    %v99 = vld [vmem:[%s1 + $0x28] sm:$0xff]
    %v100 = vld [vmem:[%s1 + $0x30] sm:$0xff]
    %v101 = vld [vmem:[%s1 + $0x38] sm:$0xff]
    %v102 = vld [vmem:[%s1 + $0x40] sm:$0xff]
    %v103 = vld [vmem:[%s1 + $0x48] sm:$0xff]
    %v104 = vld [vmem:[%s1 + $0x50] sm:$0xff]
    %v105 = vld [vmem:[%s1 + $0x58] sm:$0xff]
    %v106 = vld [vmem:[%s1 + $0x60] sm:$0xff]
    %v107 = vld [vmem:[%s1 + $0x68] sm:$0xff]
    %v108 = vld [vmem:[%s1 + $0x70] sm:$0xff]
    %v109 = vld [vmem:[%s1 + $0x78] sm:$0xff]
    %v110 = vld [vmem:[%s1 + $0x80] sm:$0xff]
    %v111 = vld [vmem:[%s1 + $0x88] sm:$0xff]
    %v112 = vld [vmem:[%s1 + $0x90] sm:$0xff]
    %v113 = vld [vmem:[%s1 + $0x98] sm:$0xff]
    %v114 = vld [vmem:[%s1 + $0xa0] sm:$0xff]
    %v115 = vld [vmem:[%s1 + $0xa8] sm:$0xff]
    %v116 = vld [vmem:[%s1 + $0xb0] sm:$0xff]
    %v117 = vld [vmem:[%s1 + $0xb8] sm:$0xff]
    %v118 = vld [vmem:[%s2] sm:$0x1]
    %v120 = vlaneseq
    %v121 = vshrl.u32 %v120, 7
    %v122 = vsub.s32 0, %v121
    %v123 = vrot.slane %v118, %v122
    %vm125 = vcmask 523264
    %v127 = vsel %vm125, %v79, 0
    %v130 = vsel %vm125, %v81, 0
    %v133 = vsel %vm125, %v83, 0
    %v136 = vsel %vm125, %v85, 0
    %v139 = vsel %vm125, %v87, 0
    %v142 = vsel %vm125, %v89, 0
    %v145 = vsel %vm125, %v91, 0
    %v148 = vsel %vm125, %v93, 0
    %150 = vmatprep.subr.mxu0 0.0
    %151 = vmatpush1.msra.mxu0 %v109
    %152 = vmatprep.subr.mxu0 0.0
    %153 = vmatpush1.msra.mxu0 %v108
    %154 = vmatprep.subr.mxu0 0.0
    %155 = vmatpush1.msra.mxu0 %v107
    %156 = vmatprep.subr.mxu0 0.0
    %157 = vmatpush1.msra.mxu0 %v106
    %158 = vmatprep.subr.mxu0 0.0
    %159 = vmatpush1.msra.mxu0 %v105
    %160 = vmatprep.subr.mxu0 0.0
    %161 = vmatpush1.msra.mxu0 %v104
    %162 = vmatprep.subr.mxu0 0.0
    %163 = vmatpush1.msra.mxu0 %v103
    %164 = vmatprep.subr.mxu0 0.0
    %165 = vmatpush1.msra.mxu0 %v102
    %166 = vmatprep.subr.mxu0 0.0
    %167 = vmatpush1.msra.mxu0 %v101
    %168 = vmatprep.subr.mxu0 0.0
    %169 = vmatpush1.msra.mxu0 %v100
    %170 = vmatprep.subr.mxu0 0.0
    %171 = vmatpush1.msra.mxu0 %v99
    %172 = vmatprep.subr.mxu0 0.0
    %173 = vmatpush1.msra.mxu0 %v98
    %174 = vmatprep.subr.mxu0 0.0
    %175 = vmatpush1.msra.mxu0 %v97
    %176 = vmatprep.subr.mxu0 0.0
    %177 = vmatpush1.msra.mxu0 %v96
    %178 = vmatprep.subr.mxu0 0.0
    %179 = vmatpush1.msra.mxu0 %v95
    %180 = vmatprep.subr.mxu0 0.0
    %181 = vmatpush1.msra.mxu0 %v94
    %182 = vmatprep.subr.mxu0 0.0
    %183 = vmatpush2.msra.mxu0 0.0
    %184 = vmatprep.subr.mxu0 0.0
    %185 = vmatpush2.msra.mxu0 0.0
    %186 = vmatprep.subr.mxu0 0.0
    %187 = vmatpush2.msra.mxu0 0.0
    %188 = vmatprep.subr.mxu0 0.0
    %189 = vmatpush2.msra.mxu0 0.0
    %190 = vmatprep.subr.mxu0 0.0
    %191 = vmatpush2.msra.mxu0 0.0
    %192 = vmatprep.subr.mxu0 0.0
    %193 = vmatpush2.msra.mxu0 0.0
    %194 = vmatprep.subr.mxu0 0.0
    %195 = vmatpush2.msra.mxu0 0.0
    %196 = vmatprep.subr.mxu0 0.0
    %197 = vmatpush2.msra.mxu0 0.0
    %198 = vmatprep.subr.mxu0 0.0
    %199 = vmatpush2.msra.mxu0 %v117
    %200 = vmatprep.subr.mxu0 0.0
    %201 = vmatpush2.msra.mxu0 %v116
    %202 = vmatprep.subr.mxu0 0.0
    %203 = vmatpush2.msra.mxu0 %v115
    %204 = vmatprep.subr.mxu0 0.0
    %205 = vmatpush2.msra.mxu0 %v114
    %206 = vmatprep.subr.mxu0 0.0
    %207 = vmatpush2.msra.mxu0 %v113
    %208 = vmatprep.subr.mxu0 0.0
    %209 = vmatpush2.msra.mxu0 %v112
    %210 = vmatprep.subr.mxu0 0.0
    %211 = vmatpush2.msra.mxu0 %v111
    %212 = vmatprep.subr.mxu0 0.0
    %213 = vmatpush2.msra.mxu0 %v110
    %214 = vmatprep.mubr.f32.mxu0 %v127
    %215 = vmatmul.mubr.f32.gmra.mxu0 %v78
    %v216 = vpop.f32.mrf.mxu0
    %v217 = vadd.f32 %v123, %v216
    %v218 = vpop.f32.mrf.mxu0
    %219 = vmatprep.mubr.f32.mxu0 %v130
    %220 = vmatmul.mubr.f32.gmra.mxu0 %v80
    %v221 = vpop.f32.mrf.mxu0
    %v222 = vadd.f32 %v123, %v221
    %v223 = vpop.f32.mrf.mxu0
    %224 = vmatprep.mubr.f32.mxu0 %v133
    %225 = vmatmul.mubr.f32.gmra.mxu0 %v82
    %v226 = vpop.f32.mrf.mxu0
    %v227 = vadd.f32 %v123, %v226
    %v228 = vpop.f32.mrf.mxu0
    %229 = vmatprep.mubr.f32.mxu0 %v136
    %230 = vmatmul.mubr.f32.gmra.mxu0 %v84
    %v231 = vpop.f32.mrf.mxu0
    %v232 = vadd.f32 %v123, %v231
    %v233 = vpop.f32.mrf.mxu0
    %234 = vmatprep.mubr.f32.mxu0 %v139
    %235 = vmatmul.mubr.f32.gmra.mxu0 %v86
    %v236 = vpop.f32.mrf.mxu0
    %v237 = vadd.f32 %v123, %v236
    %v238 = vpop.f32.mrf.mxu0
    %239 = vmatprep.mubr.f32.mxu0 %v142
    %240 = vmatmul.mubr.f32.gmra.mxu0 %v88
    %v241 = vpop.f32.mrf.mxu0
    %v242 = vadd.f32 %v123, %v241
    %v243 = vpop.f32.mrf.mxu0
    %244 = vmatprep.mubr.f32.mxu0 %v145
    %245 = vmatmul.mubr.f32.gmra.mxu0 %v90
    %v246 = vpop.f32.mrf.mxu0
    %v247 = vadd.f32 %v123, %v246
    %v248 = vpop.f32.mrf.mxu0
    %249 = vmatprep.mubr.f32.mxu0 %v148
    %250 = vmatmul.mubr.f32.gmra.mxu0 %v92
    %v251 = vpop.f32.mrf.mxu0
    %v252 = vadd.f32 %v123, %v251
    %v253 = vpop.f32.mrf.mxu0
    %254 = vdwg.mxu0
    %v255 = vld [vmem:[%s3] sm:$0xff]
    %v256 = vld [vmem:[%s3 + $0x8] sm:$0xff]
    %v257 = vld [vmem:[%s3 + $0x10] sm:$0xff]
    %v258 = vld [vmem:[%s3 + $0x18] sm:$0xff]
    %v259 = vld [vmem:[%s4] sm:$0x1]
    %v261 = vlaneseq
    %v262 = vshrl.u32 %v261, 7
    %v263 = vsub.s32 0, %v262
    %v264 = vrot.slane %v259, %v263
    %vm266 = vcmask 261120
    %v268 = vsel %vm266, %v217, 0
    %v271 = vsel %vm266, %v222, 0
    %v274 = vsel %vm266, %v227, 0
    %v277 = vsel %vm266, %v232, 0
    %v280 = vsel %vm266, %v237, 0
    %v283 = vsel %vm266, %v242, 0
    %v286 = vsel %vm266, %v247, 0
    %v289 = vsel %vm266, %v252, 0
    %291 = vmatprep.subr.mxu0 0.0
    %292 = vmatpush1.msra.mxu0 0.0
    %293 = vmatprep.subr.mxu0 0.0
    %294 = vmatpush1.msra.mxu0 0.0
    %295 = vmatprep.subr.mxu0 0.0
    %296 = vmatpush1.msra.mxu0 0.0
    %297 = vmatprep.subr.mxu0 0.0
    %298 = vmatpush1.msra.mxu0 0.0
    %299 = vmatprep.subr.mxu0 0.0
    %300 = vmatpush1.msra.mxu0 0.0
    %301 = vmatprep.subr.mxu0 0.0
    %302 = vmatpush1.msra.mxu0 0.0
    %303 = vmatprep.subr.mxu0 0.0
    %304 = vmatpush1.msra.mxu0 0.0
    %305 = vmatprep.subr.mxu0 0.0
    %306 = vmatpush1.msra.mxu0 0.0
    %307 = vmatprep.subr.mxu0 0.0
    %308 = vmatpush1.msra.mxu0 0.0
    %309 = vmatprep.subr.mxu0 0.0
    %310 = vmatpush1.msra.mxu0 0.0
    %311 = vmatprep.subr.mxu0 0.0
    %312 = vmatpush1.msra.mxu0 0.0
    %313 = vmatprep.subr.mxu0 0.0
    %314 = vmatpush1.msra.mxu0 0.0
    %315 = vmatprep.subr.mxu0 0.0
    %316 = vmatpush1.msra.mxu0 %v258
    %317 = vmatprep.subr.mxu0 0.0
    %318 = vmatpush1.msra.mxu0 %v257
    %319 = vmatprep.subr.mxu0 0.0
    %320 = vmatpush1.msra.mxu0 %v256
    %321 = vmatprep.subr.mxu0 0.0
    %322 = vmatpush1.msra.mxu0 %v255
    %323 = vmatprep.subr.mxu0 0.0
    %324 = vmatpush2.msra.mxu0 0.0
    %325 = vmatprep.subr.mxu0 0.0
    %326 = vmatpush2.msra.mxu0 0.0
    %327 = vmatprep.subr.mxu0 0.0
    %328 = vmatpush2.msra.mxu0 0.0
    %329 = vmatprep.subr.mxu0 0.0
    %330 = vmatpush2.msra.mxu0 0.0
    %331 = vmatprep.subr.mxu0 0.0
    %332 = vmatpush2.msra.mxu0 0.0
    %333 = vmatprep.subr.mxu0 0.0
    %334 = vmatpush2.msra.mxu0 0.0
    %335 = vmatprep.subr.mxu0 0.0
    %336 = vmatpush2.msra.mxu0 0.0
    %337 = vmatprep.subr.mxu0 0.0
    %338 = vmatpush2.msra.mxu0 0.0
    %339 = vmatprep.subr.mxu0 0.0
    %340 = vmatpush2.msra.mxu0 0.0
    %341 = vmatprep.subr.mxu0 0.0
    %342 = vmatpush2.msra.mxu0 0.0
    %343 = vmatprep.subr.mxu0 0.0
    %344 = vmatpush2.msra.mxu0 0.0
    %345 = vmatprep.subr.mxu0 0.0
    %346 = vmatpush2.msra.mxu0 0.0
    %347 = vmatprep.subr.mxu0 0.0
    %348 = vmatpush2.msra.mxu0 0.0
    %349 = vmatprep.subr.mxu0 0.0
    %350 = vmatpush2.msra.mxu0 0.0
    %351 = vmatprep.subr.mxu0 0.0
    %352 = vmatpush2.msra.mxu0 0.0
    %353 = vmatprep.subr.mxu0 0.0
    %354 = vmatpush2.msra.mxu0 0.0
    %355 = vmatprep.mubr.f32.mxu0 0.0
    %356 = vmatmul.mubr.f32.gmra.mxu0 %v268
    %v357 = vpop.f32.mrf.mxu0
    %v358 = vadd.f32 %v264, %v357
    %v359 = vpop.f32.mrf.mxu0
    %360 = vmatprep.mubr.f32.mxu0 0.0
    %361 = vmatmul.mubr.f32.gmra.mxu0 %v271
    %v362 = vpop.f32.mrf.mxu0
    %v363 = vadd.f32 %v264, %v362
    %v364 = vpop.f32.mrf.mxu0
    %365 = vmatprep.mubr.f32.mxu0 0.0
    %366 = vmatmul.mubr.f32.gmra.mxu0 %v274
    %v367 = vpop.f32.mrf.mxu0
    %v368 = vadd.f32 %v264, %v367
    %v369 = vpop.f32.mrf.mxu0
    %370 = vmatprep.mubr.f32.mxu0 0.0
    %371 = vmatmul.mubr.f32.gmra.mxu0 %v277
    %v372 = vpop.f32.mrf.mxu0
    %v373 = vadd.f32 %v264, %v372
    %v374 = vpop.f32.mrf.mxu0
    %375 = vmatprep.mubr.f32.mxu0 0.0
    %376 = vmatmul.mubr.f32.gmra.mxu0 %v280
    %v377 = vpop.f32.mrf.mxu0
    %v378 = vadd.f32 %v264, %v377
    %v379 = vpop.f32.mrf.mxu0
    %380 = vmatprep.mubr.f32.mxu0 0.0
    %381 = vmatmul.mubr.f32.gmra.mxu0 %v283
    %v382 = vpop.f32.mrf.mxu0
    %v383 = vadd.f32 %v264, %v382
    %v384 = vpop.f32.mrf.mxu0
    %385 = vmatprep.mubr.f32.mxu0 0.0
    %386 = vmatmul.mubr.f32.gmra.mxu0 %v286
    %v387 = vpop.f32.mrf.mxu0
    %v388 = vadd.f32 %v264, %v387
    %v389 = vpop.f32.mrf.mxu0
    %390 = vmatprep.mubr.f32.mxu0 0.0
    %391 = vmatmul.mubr.f32.gmra.mxu0 %v289
    %v392 = vpop.f32.mrf.mxu0
    %v393 = vadd.f32 %v264, %v392
    %v394 = vpop.f32.mrf.mxu0
    %395 = vdwg.mxu0
    %v396 = vld [vmem:[%s21] sm:$0xff]
    %v397 = vld [vmem:[%s21 + $0x8] sm:$0xff]
    %v398 = vld [vmem:[%s21 + $0x10] sm:$0xff]
    %v399 = vld [vmem:[%s21 + $0x18] sm:$0xff]
    %v400 = vld [vmem:[%s5] sm:$0x1]
    %v401 = vld [vmem:[%s6] sm:$0x1]
    %v402 = vsel %vm266, %v358, 0.0
    %403 = vadd.xlane.f32.xlu0 %v402
    %v404 = vpop.xlane.xlu0 %403
    %v405 = vsel %vm266, %v363, 0.0
    %406 = vadd.xlane.f32.xlu0 %v405
    %v407 = vpop.xlane.xlu0 %406
    %v408 = vsel %vm266, %v368, 0.0
    %409 = vadd.xlane.f32.xlu0 %v408
    %v410 = vpop.xlane.xlu0 %409
    %v411 = vsel %vm266, %v373, 0.0
    %412 = vadd.xlane.f32.xlu0 %v411
    %v413 = vpop.xlane.xlu0 %412
    %v414 = vsel %vm266, %v378, 0.0
    %415 = vadd.xlane.f32.xlu0 %v414
    %v416 = vpop.xlane.xlu0 %415
    %v417 = vsel %vm266, %v383, 0.0
    %418 = vadd.xlane.f32.xlu0 %v417
    %v419 = vpop.xlane.xlu0 %418
    %v420 = vsel %vm266, %v388, 0.0
    %421 = vadd.xlane.f32.xlu0 %v420
    %v422 = vpop.xlane.xlu0 %421
    %v423 = vsel %vm266, %v393, 0.0
    %424 = vadd.xlane.f32.xlu0 %v423
    %v425 = vpop.xlane.xlu0 %424
    %v426 = vrcp.pop 32.0
    %v427 = vmul.f32 %v404, %v426
    %v428 = vmul.f32 %v407, %v426
    %v429 = vmul.f32 %v410, %v426
    %v430 = vmul.f32 %v413, %v426
    %v431 = vmul.f32 %v416, %v426
    %v432 = vmul.f32 %v419, %v426
    %v433 = vmul.f32 %v422, %v426
    %v434 = vmul.f32 %v425, %v426
    %v435 = vsub.f32 %v358, %v427
    %v436 = vsub.f32 %v363, %v428
    %v437 = vsub.f32 %v368, %v429
    %v438 = vsub.f32 %v373, %v430
    %v439 = vsub.f32 %v378, %v431
    %v440 = vsub.f32 %v383, %v432
    %v441 = vsub.f32 %v388, %v433
    %v442 = vsub.f32 %v393, %v434
    %v443 = vmul.f32 %v435, %v435
    %v444 = vmul.f32 %v436, %v436
    %v445 = vmul.f32 %v437, %v437
    %v446 = vmul.f32 %v438, %v438
    %v447 = vmul.f32 %v439, %v439
    %v448 = vmul.f32 %v440, %v440
    %v449 = vmul.f32 %v441, %v441
    %v450 = vmul.f32 %v442, %v442
    %v451 = vsel %vm266, %v443, 0.0
    %452 = vadd.xlane.f32.xlu0 %v451
    %v453 = vpop.xlane.xlu0 %452
    %v454 = vsel %vm266, %v444, 0.0
    %455 = vadd.xlane.f32.xlu0 %v454
    %v456 = vpop.xlane.xlu0 %455
    %v457 = vsel %vm266, %v445, 0.0
    %458 = vadd.xlane.f32.xlu0 %v457
    %v459 = vpop.xlane.xlu0 %458
    %v460 = vsel %vm266, %v446, 0.0
    %461 = vadd.xlane.f32.xlu0 %v460
    %v462 = vpop.xlane.xlu0 %461
    %v463 = vsel %vm266, %v447, 0.0
    %464 = vadd.xlane.f32.xlu0 %v463
    %v465 = vpop.xlane.xlu0 %464
    %v466 = vsel %vm266, %v448, 0.0
    %467 = vadd.xlane.f32.xlu0 %v466
    %v468 = vpop.xlane.xlu0 %467
    %v469 = vsel %vm266, %v449, 0.0
    %470 = vadd.xlane.f32.xlu0 %v469
    %v471 = vpop.xlane.xlu0 %470
    %v472 = vsel %vm266, %v450, 0.0
    %473 = vadd.xlane.f32.xlu0 %v472
    %v474 = vpop.xlane.xlu0 %473
    %v475 = vmul.f32 %v453, %v426
    %v476 = vmul.f32 %v456, %v426
    %v477 = vmul.f32 %v459, %v426
    %v478 = vmul.f32 %v462, %v426
    %v479 = vmul.f32 %v465, %v426
    %v480 = vmul.f32 %v468, %v426
    %v481 = vmul.f32 %v471, %v426
    %v482 = vmul.f32 %v474, %v426
    %v483 = vadd.f32 %v475, 1e-05
    %v484 = vadd.f32 %v476, 1e-05
    %v485 = vadd.f32 %v477, 1e-05
    %v486 = vadd.f32 %v478, 1e-05
    %v487 = vadd.f32 %v479, 1e-05
    %v488 = vadd.f32 %v480, 1e-05
    %v489 = vadd.f32 %v481, 1e-05
    %v490 = vadd.f32 %v482, 1e-05
    %v491 = vrsqrt.pop %v483
    %v492 = vrsqrt.pop %v484
    %v493 = vrsqrt.pop %v485
    %v494 = vrsqrt.pop %v486
    %v495 = vrsqrt.pop %v487
    %v496 = vrsqrt.pop %v488
    %v497 = vrsqrt.pop %v489
    %v498 = vrsqrt.pop %v490
    %v499 = vmul.f32 %v435, %v491
    %v500 = vmul.f32 %v436, %v492
    %v501 = vmul.f32 %v437, %v493
    %v502 = vmul.f32 %v438, %v494
    %v503 = vmul.f32 %v439, %v495
    %v504 = vmul.f32 %v440, %v496
    %v505 = vmul.f32 %v441, %v497
    %v506 = vmul.f32 %v442, %v498
    %v508 = vlaneseq
    %v509 = vshrl.u32 %v508, 7
    %v510 = vsub.s32 0, %v509
    %v511 = vrot.slane %v400, %v510
    %v513 = vmul.f32 %v499, %v511
    %v514 = vmul.f32 %v500, %v511
    %v515 = vmul.f32 %v501, %v511
    %v516 = vmul.f32 %v502, %v511
    %v517 = vmul.f32 %v503, %v511
    %v518 = vmul.f32 %v504, %v511
    %v519 = vmul.f32 %v505, %v511
    %v520 = vmul.f32 %v506, %v511
    %v522 = vlaneseq
    %v523 = vshrl.u32 %v522, 7
    %v524 = vsub.s32 0, %v523
    %v525 = vrot.slane %v401, %v524
    %v527 = vadd.f32 %v513, %v525
    %v528 = vadd.f32 %v514, %v525
    %v529 = vadd.f32 %v515, %v525
    %v530 = vadd.f32 %v516, %v525
    %v531 = vadd.f32 %v517, %v525
    %v532 = vadd.f32 %v518, %v525
    %v533 = vadd.f32 %v519, %v525
    %v534 = vadd.f32 %v520, %v525
    %v535 = vld [vmem:[%s7] sm:$0xff]
    %v536 = vld [vmem:[%s7 + $0x8] sm:$0xff]
    %v537 = vld [vmem:[%s7 + $0x10] sm:$0xff]
    %v538 = vld [vmem:[%s7 + $0x18] sm:$0xff]
    %v539 = vld [vmem:[%s8] sm:$0x1]
    %v541 = vlaneseq
    %v542 = vshrl.u32 %v541, 7
    %v543 = vsub.s32 0, %v542
    %v544 = vrot.slane %v539, %v543
    %v547 = vsel %vm266, %v527, 0
    %v550 = vsel %vm266, %v528, 0
    %v553 = vsel %vm266, %v529, 0
    %v556 = vsel %vm266, %v530, 0
    %v559 = vsel %vm266, %v531, 0
    %v562 = vsel %vm266, %v532, 0
    %v565 = vsel %vm266, %v533, 0
    %v568 = vsel %vm266, %v534, 0
    %570 = vmatprep.subr.mxu0 0.0
    %571 = vmatpush1.msra.mxu0 0.0
    %572 = vmatprep.subr.mxu0 0.0
    %573 = vmatpush1.msra.mxu0 0.0
    %574 = vmatprep.subr.mxu0 0.0
    %575 = vmatpush1.msra.mxu0 0.0
    %576 = vmatprep.subr.mxu0 0.0
    %577 = vmatpush1.msra.mxu0 0.0
    %578 = vmatprep.subr.mxu0 0.0
    %579 = vmatpush1.msra.mxu0 0.0
    %580 = vmatprep.subr.mxu0 0.0
    %581 = vmatpush1.msra.mxu0 0.0
    %582 = vmatprep.subr.mxu0 0.0
    %583 = vmatpush1.msra.mxu0 0.0
    %584 = vmatprep.subr.mxu0 0.0
    %585 = vmatpush1.msra.mxu0 0.0
    %586 = vmatprep.subr.mxu0 0.0
    %587 = vmatpush1.msra.mxu0 0.0
    %588 = vmatprep.subr.mxu0 0.0
    %589 = vmatpush1.msra.mxu0 0.0
    %590 = vmatprep.subr.mxu0 0.0
    %591 = vmatpush1.msra.mxu0 0.0
    %592 = vmatprep.subr.mxu0 0.0
    %593 = vmatpush1.msra.mxu0 0.0
    %594 = vmatprep.subr.mxu0 0.0
    %595 = vmatpush1.msra.mxu0 %v538
    %596 = vmatprep.subr.mxu0 0.0
    %597 = vmatpush1.msra.mxu0 %v537
    %598 = vmatprep.subr.mxu0 0.0
    %599 = vmatpush1.msra.mxu0 %v536
    %600 = vmatprep.subr.mxu0 0.0
    %601 = vmatpush1.msra.mxu0 %v535
    %602 = vmatprep.subr.mxu0 0.0
    %603 = vmatpush2.msra.mxu0 0.0
    %604 = vmatprep.subr.mxu0 0.0
    %605 = vmatpush2.msra.mxu0 0.0
    %606 = vmatprep.subr.mxu0 0.0
    %607 = vmatpush2.msra.mxu0 0.0
    %608 = vmatprep.subr.mxu0 0.0
    %609 = vmatpush2.msra.mxu0 0.0
    %610 = vmatprep.subr.mxu0 0.0
    %611 = vmatpush2.msra.mxu0 0.0
    %612 = vmatprep.subr.mxu0 0.0
    %613 = vmatpush2.msra.mxu0 0.0
    %614 = vmatprep.subr.mxu0 0.0
    %615 = vmatpush2.msra.mxu0 0.0
    %616 = vmatprep.subr.mxu0 0.0
    %617 = vmatpush2.msra.mxu0 0.0
    %618 = vmatprep.subr.mxu0 0.0
    %619 = vmatpush2.msra.mxu0 0.0
    %620 = vmatprep.subr.mxu0 0.0
    %621 = vmatpush2.msra.mxu0 0.0
    %622 = vmatprep.subr.mxu0 0.0
    %623 = vmatpush2.msra.mxu0 0.0
    %624 = vmatprep.subr.mxu0 0.0
    %625 = vmatpush2.msra.mxu0 0.0
    %626 = vmatprep.subr.mxu0 0.0
    %627 = vmatpush2.msra.mxu0 0.0
    %628 = vmatprep.subr.mxu0 0.0
    %629 = vmatpush2.msra.mxu0 0.0
    %630 = vmatprep.subr.mxu0 0.0
    %631 = vmatpush2.msra.mxu0 0.0
    %632 = vmatprep.subr.mxu0 0.0
    %633 = vmatpush2.msra.mxu0 0.0
    %634 = vmatprep.mubr.f32.mxu0 0.0
    %635 = vmatmul.mubr.f32.gmra.mxu0 %v547
    %v636 = vpop.f32.mrf.mxu0
    %v637 = vadd.f32 %v544, %v636
    %v638 = vpop.f32.mrf.mxu0
    %639 = vmatprep.mubr.f32.mxu0 0.0
    %640 = vmatmul.mubr.f32.gmra.mxu0 %v550
    %v641 = vpop.f32.mrf.mxu0
    %v642 = vadd.f32 %v544, %v641
    %v643 = vpop.f32.mrf.mxu0
    %644 = vmatprep.mubr.f32.mxu0 0.0
    %645 = vmatmul.mubr.f32.gmra.mxu0 %v553
    %v646 = vpop.f32.mrf.mxu0
    %v647 = vadd.f32 %v544, %v646
    %v648 = vpop.f32.mrf.mxu0
    %649 = vmatprep.mubr.f32.mxu0 0.0
    %650 = vmatmul.mubr.f32.gmra.mxu0 %v556
    %v651 = vpop.f32.mrf.mxu0
    %v652 = vadd.f32 %v544, %v651
    %v653 = vpop.f32.mrf.mxu0
    %654 = vmatprep.mubr.f32.mxu0 0.0
    %655 = vmatmul.mubr.f32.gmra.mxu0 %v559
    %v656 = vpop.f32.mrf.mxu0
    %v657 = vadd.f32 %v544, %v656
    %v658 = vpop.f32.mrf.mxu0
    %659 = vmatprep.mubr.f32.mxu0 0.0
    %660 = vmatmul.mubr.f32.gmra.mxu0 %v562
    %v661 = vpop.f32.mrf.mxu0
    %v662 = vadd.f32 %v544, %v661
    %v663 = vpop.f32.mrf.mxu0
    %664 = vmatprep.mubr.f32.mxu0 0.0
    %665 = vmatmul.mubr.f32.gmra.mxu0 %v565
    %v666 = vpop.f32.mrf.mxu0
    %v667 = vadd.f32 %v544, %v666
    %v668 = vpop.f32.mrf.mxu0
    %669 = vmatprep.mubr.f32.mxu0 0.0
    %670 = vmatmul.mubr.f32.gmra.mxu0 %v568
    %v671 = vpop.f32.mrf.mxu0
    %v672 = vadd.f32 %v544, %v671
    %v673 = vpop.f32.mrf.mxu0
    %674 = vdwg.mxu0
    %v675 = vld [vmem:[%s9] sm:$0xff]
    %v676 = vld [vmem:[%s9 + $0x8] sm:$0xff]
    %v677 = vld [vmem:[%s9 + $0x10] sm:$0xff]
    %v678 = vld [vmem:[%s9 + $0x18] sm:$0xff]
    %v679 = vld [vmem:[%s10] sm:$0x1]
    %v681 = vlaneseq
    %v682 = vshrl.u32 %v681, 7
    %v683 = vsub.s32 0, %v682
    %v684 = vrot.slane %v679, %v683
    %686 = vmatprep.subr.mxu0 0.0
    %687 = vmatpush1.msra.mxu0 0.0
    %688 = vmatprep.subr.mxu0 0.0
    %689 = vmatpush1.msra.mxu0 0.0
    %690 = vmatprep.subr.mxu0 0.0
    %691 = vmatpush1.msra.mxu0 0.0
    %692 = vmatprep.subr.mxu0 0.0
    %693 = vmatpush1.msra.mxu0 0.0
    %694 = vmatprep.subr.mxu0 0.0
    %695 = vmatpush1.msra.mxu0 0.0
    %696 = vmatprep.subr.mxu0 0.0
    %697 = vmatpush1.msra.mxu0 0.0
    %698 = vmatprep.subr.mxu0 0.0
    %699 = vmatpush1.msra.mxu0 0.0
    %700 = vmatprep.subr.mxu0 0.0
    %701 = vmatpush1.msra.mxu0 0.0
    %702 = vmatprep.subr.mxu0 0.0
    %703 = vmatpush1.msra.mxu0 0.0
    %704 = vmatprep.subr.mxu0 0.0
    %705 = vmatpush1.msra.mxu0 0.0
    %706 = vmatprep.subr.mxu0 0.0
    %707 = vmatpush1.msra.mxu0 0.0
    %708 = vmatprep.subr.mxu0 0.0
    %709 = vmatpush1.msra.mxu0 0.0
    %710 = vmatprep.subr.mxu0 0.0
    %711 = vmatpush1.msra.mxu0 %v678
    %712 = vmatprep.subr.mxu0 0.0
    %713 = vmatpush1.msra.mxu0 %v677
    %714 = vmatprep.subr.mxu0 0.0
    %715 = vmatpush1.msra.mxu0 %v676
    %716 = vmatprep.subr.mxu0 0.0
    %717 = vmatpush1.msra.mxu0 %v675
    %718 = vmatprep.subr.mxu0 0.0
    %719 = vmatpush2.msra.mxu0 0.0
    %720 = vmatprep.subr.mxu0 0.0
    %721 = vmatpush2.msra.mxu0 0.0
    %722 = vmatprep.subr.mxu0 0.0
    %723 = vmatpush2.msra.mxu0 0.0
    %724 = vmatprep.subr.mxu0 0.0
    %725 = vmatpush2.msra.mxu0 0.0
    %726 = vmatprep.subr.mxu0 0.0
    %727 = vmatpush2.msra.mxu0 0.0
    %728 = vmatprep.subr.mxu0 0.0
    %729 = vmatpush2.msra.mxu0 0.0
    %730 = vmatprep.subr.mxu0 0.0
    %731 = vmatpush2.msra.mxu0 0.0
    %732 = vmatprep.subr.mxu0 0.0
    %733 = vmatpush2.msra.mxu0 0.0
    %734 = vmatprep.subr.mxu0 0.0
    %735 = vmatpush2.msra.mxu0 0.0
    %736 = vmatprep.subr.mxu0 0.0
    %737 = vmatpush2.msra.mxu0 0.0
    %738 = vmatprep.subr.mxu0 0.0
    %739 = vmatpush2.msra.mxu0 0.0
    %740 = vmatprep.subr.mxu0 0.0
    %741 = vmatpush2.msra.mxu0 0.0
    %742 = vmatprep.subr.mxu0 0.0
    %743 = vmatpush2.msra.mxu0 0.0
    %744 = vmatprep.subr.mxu0 0.0
    %745 = vmatpush2.msra.mxu0 0.0
    %746 = vmatprep.subr.mxu0 0.0
    %747 = vmatpush2.msra.mxu0 0.0
    %748 = vmatprep.subr.mxu0 0.0
    %749 = vmatpush2.msra.mxu0 0.0
    %750 = vmatprep.mubr.f32.mxu0 0.0
    %751 = vmatmul.mubr.f32.gmra.mxu0 %v547
    %v752 = vpop.f32.mrf.mxu0
    %v753 = vadd.f32 %v684, %v752
    %v754 = vpop.f32.mrf.mxu0
    %755 = vmatprep.mubr.f32.mxu0 0.0
    %756 = vmatmul.mubr.f32.gmra.mxu0 %v550
    %v757 = vpop.f32.mrf.mxu0
    %v758 = vadd.f32 %v684, %v757
    %v759 = vpop.f32.mrf.mxu0
    %760 = vmatprep.mubr.f32.mxu0 0.0
    %761 = vmatmul.mubr.f32.gmra.mxu0 %v553
    %v762 = vpop.f32.mrf.mxu0
    %v763 = vadd.f32 %v684, %v762
    %v764 = vpop.f32.mrf.mxu0
    %765 = vmatprep.mubr.f32.mxu0 0.0
    %766 = vmatmul.mubr.f32.gmra.mxu0 %v556
    %v767 = vpop.f32.mrf.mxu0
    %v768 = vadd.f32 %v684, %v767
    %v769 = vpop.f32.mrf.mxu0
    %770 = vmatprep.mubr.f32.mxu0 0.0
    %771 = vmatmul.mubr.f32.gmra.mxu0 %v559
    %v772 = vpop.f32.mrf.mxu0
    %v773 = vadd.f32 %v684, %v772
    %v774 = vpop.f32.mrf.mxu0
    %775 = vmatprep.mubr.f32.mxu0 0.0
    %776 = vmatmul.mubr.f32.gmra.mxu0 %v562
    %v777 = vpop.f32.mrf.mxu0
    %v778 = vadd.f32 %v684, %v777
    %v779 = vpop.f32.mrf.mxu0
    %780 = vmatprep.mubr.f32.mxu0 0.0
    %781 = vmatmul.mubr.f32.gmra.mxu0 %v565
    %v782 = vpop.f32.mrf.mxu0
    %v783 = vadd.f32 %v684, %v782
    %v784 = vpop.f32.mrf.mxu0
    %785 = vmatprep.mubr.f32.mxu0 0.0
    %786 = vmatmul.mubr.f32.gmra.mxu0 %v568
    %v787 = vpop.f32.mrf.mxu0
    %v788 = vadd.f32 %v684, %v787
    %v789 = vpop.f32.mrf.mxu0
    %790 = vdwg.mxu0
    %v791 = vld [vmem:[%s11] sm:$0xff]
    %v792 = vld [vmem:[%s11 + $0x8] sm:$0xff]
    %v793 = vld [vmem:[%s11 + $0x10] sm:$0xff]
    %v794 = vld [vmem:[%s11 + $0x18] sm:$0xff]
    %v795 = vld [vmem:[%s12] sm:$0x1]
    %v797 = vlaneseq
    %v798 = vshrl.u32 %v797, 7
    %v799 = vsub.s32 0, %v798
    %v800 = vrot.slane %v795, %v799
    %802 = vmatprep.subr.mxu0 0.0
    %803 = vmatpush1.msra.mxu0 0.0
    %804 = vmatprep.subr.mxu0 0.0
    %805 = vmatpush1.msra.mxu0 0.0
    %806 = vmatprep.subr.mxu0 0.0
    %807 = vmatpush1.msra.mxu0 0.0
    %808 = vmatprep.subr.mxu0 0.0
    %809 = vmatpush1.msra.mxu0 0.0
    %810 = vmatprep.subr.mxu0 0.0
    %811 = vmatpush1.msra.mxu0 0.0
    %812 = vmatprep.subr.mxu0 0.0
    %813 = vmatpush1.msra.mxu0 0.0
    %814 = vmatprep.subr.mxu0 0.0
    %815 = vmatpush1.msra.mxu0 0.0
    %816 = vmatprep.subr.mxu0 0.0
    %817 = vmatpush1.msra.mxu0 0.0
    %818 = vmatprep.subr.mxu0 0.0
    %819 = vmatpush1.msra.mxu0 0.0
    %820 = vmatprep.subr.mxu0 0.0
    %821 = vmatpush1.msra.mxu0 0.0
    %822 = vmatprep.subr.mxu0 0.0
    %823 = vmatpush1.msra.mxu0 0.0
    %824 = vmatprep.subr.mxu0 0.0
    %825 = vmatpush1.msra.mxu0 0.0
    %826 = vmatprep.subr.mxu0 0.0
    %827 = vmatpush1.msra.mxu0 %v794
    %828 = vmatprep.subr.mxu0 0.0
    %829 = vmatpush1.msra.mxu0 %v793
    %830 = vmatprep.subr.mxu0 0.0
    %831 = vmatpush1.msra.mxu0 %v792
    %832 = vmatprep.subr.mxu0 0.0
    %833 = vmatpush1.msra.mxu0 %v791
    %834 = vmatprep.subr.mxu0 0.0
    %835 = vmatpush2.msra.mxu0 0.0
    %836 = vmatprep.subr.mxu0 0.0
    %837 = vmatpush2.msra.mxu0 0.0
    %838 = vmatprep.subr.mxu0 0.0
    %839 = vmatpush2.msra.mxu0 0.0
    %840 = vmatprep.subr.mxu0 0.0
    %841 = vmatpush2.msra.mxu0 0.0
    %842 = vmatprep.subr.mxu0 0.0
    %843 = vmatpush2.msra.mxu0 0.0
    %844 = vmatprep.subr.mxu0 0.0
    %845 = vmatpush2.msra.mxu0 0.0
    %846 = vmatprep.subr.mxu0 0.0
    %847 = vmatpush2.msra.mxu0 0.0
    %848 = vmatprep.subr.mxu0 0.0
    %849 = vmatpush2.msra.mxu0 0.0
    %850 = vmatprep.subr.mxu0 0.0
    %851 = vmatpush2.msra.mxu0 0.0
    %852 = vmatprep.subr.mxu0 0.0
    %853 = vmatpush2.msra.mxu0 0.0
    %854 = vmatprep.subr.mxu0 0.0
    %855 = vmatpush2.msra.mxu0 0.0
    %856 = vmatprep.subr.mxu0 0.0
    %857 = vmatpush2.msra.mxu0 0.0
    %858 = vmatprep.subr.mxu0 0.0
    %859 = vmatpush2.msra.mxu0 0.0
    %860 = vmatprep.subr.mxu0 0.0
    %861 = vmatpush2.msra.mxu0 0.0
    %862 = vmatprep.subr.mxu0 0.0
    %863 = vmatpush2.msra.mxu0 0.0
    %864 = vmatprep.subr.mxu0 0.0
    %865 = vmatpush2.msra.mxu0 0.0
    %866 = vmatprep.mubr.f32.mxu0 0.0
    %867 = vmatmul.mubr.f32.gmra.mxu0 %v547
    %v868 = vpop.f32.mrf.mxu0
    %v869 = vadd.f32 %v800, %v868
    %v870 = vpop.f32.mrf.mxu0
    %871 = vmatprep.mubr.f32.mxu0 0.0
    %872 = vmatmul.mubr.f32.gmra.mxu0 %v550
    %v873 = vpop.f32.mrf.mxu0
    %v874 = vadd.f32 %v800, %v873
    %v875 = vpop.f32.mrf.mxu0
    %876 = vmatprep.mubr.f32.mxu0 0.0
    %877 = vmatmul.mubr.f32.gmra.mxu0 %v553
    %v878 = vpop.f32.mrf.mxu0
    %v879 = vadd.f32 %v800, %v878
    %v880 = vpop.f32.mrf.mxu0
    %881 = vmatprep.mubr.f32.mxu0 0.0
    %882 = vmatmul.mubr.f32.gmra.mxu0 %v556
    %v883 = vpop.f32.mrf.mxu0
    %v884 = vadd.f32 %v800, %v883
    %v885 = vpop.f32.mrf.mxu0
    %886 = vmatprep.mubr.f32.mxu0 0.0
    %887 = vmatmul.mubr.f32.gmra.mxu0 %v559
    %v888 = vpop.f32.mrf.mxu0
    %v889 = vadd.f32 %v800, %v888
    %v890 = vpop.f32.mrf.mxu0
    %891 = vmatprep.mubr.f32.mxu0 0.0
    %892 = vmatmul.mubr.f32.gmra.mxu0 %v562
    %v893 = vpop.f32.mrf.mxu0
    %v894 = vadd.f32 %v800, %v893
    %v895 = vpop.f32.mrf.mxu0
    %896 = vmatprep.mubr.f32.mxu0 0.0
    %897 = vmatmul.mubr.f32.gmra.mxu0 %v565
    %v898 = vpop.f32.mrf.mxu0
    %v899 = vadd.f32 %v800, %v898
    %v900 = vpop.f32.mrf.mxu0
    %901 = vmatprep.mubr.f32.mxu0 0.0
    %902 = vmatmul.mubr.f32.gmra.mxu0 %v568
    %v903 = vpop.f32.mrf.mxu0
    %v904 = vadd.f32 %v800, %v903
    %v905 = vpop.f32.mrf.mxu0
    %906 = vdwg.mxu0
    %v907 = vmul.f32 %v637, 0.35355338
    %v908 = vmul.f32 %v642, 0.35355338
    %v909 = vmul.f32 %v647, 0.35355338
    %v910 = vmul.f32 %v652, 0.35355338
    %v911 = vmul.f32 %v657, 0.35355338
    %v912 = vmul.f32 %v662, 0.35355338
    %v913 = vmul.f32 %v667, 0.35355338
    %v914 = vmul.f32 %v672, 0.35355338
    %v923 = vcombine.high %v907, %v907
    %v925 = vunpack.c.l.s4 1966171168
    %v926 = vunpack.c.0.s8 %v925
    %v927 = vlaneseq
    %v928 = vshrl.u32 %v927, 7
    %v929 = vsub.s32 %v926, %v928
    %v930 = vrot.slane %v907, %v929
    %v932 = vunpack.c.l.s4 1966171168
    %v933 = vunpack.c.0.s8 %v932
    %v934 = vlaneseq
    %v935 = vshrl.u32 %v934, 7
    %v936 = vsub.s32 %v933, %v935
    %v937 = vrot.slane %v923, %v936
    %v938 = vcombine.high %v930, %v930
    %v939 = vcombine.high %v937, %v937
    %v941 = vunpack.c.l.s4 1966171168
    %v942 = vunpack.c.0.s8 %v941
    %v943 = vlaneseq
    %v944 = vshrl.u32 %v943, 7
    %v945 = vsub.s32 %v942, %v944
    %v946 = vrot.slane %v930, %v945
    %v948 = vunpack.c.l.s4 1966171168
    %v949 = vunpack.c.0.s8 %v948
    %v950 = vlaneseq
    %v951 = vshrl.u32 %v950, 7
    %v952 = vsub.s32 %v949, %v951
    %v953 = vrot.slane %v937, %v952
    %v955 = vunpack.c.l.s4 1966171168
    %v956 = vunpack.c.0.s8 %v955
    %v957 = vlaneseq
    %v958 = vshrl.u32 %v957, 7
    %v959 = vsub.s32 %v956, %v958
    %v960 = vrot.slane %v938, %v959
    %v962 = vunpack.c.l.s4 1966171168
    %v963 = vunpack.c.0.s8 %v962
    %v964 = vlaneseq
    %v965 = vshrl.u32 %v964, 7
    %v966 = vsub.s32 %v963, %v965
    %v967 = vrot.slane %v939, %v966
    %v968 = vcombine.high %v946, %v946
    %v969 = vcombine.high %v953, %v953
    %v970 = vcombine.high %v960, %v960
    %v971 = vcombine.high %v967, %v967
    %v972 = vcombine.high %v908, %v908
    %v974 = vunpack.c.l.s4 1966171168
    %v975 = vunpack.c.0.s8 %v974
    %v976 = vlaneseq
    %v977 = vshrl.u32 %v976, 7
    %v978 = vsub.s32 %v975, %v977
    %v979 = vrot.slane %v908, %v978
    %v981 = vunpack.c.l.s4 1966171168
    %v982 = vunpack.c.0.s8 %v981
    %v983 = vlaneseq
    %v984 = vshrl.u32 %v983, 7
    %v985 = vsub.s32 %v982, %v984
    %v986 = vrot.slane %v972, %v985
    %v987 = vcombine.high %v979, %v979
    %v988 = vcombine.high %v986, %v986
    %v990 = vunpack.c.l.s4 1966171168
    %v991 = vunpack.c.0.s8 %v990
    %v992 = vlaneseq
    %v993 = vshrl.u32 %v992, 7
    %v994 = vsub.s32 %v991, %v993
    %v995 = vrot.slane %v979, %v994
    %v997 = vunpack.c.l.s4 1966171168
    %v998 = vunpack.c.0.s8 %v997
    %v999 = vlaneseq
    %v1000 = vshrl.u32 %v999, 7
    %v1001 = vsub.s32 %v998, %v1000
    %v1002 = vrot.slane %v986, %v1001
    %v1004 = vunpack.c.l.s4 1966171168
    %v1005 = vunpack.c.0.s8 %v1004
    %v1006 = vlaneseq
    %v1007 = vshrl.u32 %v1006, 7
    %v1008 = vsub.s32 %v1005, %v1007
    %v1009 = vrot.slane %v987, %v1008
    %v1011 = vunpack.c.l.s4 1966171168
    %v1012 = vunpack.c.0.s8 %v1011
    %v1013 = vlaneseq
    %v1014 = vshrl.u32 %v1013, 7
    %v1015 = vsub.s32 %v1012, %v1014
    %v1016 = vrot.slane %v988, %v1015
    %v1017 = vcombine.high %v995, %v995
    %v1018 = vcombine.high %v1002, %v1002
    %v1019 = vcombine.high %v1009, %v1009
    %v1020 = vcombine.high %v1016, %v1016
    %v1021 = vcombine.high %v909, %v909
    %v1023 = vunpack.c.l.s4 1966171168
    %v1024 = vunpack.c.0.s8 %v1023
    %v1025 = vlaneseq
    %v1026 = vshrl.u32 %v1025, 7
    %v1027 = vsub.s32 %v1024, %v1026
    %v1028 = vrot.slane %v909, %v1027
    %v1030 = vunpack.c.l.s4 1966171168
    %v1031 = vunpack.c.0.s8 %v1030
    %v1032 = vlaneseq
    %v1033 = vshrl.u32 %v1032, 7
    %v1034 = vsub.s32 %v1031, %v1033
    %v1035 = vrot.slane %v1021, %v1034
    %v1036 = vcombine.high %v1028, %v1028
    %v1037 = vcombine.high %v1035, %v1035
    %v1039 = vunpack.c.l.s4 1966171168
    %v1040 = vunpack.c.0.s8 %v1039
    %v1041 = vlaneseq
    %v1042 = vshrl.u32 %v1041, 7
    %v1043 = vsub.s32 %v1040, %v1042
    %v1044 = vrot.slane %v1028, %v1043
    %v1046 = vunpack.c.l.s4 1966171168
    %v1047 = vunpack.c.0.s8 %v1046
    %v1048 = vlaneseq
    %v1049 = vshrl.u32 %v1048, 7
    %v1050 = vsub.s32 %v1047, %v1049
    %v1051 = vrot.slane %v1035, %v1050
    %v1053 = vunpack.c.l.s4 1966171168
    %v1054 = vunpack.c.0.s8 %v1053
    %v1055 = vlaneseq
    %v1056 = vshrl.u32 %v1055, 7
    %v1057 = vsub.s32 %v1054, %v1056
    %v1058 = vrot.slane %v1036, %v1057
    %v1060 = vunpack.c.l.s4 1966171168
    %v1061 = vunpack.c.0.s8 %v1060
    %v1062 = vlaneseq
    %v1063 = vshrl.u32 %v1062, 7
    %v1064 = vsub.s32 %v1061, %v1063
    %v1065 = vrot.slane %v1037, %v1064
    %v1066 = vcombine.high %v1044, %v1044
    %v1067 = vcombine.high %v1051, %v1051
    %v1068 = vcombine.high %v1058, %v1058
    %v1069 = vcombine.high %v1065, %v1065
    %v1070 = vcombine.high %v910, %v910
    %v1072 = vunpack.c.l.s4 1966171168
    %v1073 = vunpack.c.0.s8 %v1072
    %v1074 = vlaneseq
    %v1075 = vshrl.u32 %v1074, 7
    %v1076 = vsub.s32 %v1073, %v1075
    %v1077 = vrot.slane %v910, %v1076
    %v1079 = vunpack.c.l.s4 1966171168
    %v1080 = vunpack.c.0.s8 %v1079
    %v1081 = vlaneseq
    %v1082 = vshrl.u32 %v1081, 7
    %v1083 = vsub.s32 %v1080, %v1082
    %v1084 = vrot.slane %v1070, %v1083
    %v1085 = vcombine.high %v1077, %v1077
    %v1086 = vcombine.high %v1084, %v1084
    %v1088 = vunpack.c.l.s4 1966171168
    %v1089 = vunpack.c.0.s8 %v1088
    %v1090 = vlaneseq
    %v1091 = vshrl.u32 %v1090, 7
    %v1092 = vsub.s32 %v1089, %v1091
    %v1093 = vrot.slane %v1077, %v1092
    %v1095 = vunpack.c.l.s4 1966171168
    %v1096 = vunpack.c.0.s8 %v1095
    %v1097 = vlaneseq
    %v1098 = vshrl.u32 %v1097, 7
    %v1099 = vsub.s32 %v1096, %v1098
    %v1100 = vrot.slane %v1084, %v1099
    %v1102 = vunpack.c.l.s4 1966171168
    %v1103 = vunpack.c.0.s8 %v1102
    %v1104 = vlaneseq
    %v1105 = vshrl.u32 %v1104, 7
    %v1106 = vsub.s32 %v1103, %v1105
    %v1107 = vrot.slane %v1085, %v1106
    %v1109 = vunpack.c.l.s4 1966171168
    %v1110 = vunpack.c.0.s8 %v1109
    %v1111 = vlaneseq
    %v1112 = vshrl.u32 %v1111, 7
    %v1113 = vsub.s32 %v1110, %v1112
    %v1114 = vrot.slane %v1086, %v1113
    %v1115 = vcombine.high %v1093, %v1093
    %v1116 = vcombine.high %v1100, %v1100
    %v1117 = vcombine.high %v1107, %v1107
    %v1118 = vcombine.high %v1114, %v1114
    %v1119 = vcombine.high %v911, %v911
    %v1121 = vunpack.c.l.s4 1966171168
    %v1122 = vunpack.c.0.s8 %v1121
    %v1123 = vlaneseq
    %v1124 = vshrl.u32 %v1123, 7
    %v1125 = vsub.s32 %v1122, %v1124
    %v1126 = vrot.slane %v911, %v1125
    %v1128 = vunpack.c.l.s4 1966171168
    %v1129 = vunpack.c.0.s8 %v1128
    %v1130 = vlaneseq
    %v1131 = vshrl.u32 %v1130, 7
    %v1132 = vsub.s32 %v1129, %v1131
    %v1133 = vrot.slane %v1119, %v1132
    %v1134 = vcombine.high %v1126, %v1126
    %v1135 = vcombine.high %v1133, %v1133
    %v1137 = vunpack.c.l.s4 1966171168
    %v1138 = vunpack.c.0.s8 %v1137
    %v1139 = vlaneseq
    %v1140 = vshrl.u32 %v1139, 7
    %v1141 = vsub.s32 %v1138, %v1140
    %v1142 = vrot.slane %v1126, %v1141
    %v1144 = vunpack.c.l.s4 1966171168
    %v1145 = vunpack.c.0.s8 %v1144
    %v1146 = vlaneseq
    %v1147 = vshrl.u32 %v1146, 7
    %v1148 = vsub.s32 %v1145, %v1147
    %v1149 = vrot.slane %v1133, %v1148
    %v1151 = vunpack.c.l.s4 1966171168
    %v1152 = vunpack.c.0.s8 %v1151
    %v1153 = vlaneseq
    %v1154 = vshrl.u32 %v1153, 7
    %v1155 = vsub.s32 %v1152, %v1154
    %v1156 = vrot.slane %v1134, %v1155
    %v1158 = vunpack.c.l.s4 1966171168
    %v1159 = vunpack.c.0.s8 %v1158
    %v1160 = vlaneseq
    %v1161 = vshrl.u32 %v1160, 7
    %v1162 = vsub.s32 %v1159, %v1161
    %v1163 = vrot.slane %v1135, %v1162
    %v1164 = vcombine.high %v1142, %v1142
    %v1165 = vcombine.high %v1149, %v1149
    %v1166 = vcombine.high %v1156, %v1156
    %v1167 = vcombine.high %v1163, %v1163
    %v1168 = vcombine.high %v912, %v912
    %v1170 = vunpack.c.l.s4 1966171168
    %v1171 = vunpack.c.0.s8 %v1170
    %v1172 = vlaneseq
    %v1173 = vshrl.u32 %v1172, 7
    %v1174 = vsub.s32 %v1171, %v1173
    %v1175 = vrot.slane %v912, %v1174
    %v1177 = vunpack.c.l.s4 1966171168
    %v1178 = vunpack.c.0.s8 %v1177
    %v1179 = vlaneseq
    %v1180 = vshrl.u32 %v1179, 7
    %v1181 = vsub.s32 %v1178, %v1180
    %v1182 = vrot.slane %v1168, %v1181
    %v1183 = vcombine.high %v1175, %v1175
    %v1184 = vcombine.high %v1182, %v1182
    %v1186 = vunpack.c.l.s4 1966171168
    %v1187 = vunpack.c.0.s8 %v1186
    %v1188 = vlaneseq
    %v1189 = vshrl.u32 %v1188, 7
    %v1190 = vsub.s32 %v1187, %v1189
    %v1191 = vrot.slane %v1175, %v1190
    %v1193 = vunpack.c.l.s4 1966171168
    %v1194 = vunpack.c.0.s8 %v1193
    %v1195 = vlaneseq
    %v1196 = vshrl.u32 %v1195, 7
    %v1197 = vsub.s32 %v1194, %v1196
    %v1198 = vrot.slane %v1182, %v1197
    %v1200 = vunpack.c.l.s4 1966171168
    %v1201 = vunpack.c.0.s8 %v1200
    %v1202 = vlaneseq
    %v1203 = vshrl.u32 %v1202, 7
    %v1204 = vsub.s32 %v1201, %v1203
    %v1205 = vrot.slane %v1183, %v1204
    %v1207 = vunpack.c.l.s4 1966171168
    %v1208 = vunpack.c.0.s8 %v1207
    %v1209 = vlaneseq
    %v1210 = vshrl.u32 %v1209, 7
    %v1211 = vsub.s32 %v1208, %v1210
    %v1212 = vrot.slane %v1184, %v1211
    %v1213 = vcombine.high %v1191, %v1191
    %v1214 = vcombine.high %v1198, %v1198
    %v1215 = vcombine.high %v1205, %v1205
    %v1216 = vcombine.high %v1212, %v1212
    %v1217 = vcombine.high %v913, %v913
    %v1219 = vunpack.c.l.s4 1966171168
    %v1220 = vunpack.c.0.s8 %v1219
    %v1221 = vlaneseq
    %v1222 = vshrl.u32 %v1221, 7
    %v1223 = vsub.s32 %v1220, %v1222
    %v1224 = vrot.slane %v913, %v1223
    %v1226 = vunpack.c.l.s4 1966171168
    %v1227 = vunpack.c.0.s8 %v1226
    %v1228 = vlaneseq
    %v1229 = vshrl.u32 %v1228, 7
    %v1230 = vsub.s32 %v1227, %v1229
    %v1231 = vrot.slane %v1217, %v1230
    %v1232 = vcombine.high %v1224, %v1224
    %v1233 = vcombine.high %v1231, %v1231
    %v1235 = vunpack.c.l.s4 1966171168
    %v1236 = vunpack.c.0.s8 %v1235
    %v1237 = vlaneseq
    %v1238 = vshrl.u32 %v1237, 7
    %v1239 = vsub.s32 %v1236, %v1238
    %v1240 = vrot.slane %v1224, %v1239
    %v1242 = vunpack.c.l.s4 1966171168
    %v1243 = vunpack.c.0.s8 %v1242
    %v1244 = vlaneseq
    %v1245 = vshrl.u32 %v1244, 7
    %v1246 = vsub.s32 %v1243, %v1245
    %v1247 = vrot.slane %v1231, %v1246
    %v1249 = vunpack.c.l.s4 1966171168
    %v1250 = vunpack.c.0.s8 %v1249
    %v1251 = vlaneseq
    %v1252 = vshrl.u32 %v1251, 7
    %v1253 = vsub.s32 %v1250, %v1252
    %v1254 = vrot.slane %v1232, %v1253
    %v1256 = vunpack.c.l.s4 1966171168
    %v1257 = vunpack.c.0.s8 %v1256
    %v1258 = vlaneseq
    %v1259 = vshrl.u32 %v1258, 7
    %v1260 = vsub.s32 %v1257, %v1259
    %v1261 = vrot.slane %v1233, %v1260
    %v1262 = vcombine.high %v1240, %v1240
    %v1263 = vcombine.high %v1247, %v1247
    %v1264 = vcombine.high %v1254, %v1254
    %v1265 = vcombine.high %v1261, %v1261
    %v1266 = vcombine.high %v914, %v914
    %v1268 = vunpack.c.l.s4 1966171168
    %v1269 = vunpack.c.0.s8 %v1268
    %v1270 = vlaneseq
    %v1271 = vshrl.u32 %v1270, 7
    %v1272 = vsub.s32 %v1269, %v1271
    %v1273 = vrot.slane %v914, %v1272
    %v1275 = vunpack.c.l.s4 1966171168
    %v1276 = vunpack.c.0.s8 %v1275
    %v1277 = vlaneseq
    %v1278 = vshrl.u32 %v1277, 7
    %v1279 = vsub.s32 %v1276, %v1278
    %v1280 = vrot.slane %v1266, %v1279
    %v1281 = vcombine.high %v1273, %v1273
    %v1282 = vcombine.high %v1280, %v1280
    %v1284 = vunpack.c.l.s4 1966171168
    %v1285 = vunpack.c.0.s8 %v1284
    %v1286 = vlaneseq
    %v1287 = vshrl.u32 %v1286, 7
    %v1288 = vsub.s32 %v1285, %v1287
    %v1289 = vrot.slane %v1273, %v1288
    %v1291 = vunpack.c.l.s4 1966171168
    %v1292 = vunpack.c.0.s8 %v1291
    %v1293 = vlaneseq
    %v1294 = vshrl.u32 %v1293, 7
    %v1295 = vsub.s32 %v1292, %v1294
    %v1296 = vrot.slane %v1280, %v1295
    %v1298 = vunpack.c.l.s4 1966171168
    %v1299 = vunpack.c.0.s8 %v1298
    %v1300 = vlaneseq
    %v1301 = vshrl.u32 %v1300, 7
    %v1302 = vsub.s32 %v1299, %v1301
    %v1303 = vrot.slane %v1281, %v1302
    %v1305 = vunpack.c.l.s4 1966171168
    %v1306 = vunpack.c.0.s8 %v1305
    %v1307 = vlaneseq
    %v1308 = vshrl.u32 %v1307, 7
    %v1309 = vsub.s32 %v1306, %v1308
    %v1310 = vrot.slane %v1282, %v1309
    %v1311 = vcombine.high %v1289, %v1289
    %v1312 = vcombine.high %v1296, %v1296
    %v1313 = vcombine.high %v1303, %v1303
    %v1314 = vcombine.high %v1310, %v1310
    %v1315 = vlaneseq
    %v1316 = vshrl.u32 %v1315, 7
    %v1317 = vsub.s32 0, %v1316
    %v1318 = vrot.slane %v946, %v1317
    %v1319 = vlaneseq
    %v1320 = vshrl.u32 %v1319, 7
    %v1321 = vsub.s32 0, %v1320
    %v1322 = vrot.slane %v960, %v1321
    %v1323 = vlaneseq
    %v1324 = vshrl.u32 %v1323, 7
    %v1325 = vsub.s32 0, %v1324
    %v1326 = vrot.slane %v968, %v1325
    %v1327 = vlaneseq
    %v1328 = vshrl.u32 %v1327, 7
    %v1329 = vsub.s32 0, %v1328
    %v1330 = vrot.slane %v970, %v1329
    %v1331 = vlaneseq
    %v1332 = vshrl.u32 %v1331, 7
    %v1333 = vsub.s32 0, %v1332
    %v1334 = vrot.slane %v953, %v1333
    %v1335 = vlaneseq
    %v1336 = vshrl.u32 %v1335, 7
    %v1337 = vsub.s32 0, %v1336
    %v1338 = vrot.slane %v967, %v1337
    %v1339 = vlaneseq
    %v1340 = vshrl.u32 %v1339, 7
    %v1341 = vsub.s32 0, %v1340
    %v1342 = vrot.slane %v969, %v1341
    %v1343 = vlaneseq
    %v1344 = vshrl.u32 %v1343, 7
    %v1345 = vsub.s32 0, %v1344
    %v1346 = vrot.slane %v971, %v1345
    %v1347 = vlaneseq
    %v1348 = vshrl.u32 %v1347, 7
    %v1349 = vsub.s32 0, %v1348
    %v1350 = vrot.slane %v995, %v1349
    %v1351 = vlaneseq
    %v1352 = vshrl.u32 %v1351, 7
    %v1353 = vsub.s32 0, %v1352
    %v1354 = vrot.slane %v1009, %v1353
    %v1355 = vlaneseq
    %v1356 = vshrl.u32 %v1355, 7
    %v1357 = vsub.s32 0, %v1356
    %v1358 = vrot.slane %v1017, %v1357
    %v1359 = vlaneseq
    %v1360 = vshrl.u32 %v1359, 7
    %v1361 = vsub.s32 0, %v1360
    %v1362 = vrot.slane %v1019, %v1361
    %v1363 = vlaneseq
    %v1364 = vshrl.u32 %v1363, 7
    %v1365 = vsub.s32 0, %v1364
    %v1366 = vrot.slane %v1002, %v1365
    %v1367 = vlaneseq
    %v1368 = vshrl.u32 %v1367, 7
    %v1369 = vsub.s32 0, %v1368
    %v1370 = vrot.slane %v1016, %v1369
    %v1371 = vlaneseq
    %v1372 = vshrl.u32 %v1371, 7
    %v1373 = vsub.s32 0, %v1372
    %v1374 = vrot.slane %v1018, %v1373
    %v1375 = vlaneseq
    %v1376 = vshrl.u32 %v1375, 7
    %v1377 = vsub.s32 0, %v1376
    %v1378 = vrot.slane %v1020, %v1377
    %v1379 = vlaneseq
    %v1380 = vshrl.u32 %v1379, 7
    %v1381 = vsub.s32 0, %v1380
    %v1382 = vrot.slane %v1044, %v1381
    %v1383 = vlaneseq
    %v1384 = vshrl.u32 %v1383, 7
    %v1385 = vsub.s32 0, %v1384
    %v1386 = vrot.slane %v1058, %v1385
    %v1387 = vlaneseq
    %v1388 = vshrl.u32 %v1387, 7
    %v1389 = vsub.s32 0, %v1388
    %v1390 = vrot.slane %v1066, %v1389
    %v1391 = vlaneseq
    %v1392 = vshrl.u32 %v1391, 7
    %v1393 = vsub.s32 0, %v1392
    %v1394 = vrot.slane %v1068, %v1393
    %v1395 = vlaneseq
    %v1396 = vshrl.u32 %v1395, 7
    %v1397 = vsub.s32 0, %v1396
    %v1398 = vrot.slane %v1051, %v1397
    %v1399 = vlaneseq
    %v1400 = vshrl.u32 %v1399, 7
    %v1401 = vsub.s32 0, %v1400
    %v1402 = vrot.slane %v1065, %v1401
    %v1403 = vlaneseq
    %v1404 = vshrl.u32 %v1403, 7
    %v1405 = vsub.s32 0, %v1404
    %v1406 = vrot.slane %v1067, %v1405
    %v1407 = vlaneseq
    %v1408 = vshrl.u32 %v1407, 7
    %v1409 = vsub.s32 0, %v1408
    %v1410 = vrot.slane %v1069, %v1409
    %v1411 = vlaneseq
    %v1412 = vshrl.u32 %v1411, 7
    %v1413 = vsub.s32 0, %v1412
    %v1414 = vrot.slane %v1093, %v1413
    %v1415 = vlaneseq
    %v1416 = vshrl.u32 %v1415, 7
    %v1417 = vsub.s32 0, %v1416
    %v1418 = vrot.slane %v1107, %v1417
    %v1419 = vlaneseq
    %v1420 = vshrl.u32 %v1419, 7
    %v1421 = vsub.s32 0, %v1420
    %v1422 = vrot.slane %v1115, %v1421
    %v1423 = vlaneseq
    %v1424 = vshrl.u32 %v1423, 7
    %v1425 = vsub.s32 0, %v1424
    %v1426 = vrot.slane %v1117, %v1425
    %v1427 = vlaneseq
    %v1428 = vshrl.u32 %v1427, 7
    %v1429 = vsub.s32 0, %v1428
    %v1430 = vrot.slane %v1100, %v1429
    %v1431 = vlaneseq
    %v1432 = vshrl.u32 %v1431, 7
    %v1433 = vsub.s32 0, %v1432
    %v1434 = vrot.slane %v1114, %v1433
    %v1435 = vlaneseq
    %v1436 = vshrl.u32 %v1435, 7
    %v1437 = vsub.s32 0, %v1436
    %v1438 = vrot.slane %v1116, %v1437
    %v1439 = vlaneseq
    %v1440 = vshrl.u32 %v1439, 7
    %v1441 = vsub.s32 0, %v1440
    %v1442 = vrot.slane %v1118, %v1441
    %v1443 = vlaneseq
    %v1444 = vshrl.u32 %v1443, 7
    %v1445 = vsub.s32 0, %v1444
    %v1446 = vrot.slane %v1142, %v1445
    %v1447 = vlaneseq
    %v1448 = vshrl.u32 %v1447, 7
    %v1449 = vsub.s32 0, %v1448
    %v1450 = vrot.slane %v1156, %v1449
    %v1451 = vlaneseq
    %v1452 = vshrl.u32 %v1451, 7
    %v1453 = vsub.s32 0, %v1452
    %v1454 = vrot.slane %v1164, %v1453
    %v1455 = vlaneseq
    %v1456 = vshrl.u32 %v1455, 7
    %v1457 = vsub.s32 0, %v1456
    %v1458 = vrot.slane %v1166, %v1457
    %v1459 = vlaneseq
    %v1460 = vshrl.u32 %v1459, 7
    %v1461 = vsub.s32 0, %v1460
    %v1462 = vrot.slane %v1149, %v1461
    %v1463 = vlaneseq
    %v1464 = vshrl.u32 %v1463, 7
    %v1465 = vsub.s32 0, %v1464
    %v1466 = vrot.slane %v1163, %v1465
    %v1467 = vlaneseq
    %v1468 = vshrl.u32 %v1467, 7
    %v1469 = vsub.s32 0, %v1468
    %v1470 = vrot.slane %v1165, %v1469
    %v1471 = vlaneseq
    %v1472 = vshrl.u32 %v1471, 7
    %v1473 = vsub.s32 0, %v1472
    %v1474 = vrot.slane %v1167, %v1473
    %v1475 = vlaneseq
    %v1476 = vshrl.u32 %v1475, 7
    %v1477 = vsub.s32 0, %v1476
    %v1478 = vrot.slane %v1191, %v1477
    %v1479 = vlaneseq
    %v1480 = vshrl.u32 %v1479, 7
    %v1481 = vsub.s32 0, %v1480
    %v1482 = vrot.slane %v1205, %v1481
    %v1483 = vlaneseq
    %v1484 = vshrl.u32 %v1483, 7
    %v1485 = vsub.s32 0, %v1484
    %v1486 = vrot.slane %v1213, %v1485
    %v1487 = vlaneseq
    %v1488 = vshrl.u32 %v1487, 7
    %v1489 = vsub.s32 0, %v1488
    %v1490 = vrot.slane %v1215, %v1489
    %v1491 = vlaneseq
    %v1492 = vshrl.u32 %v1491, 7
    %v1493 = vsub.s32 0, %v1492
    %v1494 = vrot.slane %v1198, %v1493
    %v1495 = vlaneseq
    %v1496 = vshrl.u32 %v1495, 7
    %v1497 = vsub.s32 0, %v1496
    %v1498 = vrot.slane %v1212, %v1497
    %v1499 = vlaneseq
    %v1500 = vshrl.u32 %v1499, 7
    %v1501 = vsub.s32 0, %v1500
    %v1502 = vrot.slane %v1214, %v1501
    %v1503 = vlaneseq
    %v1504 = vshrl.u32 %v1503, 7
    %v1505 = vsub.s32 0, %v1504
    %v1506 = vrot.slane %v1216, %v1505
    %v1507 = vlaneseq
    %v1508 = vshrl.u32 %v1507, 7
    %v1509 = vsub.s32 0, %v1508
    %v1510 = vrot.slane %v1240, %v1509
    %v1511 = vlaneseq
    %v1512 = vshrl.u32 %v1511, 7
    %v1513 = vsub.s32 0, %v1512
    %v1514 = vrot.slane %v1254, %v1513
    %v1515 = vlaneseq
    %v1516 = vshrl.u32 %v1515, 7
    %v1517 = vsub.s32 0, %v1516
    %v1518 = vrot.slane %v1262, %v1517
    %v1519 = vlaneseq
    %v1520 = vshrl.u32 %v1519, 7
    %v1521 = vsub.s32 0, %v1520
    %v1522 = vrot.slane %v1264, %v1521
    %v1523 = vlaneseq
    %v1524 = vshrl.u32 %v1523, 7
    %v1525 = vsub.s32 0, %v1524
    %v1526 = vrot.slane %v1247, %v1525
    %v1527 = vlaneseq
    %v1528 = vshrl.u32 %v1527, 7
    %v1529 = vsub.s32 0, %v1528
    %v1530 = vrot.slane %v1261, %v1529
    %v1531 = vlaneseq
    %v1532 = vshrl.u32 %v1531, 7
    %v1533 = vsub.s32 0, %v1532
    %v1534 = vrot.slane %v1263, %v1533
    %v1535 = vlaneseq
    %v1536 = vshrl.u32 %v1535, 7
    %v1537 = vsub.s32 0, %v1536
    %v1538 = vrot.slane %v1265, %v1537
    %v1539 = vlaneseq
    %v1540 = vshrl.u32 %v1539, 7
    %v1541 = vsub.s32 0, %v1540
    %v1542 = vrot.slane %v1289, %v1541
    %v1543 = vlaneseq
    %v1544 = vshrl.u32 %v1543, 7
    %v1545 = vsub.s32 0, %v1544
    %v1546 = vrot.slane %v1303, %v1545
    %v1547 = vlaneseq
    %v1548 = vshrl.u32 %v1547, 7
    %v1549 = vsub.s32 0, %v1548
    %v1550 = vrot.slane %v1311, %v1549
    %v1551 = vlaneseq
    %v1552 = vshrl.u32 %v1551, 7
    %v1553 = vsub.s32 0, %v1552
    %v1554 = vrot.slane %v1313, %v1553
    %v1555 = vlaneseq
    %v1556 = vshrl.u32 %v1555, 7
    %v1557 = vsub.s32 0, %v1556
    %v1558 = vrot.slane %v1296, %v1557
    %v1559 = vlaneseq
    %v1560 = vshrl.u32 %v1559, 7
    %v1561 = vsub.s32 0, %v1560
    %v1562 = vrot.slane %v1310, %v1561
    %v1563 = vlaneseq
    %v1564 = vshrl.u32 %v1563, 7
    %v1565 = vsub.s32 0, %v1564
    %v1566 = vrot.slane %v1312, %v1565
    %v1567 = vlaneseq
    %v1568 = vshrl.u32 %v1567, 7
    %v1569 = vsub.s32 0, %v1568
    %v1570 = vrot.slane %v1314, %v1569
    %v1635 = vmul.f32 %v1318, %v753
    %v1636 = vmul.f32 %v1322, %v753
    %v1637 = vmul.f32 %v1326, %v753
    %v1638 = vmul.f32 %v1330, %v753
    %v1639 = vmul.f32 %v1334, %v753
    %v1640 = vmul.f32 %v1338, %v753
    %v1641 = vmul.f32 %v1342, %v753
    %v1642 = vmul.f32 %v1346, %v753
    %v1643 = vmul.f32 %v1350, %v758
    %v1644 = vmul.f32 %v1354, %v758
    %v1645 = vmul.f32 %v1358, %v758
    %v1646 = vmul.f32 %v1362, %v758
    %v1647 = vmul.f32 %v1366, %v758
    %v1648 = vmul.f32 %v1370, %v758
    %v1649 = vmul.f32 %v1374, %v758
    %v1650 = vmul.f32 %v1378, %v758
    %v1651 = vmul.f32 %v1382, %v763
    %v1652 = vmul.f32 %v1386, %v763
    %v1653 = vmul.f32 %v1390, %v763
    %v1654 = vmul.f32 %v1394, %v763
    %v1655 = vmul.f32 %v1398, %v763
    %v1656 = vmul.f32 %v1402, %v763
    %v1657 = vmul.f32 %v1406, %v763
    %v1658 = vmul.f32 %v1410, %v763
    %v1659 = vmul.f32 %v1414, %v768
    %v1660 = vmul.f32 %v1418, %v768
    %v1661 = vmul.f32 %v1422, %v768
    %v1662 = vmul.f32 %v1426, %v768
    %v1663 = vmul.f32 %v1430, %v768
    %v1664 = vmul.f32 %v1434, %v768
    %v1665 = vmul.f32 %v1438, %v768
    %v1666 = vmul.f32 %v1442, %v768
    %v1667 = vmul.f32 %v1446, %v773
    %v1668 = vmul.f32 %v1450, %v773
    %v1669 = vmul.f32 %v1454, %v773
    %v1670 = vmul.f32 %v1458, %v773
    %v1671 = vmul.f32 %v1462, %v773
    %v1672 = vmul.f32 %v1466, %v773
    %v1673 = vmul.f32 %v1470, %v773
    %v1674 = vmul.f32 %v1474, %v773
    %v1675 = vmul.f32 %v1478, %v778
    %v1676 = vmul.f32 %v1482, %v778
    %v1677 = vmul.f32 %v1486, %v778
    %v1678 = vmul.f32 %v1490, %v778
    %v1679 = vmul.f32 %v1494, %v778
    %v1680 = vmul.f32 %v1498, %v778
    %v1681 = vmul.f32 %v1502, %v778
    %v1682 = vmul.f32 %v1506, %v778
    %v1683 = vmul.f32 %v1510, %v783
    %v1684 = vmul.f32 %v1514, %v783
    %v1685 = vmul.f32 %v1518, %v783
    %v1686 = vmul.f32 %v1522, %v783
    %v1687 = vmul.f32 %v1526, %v783
    %v1688 = vmul.f32 %v1530, %v783
    %v1689 = vmul.f32 %v1534, %v783
    %v1690 = vmul.f32 %v1538, %v783
    %v1691 = vmul.f32 %v1542, %v788
    %v1692 = vmul.f32 %v1546, %v788
    %v1693 = vmul.f32 %v1550, %v788
    %v1694 = vmul.f32 %v1554, %v788
    %v1695 = vmul.f32 %v1558, %v788
    %v1696 = vmul.f32 %v1562, %v788
    %v1697 = vmul.f32 %v1566, %v788
    %v1698 = vmul.f32 %v1570, %v788
    %v1700 = vsel %vm266, %v1635, 0
    %v1703 = vsel %vm266, %v1636, 0
    %v1706 = vsel %vm266, %v1637, 0
    %v1709 = vsel %vm266, %v1638, 0
    %v1712 = vsel %vm266, %v1639, 0
    %v1715 = vsel %vm266, %v1640, 0
    %v1718 = vsel %vm266, %v1641, 0
    %v1721 = vsel %vm266, %v1642, 0
    %v1724 = vsel %vm266, %v1643, 0
    %v1727 = vsel %vm266, %v1644, 0
    %v1730 = vsel %vm266, %v1645, 0
    %v1733 = vsel %vm266, %v1646, 0
    %v1736 = vsel %vm266, %v1647, 0
    %v1739 = vsel %vm266, %v1648, 0
    %v1742 = vsel %vm266, %v1649, 0
    %v1745 = vsel %vm266, %v1650, 0
    %v1748 = vsel %vm266, %v1651, 0
    %v1751 = vsel %vm266, %v1652, 0
    %v1754 = vsel %vm266, %v1653, 0
    %v1757 = vsel %vm266, %v1654, 0
    %v1760 = vsel %vm266, %v1655, 0
    %v1763 = vsel %vm266, %v1656, 0
    %v1766 = vsel %vm266, %v1657, 0
    %v1769 = vsel %vm266, %v1658, 0
    %v1772 = vsel %vm266, %v1659, 0
    %v1775 = vsel %vm266, %v1660, 0
    %v1778 = vsel %vm266, %v1661, 0
    %v1781 = vsel %vm266, %v1662, 0
    %v1784 = vsel %vm266, %v1663, 0
    %v1787 = vsel %vm266, %v1664, 0
    %v1790 = vsel %vm266, %v1665, 0
    %v1793 = vsel %vm266, %v1666, 0
    %v1796 = vsel %vm266, %v1667, 0
    %v1799 = vsel %vm266, %v1668, 0
    %v1802 = vsel %vm266, %v1669, 0
    %v1805 = vsel %vm266, %v1670, 0
    %v1808 = vsel %vm266, %v1671, 0
    %v1811 = vsel %vm266, %v1672, 0
    %v1814 = vsel %vm266, %v1673, 0
    %v1817 = vsel %vm266, %v1674, 0
    %v1820 = vsel %vm266, %v1675, 0
    %v1823 = vsel %vm266, %v1676, 0
    %v1826 = vsel %vm266, %v1677, 0
    %v1829 = vsel %vm266, %v1678, 0
    %v1832 = vsel %vm266, %v1679, 0
    %v1835 = vsel %vm266, %v1680, 0
    %v1838 = vsel %vm266, %v1681, 0
    %v1841 = vsel %vm266, %v1682, 0
    %v1844 = vsel %vm266, %v1683, 0
    %v1847 = vsel %vm266, %v1684, 0
    %v1850 = vsel %vm266, %v1685, 0
    %v1853 = vsel %vm266, %v1686, 0
    %v1856 = vsel %vm266, %v1687, 0
    %v1859 = vsel %vm266, %v1688, 0
    %v1862 = vsel %vm266, %v1689, 0
    %v1865 = vsel %vm266, %v1690, 0
    %v1868 = vsel %vm266, %v1691, 0
    %v1871 = vsel %vm266, %v1692, 0
    %v1874 = vsel %vm266, %v1693, 0
    %v1877 = vsel %vm266, %v1694, 0
    %v1880 = vsel %vm266, %v1695, 0
    %v1883 = vsel %vm266, %v1696, 0
    %v1886 = vsel %vm266, %v1697, 0
    %v1889 = vsel %vm266, %v1698, 0
    %1891 = vmatprep.subr.mxu0 0.0
    %1892 = vmatpush1.msra.mxu0 0.0
    %1893 = vmatprep.subr.mxu0 0.0
    %1894 = vmatpush1.msra.mxu0 0.0
    %1895 = vmatprep.subr.mxu0 0.0
    %1896 = vmatpush1.msra.mxu0 0.0
    %1897 = vmatprep.subr.mxu0 0.0
    %1898 = vmatpush1.msra.mxu0 0.0
    %1899 = vmatprep.subr.mxu0 0.0
    %1900 = vmatpush1.msra.mxu0 0.0
    %1901 = vmatprep.subr.mxu0 0.0
    %1902 = vmatpush1.msra.mxu0 0.0
    %1903 = vmatprep.subr.mxu0 0.0
    %1904 = vmatpush1.msra.mxu0 0.0
    %1905 = vmatprep.subr.mxu0 0.0
    %1906 = vmatpush1.msra.mxu0 0.0
    %1907 = vmatprep.subr.mxu0 0.0
    %1908 = vmatpush1.msra.mxu0 0.0
    %1909 = vmatprep.subr.mxu0 0.0
    %1910 = vmatpush1.msra.mxu0 0.0
    %1911 = vmatprep.subr.mxu0 0.0
    %1912 = vmatpush1.msra.mxu0 0.0
    %1913 = vmatprep.subr.mxu0 0.0
    %1914 = vmatpush1.msra.mxu0 0.0
    %1915 = vmatprep.subr.mxu0 0.0
    %1916 = vmatpush1.msra.mxu0 %v399
    %1917 = vmatprep.subr.mxu0 0.0
    %1918 = vmatpush1.msra.mxu0 %v398
    %1919 = vmatprep.subr.mxu0 0.0
    %1920 = vmatpush1.msra.mxu0 %v397
    %1921 = vmatprep.subr.mxu0 0.0
    %1922 = vmatpush1.msra.mxu0 %v396
    %1923 = vmatprep.subr.mxu0 0.0
    %1924 = vmatpush2.msra.mxu0 0.0
    %1925 = vmatprep.subr.mxu0 0.0
    %1926 = vmatpush2.msra.mxu0 0.0
    %1927 = vmatprep.subr.mxu0 0.0
    %1928 = vmatpush2.msra.mxu0 0.0
    %1929 = vmatprep.subr.mxu0 0.0
    %1930 = vmatpush2.msra.mxu0 0.0
    %1931 = vmatprep.subr.mxu0 0.0
    %1932 = vmatpush2.msra.mxu0 0.0
    %1933 = vmatprep.subr.mxu0 0.0
    %1934 = vmatpush2.msra.mxu0 0.0
    %1935 = vmatprep.subr.mxu0 0.0
    %1936 = vmatpush2.msra.mxu0 0.0
    %1937 = vmatprep.subr.mxu0 0.0
    %1938 = vmatpush2.msra.mxu0 0.0
    %1939 = vmatprep.subr.mxu0 0.0
    %1940 = vmatpush2.msra.mxu0 0.0
    %1941 = vmatprep.subr.mxu0 0.0
    %1942 = vmatpush2.msra.mxu0 0.0
    %1943 = vmatprep.subr.mxu0 0.0
    %1944 = vmatpush2.msra.mxu0 0.0
    %1945 = vmatprep.subr.mxu0 0.0
    %1946 = vmatpush2.msra.mxu0 0.0
    %1947 = vmatprep.subr.mxu0 0.0
    %1948 = vmatpush2.msra.mxu0 0.0
    %1949 = vmatprep.subr.mxu0 0.0
    %1950 = vmatpush2.msra.mxu0 0.0
    %1951 = vmatprep.subr.mxu0 0.0
    %1952 = vmatpush2.msra.mxu0 0.0
    %1953 = vmatprep.subr.mxu0 0.0
    %1954 = vmatpush2.msra.mxu0 0.0
    %1955 = vmatprep.mubr.f32.mxu0 0.0
    %1956 = vmatmul.mubr.f32.gmra.mxu0 %v1700
    %v1957 = vpop.f32.mrf.mxu0
    %v1958 = vadd.f32 0.0, %v1957
    %v1959 = vpop.f32.mrf.mxu0
    %1960 = vmatprep.mubr.f32.mxu0 0.0
    %1961 = vmatmul.mubr.f32.gmra.mxu0 %v1703
    %v1962 = vpop.f32.mrf.mxu0
    %v1963 = vadd.f32 0.0, %v1962
    %v1964 = vpop.f32.mrf.mxu0
    %1965 = vmatprep.mubr.f32.mxu0 0.0
    %1966 = vmatmul.mubr.f32.gmra.mxu0 %v1706
    %v1967 = vpop.f32.mrf.mxu0
    %v1968 = vadd.f32 0.0, %v1967
    %v1969 = vpop.f32.mrf.mxu0
    %1970 = vmatprep.mubr.f32.mxu0 0.0
    %1971 = vmatmul.mubr.f32.gmra.mxu0 %v1709
    %v1972 = vpop.f32.mrf.mxu0
    %v1973 = vadd.f32 0.0, %v1972
    %v1974 = vpop.f32.mrf.mxu0
    %1975 = vmatprep.mubr.f32.mxu0 0.0
    %1976 = vmatmul.mubr.f32.gmra.mxu0 %v1712
    %v1977 = vpop.f32.mrf.mxu0
    %v1978 = vadd.f32 0.0, %v1977
    %v1979 = vpop.f32.mrf.mxu0
    %1980 = vmatprep.mubr.f32.mxu0 0.0
    %1981 = vmatmul.mubr.f32.gmra.mxu0 %v1715
    %v1982 = vpop.f32.mrf.mxu0
    %v1983 = vadd.f32 0.0, %v1982
    %v1984 = vpop.f32.mrf.mxu0
    %1985 = vmatprep.mubr.f32.mxu0 0.0
    %1986 = vmatmul.mubr.f32.gmra.mxu0 %v1718
    %v1987 = vpop.f32.mrf.mxu0
    %v1988 = vadd.f32 0.0, %v1987
    %v1989 = vpop.f32.mrf.mxu0
    %1990 = vmatprep.mubr.f32.mxu0 0.0
    %1991 = vmatmul.mubr.f32.gmra.mxu0 %v1721
    %v1992 = vpop.f32.mrf.mxu0
    %v1993 = vadd.f32 0.0, %v1992
    %v1994 = vpop.f32.mrf.mxu0
    %1995 = vmatprep.mubr.f32.mxu0 0.0
    %1996 = vmatmul.mubr.f32.gmra.mxu0 %v1724
    %v1997 = vpop.f32.mrf.mxu0
    %v1998 = vadd.f32 0.0, %v1997
    %v1999 = vpop.f32.mrf.mxu0
    %2000 = vmatprep.mubr.f32.mxu0 0.0
    %2001 = vmatmul.mubr.f32.gmra.mxu0 %v1727
    %v2002 = vpop.f32.mrf.mxu0
    %v2003 = vadd.f32 0.0, %v2002
    %v2004 = vpop.f32.mrf.mxu0
    %2005 = vmatprep.mubr.f32.mxu0 0.0
    %2006 = vmatmul.mubr.f32.gmra.mxu0 %v1730
    %v2007 = vpop.f32.mrf.mxu0
    %v2008 = vadd.f32 0.0, %v2007
    %v2009 = vpop.f32.mrf.mxu0
    %2010 = vmatprep.mubr.f32.mxu0 0.0
    %2011 = vmatmul.mubr.f32.gmra.mxu0 %v1733
    %v2012 = vpop.f32.mrf.mxu0
    %v2013 = vadd.f32 0.0, %v2012
    %v2014 = vpop.f32.mrf.mxu0
    %2015 = vmatprep.mubr.f32.mxu0 0.0
    %2016 = vmatmul.mubr.f32.gmra.mxu0 %v1736
    %v2017 = vpop.f32.mrf.mxu0
    %v2018 = vadd.f32 0.0, %v2017
    %v2019 = vpop.f32.mrf.mxu0
    %2020 = vmatprep.mubr.f32.mxu0 0.0
    %2021 = vmatmul.mubr.f32.gmra.mxu0 %v1739
    %v2022 = vpop.f32.mrf.mxu0
    %v2023 = vadd.f32 0.0, %v2022
    %v2024 = vpop.f32.mrf.mxu0
    %2025 = vmatprep.mubr.f32.mxu0 0.0
    %2026 = vmatmul.mubr.f32.gmra.mxu0 %v1742
    %v2027 = vpop.f32.mrf.mxu0
    %v2028 = vadd.f32 0.0, %v2027
    %v2029 = vpop.f32.mrf.mxu0
    %2030 = vmatprep.mubr.f32.mxu0 0.0
    %2031 = vmatmul.mubr.f32.gmra.mxu0 %v1745
    %v2032 = vpop.f32.mrf.mxu0
    %v2033 = vadd.f32 0.0, %v2032
    %v2034 = vpop.f32.mrf.mxu0
    %2035 = vmatprep.mubr.f32.mxu0 0.0
    %2036 = vmatmul.mubr.f32.gmra.mxu0 %v1748
    %v2037 = vpop.f32.mrf.mxu0
    %v2038 = vadd.f32 0.0, %v2037
    %v2039 = vpop.f32.mrf.mxu0
    %2040 = vmatprep.mubr.f32.mxu0 0.0
    %2041 = vmatmul.mubr.f32.gmra.mxu0 %v1751
    %v2042 = vpop.f32.mrf.mxu0
    %v2043 = vadd.f32 0.0, %v2042
    %v2044 = vpop.f32.mrf.mxu0
    %2045 = vmatprep.mubr.f32.mxu0 0.0
    %2046 = vmatmul.mubr.f32.gmra.mxu0 %v1754
    %v2047 = vpop.f32.mrf.mxu0
    %v2048 = vadd.f32 0.0, %v2047
    %v2049 = vpop.f32.mrf.mxu0
    %2050 = vmatprep.mubr.f32.mxu0 0.0
    %2051 = vmatmul.mubr.f32.gmra.mxu0 %v1757
    %v2052 = vpop.f32.mrf.mxu0
    %v2053 = vadd.f32 0.0, %v2052
    %v2054 = vpop.f32.mrf.mxu0
    %2055 = vmatprep.mubr.f32.mxu0 0.0
    %2056 = vmatmul.mubr.f32.gmra.mxu0 %v1760
    %v2057 = vpop.f32.mrf.mxu0
    %v2058 = vadd.f32 0.0, %v2057
    %v2059 = vpop.f32.mrf.mxu0
    %2060 = vmatprep.mubr.f32.mxu0 0.0
    %2061 = vmatmul.mubr.f32.gmra.mxu0 %v1763
    %v2062 = vpop.f32.mrf.mxu0
    %v2063 = vadd.f32 0.0, %v2062
    %v2064 = vpop.f32.mrf.mxu0
    %2065 = vmatprep.mubr.f32.mxu0 0.0
    %2066 = vmatmul.mubr.f32.gmra.mxu0 %v1766
    %v2067 = vpop.f32.mrf.mxu0
    %v2068 = vadd.f32 0.0, %v2067
    %v2069 = vpop.f32.mrf.mxu0
    %2070 = vmatprep.mubr.f32.mxu0 0.0
    %2071 = vmatmul.mubr.f32.gmra.mxu0 %v1769
    %v2072 = vpop.f32.mrf.mxu0
    %v2073 = vadd.f32 0.0, %v2072
    %v2074 = vpop.f32.mrf.mxu0
    %2075 = vmatprep.mubr.f32.mxu0 0.0
    %2076 = vmatmul.mubr.f32.gmra.mxu0 %v1772
    %v2077 = vpop.f32.mrf.mxu0
    %v2078 = vadd.f32 0.0, %v2077
    %v2079 = vpop.f32.mrf.mxu0
    %2080 = vmatprep.mubr.f32.mxu0 0.0
    %2081 = vmatmul.mubr.f32.gmra.mxu0 %v1775
    %v2082 = vpop.f32.mrf.mxu0
    %v2083 = vadd.f32 0.0, %v2082
    %v2084 = vpop.f32.mrf.mxu0
    %2085 = vmatprep.mubr.f32.mxu0 0.0
    %2086 = vmatmul.mubr.f32.gmra.mxu0 %v1778
    %v2087 = vpop.f32.mrf.mxu0
    %v2088 = vadd.f32 0.0, %v2087
    %v2089 = vpop.f32.mrf.mxu0
    %2090 = vmatprep.mubr.f32.mxu0 0.0
    %2091 = vmatmul.mubr.f32.gmra.mxu0 %v1781
    %v2092 = vpop.f32.mrf.mxu0
    %v2093 = vadd.f32 0.0, %v2092
    %v2094 = vpop.f32.mrf.mxu0
    %2095 = vmatprep.mubr.f32.mxu0 0.0
    %2096 = vmatmul.mubr.f32.gmra.mxu0 %v1784
    %v2097 = vpop.f32.mrf.mxu0
    %v2098 = vadd.f32 0.0, %v2097
    %v2099 = vpop.f32.mrf.mxu0
    %2100 = vmatprep.mubr.f32.mxu0 0.0
    %2101 = vmatmul.mubr.f32.gmra.mxu0 %v1787
    %v2102 = vpop.f32.mrf.mxu0
    %v2103 = vadd.f32 0.0, %v2102
    %v2104 = vpop.f32.mrf.mxu0
    %2105 = vmatprep.mubr.f32.mxu0 0.0
    %2106 = vmatmul.mubr.f32.gmra.mxu0 %v1790
    %v2107 = vpop.f32.mrf.mxu0
    %v2108 = vadd.f32 0.0, %v2107
    %v2109 = vpop.f32.mrf.mxu0
    %2110 = vmatprep.mubr.f32.mxu0 0.0
    %2111 = vmatmul.mubr.f32.gmra.mxu0 %v1793
    %v2112 = vpop.f32.mrf.mxu0
    %v2113 = vadd.f32 0.0, %v2112
    %v2114 = vpop.f32.mrf.mxu0
    %2115 = vmatprep.mubr.f32.mxu0 0.0
    %2116 = vmatmul.mubr.f32.gmra.mxu0 %v1796
    %v2117 = vpop.f32.mrf.mxu0
    %v2118 = vadd.f32 0.0, %v2117
    %v2119 = vpop.f32.mrf.mxu0
    %2120 = vmatprep.mubr.f32.mxu0 0.0
    %2121 = vmatmul.mubr.f32.gmra.mxu0 %v1799
    %v2122 = vpop.f32.mrf.mxu0
    %v2123 = vadd.f32 0.0, %v2122
    %v2124 = vpop.f32.mrf.mxu0
    %2125 = vmatprep.mubr.f32.mxu0 0.0
    %2126 = vmatmul.mubr.f32.gmra.mxu0 %v1802
    %v2127 = vpop.f32.mrf.mxu0
    %v2128 = vadd.f32 0.0, %v2127
    %v2129 = vpop.f32.mrf.mxu0
    %2130 = vmatprep.mubr.f32.mxu0 0.0
    %2131 = vmatmul.mubr.f32.gmra.mxu0 %v1805
    %v2132 = vpop.f32.mrf.mxu0
    %v2133 = vadd.f32 0.0, %v2132
    %v2134 = vpop.f32.mrf.mxu0
    %2135 = vmatprep.mubr.f32.mxu0 0.0
    %2136 = vmatmul.mubr.f32.gmra.mxu0 %v1808
    %v2137 = vpop.f32.mrf.mxu0
    %v2138 = vadd.f32 0.0, %v2137
    %v2139 = vpop.f32.mrf.mxu0
    %2140 = vmatprep.mubr.f32.mxu0 0.0
    %2141 = vmatmul.mubr.f32.gmra.mxu0 %v1811
    %v2142 = vpop.f32.mrf.mxu0
    %v2143 = vadd.f32 0.0, %v2142
    %v2144 = vpop.f32.mrf.mxu0
    %2145 = vmatprep.mubr.f32.mxu0 0.0
    %2146 = vmatmul.mubr.f32.gmra.mxu0 %v1814
    %v2147 = vpop.f32.mrf.mxu0
    %v2148 = vadd.f32 0.0, %v2147
    %v2149 = vpop.f32.mrf.mxu0
    %2150 = vmatprep.mubr.f32.mxu0 0.0
    %2151 = vmatmul.mubr.f32.gmra.mxu0 %v1817
    %v2152 = vpop.f32.mrf.mxu0
    %v2153 = vadd.f32 0.0, %v2152
    %v2154 = vpop.f32.mrf.mxu0
    %2155 = vmatprep.mubr.f32.mxu0 0.0
    %2156 = vmatmul.mubr.f32.gmra.mxu0 %v1820
    %v2157 = vpop.f32.mrf.mxu0
    %v2158 = vadd.f32 0.0, %v2157
    %v2159 = vpop.f32.mrf.mxu0
    %2160 = vmatprep.mubr.f32.mxu0 0.0
    %2161 = vmatmul.mubr.f32.gmra.mxu0 %v1823
    %v2162 = vpop.f32.mrf.mxu0
    %v2163 = vadd.f32 0.0, %v2162
    %v2164 = vpop.f32.mrf.mxu0
    %2165 = vmatprep.mubr.f32.mxu0 0.0
    %2166 = vmatmul.mubr.f32.gmra.mxu0 %v1826
    %v2167 = vpop.f32.mrf.mxu0
    %v2168 = vadd.f32 0.0, %v2167
    %v2169 = vpop.f32.mrf.mxu0
    %2170 = vmatprep.mubr.f32.mxu0 0.0
    %2171 = vmatmul.mubr.f32.gmra.mxu0 %v1829
    %v2172 = vpop.f32.mrf.mxu0
    %v2173 = vadd.f32 0.0, %v2172
    %v2174 = vpop.f32.mrf.mxu0
    %2175 = vmatprep.mubr.f32.mxu0 0.0
    %2176 = vmatmul.mubr.f32.gmra.mxu0 %v1832
    %v2177 = vpop.f32.mrf.mxu0
    %v2178 = vadd.f32 0.0, %v2177
    %v2179 = vpop.f32.mrf.mxu0
    %2180 = vmatprep.mubr.f32.mxu0 0.0
    %2181 = vmatmul.mubr.f32.gmra.mxu0 %v1835
    %v2182 = vpop.f32.mrf.mxu0
    %v2183 = vadd.f32 0.0, %v2182
    %v2184 = vpop.f32.mrf.mxu0
    %2185 = vmatprep.mubr.f32.mxu0 0.0
    %2186 = vmatmul.mubr.f32.gmra.mxu0 %v1838
    %v2187 = vpop.f32.mrf.mxu0
    %v2188 = vadd.f32 0.0, %v2187
    %v2189 = vpop.f32.mrf.mxu0
    %2190 = vmatprep.mubr.f32.mxu0 0.0
    %2191 = vmatmul.mubr.f32.gmra.mxu0 %v1841
    %v2192 = vpop.f32.mrf.mxu0
    %v2193 = vadd.f32 0.0, %v2192
    %v2194 = vpop.f32.mrf.mxu0
    %2195 = vmatprep.mubr.f32.mxu0 0.0
    %2196 = vmatmul.mubr.f32.gmra.mxu0 %v1844
    %v2197 = vpop.f32.mrf.mxu0
    %v2198 = vadd.f32 0.0, %v2197
    %v2199 = vpop.f32.mrf.mxu0
    %2200 = vmatprep.mubr.f32.mxu0 0.0
    %2201 = vmatmul.mubr.f32.gmra.mxu0 %v1847
    %v2202 = vpop.f32.mrf.mxu0
    %v2203 = vadd.f32 0.0, %v2202
    %v2204 = vpop.f32.mrf.mxu0
    %2205 = vmatprep.mubr.f32.mxu0 0.0
    %2206 = vmatmul.mubr.f32.gmra.mxu0 %v1850
    %v2207 = vpop.f32.mrf.mxu0
    %v2208 = vadd.f32 0.0, %v2207
    %v2209 = vpop.f32.mrf.mxu0
    %2210 = vmatprep.mubr.f32.mxu0 0.0
    %2211 = vmatmul.mubr.f32.gmra.mxu0 %v1853
    %v2212 = vpop.f32.mrf.mxu0
    %v2213 = vadd.f32 0.0, %v2212
    %v2214 = vpop.f32.mrf.mxu0
    %2215 = vmatprep.mubr.f32.mxu0 0.0
    %2216 = vmatmul.mubr.f32.gmra.mxu0 %v1856
    %v2217 = vpop.f32.mrf.mxu0
    %v2218 = vadd.f32 0.0, %v2217
    %v2219 = vpop.f32.mrf.mxu0
    %2220 = vmatprep.mubr.f32.mxu0 0.0
    %2221 = vmatmul.mubr.f32.gmra.mxu0 %v1859
    %v2222 = vpop.f32.mrf.mxu0
    %v2223 = vadd.f32 0.0, %v2222
    %v2224 = vpop.f32.mrf.mxu0
    %2225 = vmatprep.mubr.f32.mxu0 0.0
    %2226 = vmatmul.mubr.f32.gmra.mxu0 %v1862
    %v2227 = vpop.f32.mrf.mxu0
    %v2228 = vadd.f32 0.0, %v2227
    %v2229 = vpop.f32.mrf.mxu0
    %2230 = vmatprep.mubr.f32.mxu0 0.0
    %2231 = vmatmul.mubr.f32.gmra.mxu0 %v1865
    %v2232 = vpop.f32.mrf.mxu0
    %v2233 = vadd.f32 0.0, %v2232
    %v2234 = vpop.f32.mrf.mxu0
    %2235 = vmatprep.mubr.f32.mxu0 0.0
    %2236 = vmatmul.mubr.f32.gmra.mxu0 %v1868
    %v2237 = vpop.f32.mrf.mxu0
    %v2238 = vadd.f32 0.0, %v2237
    %v2239 = vpop.f32.mrf.mxu0
    %2240 = vmatprep.mubr.f32.mxu0 0.0
    %2241 = vmatmul.mubr.f32.gmra.mxu0 %v1871
    %v2242 = vpop.f32.mrf.mxu0
    %v2243 = vadd.f32 0.0, %v2242
    %v2244 = vpop.f32.mrf.mxu0
    %2245 = vmatprep.mubr.f32.mxu0 0.0
    %2246 = vmatmul.mubr.f32.gmra.mxu0 %v1874
    %v2247 = vpop.f32.mrf.mxu0
    %v2248 = vadd.f32 0.0, %v2247
    %v2249 = vpop.f32.mrf.mxu0
    %2250 = vmatprep.mubr.f32.mxu0 0.0
    %2251 = vmatmul.mubr.f32.gmra.mxu0 %v1877
    %v2252 = vpop.f32.mrf.mxu0
    %v2253 = vadd.f32 0.0, %v2252
    %v2254 = vpop.f32.mrf.mxu0
    %2255 = vmatprep.mubr.f32.mxu0 0.0
    %2256 = vmatmul.mubr.f32.gmra.mxu0 %v1880
    %v2257 = vpop.f32.mrf.mxu0
    %v2258 = vadd.f32 0.0, %v2257
    %v2259 = vpop.f32.mrf.mxu0
    %2260 = vmatprep.mubr.f32.mxu0 0.0
    %2261 = vmatmul.mubr.f32.gmra.mxu0 %v1883
    %v2262 = vpop.f32.mrf.mxu0
    %v2263 = vadd.f32 0.0, %v2262
    %v2264 = vpop.f32.mrf.mxu0
    %2265 = vmatprep.mubr.f32.mxu0 0.0
    %2266 = vmatmul.mubr.f32.gmra.mxu0 %v1886
    %v2267 = vpop.f32.mrf.mxu0
    %v2268 = vadd.f32 0.0, %v2267
    %v2269 = vpop.f32.mrf.mxu0
    %2270 = vmatprep.mubr.f32.mxu0 0.0
    %2271 = vmatmul.mubr.f32.gmra.mxu0 %v1889
    %v2272 = vpop.f32.mrf.mxu0
    %v2273 = vadd.f32 0.0, %v2272
    %v2274 = vpop.f32.mrf.mxu0
    %2275 = vdwg.mxu0
    %v2276 = vsel %vm266, %v1958, -inf
    %v2277 = vrot.slane %v2276, 4
    %v2278 = vmax.f32 %v2276, %v2277
    %v2279 = vrot.slane %v2278, 2
    %v2280 = vmax.f32 %v2278, %v2279
    %v2281 = vrot.slane %v2280, 1
    %v2282 = vmax.f32 %v2280, %v2281
    %v2283 = vsel %vm266, %v1963, -inf
    %v2284 = vrot.slane %v2283, 4
    %v2285 = vmax.f32 %v2283, %v2284
    %v2286 = vrot.slane %v2285, 2
    %v2287 = vmax.f32 %v2285, %v2286
    %v2288 = vrot.slane %v2287, 1
    %v2289 = vmax.f32 %v2287, %v2288
    %v2290 = vsel %vm266, %v1968, -inf
    %v2291 = vrot.slane %v2290, 4
    %v2292 = vmax.f32 %v2290, %v2291
    %v2293 = vrot.slane %v2292, 2
    %v2294 = vmax.f32 %v2292, %v2293
    %v2295 = vrot.slane %v2294, 1
    %v2296 = vmax.f32 %v2294, %v2295
    %v2297 = vsel %vm266, %v1973, -inf
    %v2298 = vrot.slane %v2297, 4
    %v2299 = vmax.f32 %v2297, %v2298
    %v2300 = vrot.slane %v2299, 2
    %v2301 = vmax.f32 %v2299, %v2300
    %v2302 = vrot.slane %v2301, 1
    %v2303 = vmax.f32 %v2301, %v2302
    %v2304 = vsel %vm266, %v1978, -inf
    %v2305 = vrot.slane %v2304, 4
    %v2306 = vmax.f32 %v2304, %v2305
    %v2307 = vrot.slane %v2306, 2
    %v2308 = vmax.f32 %v2306, %v2307
    %v2309 = vrot.slane %v2308, 1
    %v2310 = vmax.f32 %v2308, %v2309
    %v2311 = vsel %vm266, %v1983, -inf
    %v2312 = vrot.slane %v2311, 4
    %v2313 = vmax.f32 %v2311, %v2312
    %v2314 = vrot.slane %v2313, 2
    %v2315 = vmax.f32 %v2313, %v2314
    %v2316 = vrot.slane %v2315, 1
    %v2317 = vmax.f32 %v2315, %v2316
    %v2318 = vsel %vm266, %v1988, -inf
    %v2319 = vrot.slane %v2318, 4
    %v2320 = vmax.f32 %v2318, %v2319
    %v2321 = vrot.slane %v2320, 2
    %v2322 = vmax.f32 %v2320, %v2321
    %v2323 = vrot.slane %v2322, 1
    %v2324 = vmax.f32 %v2322, %v2323
    %v2325 = vsel %vm266, %v1993, -inf
    %v2326 = vrot.slane %v2325, 4
    %v2327 = vmax.f32 %v2325, %v2326
    %v2328 = vrot.slane %v2327, 2
    %v2329 = vmax.f32 %v2327, %v2328
    %v2330 = vrot.slane %v2329, 1
    %v2331 = vmax.f32 %v2329, %v2330
    %v2332 = vsel %vm266, %v1998, -inf
    %v2333 = vrot.slane %v2332, 4
    %v2334 = vmax.f32 %v2332, %v2333
    %v2335 = vrot.slane %v2334, 2
    %v2336 = vmax.f32 %v2334, %v2335
    %v2337 = vrot.slane %v2336, 1
    %v2338 = vmax.f32 %v2336, %v2337
    %v2339 = vsel %vm266, %v2003, -inf
    %v2340 = vrot.slane %v2339, 4
    %v2341 = vmax.f32 %v2339, %v2340
    %v2342 = vrot.slane %v2341, 2
    %v2343 = vmax.f32 %v2341, %v2342
    %v2344 = vrot.slane %v2343, 1
    %v2345 = vmax.f32 %v2343, %v2344
    %v2346 = vsel %vm266, %v2008, -inf
    %v2347 = vrot.slane %v2346, 4
    %v2348 = vmax.f32 %v2346, %v2347
    %v2349 = vrot.slane %v2348, 2
    %v2350 = vmax.f32 %v2348, %v2349
    %v2351 = vrot.slane %v2350, 1
    %v2352 = vmax.f32 %v2350, %v2351
    %v2353 = vsel %vm266, %v2013, -inf
    %v2354 = vrot.slane %v2353, 4
    %v2355 = vmax.f32 %v2353, %v2354
    %v2356 = vrot.slane %v2355, 2
    %v2357 = vmax.f32 %v2355, %v2356
    %v2358 = vrot.slane %v2357, 1
    %v2359 = vmax.f32 %v2357, %v2358
    %v2360 = vsel %vm266, %v2018, -inf
    %v2361 = vrot.slane %v2360, 4
    %v2362 = vmax.f32 %v2360, %v2361
    %v2363 = vrot.slane %v2362, 2
    %v2364 = vmax.f32 %v2362, %v2363
    %v2365 = vrot.slane %v2364, 1
    %v2366 = vmax.f32 %v2364, %v2365
    %v2367 = vsel %vm266, %v2023, -inf
    %v2368 = vrot.slane %v2367, 4
    %v2369 = vmax.f32 %v2367, %v2368
    %v2370 = vrot.slane %v2369, 2
    %v2371 = vmax.f32 %v2369, %v2370
    %v2372 = vrot.slane %v2371, 1
    %v2373 = vmax.f32 %v2371, %v2372
    %v2374 = vsel %vm266, %v2028, -inf
    %v2375 = vrot.slane %v2374, 4
    %v2376 = vmax.f32 %v2374, %v2375
    %v2377 = vrot.slane %v2376, 2
    %v2378 = vmax.f32 %v2376, %v2377
    %v2379 = vrot.slane %v2378, 1
    %v2380 = vmax.f32 %v2378, %v2379
    %v2381 = vsel %vm266, %v2033, -inf
    %v2382 = vrot.slane %v2381, 4
    %v2383 = vmax.f32 %v2381, %v2382
    %v2384 = vrot.slane %v2383, 2
    %v2385 = vmax.f32 %v2383, %v2384
    %v2386 = vrot.slane %v2385, 1
    %v2387 = vmax.f32 %v2385, %v2386
    %v2388 = vsel %vm266, %v2038, -inf
    %v2389 = vrot.slane %v2388, 4
    %v2390 = vmax.f32 %v2388, %v2389
    %v2391 = vrot.slane %v2390, 2
    %v2392 = vmax.f32 %v2390, %v2391
    %v2393 = vrot.slane %v2392, 1
    %v2394 = vmax.f32 %v2392, %v2393
    %v2395 = vsel %vm266, %v2043, -inf
    %v2396 = vrot.slane %v2395, 4
    %v2397 = vmax.f32 %v2395, %v2396
    %v2398 = vrot.slane %v2397, 2
    %v2399 = vmax.f32 %v2397, %v2398
    %v2400 = vrot.slane %v2399, 1
    %v2401 = vmax.f32 %v2399, %v2400
    %v2402 = vsel %vm266, %v2048, -inf
    %v2403 = vrot.slane %v2402, 4
    %v2404 = vmax.f32 %v2402, %v2403
    %v2405 = vrot.slane %v2404, 2
    %v2406 = vmax.f32 %v2404, %v2405
    %v2407 = vrot.slane %v2406, 1
    %v2408 = vmax.f32 %v2406, %v2407
    %v2409 = vsel %vm266, %v2053, -inf
    %v2410 = vrot.slane %v2409, 4
    %v2411 = vmax.f32 %v2409, %v2410
    %v2412 = vrot.slane %v2411, 2
    %v2413 = vmax.f32 %v2411, %v2412
    %v2414 = vrot.slane %v2413, 1
    %v2415 = vmax.f32 %v2413, %v2414
    %v2416 = vsel %vm266, %v2058, -inf
    %v2417 = vrot.slane %v2416, 4
    %v2418 = vmax.f32 %v2416, %v2417
    %v2419 = vrot.slane %v2418, 2
    %v2420 = vmax.f32 %v2418, %v2419
    %v2421 = vrot.slane %v2420, 1
    %v2422 = vmax.f32 %v2420, %v2421
    %v2423 = vsel %vm266, %v2063, -inf
    %v2424 = vrot.slane %v2423, 4
    %v2425 = vmax.f32 %v2423, %v2424
    %v2426 = vrot.slane %v2425, 2
    %v2427 = vmax.f32 %v2425, %v2426
    %v2428 = vrot.slane %v2427, 1
    %v2429 = vmax.f32 %v2427, %v2428
    %v2430 = vsel %vm266, %v2068, -inf
    %v2431 = vrot.slane %v2430, 4
    %v2432 = vmax.f32 %v2430, %v2431
    %v2433 = vrot.slane %v2432, 2
    %v2434 = vmax.f32 %v2432, %v2433
    %v2435 = vrot.slane %v2434, 1
    %v2436 = vmax.f32 %v2434, %v2435
    %v2437 = vsel %vm266, %v2073, -inf
    %v2438 = vrot.slane %v2437, 4
    %v2439 = vmax.f32 %v2437, %v2438
    %v2440 = vrot.slane %v2439, 2
    %v2441 = vmax.f32 %v2439, %v2440
    %v2442 = vrot.slane %v2441, 1
    %v2443 = vmax.f32 %v2441, %v2442
    %v2444 = vsel %vm266, %v2078, -inf
    %v2445 = vrot.slane %v2444, 4
    %v2446 = vmax.f32 %v2444, %v2445
    %v2447 = vrot.slane %v2446, 2
    %v2448 = vmax.f32 %v2446, %v2447
    %v2449 = vrot.slane %v2448, 1
    %v2450 = vmax.f32 %v2448, %v2449
    %v2451 = vsel %vm266, %v2083, -inf
    %v2452 = vrot.slane %v2451, 4
    %v2453 = vmax.f32 %v2451, %v2452
    %v2454 = vrot.slane %v2453, 2
    %v2455 = vmax.f32 %v2453, %v2454
    %v2456 = vrot.slane %v2455, 1
    %v2457 = vmax.f32 %v2455, %v2456
    %v2458 = vsel %vm266, %v2088, -inf
    %v2459 = vrot.slane %v2458, 4
    %v2460 = vmax.f32 %v2458, %v2459
    %v2461 = vrot.slane %v2460, 2
    %v2462 = vmax.f32 %v2460, %v2461
    %v2463 = vrot.slane %v2462, 1
    %v2464 = vmax.f32 %v2462, %v2463
    %v2465 = vsel %vm266, %v2093, -inf
    %v2466 = vrot.slane %v2465, 4
    %v2467 = vmax.f32 %v2465, %v2466
    %v2468 = vrot.slane %v2467, 2
    %v2469 = vmax.f32 %v2467, %v2468
    %v2470 = vrot.slane %v2469, 1
    %v2471 = vmax.f32 %v2469, %v2470
    %v2472 = vsel %vm266, %v2098, -inf
    %v2473 = vrot.slane %v2472, 4
    %v2474 = vmax.f32 %v2472, %v2473
    %v2475 = vrot.slane %v2474, 2
    %v2476 = vmax.f32 %v2474, %v2475
    %v2477 = vrot.slane %v2476, 1
    %v2478 = vmax.f32 %v2476, %v2477
    %v2479 = vsel %vm266, %v2103, -inf
    %v2480 = vrot.slane %v2479, 4
    %v2481 = vmax.f32 %v2479, %v2480
    %v2482 = vrot.slane %v2481, 2
    %v2483 = vmax.f32 %v2481, %v2482
    %v2484 = vrot.slane %v2483, 1
    %v2485 = vmax.f32 %v2483, %v2484
    %v2486 = vsel %vm266, %v2108, -inf
    %v2487 = vrot.slane %v2486, 4
    %v2488 = vmax.f32 %v2486, %v2487
    %v2489 = vrot.slane %v2488, 2
    %v2490 = vmax.f32 %v2488, %v2489
    %v2491 = vrot.slane %v2490, 1
    %v2492 = vmax.f32 %v2490, %v2491
    %v2493 = vsel %vm266, %v2113, -inf
    %v2494 = vrot.slane %v2493, 4
    %v2495 = vmax.f32 %v2493, %v2494
    %v2496 = vrot.slane %v2495, 2
    %v2497 = vmax.f32 %v2495, %v2496
    %v2498 = vrot.slane %v2497, 1
    %v2499 = vmax.f32 %v2497, %v2498
    %v2500 = vsel %vm266, %v2118, -inf
    %v2501 = vrot.slane %v2500, 4
    %v2502 = vmax.f32 %v2500, %v2501
    %v2503 = vrot.slane %v2502, 2
    %v2504 = vmax.f32 %v2502, %v2503
    %v2505 = vrot.slane %v2504, 1
    %v2506 = vmax.f32 %v2504, %v2505
    %v2507 = vsel %vm266, %v2123, -inf
    %v2508 = vrot.slane %v2507, 4
    %v2509 = vmax.f32 %v2507, %v2508
    %v2510 = vrot.slane %v2509, 2
    %v2511 = vmax.f32 %v2509, %v2510
    %v2512 = vrot.slane %v2511, 1
    %v2513 = vmax.f32 %v2511, %v2512
    %v2514 = vsel %vm266, %v2128, -inf
    %v2515 = vrot.slane %v2514, 4
    %v2516 = vmax.f32 %v2514, %v2515
    %v2517 = vrot.slane %v2516, 2
    %v2518 = vmax.f32 %v2516, %v2517
    %v2519 = vrot.slane %v2518, 1
    %v2520 = vmax.f32 %v2518, %v2519
    %v2521 = vsel %vm266, %v2133, -inf
    %v2522 = vrot.slane %v2521, 4
    %v2523 = vmax.f32 %v2521, %v2522
    %v2524 = vrot.slane %v2523, 2
    %v2525 = vmax.f32 %v2523, %v2524
    %v2526 = vrot.slane %v2525, 1
    %v2527 = vmax.f32 %v2525, %v2526
    %v2528 = vsel %vm266, %v2138, -inf
    %v2529 = vrot.slane %v2528, 4
    %v2530 = vmax.f32 %v2528, %v2529
    %v2531 = vrot.slane %v2530, 2
    %v2532 = vmax.f32 %v2530, %v2531
    %v2533 = vrot.slane %v2532, 1
    %v2534 = vmax.f32 %v2532, %v2533
    %v2535 = vsel %vm266, %v2143, -inf
    %v2536 = vrot.slane %v2535, 4
    %v2537 = vmax.f32 %v2535, %v2536
    %v2538 = vrot.slane %v2537, 2
    %v2539 = vmax.f32 %v2537, %v2538
    %v2540 = vrot.slane %v2539, 1
    %v2541 = vmax.f32 %v2539, %v2540
    %v2542 = vsel %vm266, %v2148, -inf
    %v2543 = vrot.slane %v2542, 4
    %v2544 = vmax.f32 %v2542, %v2543
    %v2545 = vrot.slane %v2544, 2
    %v2546 = vmax.f32 %v2544, %v2545
    %v2547 = vrot.slane %v2546, 1
    %v2548 = vmax.f32 %v2546, %v2547
    %v2549 = vsel %vm266, %v2153, -inf
    %v2550 = vrot.slane %v2549, 4
    %v2551 = vmax.f32 %v2549, %v2550
    %v2552 = vrot.slane %v2551, 2
    %v2553 = vmax.f32 %v2551, %v2552
    %v2554 = vrot.slane %v2553, 1
    %v2555 = vmax.f32 %v2553, %v2554
    %v2556 = vsel %vm266, %v2158, -inf
    %v2557 = vrot.slane %v2556, 4
    %v2558 = vmax.f32 %v2556, %v2557
    %v2559 = vrot.slane %v2558, 2
    %v2560 = vmax.f32 %v2558, %v2559
    %v2561 = vrot.slane %v2560, 1
    %v2562 = vmax.f32 %v2560, %v2561
    %v2563 = vsel %vm266, %v2163, -inf
    %v2564 = vrot.slane %v2563, 4
    %v2565 = vmax.f32 %v2563, %v2564
    %v2566 = vrot.slane %v2565, 2
    %v2567 = vmax.f32 %v2565, %v2566
    %v2568 = vrot.slane %v2567, 1
    %v2569 = vmax.f32 %v2567, %v2568
    %v2570 = vsel %vm266, %v2168, -inf
    %v2571 = vrot.slane %v2570, 4
    %v2572 = vmax.f32 %v2570, %v2571
    %v2573 = vrot.slane %v2572, 2
    %v2574 = vmax.f32 %v2572, %v2573
    %v2575 = vrot.slane %v2574, 1
    %v2576 = vmax.f32 %v2574, %v2575
    %v2577 = vsel %vm266, %v2173, -inf
    %v2578 = vrot.slane %v2577, 4
    %v2579 = vmax.f32 %v2577, %v2578
    %v2580 = vrot.slane %v2579, 2
    %v2581 = vmax.f32 %v2579, %v2580
    %v2582 = vrot.slane %v2581, 1
    %v2583 = vmax.f32 %v2581, %v2582
    %v2584 = vsel %vm266, %v2178, -inf
    %v2585 = vrot.slane %v2584, 4
    %v2586 = vmax.f32 %v2584, %v2585
    %v2587 = vrot.slane %v2586, 2
    %v2588 = vmax.f32 %v2586, %v2587
    %v2589 = vrot.slane %v2588, 1
    %v2590 = vmax.f32 %v2588, %v2589
    %v2591 = vsel %vm266, %v2183, -inf
    %v2592 = vrot.slane %v2591, 4
    %v2593 = vmax.f32 %v2591, %v2592
    %v2594 = vrot.slane %v2593, 2
    %v2595 = vmax.f32 %v2593, %v2594
    %v2596 = vrot.slane %v2595, 1
    %v2597 = vmax.f32 %v2595, %v2596
    %v2598 = vsel %vm266, %v2188, -inf
    %v2599 = vrot.slane %v2598, 4
    %v2600 = vmax.f32 %v2598, %v2599
    %v2601 = vrot.slane %v2600, 2
    %v2602 = vmax.f32 %v2600, %v2601
    %v2603 = vrot.slane %v2602, 1
    %v2604 = vmax.f32 %v2602, %v2603
    %v2605 = vsel %vm266, %v2193, -inf
    %v2606 = vrot.slane %v2605, 4
    %v2607 = vmax.f32 %v2605, %v2606
    %v2608 = vrot.slane %v2607, 2
    %v2609 = vmax.f32 %v2607, %v2608
    %v2610 = vrot.slane %v2609, 1
    %v2611 = vmax.f32 %v2609, %v2610
    %v2612 = vsel %vm266, %v2198, -inf
    %v2613 = vrot.slane %v2612, 4
    %v2614 = vmax.f32 %v2612, %v2613
    %v2615 = vrot.slane %v2614, 2
    %v2616 = vmax.f32 %v2614, %v2615
    %v2617 = vrot.slane %v2616, 1
    %v2618 = vmax.f32 %v2616, %v2617
    %v2619 = vsel %vm266, %v2203, -inf
    %v2620 = vrot.slane %v2619, 4
    %v2621 = vmax.f32 %v2619, %v2620
    %v2622 = vrot.slane %v2621, 2
    %v2623 = vmax.f32 %v2621, %v2622
    %v2624 = vrot.slane %v2623, 1
    %v2625 = vmax.f32 %v2623, %v2624
    %v2626 = vsel %vm266, %v2208, -inf
    %v2627 = vrot.slane %v2626, 4
    %v2628 = vmax.f32 %v2626, %v2627
    %v2629 = vrot.slane %v2628, 2
    %v2630 = vmax.f32 %v2628, %v2629
    %v2631 = vrot.slane %v2630, 1
    %v2632 = vmax.f32 %v2630, %v2631
    %v2633 = vsel %vm266, %v2213, -inf
    %v2634 = vrot.slane %v2633, 4
    %v2635 = vmax.f32 %v2633, %v2634
    %v2636 = vrot.slane %v2635, 2
    %v2637 = vmax.f32 %v2635, %v2636
    %v2638 = vrot.slane %v2637, 1
    %v2639 = vmax.f32 %v2637, %v2638
    %v2640 = vsel %vm266, %v2218, -inf
    %v2641 = vrot.slane %v2640, 4
    %v2642 = vmax.f32 %v2640, %v2641
    %v2643 = vrot.slane %v2642, 2
    %v2644 = vmax.f32 %v2642, %v2643
    %v2645 = vrot.slane %v2644, 1
    %v2646 = vmax.f32 %v2644, %v2645
    %v2647 = vsel %vm266, %v2223, -inf
    %v2648 = vrot.slane %v2647, 4
    %v2649 = vmax.f32 %v2647, %v2648
    %v2650 = vrot.slane %v2649, 2
    %v2651 = vmax.f32 %v2649, %v2650
    %v2652 = vrot.slane %v2651, 1
    %v2653 = vmax.f32 %v2651, %v2652
    %v2654 = vsel %vm266, %v2228, -inf
    %v2655 = vrot.slane %v2654, 4
    %v2656 = vmax.f32 %v2654, %v2655
    %v2657 = vrot.slane %v2656, 2
    %v2658 = vmax.f32 %v2656, %v2657
    %v2659 = vrot.slane %v2658, 1
    %v2660 = vmax.f32 %v2658, %v2659
    %v2661 = vsel %vm266, %v2233, -inf
    %v2662 = vrot.slane %v2661, 4
    %v2663 = vmax.f32 %v2661, %v2662
    %v2664 = vrot.slane %v2663, 2
    %v2665 = vmax.f32 %v2663, %v2664
    %v2666 = vrot.slane %v2665, 1
    %v2667 = vmax.f32 %v2665, %v2666
    %v2668 = vsel %vm266, %v2238, -inf
    %v2669 = vrot.slane %v2668, 4
    %v2670 = vmax.f32 %v2668, %v2669
    %v2671 = vrot.slane %v2670, 2
    %v2672 = vmax.f32 %v2670, %v2671
    %v2673 = vrot.slane %v2672, 1
    %v2674 = vmax.f32 %v2672, %v2673
    %v2675 = vsel %vm266, %v2243, -inf
    %v2676 = vrot.slane %v2675, 4
    %v2677 = vmax.f32 %v2675, %v2676
    %v2678 = vrot.slane %v2677, 2
    %v2679 = vmax.f32 %v2677, %v2678
    %v2680 = vrot.slane %v2679, 1
    %v2681 = vmax.f32 %v2679, %v2680
    %v2682 = vsel %vm266, %v2248, -inf
    %v2683 = vrot.slane %v2682, 4
    %v2684 = vmax.f32 %v2682, %v2683
    %v2685 = vrot.slane %v2684, 2
    %v2686 = vmax.f32 %v2684, %v2685
    %v2687 = vrot.slane %v2686, 1
    %v2688 = vmax.f32 %v2686, %v2687
    %v2689 = vsel %vm266, %v2253, -inf
    %v2690 = vrot.slane %v2689, 4
    %v2691 = vmax.f32 %v2689, %v2690
    %v2692 = vrot.slane %v2691, 2
    %v2693 = vmax.f32 %v2691, %v2692
    %v2694 = vrot.slane %v2693, 1
    %v2695 = vmax.f32 %v2693, %v2694
    %v2696 = vsel %vm266, %v2258, -inf
    %v2697 = vrot.slane %v2696, 4
    %v2698 = vmax.f32 %v2696, %v2697
    %v2699 = vrot.slane %v2698, 2
    %v2700 = vmax.f32 %v2698, %v2699
    %v2701 = vrot.slane %v2700, 1
    %v2702 = vmax.f32 %v2700, %v2701
    %v2703 = vsel %vm266, %v2263, -inf
    %v2704 = vrot.slane %v2703, 4
    %v2705 = vmax.f32 %v2703, %v2704
    %v2706 = vrot.slane %v2705, 2
    %v2707 = vmax.f32 %v2705, %v2706
    %v2708 = vrot.slane %v2707, 1
    %v2709 = vmax.f32 %v2707, %v2708
    %v2710 = vsel %vm266, %v2268, -inf
    %v2711 = vrot.slane %v2710, 4
    %v2712 = vmax.f32 %v2710, %v2711
    %v2713 = vrot.slane %v2712, 2
    %v2714 = vmax.f32 %v2712, %v2713
    %v2715 = vrot.slane %v2714, 1
    %v2716 = vmax.f32 %v2714, %v2715
    %v2717 = vsel %vm266, %v2273, -inf
    %v2718 = vrot.slane %v2717, 4
    %v2719 = vmax.f32 %v2717, %v2718
    %v2720 = vrot.slane %v2719, 2
    %v2721 = vmax.f32 %v2719, %v2720
    %v2722 = vrot.slane %v2721, 1
    %v2723 = vmax.f32 %v2721, %v2722
    %v2724 = vsub.f32 %v1958, %v2282
    %v2725 = vsub.f32 %v1963, %v2289
    %v2726 = vsub.f32 %v1968, %v2296
    %v2727 = vsub.f32 %v1973, %v2303
    %v2728 = vsub.f32 %v1978, %v2310
    %v2729 = vsub.f32 %v1983, %v2317
    %v2730 = vsub.f32 %v1988, %v2324
    %v2731 = vsub.f32 %v1993, %v2331
    %v2732 = vsub.f32 %v1998, %v2338
    %v2733 = vsub.f32 %v2003, %v2345
    %v2734 = vsub.f32 %v2008, %v2352
    %v2735 = vsub.f32 %v2013, %v2359
    %v2736 = vsub.f32 %v2018, %v2366
    %v2737 = vsub.f32 %v2023, %v2373
    %v2738 = vsub.f32 %v2028, %v2380
    %v2739 = vsub.f32 %v2033, %v2387
    %v2740 = vsub.f32 %v2038, %v2394
    %v2741 = vsub.f32 %v2043, %v2401
    %v2742 = vsub.f32 %v2048, %v2408
    %v2743 = vsub.f32 %v2053, %v2415
    %v2744 = vsub.f32 %v2058, %v2422
    %v2745 = vsub.f32 %v2063, %v2429
    %v2746 = vsub.f32 %v2068, %v2436
    %v2747 = vsub.f32 %v2073, %v2443
    %v2748 = vsub.f32 %v2078, %v2450
    %v2749 = vsub.f32 %v2083, %v2457
    %v2750 = vsub.f32 %v2088, %v2464
    %v2751 = vsub.f32 %v2093, %v2471
    %v2752 = vsub.f32 %v2098, %v2478
    %v2753 = vsub.f32 %v2103, %v2485
    %v2754 = vsub.f32 %v2108, %v2492
    %v2755 = vsub.f32 %v2113, %v2499
    %v2756 = vsub.f32 %v2118, %v2506
    %v2757 = vsub.f32 %v2123, %v2513
    %v2758 = vsub.f32 %v2128, %v2520
    %v2759 = vsub.f32 %v2133, %v2527
    %v2760 = vsub.f32 %v2138, %v2534
    %v2761 = vsub.f32 %v2143, %v2541
    %v2762 = vsub.f32 %v2148, %v2548
    %v2763 = vsub.f32 %v2153, %v2555
    %v2764 = vsub.f32 %v2158, %v2562
    %v2765 = vsub.f32 %v2163, %v2569
    %v2766 = vsub.f32 %v2168, %v2576
    %v2767 = vsub.f32 %v2173, %v2583
    %v2768 = vsub.f32 %v2178, %v2590
    %v2769 = vsub.f32 %v2183, %v2597
    %v2770 = vsub.f32 %v2188, %v2604
    %v2771 = vsub.f32 %v2193, %v2611
    %v2772 = vsub.f32 %v2198, %v2618
    %v2773 = vsub.f32 %v2203, %v2625
    %v2774 = vsub.f32 %v2208, %v2632
    %v2775 = vsub.f32 %v2213, %v2639
    %v2776 = vsub.f32 %v2218, %v2646
    %v2777 = vsub.f32 %v2223, %v2653
    %v2778 = vsub.f32 %v2228, %v2660
    %v2779 = vsub.f32 %v2233, %v2667
    %v2780 = vsub.f32 %v2238, %v2674
    %v2781 = vsub.f32 %v2243, %v2681
    %v2782 = vsub.f32 %v2248, %v2688
    %v2783 = vsub.f32 %v2253, %v2695
    %v2784 = vsub.f32 %v2258, %v2702
    %v2785 = vsub.f32 %v2263, %v2709
    %v2786 = vsub.f32 %v2268, %v2716
    %v2787 = vsub.f32 %v2273, %v2723
    %v2788 = vmul.f32 %v2724, 1.442695
    %v2789 = vpow.pop %v2788
    %v2790 = vmul.f32 %v2725, 1.442695
    %v2791 = vpow.pop %v2790
    %v2792 = vmul.f32 %v2726, 1.442695
    %v2793 = vpow.pop %v2792
    %v2794 = vmul.f32 %v2727, 1.442695
    %v2795 = vpow.pop %v2794
    %v2796 = vmul.f32 %v2728, 1.442695
    %v2797 = vpow.pop %v2796
    %v2798 = vmul.f32 %v2729, 1.442695
    %v2799 = vpow.pop %v2798
    %v2800 = vmul.f32 %v2730, 1.442695
    %v2801 = vpow.pop %v2800
    %v2802 = vmul.f32 %v2731, 1.442695
    %v2803 = vpow.pop %v2802
    %v2804 = vmul.f32 %v2732, 1.442695
    %v2805 = vpow.pop %v2804
    %v2806 = vmul.f32 %v2733, 1.442695
    %v2807 = vpow.pop %v2806
    %v2808 = vmul.f32 %v2734, 1.442695
    %v2809 = vpow.pop %v2808
    %v2810 = vmul.f32 %v2735, 1.442695
    %v2811 = vpow.pop %v2810
    %v2812 = vmul.f32 %v2736, 1.442695
    %v2813 = vpow.pop %v2812
    %v2814 = vmul.f32 %v2737, 1.442695
    %v2815 = vpow.pop %v2814
    %v2816 = vmul.f32 %v2738, 1.442695
    %v2817 = vpow.pop %v2816
    %v2818 = vmul.f32 %v2739, 1.442695
    %v2819 = vpow.pop %v2818
    %v2820 = vmul.f32 %v2740, 1.442695
    %v2821 = vpow.pop %v2820
    %v2822 = vmul.f32 %v2741, 1.442695
    %v2823 = vpow.pop %v2822
    %v2824 = vmul.f32 %v2742, 1.442695
    %v2825 = vpow.pop %v2824
    %v2826 = vmul.f32 %v2743, 1.442695
    %v2827 = vpow.pop %v2826
    %v2828 = vmul.f32 %v2744, 1.442695
    %v2829 = vpow.pop %v2828
    %v2830 = vmul.f32 %v2745, 1.442695
    %v2831 = vpow.pop %v2830
    %v2832 = vmul.f32 %v2746, 1.442695
    %v2833 = vpow.pop %v2832
    %v2834 = vmul.f32 %v2747, 1.442695
    %v2835 = vpow.pop %v2834
    %v2836 = vmul.f32 %v2748, 1.442695
    %v2837 = vpow.pop %v2836
    %v2838 = vmul.f32 %v2749, 1.442695
    %v2839 = vpow.pop %v2838
    %v2840 = vmul.f32 %v2750, 1.442695
    %v2841 = vpow.pop %v2840
    %v2842 = vmul.f32 %v2751, 1.442695
    %v2843 = vpow.pop %v2842
    %v2844 = vmul.f32 %v2752, 1.442695
    %v2845 = vpow.pop %v2844
    %v2846 = vmul.f32 %v2753, 1.442695
    %v2847 = vpow.pop %v2846
    %v2848 = vmul.f32 %v2754, 1.442695
    %v2849 = vpow.pop %v2848
    %v2850 = vmul.f32 %v2755, 1.442695
    %v2851 = vpow.pop %v2850
    %v2852 = vmul.f32 %v2756, 1.442695
    %v2853 = vpow.pop %v2852
    %v2854 = vmul.f32 %v2757, 1.442695
    %v2855 = vpow.pop %v2854
    %v2856 = vmul.f32 %v2758, 1.442695
    %v2857 = vpow.pop %v2856
    %v2858 = vmul.f32 %v2759, 1.442695
    %v2859 = vpow.pop %v2858
    %v2860 = vmul.f32 %v2760, 1.442695
    %v2861 = vpow.pop %v2860
    %v2862 = vmul.f32 %v2761, 1.442695
    %v2863 = vpow.pop %v2862
    %v2864 = vmul.f32 %v2762, 1.442695
    %v2865 = vpow.pop %v2864
    %v2866 = vmul.f32 %v2763, 1.442695
    %v2867 = vpow.pop %v2866
    %v2868 = vmul.f32 %v2764, 1.442695
    %v2869 = vpow.pop %v2868
    %v2870 = vmul.f32 %v2765, 1.442695
    %v2871 = vpow.pop %v2870
    %v2872 = vmul.f32 %v2766, 1.442695
    %v2873 = vpow.pop %v2872
    %v2874 = vmul.f32 %v2767, 1.442695
    %v2875 = vpow.pop %v2874
    %v2876 = vmul.f32 %v2768, 1.442695
    %v2877 = vpow.pop %v2876
    %v2878 = vmul.f32 %v2769, 1.442695
    %v2879 = vpow.pop %v2878
    %v2880 = vmul.f32 %v2770, 1.442695
    %v2881 = vpow.pop %v2880
    %v2882 = vmul.f32 %v2771, 1.442695
    %v2883 = vpow.pop %v2882
    %v2884 = vmul.f32 %v2772, 1.442695
    %v2885 = vpow.pop %v2884
    %v2886 = vmul.f32 %v2773, 1.442695
    %v2887 = vpow.pop %v2886
    %v2888 = vmul.f32 %v2774, 1.442695
    %v2889 = vpow.pop %v2888
    %v2890 = vmul.f32 %v2775, 1.442695
    %v2891 = vpow.pop %v2890
    %v2892 = vmul.f32 %v2776, 1.442695
    %v2893 = vpow.pop %v2892
    %v2894 = vmul.f32 %v2777, 1.442695
    %v2895 = vpow.pop %v2894
    %v2896 = vmul.f32 %v2778, 1.442695
    %v2897 = vpow.pop %v2896
    %v2898 = vmul.f32 %v2779, 1.442695
    %v2899 = vpow.pop %v2898
    %v2900 = vmul.f32 %v2780, 1.442695
    %v2901 = vpow.pop %v2900
    %v2902 = vmul.f32 %v2781, 1.442695
    %v2903 = vpow.pop %v2902
    %v2904 = vmul.f32 %v2782, 1.442695
    %v2905 = vpow.pop %v2904
    %v2906 = vmul.f32 %v2783, 1.442695
    %v2907 = vpow.pop %v2906
    %v2908 = vmul.f32 %v2784, 1.442695
    %v2909 = vpow.pop %v2908
    %v2910 = vmul.f32 %v2785, 1.442695
    %v2911 = vpow.pop %v2910
    %v2912 = vmul.f32 %v2786, 1.442695
    %v2913 = vpow.pop %v2912
    %v2914 = vmul.f32 %v2787, 1.442695
    %v2915 = vpow.pop %v2914
    %v2916 = vsel %vm266, %v2789, 0.0
    %v2917 = vrot.slane %v2916, 4
    %v2918 = vadd.f32 %v2916, %v2917
    %v2919 = vrot.slane %v2918, 2
    %v2920 = vadd.f32 %v2918, %v2919
    %v2921 = vrot.slane %v2920, 1
    %v2922 = vadd.f32 %v2920, %v2921
    %v2923 = vsel %vm266, %v2791, 0.0
    %v2924 = vrot.slane %v2923, 4
    %v2925 = vadd.f32 %v2923, %v2924
    %v2926 = vrot.slane %v2925, 2
    %v2927 = vadd.f32 %v2925, %v2926
    %v2928 = vrot.slane %v2927, 1
    %v2929 = vadd.f32 %v2927, %v2928
    %v2930 = vsel %vm266, %v2793, 0.0
    %v2931 = vrot.slane %v2930, 4
    %v2932 = vadd.f32 %v2930, %v2931
    %v2933 = vrot.slane %v2932, 2
    %v2934 = vadd.f32 %v2932, %v2933
    %v2935 = vrot.slane %v2934, 1
    %v2936 = vadd.f32 %v2934, %v2935
    %v2937 = vsel %vm266, %v2795, 0.0
    %v2938 = vrot.slane %v2937, 4
    %v2939 = vadd.f32 %v2937, %v2938
    %v2940 = vrot.slane %v2939, 2
    %v2941 = vadd.f32 %v2939, %v2940
    %v2942 = vrot.slane %v2941, 1
    %v2943 = vadd.f32 %v2941, %v2942
    %v2944 = vsel %vm266, %v2797, 0.0
    %v2945 = vrot.slane %v2944, 4
    %v2946 = vadd.f32 %v2944, %v2945
    %v2947 = vrot.slane %v2946, 2
    %v2948 = vadd.f32 %v2946, %v2947
    %v2949 = vrot.slane %v2948, 1
    %v2950 = vadd.f32 %v2948, %v2949
    %v2951 = vsel %vm266, %v2799, 0.0
    %v2952 = vrot.slane %v2951, 4
    %v2953 = vadd.f32 %v2951, %v2952
    %v2954 = vrot.slane %v2953, 2
    %v2955 = vadd.f32 %v2953, %v2954
    %v2956 = vrot.slane %v2955, 1
    %v2957 = vadd.f32 %v2955, %v2956
    %v2958 = vsel %vm266, %v2801, 0.0
    %v2959 = vrot.slane %v2958, 4
    %v2960 = vadd.f32 %v2958, %v2959
    %v2961 = vrot.slane %v2960, 2
    %v2962 = vadd.f32 %v2960, %v2961
    %v2963 = vrot.slane %v2962, 1
    %v2964 = vadd.f32 %v2962, %v2963
    %v2965 = vsel %vm266, %v2803, 0.0
    %v2966 = vrot.slane %v2965, 4
    %v2967 = vadd.f32 %v2965, %v2966
    %v2968 = vrot.slane %v2967, 2
    %v2969 = vadd.f32 %v2967, %v2968
    %v2970 = vrot.slane %v2969, 1
    %v2971 = vadd.f32 %v2969, %v2970
    %v2972 = vsel %vm266, %v2805, 0.0
    %v2973 = vrot.slane %v2972, 4
    %v2974 = vadd.f32 %v2972, %v2973
    %v2975 = vrot.slane %v2974, 2
    %v2976 = vadd.f32 %v2974, %v2975
    %v2977 = vrot.slane %v2976, 1
    %v2978 = vadd.f32 %v2976, %v2977
    %v2979 = vsel %vm266, %v2807, 0.0
    %v2980 = vrot.slane %v2979, 4
    %v2981 = vadd.f32 %v2979, %v2980
    %v2982 = vrot.slane %v2981, 2
    %v2983 = vadd.f32 %v2981, %v2982
    %v2984 = vrot.slane %v2983, 1
    %v2985 = vadd.f32 %v2983, %v2984
    %v2986 = vsel %vm266, %v2809, 0.0
    %v2987 = vrot.slane %v2986, 4
    %v2988 = vadd.f32 %v2986, %v2987
    %v2989 = vrot.slane %v2988, 2
    %v2990 = vadd.f32 %v2988, %v2989
    %v2991 = vrot.slane %v2990, 1
    %v2992 = vadd.f32 %v2990, %v2991
    %v2993 = vsel %vm266, %v2811, 0.0
    %v2994 = vrot.slane %v2993, 4
    %v2995 = vadd.f32 %v2993, %v2994
    %v2996 = vrot.slane %v2995, 2
    %v2997 = vadd.f32 %v2995, %v2996
    %v2998 = vrot.slane %v2997, 1
    %v2999 = vadd.f32 %v2997, %v2998
    %v3000 = vsel %vm266, %v2813, 0.0
    %v3001 = vrot.slane %v3000, 4
    %v3002 = vadd.f32 %v3000, %v3001
    %v3003 = vrot.slane %v3002, 2
    %v3004 = vadd.f32 %v3002, %v3003
    %v3005 = vrot.slane %v3004, 1
    %v3006 = vadd.f32 %v3004, %v3005
    %v3007 = vsel %vm266, %v2815, 0.0
    %v3008 = vrot.slane %v3007, 4
    %v3009 = vadd.f32 %v3007, %v3008
    %v3010 = vrot.slane %v3009, 2
    %v3011 = vadd.f32 %v3009, %v3010
    %v3012 = vrot.slane %v3011, 1
    %v3013 = vadd.f32 %v3011, %v3012
    %v3014 = vsel %vm266, %v2817, 0.0
    %v3015 = vrot.slane %v3014, 4
    %v3016 = vadd.f32 %v3014, %v3015
    %v3017 = vrot.slane %v3016, 2
    %v3018 = vadd.f32 %v3016, %v3017
    %v3019 = vrot.slane %v3018, 1
    %v3020 = vadd.f32 %v3018, %v3019
    %v3021 = vsel %vm266, %v2819, 0.0
    %v3022 = vrot.slane %v3021, 4
    %v3023 = vadd.f32 %v3021, %v3022
    %v3024 = vrot.slane %v3023, 2
    %v3025 = vadd.f32 %v3023, %v3024
    %v3026 = vrot.slane %v3025, 1
    %v3027 = vadd.f32 %v3025, %v3026
    %v3028 = vsel %vm266, %v2821, 0.0
    %v3029 = vrot.slane %v3028, 4
    %v3030 = vadd.f32 %v3028, %v3029
    %v3031 = vrot.slane %v3030, 2
    %v3032 = vadd.f32 %v3030, %v3031
    %v3033 = vrot.slane %v3032, 1
    %v3034 = vadd.f32 %v3032, %v3033
    %v3035 = vsel %vm266, %v2823, 0.0
    %v3036 = vrot.slane %v3035, 4
    %v3037 = vadd.f32 %v3035, %v3036
    %v3038 = vrot.slane %v3037, 2
    %v3039 = vadd.f32 %v3037, %v3038
    %v3040 = vrot.slane %v3039, 1
    %v3041 = vadd.f32 %v3039, %v3040
    %v3042 = vsel %vm266, %v2825, 0.0
    %v3043 = vrot.slane %v3042, 4
    %v3044 = vadd.f32 %v3042, %v3043
    %v3045 = vrot.slane %v3044, 2
    %v3046 = vadd.f32 %v3044, %v3045
    %v3047 = vrot.slane %v3046, 1
    %v3048 = vadd.f32 %v3046, %v3047
    %v3049 = vsel %vm266, %v2827, 0.0
    %v3050 = vrot.slane %v3049, 4
    %v3051 = vadd.f32 %v3049, %v3050
    %v3052 = vrot.slane %v3051, 2
    %v3053 = vadd.f32 %v3051, %v3052
    %v3054 = vrot.slane %v3053, 1
    %v3055 = vadd.f32 %v3053, %v3054
    %v3056 = vsel %vm266, %v2829, 0.0
    %v3057 = vrot.slane %v3056, 4
    %v3058 = vadd.f32 %v3056, %v3057
    %v3059 = vrot.slane %v3058, 2
    %v3060 = vadd.f32 %v3058, %v3059
    %v3061 = vrot.slane %v3060, 1
    %v3062 = vadd.f32 %v3060, %v3061
    %v3063 = vsel %vm266, %v2831, 0.0
    %v3064 = vrot.slane %v3063, 4
    %v3065 = vadd.f32 %v3063, %v3064
    %v3066 = vrot.slane %v3065, 2
    %v3067 = vadd.f32 %v3065, %v3066
    %v3068 = vrot.slane %v3067, 1
    %v3069 = vadd.f32 %v3067, %v3068
    %v3070 = vsel %vm266, %v2833, 0.0
    %v3071 = vrot.slane %v3070, 4
    %v3072 = vadd.f32 %v3070, %v3071
    %v3073 = vrot.slane %v3072, 2
    %v3074 = vadd.f32 %v3072, %v3073
    %v3075 = vrot.slane %v3074, 1
    %v3076 = vadd.f32 %v3074, %v3075
    %v3077 = vsel %vm266, %v2835, 0.0
    %v3078 = vrot.slane %v3077, 4
    %v3079 = vadd.f32 %v3077, %v3078
    %v3080 = vrot.slane %v3079, 2
    %v3081 = vadd.f32 %v3079, %v3080
    %v3082 = vrot.slane %v3081, 1
    %v3083 = vadd.f32 %v3081, %v3082
    %v3084 = vsel %vm266, %v2837, 0.0
    %v3085 = vrot.slane %v3084, 4
    %v3086 = vadd.f32 %v3084, %v3085
    %v3087 = vrot.slane %v3086, 2
    %v3088 = vadd.f32 %v3086, %v3087
    %v3089 = vrot.slane %v3088, 1
    %v3090 = vadd.f32 %v3088, %v3089
    %v3091 = vsel %vm266, %v2839, 0.0
    %v3092 = vrot.slane %v3091, 4
    %v3093 = vadd.f32 %v3091, %v3092
    %v3094 = vrot.slane %v3093, 2
    %v3095 = vadd.f32 %v3093, %v3094
    %v3096 = vrot.slane %v3095, 1
    %v3097 = vadd.f32 %v3095, %v3096
    %v3098 = vsel %vm266, %v2841, 0.0
    %v3099 = vrot.slane %v3098, 4
    %v3100 = vadd.f32 %v3098, %v3099
    %v3101 = vrot.slane %v3100, 2
    %v3102 = vadd.f32 %v3100, %v3101
    %v3103 = vrot.slane %v3102, 1
    %v3104 = vadd.f32 %v3102, %v3103
    %v3105 = vsel %vm266, %v2843, 0.0
    %v3106 = vrot.slane %v3105, 4
    %v3107 = vadd.f32 %v3105, %v3106
    %v3108 = vrot.slane %v3107, 2
    %v3109 = vadd.f32 %v3107, %v3108
    %v3110 = vrot.slane %v3109, 1
    %v3111 = vadd.f32 %v3109, %v3110
    %v3112 = vsel %vm266, %v2845, 0.0
    %v3113 = vrot.slane %v3112, 4
    %v3114 = vadd.f32 %v3112, %v3113
    %v3115 = vrot.slane %v3114, 2
    %v3116 = vadd.f32 %v3114, %v3115
    %v3117 = vrot.slane %v3116, 1
    %v3118 = vadd.f32 %v3116, %v3117
    %v3119 = vsel %vm266, %v2847, 0.0
    %v3120 = vrot.slane %v3119, 4
    %v3121 = vadd.f32 %v3119, %v3120
    %v3122 = vrot.slane %v3121, 2
    %v3123 = vadd.f32 %v3121, %v3122
    %v3124 = vrot.slane %v3123, 1
    %v3125 = vadd.f32 %v3123, %v3124
    %v3126 = vsel %vm266, %v2849, 0.0
    %v3127 = vrot.slane %v3126, 4
    %v3128 = vadd.f32 %v3126, %v3127
    %v3129 = vrot.slane %v3128, 2
    %v3130 = vadd.f32 %v3128, %v3129
    %v3131 = vrot.slane %v3130, 1
    %v3132 = vadd.f32 %v3130, %v3131
    %v3133 = vsel %vm266, %v2851, 0.0
    %v3134 = vrot.slane %v3133, 4
    %v3135 = vadd.f32 %v3133, %v3134
    %v3136 = vrot.slane %v3135, 2
    %v3137 = vadd.f32 %v3135, %v3136
    %v3138 = vrot.slane %v3137, 1
    %v3139 = vadd.f32 %v3137, %v3138
    %v3140 = vsel %vm266, %v2853, 0.0
    %v3141 = vrot.slane %v3140, 4
    %v3142 = vadd.f32 %v3140, %v3141
    %v3143 = vrot.slane %v3142, 2
    %v3144 = vadd.f32 %v3142, %v3143
    %v3145 = vrot.slane %v3144, 1
    %v3146 = vadd.f32 %v3144, %v3145
    %v3147 = vsel %vm266, %v2855, 0.0
    %v3148 = vrot.slane %v3147, 4
    %v3149 = vadd.f32 %v3147, %v3148
    %v3150 = vrot.slane %v3149, 2
    %v3151 = vadd.f32 %v3149, %v3150
    %v3152 = vrot.slane %v3151, 1
    %v3153 = vadd.f32 %v3151, %v3152
    %v3154 = vsel %vm266, %v2857, 0.0
    %v3155 = vrot.slane %v3154, 4
    %v3156 = vadd.f32 %v3154, %v3155
    %v3157 = vrot.slane %v3156, 2
    %v3158 = vadd.f32 %v3156, %v3157
    %v3159 = vrot.slane %v3158, 1
    %v3160 = vadd.f32 %v3158, %v3159
    %v3161 = vsel %vm266, %v2859, 0.0
    %v3162 = vrot.slane %v3161, 4
    %v3163 = vadd.f32 %v3161, %v3162
    %v3164 = vrot.slane %v3163, 2
    %v3165 = vadd.f32 %v3163, %v3164
    %v3166 = vrot.slane %v3165, 1
    %v3167 = vadd.f32 %v3165, %v3166
    %v3168 = vsel %vm266, %v2861, 0.0
    %v3169 = vrot.slane %v3168, 4
    %v3170 = vadd.f32 %v3168, %v3169
    %v3171 = vrot.slane %v3170, 2
    %v3172 = vadd.f32 %v3170, %v3171
    %v3173 = vrot.slane %v3172, 1
    %v3174 = vadd.f32 %v3172, %v3173
    %v3175 = vsel %vm266, %v2863, 0.0
    %v3176 = vrot.slane %v3175, 4
    %v3177 = vadd.f32 %v3175, %v3176
    %v3178 = vrot.slane %v3177, 2
    %v3179 = vadd.f32 %v3177, %v3178
    %v3180 = vrot.slane %v3179, 1
    %v3181 = vadd.f32 %v3179, %v3180
    %v3182 = vsel %vm266, %v2865, 0.0
    %v3183 = vrot.slane %v3182, 4
    %v3184 = vadd.f32 %v3182, %v3183
    %v3185 = vrot.slane %v3184, 2
    %v3186 = vadd.f32 %v3184, %v3185
    %v3187 = vrot.slane %v3186, 1
    %v3188 = vadd.f32 %v3186, %v3187
    %v3189 = vsel %vm266, %v2867, 0.0
    %v3190 = vrot.slane %v3189, 4
    %v3191 = vadd.f32 %v3189, %v3190
    %v3192 = vrot.slane %v3191, 2
    %v3193 = vadd.f32 %v3191, %v3192
    %v3194 = vrot.slane %v3193, 1
    %v3195 = vadd.f32 %v3193, %v3194
    %v3196 = vsel %vm266, %v2869, 0.0
    %v3197 = vrot.slane %v3196, 4
    %v3198 = vadd.f32 %v3196, %v3197
    %v3199 = vrot.slane %v3198, 2
    %v3200 = vadd.f32 %v3198, %v3199
    %v3201 = vrot.slane %v3200, 1
    %v3202 = vadd.f32 %v3200, %v3201
    %v3203 = vsel %vm266, %v2871, 0.0
    %v3204 = vrot.slane %v3203, 4
    %v3205 = vadd.f32 %v3203, %v3204
    %v3206 = vrot.slane %v3205, 2
    %v3207 = vadd.f32 %v3205, %v3206
    %v3208 = vrot.slane %v3207, 1
    %v3209 = vadd.f32 %v3207, %v3208
    %v3210 = vsel %vm266, %v2873, 0.0
    %v3211 = vrot.slane %v3210, 4
    %v3212 = vadd.f32 %v3210, %v3211
    %v3213 = vrot.slane %v3212, 2
    %v3214 = vadd.f32 %v3212, %v3213
    %v3215 = vrot.slane %v3214, 1
    %v3216 = vadd.f32 %v3214, %v3215
    %v3217 = vsel %vm266, %v2875, 0.0
    %v3218 = vrot.slane %v3217, 4
    %v3219 = vadd.f32 %v3217, %v3218
    %v3220 = vrot.slane %v3219, 2
    %v3221 = vadd.f32 %v3219, %v3220
    %v3222 = vrot.slane %v3221, 1
    %v3223 = vadd.f32 %v3221, %v3222
    %v3224 = vsel %vm266, %v2877, 0.0
    %v3225 = vrot.slane %v3224, 4
    %v3226 = vadd.f32 %v3224, %v3225
    %v3227 = vrot.slane %v3226, 2
    %v3228 = vadd.f32 %v3226, %v3227
    %v3229 = vrot.slane %v3228, 1
    %v3230 = vadd.f32 %v3228, %v3229
    %v3231 = vsel %vm266, %v2879, 0.0
    %v3232 = vrot.slane %v3231, 4
    %v3233 = vadd.f32 %v3231, %v3232
    %v3234 = vrot.slane %v3233, 2
    %v3235 = vadd.f32 %v3233, %v3234
    %v3236 = vrot.slane %v3235, 1
    %v3237 = vadd.f32 %v3235, %v3236
    %v3238 = vsel %vm266, %v2881, 0.0
    %v3239 = vrot.slane %v3238, 4
    %v3240 = vadd.f32 %v3238, %v3239
    %v3241 = vrot.slane %v3240, 2
    %v3242 = vadd.f32 %v3240, %v3241
    %v3243 = vrot.slane %v3242, 1
    %v3244 = vadd.f32 %v3242, %v3243
    %v3245 = vsel %vm266, %v2883, 0.0
    %v3246 = vrot.slane %v3245, 4
    %v3247 = vadd.f32 %v3245, %v3246
    %v3248 = vrot.slane %v3247, 2
    %v3249 = vadd.f32 %v3247, %v3248
    %v3250 = vrot.slane %v3249, 1
    %v3251 = vadd.f32 %v3249, %v3250
    %v3252 = vsel %vm266, %v2885, 0.0
    %v3253 = vrot.slane %v3252, 4
    %v3254 = vadd.f32 %v3252, %v3253
    %v3255 = vrot.slane %v3254, 2
    %v3256 = vadd.f32 %v3254, %v3255
    %v3257 = vrot.slane %v3256, 1
    %v3258 = vadd.f32 %v3256, %v3257
    %v3259 = vsel %vm266, %v2887, 0.0
    %v3260 = vrot.slane %v3259, 4
    %v3261 = vadd.f32 %v3259, %v3260
    %v3262 = vrot.slane %v3261, 2
    %v3263 = vadd.f32 %v3261, %v3262
    %v3264 = vrot.slane %v3263, 1
    %v3265 = vadd.f32 %v3263, %v3264
    %v3266 = vsel %vm266, %v2889, 0.0
    %v3267 = vrot.slane %v3266, 4
    %v3268 = vadd.f32 %v3266, %v3267
    %v3269 = vrot.slane %v3268, 2
    %v3270 = vadd.f32 %v3268, %v3269
    %v3271 = vrot.slane %v3270, 1
    %v3272 = vadd.f32 %v3270, %v3271
    %v3273 = vsel %vm266, %v2891, 0.0
    %v3274 = vrot.slane %v3273, 4
    %v3275 = vadd.f32 %v3273, %v3274
    %v3276 = vrot.slane %v3275, 2
    %v3277 = vadd.f32 %v3275, %v3276
    %v3278 = vrot.slane %v3277, 1
    %v3279 = vadd.f32 %v3277, %v3278
    %v3280 = vsel %vm266, %v2893, 0.0
    %v3281 = vrot.slane %v3280, 4
    %v3282 = vadd.f32 %v3280, %v3281
    %v3283 = vrot.slane %v3282, 2
    %v3284 = vadd.f32 %v3282, %v3283
    %v3285 = vrot.slane %v3284, 1
    %v3286 = vadd.f32 %v3284, %v3285
    %v3287 = vsel %vm266, %v2895, 0.0
    %v3288 = vrot.slane %v3287, 4
    %v3289 = vadd.f32 %v3287, %v3288
    %v3290 = vrot.slane %v3289, 2
    %v3291 = vadd.f32 %v3289, %v3290
    %v3292 = vrot.slane %v3291, 1
    %v3293 = vadd.f32 %v3291, %v3292
    %v3294 = vsel %vm266, %v2897, 0.0
    %v3295 = vrot.slane %v3294, 4
    %v3296 = vadd.f32 %v3294, %v3295
    %v3297 = vrot.slane %v3296, 2
    %v3298 = vadd.f32 %v3296, %v3297
    %v3299 = vrot.slane %v3298, 1
    %v3300 = vadd.f32 %v3298, %v3299
    %v3301 = vsel %vm266, %v2899, 0.0
    %v3302 = vrot.slane %v3301, 4
    %v3303 = vadd.f32 %v3301, %v3302
    %v3304 = vrot.slane %v3303, 2
    %v3305 = vadd.f32 %v3303, %v3304
    %v3306 = vrot.slane %v3305, 1
    %v3307 = vadd.f32 %v3305, %v3306
    %v3308 = vsel %vm266, %v2901, 0.0
    %v3309 = vrot.slane %v3308, 4
    %v3310 = vadd.f32 %v3308, %v3309
    %v3311 = vrot.slane %v3310, 2
    %v3312 = vadd.f32 %v3310, %v3311
    %v3313 = vrot.slane %v3312, 1
    %v3314 = vadd.f32 %v3312, %v3313
    %v3315 = vsel %vm266, %v2903, 0.0
    %v3316 = vrot.slane %v3315, 4
    %v3317 = vadd.f32 %v3315, %v3316
    %v3318 = vrot.slane %v3317, 2
    %v3319 = vadd.f32 %v3317, %v3318
    %v3320 = vrot.slane %v3319, 1
    %v3321 = vadd.f32 %v3319, %v3320
    %v3322 = vsel %vm266, %v2905, 0.0
    %v3323 = vrot.slane %v3322, 4
    %v3324 = vadd.f32 %v3322, %v3323
    %v3325 = vrot.slane %v3324, 2
    %v3326 = vadd.f32 %v3324, %v3325
    %v3327 = vrot.slane %v3326, 1
    %v3328 = vadd.f32 %v3326, %v3327
    %v3329 = vsel %vm266, %v2907, 0.0
    %v3330 = vrot.slane %v3329, 4
    %v3331 = vadd.f32 %v3329, %v3330
    %v3332 = vrot.slane %v3331, 2
    %v3333 = vadd.f32 %v3331, %v3332
    %v3334 = vrot.slane %v3333, 1
    %v3335 = vadd.f32 %v3333, %v3334
    %v3336 = vsel %vm266, %v2909, 0.0
    %v3337 = vrot.slane %v3336, 4
    %v3338 = vadd.f32 %v3336, %v3337
    %v3339 = vrot.slane %v3338, 2
    %v3340 = vadd.f32 %v3338, %v3339
    %v3341 = vrot.slane %v3340, 1
    %v3342 = vadd.f32 %v3340, %v3341
    %v3343 = vsel %vm266, %v2911, 0.0
    %v3344 = vrot.slane %v3343, 4
    %v3345 = vadd.f32 %v3343, %v3344
    %v3346 = vrot.slane %v3345, 2
    %v3347 = vadd.f32 %v3345, %v3346
    %v3348 = vrot.slane %v3347, 1
    %v3349 = vadd.f32 %v3347, %v3348
    %v3350 = vsel %vm266, %v2913, 0.0
    %v3351 = vrot.slane %v3350, 4
    %v3352 = vadd.f32 %v3350, %v3351
    %v3353 = vrot.slane %v3352, 2
    %v3354 = vadd.f32 %v3352, %v3353
    %v3355 = vrot.slane %v3354, 1
    %v3356 = vadd.f32 %v3354, %v3355
    %v3357 = vsel %vm266, %v2915, 0.0
    %v3358 = vrot.slane %v3357, 4
    %v3359 = vadd.f32 %v3357, %v3358
    %v3360 = vrot.slane %v3359, 2
    %v3361 = vadd.f32 %v3359, %v3360
    %v3362 = vrot.slane %v3361, 1
    %v3363 = vadd.f32 %v3361, %v3362
    %v3364 = vmul.f32 %v2789, %v869
    %v3365 = vmul.f32 %v2791, %v869
    %v3366 = vmul.f32 %v2793, %v869
    %v3367 = vmul.f32 %v2795, %v869
    %v3368 = vmul.f32 %v2797, %v869
    %v3369 = vmul.f32 %v2799, %v869
    %v3370 = vmul.f32 %v2801, %v869
    %v3371 = vmul.f32 %v2803, %v869
    %v3372 = vmul.f32 %v2805, %v874
    %v3373 = vmul.f32 %v2807, %v874
    %v3374 = vmul.f32 %v2809, %v874
    %v3375 = vmul.f32 %v2811, %v874
    %v3376 = vmul.f32 %v2813, %v874
    %v3377 = vmul.f32 %v2815, %v874
    %v3378 = vmul.f32 %v2817, %v874
    %v3379 = vmul.f32 %v2819, %v874
    %v3380 = vmul.f32 %v2821, %v879
    %v3381 = vmul.f32 %v2823, %v879
    %v3382 = vmul.f32 %v2825, %v879
    %v3383 = vmul.f32 %v2827, %v879
    %v3384 = vmul.f32 %v2829, %v879
    %v3385 = vmul.f32 %v2831, %v879
    %v3386 = vmul.f32 %v2833, %v879
    %v3387 = vmul.f32 %v2835, %v879
    %v3388 = vmul.f32 %v2837, %v884
    %v3389 = vmul.f32 %v2839, %v884
    %v3390 = vmul.f32 %v2841, %v884
    %v3391 = vmul.f32 %v2843, %v884
    %v3392 = vmul.f32 %v2845, %v884
    %v3393 = vmul.f32 %v2847, %v884
    %v3394 = vmul.f32 %v2849, %v884
    %v3395 = vmul.f32 %v2851, %v884
    %v3396 = vmul.f32 %v2853, %v889
    %v3397 = vmul.f32 %v2855, %v889
    %v3398 = vmul.f32 %v2857, %v889
    %v3399 = vmul.f32 %v2859, %v889
    %v3400 = vmul.f32 %v2861, %v889
    %v3401 = vmul.f32 %v2863, %v889
    %v3402 = vmul.f32 %v2865, %v889
    %v3403 = vmul.f32 %v2867, %v889
    %v3404 = vmul.f32 %v2869, %v894
    %v3405 = vmul.f32 %v2871, %v894
    %v3406 = vmul.f32 %v2873, %v894
    %v3407 = vmul.f32 %v2875, %v894
    %v3408 = vmul.f32 %v2877, %v894
    %v3409 = vmul.f32 %v2879, %v894
    %v3410 = vmul.f32 %v2881, %v894
    %v3411 = vmul.f32 %v2883, %v894
    %v3412 = vmul.f32 %v2885, %v899
    %v3413 = vmul.f32 %v2887, %v899
    %v3414 = vmul.f32 %v2889, %v899
    %v3415 = vmul.f32 %v2891, %v899
    %v3416 = vmul.f32 %v2893, %v899
    %v3417 = vmul.f32 %v2895, %v899
    %v3418 = vmul.f32 %v2897, %v899
    %v3419 = vmul.f32 %v2899, %v899
    %v3420 = vmul.f32 %v2901, %v904
    %v3421 = vmul.f32 %v2903, %v904
    %v3422 = vmul.f32 %v2905, %v904
    %v3423 = vmul.f32 %v2907, %v904
    %v3424 = vmul.f32 %v2909, %v904
    %v3425 = vmul.f32 %v2911, %v904
    %v3426 = vmul.f32 %v2913, %v904
    %v3427 = vmul.f32 %v2915, %v904
    %v3428 = vsel %vm266, %v3364, 0.0
    %v3429 = vrot.slane %v3428, 4
    %v3430 = vadd.f32 %v3428, %v3429
    %v3431 = vrot.slane %v3430, 2
    %v3432 = vadd.f32 %v3430, %v3431
    %v3433 = vrot.slane %v3432, 1
    %v3434 = vadd.f32 %v3432, %v3433
    %v3435 = vsel %vm266, %v3365, 0.0
    %v3436 = vrot.slane %v3435, 4
    %v3437 = vadd.f32 %v3435, %v3436
    %v3438 = vrot.slane %v3437, 2
    %v3439 = vadd.f32 %v3437, %v3438
    %v3440 = vrot.slane %v3439, 1
    %v3441 = vadd.f32 %v3439, %v3440
    %v3442 = vsel %vm266, %v3366, 0.0
    %v3443 = vrot.slane %v3442, 4
    %v3444 = vadd.f32 %v3442, %v3443
    %v3445 = vrot.slane %v3444, 2
    %v3446 = vadd.f32 %v3444, %v3445
    %v3447 = vrot.slane %v3446, 1
    %v3448 = vadd.f32 %v3446, %v3447
    %v3449 = vsel %vm266, %v3367, 0.0
    %v3450 = vrot.slane %v3449, 4
    %v3451 = vadd.f32 %v3449, %v3450
    %v3452 = vrot.slane %v3451, 2
    %v3453 = vadd.f32 %v3451, %v3452
    %v3454 = vrot.slane %v3453, 1
    %v3455 = vadd.f32 %v3453, %v3454
    %v3456 = vsel %vm266, %v3368, 0.0
    %v3457 = vrot.slane %v3456, 4
    %v3458 = vadd.f32 %v3456, %v3457
    %v3459 = vrot.slane %v3458, 2
    %v3460 = vadd.f32 %v3458, %v3459
    %v3461 = vrot.slane %v3460, 1
    %v3462 = vadd.f32 %v3460, %v3461
    %v3463 = vsel %vm266, %v3369, 0.0
    %v3464 = vrot.slane %v3463, 4
    %v3465 = vadd.f32 %v3463, %v3464
    %v3466 = vrot.slane %v3465, 2
    %v3467 = vadd.f32 %v3465, %v3466
    %v3468 = vrot.slane %v3467, 1
    %v3469 = vadd.f32 %v3467, %v3468
    %v3470 = vsel %vm266, %v3370, 0.0
    %v3471 = vrot.slane %v3470, 4
    %v3472 = vadd.f32 %v3470, %v3471
    %v3473 = vrot.slane %v3472, 2
    %v3474 = vadd.f32 %v3472, %v3473
    %v3475 = vrot.slane %v3474, 1
    %v3476 = vadd.f32 %v3474, %v3475
    %v3477 = vsel %vm266, %v3371, 0.0
    %v3478 = vrot.slane %v3477, 4
    %v3479 = vadd.f32 %v3477, %v3478
    %v3480 = vrot.slane %v3479, 2
    %v3481 = vadd.f32 %v3479, %v3480
    %v3482 = vrot.slane %v3481, 1
    %v3483 = vadd.f32 %v3481, %v3482
    %v3484 = vsel %vm266, %v3372, 0.0
    %v3485 = vrot.slane %v3484, 4
    %v3486 = vadd.f32 %v3484, %v3485
    %v3487 = vrot.slane %v3486, 2
    %v3488 = vadd.f32 %v3486, %v3487
    %v3489 = vrot.slane %v3488, 1
    %v3490 = vadd.f32 %v3488, %v3489
    %v3491 = vsel %vm266, %v3373, 0.0
    %v3492 = vrot.slane %v3491, 4
    %v3493 = vadd.f32 %v3491, %v3492
    %v3494 = vrot.slane %v3493, 2
    %v3495 = vadd.f32 %v3493, %v3494
    %v3496 = vrot.slane %v3495, 1
    %v3497 = vadd.f32 %v3495, %v3496
    %v3498 = vsel %vm266, %v3374, 0.0
    %v3499 = vrot.slane %v3498, 4
    %v3500 = vadd.f32 %v3498, %v3499
    %v3501 = vrot.slane %v3500, 2
    %v3502 = vadd.f32 %v3500, %v3501
    %v3503 = vrot.slane %v3502, 1
    %v3504 = vadd.f32 %v3502, %v3503
    %v3505 = vsel %vm266, %v3375, 0.0
    %v3506 = vrot.slane %v3505, 4
    %v3507 = vadd.f32 %v3505, %v3506
    %v3508 = vrot.slane %v3507, 2
    %v3509 = vadd.f32 %v3507, %v3508
    %v3510 = vrot.slane %v3509, 1
    %v3511 = vadd.f32 %v3509, %v3510
    %v3512 = vsel %vm266, %v3376, 0.0
    %v3513 = vrot.slane %v3512, 4
    %v3514 = vadd.f32 %v3512, %v3513
    %v3515 = vrot.slane %v3514, 2
    %v3516 = vadd.f32 %v3514, %v3515
    %v3517 = vrot.slane %v3516, 1
    %v3518 = vadd.f32 %v3516, %v3517
    %v3519 = vsel %vm266, %v3377, 0.0
    %v3520 = vrot.slane %v3519, 4
    %v3521 = vadd.f32 %v3519, %v3520
    %v3522 = vrot.slane %v3521, 2
    %v3523 = vadd.f32 %v3521, %v3522
    %v3524 = vrot.slane %v3523, 1
    %v3525 = vadd.f32 %v3523, %v3524
    %v3526 = vsel %vm266, %v3378, 0.0
    %v3527 = vrot.slane %v3526, 4
    %v3528 = vadd.f32 %v3526, %v3527
    %v3529 = vrot.slane %v3528, 2
    %v3530 = vadd.f32 %v3528, %v3529
    %v3531 = vrot.slane %v3530, 1
    %v3532 = vadd.f32 %v3530, %v3531
    %v3533 = vsel %vm266, %v3379, 0.0
    %v3534 = vrot.slane %v3533, 4
    %v3535 = vadd.f32 %v3533, %v3534
    %v3536 = vrot.slane %v3535, 2
    %v3537 = vadd.f32 %v3535, %v3536
    %v3538 = vrot.slane %v3537, 1
    %v3539 = vadd.f32 %v3537, %v3538
    %v3540 = vsel %vm266, %v3380, 0.0
    %v3541 = vrot.slane %v3540, 4
    %v3542 = vadd.f32 %v3540, %v3541
    %v3543 = vrot.slane %v3542, 2
    %v3544 = vadd.f32 %v3542, %v3543
    %v3545 = vrot.slane %v3544, 1
    %v3546 = vadd.f32 %v3544, %v3545
    %v3547 = vsel %vm266, %v3381, 0.0
    %v3548 = vrot.slane %v3547, 4
    %v3549 = vadd.f32 %v3547, %v3548
    %v3550 = vrot.slane %v3549, 2
    %v3551 = vadd.f32 %v3549, %v3550
    %v3552 = vrot.slane %v3551, 1
    %v3553 = vadd.f32 %v3551, %v3552
    %v3554 = vsel %vm266, %v3382, 0.0
    %v3555 = vrot.slane %v3554, 4
    %v3556 = vadd.f32 %v3554, %v3555
    %v3557 = vrot.slane %v3556, 2
    %v3558 = vadd.f32 %v3556, %v3557
    %v3559 = vrot.slane %v3558, 1
    %v3560 = vadd.f32 %v3558, %v3559
    %v3561 = vsel %vm266, %v3383, 0.0
    %v3562 = vrot.slane %v3561, 4
    %v3563 = vadd.f32 %v3561, %v3562
    %v3564 = vrot.slane %v3563, 2
    %v3565 = vadd.f32 %v3563, %v3564
    %v3566 = vrot.slane %v3565, 1
    %v3567 = vadd.f32 %v3565, %v3566
    %v3568 = vsel %vm266, %v3384, 0.0
    %v3569 = vrot.slane %v3568, 4
    %v3570 = vadd.f32 %v3568, %v3569
    %v3571 = vrot.slane %v3570, 2
    %v3572 = vadd.f32 %v3570, %v3571
    %v3573 = vrot.slane %v3572, 1
    %v3574 = vadd.f32 %v3572, %v3573
    %v3575 = vsel %vm266, %v3385, 0.0
    %v3576 = vrot.slane %v3575, 4
    %v3577 = vadd.f32 %v3575, %v3576
    %v3578 = vrot.slane %v3577, 2
    %v3579 = vadd.f32 %v3577, %v3578
    %v3580 = vrot.slane %v3579, 1
    %v3581 = vadd.f32 %v3579, %v3580
    %v3582 = vsel %vm266, %v3386, 0.0
    %v3583 = vrot.slane %v3582, 4
    %v3584 = vadd.f32 %v3582, %v3583
    %v3585 = vrot.slane %v3584, 2
    %v3586 = vadd.f32 %v3584, %v3585
    %v3587 = vrot.slane %v3586, 1
    %v3588 = vadd.f32 %v3586, %v3587
    %v3589 = vsel %vm266, %v3387, 0.0
    %v3590 = vrot.slane %v3589, 4
    %v3591 = vadd.f32 %v3589, %v3590
    %v3592 = vrot.slane %v3591, 2
    %v3593 = vadd.f32 %v3591, %v3592
    %v3594 = vrot.slane %v3593, 1
    %v3595 = vadd.f32 %v3593, %v3594
    %v3596 = vsel %vm266, %v3388, 0.0
    %v3597 = vrot.slane %v3596, 4
    %v3598 = vadd.f32 %v3596, %v3597
    %v3599 = vrot.slane %v3598, 2
    %v3600 = vadd.f32 %v3598, %v3599
    %v3601 = vrot.slane %v3600, 1
    %v3602 = vadd.f32 %v3600, %v3601
    %v3603 = vsel %vm266, %v3389, 0.0
    %v3604 = vrot.slane %v3603, 4
    %v3605 = vadd.f32 %v3603, %v3604
    %v3606 = vrot.slane %v3605, 2
    %v3607 = vadd.f32 %v3605, %v3606
    %v3608 = vrot.slane %v3607, 1
    %v3609 = vadd.f32 %v3607, %v3608
    %v3610 = vsel %vm266, %v3390, 0.0
    %v3611 = vrot.slane %v3610, 4
    %v3612 = vadd.f32 %v3610, %v3611
    %v3613 = vrot.slane %v3612, 2
    %v3614 = vadd.f32 %v3612, %v3613
    %v3615 = vrot.slane %v3614, 1
    %v3616 = vadd.f32 %v3614, %v3615
    %v3617 = vsel %vm266, %v3391, 0.0
    %v3618 = vrot.slane %v3617, 4
    %v3619 = vadd.f32 %v3617, %v3618
    %v3620 = vrot.slane %v3619, 2
    %v3621 = vadd.f32 %v3619, %v3620
    %v3622 = vrot.slane %v3621, 1
    %v3623 = vadd.f32 %v3621, %v3622
    %v3624 = vsel %vm266, %v3392, 0.0
    %v3625 = vrot.slane %v3624, 4
    %v3626 = vadd.f32 %v3624, %v3625
    %v3627 = vrot.slane %v3626, 2
    %v3628 = vadd.f32 %v3626, %v3627
    %v3629 = vrot.slane %v3628, 1
    %v3630 = vadd.f32 %v3628, %v3629
    %v3631 = vsel %vm266, %v3393, 0.0
    %v3632 = vrot.slane %v3631, 4
    %v3633 = vadd.f32 %v3631, %v3632
    %v3634 = vrot.slane %v3633, 2
    %v3635 = vadd.f32 %v3633, %v3634
    %v3636 = vrot.slane %v3635, 1
    %v3637 = vadd.f32 %v3635, %v3636
    %v3638 = vsel %vm266, %v3394, 0.0
    %v3639 = vrot.slane %v3638, 4
    %v3640 = vadd.f32 %v3638, %v3639
    %v3641 = vrot.slane %v3640, 2
    %v3642 = vadd.f32 %v3640, %v3641
    %v3643 = vrot.slane %v3642, 1
    %v3644 = vadd.f32 %v3642, %v3643
    %v3645 = vsel %vm266, %v3395, 0.0
    %v3646 = vrot.slane %v3645, 4
    %v3647 = vadd.f32 %v3645, %v3646
    %v3648 = vrot.slane %v3647, 2
    %v3649 = vadd.f32 %v3647, %v3648
    %v3650 = vrot.slane %v3649, 1
    %v3651 = vadd.f32 %v3649, %v3650
    %v3652 = vsel %vm266, %v3396, 0.0
    %v3653 = vrot.slane %v3652, 4
    %v3654 = vadd.f32 %v3652, %v3653
    %v3655 = vrot.slane %v3654, 2
    %v3656 = vadd.f32 %v3654, %v3655
    %v3657 = vrot.slane %v3656, 1
    %v3658 = vadd.f32 %v3656, %v3657
    %v3659 = vsel %vm266, %v3397, 0.0
    %v3660 = vrot.slane %v3659, 4
    %v3661 = vadd.f32 %v3659, %v3660
    %v3662 = vrot.slane %v3661, 2
    %v3663 = vadd.f32 %v3661, %v3662
    %v3664 = vrot.slane %v3663, 1
    %v3665 = vadd.f32 %v3663, %v3664
    %v3666 = vsel %vm266, %v3398, 0.0
    %v3667 = vrot.slane %v3666, 4
    %v3668 = vadd.f32 %v3666, %v3667
    %v3669 = vrot.slane %v3668, 2
    %v3670 = vadd.f32 %v3668, %v3669
    %v3671 = vrot.slane %v3670, 1
    %v3672 = vadd.f32 %v3670, %v3671
    %v3673 = vsel %vm266, %v3399, 0.0
    %v3674 = vrot.slane %v3673, 4
    %v3675 = vadd.f32 %v3673, %v3674
    %v3676 = vrot.slane %v3675, 2
    %v3677 = vadd.f32 %v3675, %v3676
    %v3678 = vrot.slane %v3677, 1
    %v3679 = vadd.f32 %v3677, %v3678
    %v3680 = vsel %vm266, %v3400, 0.0
    %v3681 = vrot.slane %v3680, 4
    %v3682 = vadd.f32 %v3680, %v3681
    %v3683 = vrot.slane %v3682, 2
    %v3684 = vadd.f32 %v3682, %v3683
    %v3685 = vrot.slane %v3684, 1
    %v3686 = vadd.f32 %v3684, %v3685
    %v3687 = vsel %vm266, %v3401, 0.0
    %v3688 = vrot.slane %v3687, 4
    %v3689 = vadd.f32 %v3687, %v3688
    %v3690 = vrot.slane %v3689, 2
    %v3691 = vadd.f32 %v3689, %v3690
    %v3692 = vrot.slane %v3691, 1
    %v3693 = vadd.f32 %v3691, %v3692
    %v3694 = vsel %vm266, %v3402, 0.0
    %v3695 = vrot.slane %v3694, 4
    %v3696 = vadd.f32 %v3694, %v3695
    %v3697 = vrot.slane %v3696, 2
    %v3698 = vadd.f32 %v3696, %v3697
    %v3699 = vrot.slane %v3698, 1
    %v3700 = vadd.f32 %v3698, %v3699
    %v3701 = vsel %vm266, %v3403, 0.0
    %v3702 = vrot.slane %v3701, 4
    %v3703 = vadd.f32 %v3701, %v3702
    %v3704 = vrot.slane %v3703, 2
    %v3705 = vadd.f32 %v3703, %v3704
    %v3706 = vrot.slane %v3705, 1
    %v3707 = vadd.f32 %v3705, %v3706
    %v3708 = vsel %vm266, %v3404, 0.0
    %v3709 = vrot.slane %v3708, 4
    %v3710 = vadd.f32 %v3708, %v3709
    %v3711 = vrot.slane %v3710, 2
    %v3712 = vadd.f32 %v3710, %v3711
    %v3713 = vrot.slane %v3712, 1
    %v3714 = vadd.f32 %v3712, %v3713
    %v3715 = vsel %vm266, %v3405, 0.0
    %v3716 = vrot.slane %v3715, 4
    %v3717 = vadd.f32 %v3715, %v3716
    %v3718 = vrot.slane %v3717, 2
    %v3719 = vadd.f32 %v3717, %v3718
    %v3720 = vrot.slane %v3719, 1
    %v3721 = vadd.f32 %v3719, %v3720
    %v3722 = vsel %vm266, %v3406, 0.0
    %v3723 = vrot.slane %v3722, 4
    %v3724 = vadd.f32 %v3722, %v3723
    %v3725 = vrot.slane %v3724, 2
    %v3726 = vadd.f32 %v3724, %v3725
    %v3727 = vrot.slane %v3726, 1
    %v3728 = vadd.f32 %v3726, %v3727
    %v3729 = vsel %vm266, %v3407, 0.0
    %v3730 = vrot.slane %v3729, 4
    %v3731 = vadd.f32 %v3729, %v3730
    %v3732 = vrot.slane %v3731, 2
    %v3733 = vadd.f32 %v3731, %v3732
    %v3734 = vrot.slane %v3733, 1
    %v3735 = vadd.f32 %v3733, %v3734
    %v3736 = vsel %vm266, %v3408, 0.0
    %v3737 = vrot.slane %v3736, 4
    %v3738 = vadd.f32 %v3736, %v3737
    %v3739 = vrot.slane %v3738, 2
    %v3740 = vadd.f32 %v3738, %v3739
    %v3741 = vrot.slane %v3740, 1
    %v3742 = vadd.f32 %v3740, %v3741
    %v3743 = vsel %vm266, %v3409, 0.0
    %v3744 = vrot.slane %v3743, 4
    %v3745 = vadd.f32 %v3743, %v3744
    %v3746 = vrot.slane %v3745, 2
    %v3747 = vadd.f32 %v3745, %v3746
    %v3748 = vrot.slane %v3747, 1
    %v3749 = vadd.f32 %v3747, %v3748
    %v3750 = vsel %vm266, %v3410, 0.0
    %v3751 = vrot.slane %v3750, 4
    %v3752 = vadd.f32 %v3750, %v3751
    %v3753 = vrot.slane %v3752, 2
    %v3754 = vadd.f32 %v3752, %v3753
    %v3755 = vrot.slane %v3754, 1
    %v3756 = vadd.f32 %v3754, %v3755
    %v3757 = vsel %vm266, %v3411, 0.0
    %v3758 = vrot.slane %v3757, 4
    %v3759 = vadd.f32 %v3757, %v3758
    %v3760 = vrot.slane %v3759, 2
    %v3761 = vadd.f32 %v3759, %v3760
    %v3762 = vrot.slane %v3761, 1
    %v3763 = vadd.f32 %v3761, %v3762
    %v3764 = vsel %vm266, %v3412, 0.0
    %v3765 = vrot.slane %v3764, 4
    %v3766 = vadd.f32 %v3764, %v3765
    %v3767 = vrot.slane %v3766, 2
    %v3768 = vadd.f32 %v3766, %v3767
    %v3769 = vrot.slane %v3768, 1
    %v3770 = vadd.f32 %v3768, %v3769
    %v3771 = vsel %vm266, %v3413, 0.0
    %v3772 = vrot.slane %v3771, 4
    %v3773 = vadd.f32 %v3771, %v3772
    %v3774 = vrot.slane %v3773, 2
    %v3775 = vadd.f32 %v3773, %v3774
    %v3776 = vrot.slane %v3775, 1
    %v3777 = vadd.f32 %v3775, %v3776
    %v3778 = vsel %vm266, %v3414, 0.0
    %v3779 = vrot.slane %v3778, 4
    %v3780 = vadd.f32 %v3778, %v3779
    %v3781 = vrot.slane %v3780, 2
    %v3782 = vadd.f32 %v3780, %v3781
    %v3783 = vrot.slane %v3782, 1
    %v3784 = vadd.f32 %v3782, %v3783
    %v3785 = vsel %vm266, %v3415, 0.0
    %v3786 = vrot.slane %v3785, 4
    %v3787 = vadd.f32 %v3785, %v3786
    %v3788 = vrot.slane %v3787, 2
    %v3789 = vadd.f32 %v3787, %v3788
    %v3790 = vrot.slane %v3789, 1
    %v3791 = vadd.f32 %v3789, %v3790
    %v3792 = vsel %vm266, %v3416, 0.0
    %v3793 = vrot.slane %v3792, 4
    %v3794 = vadd.f32 %v3792, %v3793
    %v3795 = vrot.slane %v3794, 2
    %v3796 = vadd.f32 %v3794, %v3795
    %v3797 = vrot.slane %v3796, 1
    %v3798 = vadd.f32 %v3796, %v3797
    %v3799 = vsel %vm266, %v3417, 0.0
    %v3800 = vrot.slane %v3799, 4
    %v3801 = vadd.f32 %v3799, %v3800
    %v3802 = vrot.slane %v3801, 2
    %v3803 = vadd.f32 %v3801, %v3802
    %v3804 = vrot.slane %v3803, 1
    %v3805 = vadd.f32 %v3803, %v3804
    %v3806 = vsel %vm266, %v3418, 0.0
    %v3807 = vrot.slane %v3806, 4
    %v3808 = vadd.f32 %v3806, %v3807
    %v3809 = vrot.slane %v3808, 2
    %v3810 = vadd.f32 %v3808, %v3809
    %v3811 = vrot.slane %v3810, 1
    %v3812 = vadd.f32 %v3810, %v3811
    %v3813 = vsel %vm266, %v3419, 0.0
    %v3814 = vrot.slane %v3813, 4
    %v3815 = vadd.f32 %v3813, %v3814
    %v3816 = vrot.slane %v3815, 2
    %v3817 = vadd.f32 %v3815, %v3816
    %v3818 = vrot.slane %v3817, 1
    %v3819 = vadd.f32 %v3817, %v3818
    %v3820 = vsel %vm266, %v3420, 0.0
    %v3821 = vrot.slane %v3820, 4
    %v3822 = vadd.f32 %v3820, %v3821
    %v3823 = vrot.slane %v3822, 2
    %v3824 = vadd.f32 %v3822, %v3823
    %v3825 = vrot.slane %v3824, 1
    %v3826 = vadd.f32 %v3824, %v3825
    %v3827 = vsel %vm266, %v3421, 0.0
    %v3828 = vrot.slane %v3827, 4
    %v3829 = vadd.f32 %v3827, %v3828
    %v3830 = vrot.slane %v3829, 2
    %v3831 = vadd.f32 %v3829, %v3830
    %v3832 = vrot.slane %v3831, 1
    %v3833 = vadd.f32 %v3831, %v3832
    %v3834 = vsel %vm266, %v3422, 0.0
    %v3835 = vrot.slane %v3834, 4
    %v3836 = vadd.f32 %v3834, %v3835
    %v3837 = vrot.slane %v3836, 2
    %v3838 = vadd.f32 %v3836, %v3837
    %v3839 = vrot.slane %v3838, 1
    %v3840 = vadd.f32 %v3838, %v3839
    %v3841 = vsel %vm266, %v3423, 0.0
    %v3842 = vrot.slane %v3841, 4
    %v3843 = vadd.f32 %v3841, %v3842
    %v3844 = vrot.slane %v3843, 2
    %v3845 = vadd.f32 %v3843, %v3844
    %v3846 = vrot.slane %v3845, 1
    %v3847 = vadd.f32 %v3845, %v3846
    %v3848 = vsel %vm266, %v3424, 0.0
    %v3849 = vrot.slane %v3848, 4
    %v3850 = vadd.f32 %v3848, %v3849
    %v3851 = vrot.slane %v3850, 2
    %v3852 = vadd.f32 %v3850, %v3851
    %v3853 = vrot.slane %v3852, 1
    %v3854 = vadd.f32 %v3852, %v3853
    %v3855 = vsel %vm266, %v3425, 0.0
    %v3856 = vrot.slane %v3855, 4
    %v3857 = vadd.f32 %v3855, %v3856
    %v3858 = vrot.slane %v3857, 2
    %v3859 = vadd.f32 %v3857, %v3858
    %v3860 = vrot.slane %v3859, 1
    %v3861 = vadd.f32 %v3859, %v3860
    %v3862 = vsel %vm266, %v3426, 0.0
    %v3863 = vrot.slane %v3862, 4
    %v3864 = vadd.f32 %v3862, %v3863
    %v3865 = vrot.slane %v3864, 2
    %v3866 = vadd.f32 %v3864, %v3865
    %v3867 = vrot.slane %v3866, 1
    %v3868 = vadd.f32 %v3866, %v3867
    %v3869 = vsel %vm266, %v3427, 0.0
    %v3870 = vrot.slane %v3869, 4
    %v3871 = vadd.f32 %v3869, %v3870
    %v3872 = vrot.slane %v3871, 2
    %v3873 = vadd.f32 %v3871, %v3872
    %v3874 = vrot.slane %v3873, 1
    %v3875 = vadd.f32 %v3873, %v3874
    %v3876 = vrcp.pop %v2922
    %v3877 = vmul.f32 %v3434, %v3876
    %v3878 = vrcp.pop %v2929
    %v3879 = vmul.f32 %v3441, %v3878
    %v3880 = vrcp.pop %v2936
    %v3881 = vmul.f32 %v3448, %v3880
    %v3882 = vrcp.pop %v2943
    %v3883 = vmul.f32 %v3455, %v3882
    %v3884 = vrcp.pop %v2950
    %v3885 = vmul.f32 %v3462, %v3884
    %v3886 = vrcp.pop %v2957
    %v3887 = vmul.f32 %v3469, %v3886
    %v3888 = vrcp.pop %v2964
    %v3889 = vmul.f32 %v3476, %v3888
    %v3890 = vrcp.pop %v2971
    %v3891 = vmul.f32 %v3483, %v3890
    %v3892 = vrcp.pop %v2978
    %v3893 = vmul.f32 %v3490, %v3892
    %v3894 = vrcp.pop %v2985
    %v3895 = vmul.f32 %v3497, %v3894
    %v3896 = vrcp.pop %v2992
    %v3897 = vmul.f32 %v3504, %v3896
    %v3898 = vrcp.pop %v2999
    %v3899 = vmul.f32 %v3511, %v3898
    %v3900 = vrcp.pop %v3006
    %v3901 = vmul.f32 %v3518, %v3900
    %v3902 = vrcp.pop %v3013
    %v3903 = vmul.f32 %v3525, %v3902
    %v3904 = vrcp.pop %v3020
    %v3905 = vmul.f32 %v3532, %v3904
    %v3906 = vrcp.pop %v3027
    %v3907 = vmul.f32 %v3539, %v3906
    %v3908 = vrcp.pop %v3034
    %v3909 = vmul.f32 %v3546, %v3908
    %v3910 = vrcp.pop %v3041
    %v3911 = vmul.f32 %v3553, %v3910
    %v3912 = vrcp.pop %v3048
    %v3913 = vmul.f32 %v3560, %v3912
    %v3914 = vrcp.pop %v3055
    %v3915 = vmul.f32 %v3567, %v3914
    %v3916 = vrcp.pop %v3062
    %v3917 = vmul.f32 %v3574, %v3916
    %v3918 = vrcp.pop %v3069
    %v3919 = vmul.f32 %v3581, %v3918
    %v3920 = vrcp.pop %v3076
    %v3921 = vmul.f32 %v3588, %v3920
    %v3922 = vrcp.pop %v3083
    %v3923 = vmul.f32 %v3595, %v3922
    %v3924 = vrcp.pop %v3090
    %v3925 = vmul.f32 %v3602, %v3924
    %v3926 = vrcp.pop %v3097
    %v3927 = vmul.f32 %v3609, %v3926
    %v3928 = vrcp.pop %v3104
    %v3929 = vmul.f32 %v3616, %v3928
    %v3930 = vrcp.pop %v3111
    %v3931 = vmul.f32 %v3623, %v3930
    %v3932 = vrcp.pop %v3118
    %v3933 = vmul.f32 %v3630, %v3932
    %v3934 = vrcp.pop %v3125
    %v3935 = vmul.f32 %v3637, %v3934
    %v3936 = vrcp.pop %v3132
    %v3937 = vmul.f32 %v3644, %v3936
    %v3938 = vrcp.pop %v3139
    %v3939 = vmul.f32 %v3651, %v3938
    %v3940 = vrcp.pop %v3146
    %v3941 = vmul.f32 %v3658, %v3940
    %v3942 = vrcp.pop %v3153
    %v3943 = vmul.f32 %v3665, %v3942
    %v3944 = vrcp.pop %v3160
    %v3945 = vmul.f32 %v3672, %v3944
    %v3946 = vrcp.pop %v3167
    %v3947 = vmul.f32 %v3679, %v3946
    %v3948 = vrcp.pop %v3174
    %v3949 = vmul.f32 %v3686, %v3948
    %v3950 = vrcp.pop %v3181
    %v3951 = vmul.f32 %v3693, %v3950
    %v3952 = vrcp.pop %v3188
    %v3953 = vmul.f32 %v3700, %v3952
    %v3954 = vrcp.pop %v3195
    %v3955 = vmul.f32 %v3707, %v3954
    %v3956 = vrcp.pop %v3202
    %v3957 = vmul.f32 %v3714, %v3956
    %v3958 = vrcp.pop %v3209
    %v3959 = vmul.f32 %v3721, %v3958
    %v3960 = vrcp.pop %v3216
    %v3961 = vmul.f32 %v3728, %v3960
    %v3962 = vrcp.pop %v3223
    %v3963 = vmul.f32 %v3735, %v3962
    %v3964 = vrcp.pop %v3230
    %v3965 = vmul.f32 %v3742, %v3964
    %v3966 = vrcp.pop %v3237
    %v3967 = vmul.f32 %v3749, %v3966
    %v3968 = vrcp.pop %v3244
    %v3969 = vmul.f32 %v3756, %v3968
    %v3970 = vrcp.pop %v3251
    %v3971 = vmul.f32 %v3763, %v3970
    %v3972 = vrcp.pop %v3258
    %v3973 = vmul.f32 %v3770, %v3972
    %v3974 = vrcp.pop %v3265
    %v3975 = vmul.f32 %v3777, %v3974
    %v3976 = vrcp.pop %v3272
    %v3977 = vmul.f32 %v3784, %v3976
    %v3978 = vrcp.pop %v3279
    %v3979 = vmul.f32 %v3791, %v3978
    %v3980 = vrcp.pop %v3286
    %v3981 = vmul.f32 %v3798, %v3980
    %v3982 = vrcp.pop %v3293
    %v3983 = vmul.f32 %v3805, %v3982
    %v3984 = vrcp.pop %v3300
    %v3985 = vmul.f32 %v3812, %v3984
    %v3986 = vrcp.pop %v3307
    %v3987 = vmul.f32 %v3819, %v3986
    %v3988 = vrcp.pop %v3314
    %v3989 = vmul.f32 %v3826, %v3988
    %v3990 = vrcp.pop %v3321
    %v3991 = vmul.f32 %v3833, %v3990
    %v3992 = vrcp.pop %v3328
    %v3993 = vmul.f32 %v3840, %v3992
    %v3994 = vrcp.pop %v3335
    %v3995 = vmul.f32 %v3847, %v3994
    %v3996 = vrcp.pop %v3342
    %v3997 = vmul.f32 %v3854, %v3996
    %v3998 = vrcp.pop %v3349
    %v3999 = vmul.f32 %v3861, %v3998
    %v4000 = vrcp.pop %v3356
    %v4001 = vmul.f32 %v3868, %v4000
    %v4002 = vrcp.pop %v3363
    %v4003 = vmul.f32 %v3875, %v4002
    %v4004 = vld [vmem:[%s13] sm:$0xff]
    %v4005 = vld [vmem:[%s13 + $0x8] sm:$0xff]
    %v4006 = vld [vmem:[%s13 + $0x10] sm:$0xff]
    %v4007 = vld [vmem:[%s13 + $0x18] sm:$0xff]
    %vm4072 = vcmask 1041409
    %v4073 = vsel %vm4072, %v3879, %v3877
    %vm4074 = vcmask 1042434
    %v4075 = vsel %vm4074, %v3881, %v4073
    %vm4076 = vcmask 1043459
    %v4077 = vsel %vm4076, %v3883, %v4075
    %vm4078 = vcmask 1044484
    %v4079 = vsel %vm4078, %v3885, %v4077
    %vm4080 = vcmask 1045509
    %v4081 = vsel %vm4080, %v3887, %v4079
    %vm4082 = vcmask 1046534
    %v4083 = vsel %vm4082, %v3889, %v4081
    %vm4084 = vcmask 1047559
    %v4085 = vsel %vm4084, %v3891, %v4083
    %v4086 = vsel %vm4072, %v3895, %v3893
    %v4087 = vsel %vm4074, %v3897, %v4086
    %v4088 = vsel %vm4076, %v3899, %v4087
    %v4089 = vsel %vm4078, %v3901, %v4088
    %v4090 = vsel %vm4080, %v3903, %v4089
    %v4091 = vsel %vm4082, %v3905, %v4090
    %v4092 = vsel %vm4084, %v3907, %v4091
    %v4093 = vsel %vm4072, %v3911, %v3909
    %v4094 = vsel %vm4074, %v3913, %v4093
    %v4095 = vsel %vm4076, %v3915, %v4094
    %v4096 = vsel %vm4078, %v3917, %v4095
    %v4097 = vsel %vm4080, %v3919, %v4096
    %v4098 = vsel %vm4082, %v3921, %v4097
    %v4099 = vsel %vm4084, %v3923, %v4098
    %v4100 = vsel %vm4072, %v3927, %v3925
    %v4101 = vsel %vm4074, %v3929, %v4100
    %v4102 = vsel %vm4076, %v3931, %v4101
    %v4103 = vsel %vm4078, %v3933, %v4102
    %v4104 = vsel %vm4080, %v3935, %v4103
    %v4105 = vsel %vm4082, %v3937, %v4104
    %v4106 = vsel %vm4084, %v3939, %v4105
    %v4107 = vsel %vm4072, %v3943, %v3941
    %v4108 = vsel %vm4074, %v3945, %v4107
    %v4109 = vsel %vm4076, %v3947, %v4108
    %v4110 = vsel %vm4078, %v3949, %v4109
    %v4111 = vsel %vm4080, %v3951, %v4110
    %v4112 = vsel %vm4082, %v3953, %v4111
    %v4113 = vsel %vm4084, %v3955, %v4112
    %v4114 = vsel %vm4072, %v3959, %v3957
    %v4115 = vsel %vm4074, %v3961, %v4114
    %v4116 = vsel %vm4076, %v3963, %v4115
    %v4117 = vsel %vm4078, %v3965, %v4116
    %v4118 = vsel %vm4080, %v3967, %v4117
    %v4119 = vsel %vm4082, %v3969, %v4118
    %v4120 = vsel %vm4084, %v3971, %v4119
    %v4121 = vsel %vm4072, %v3975, %v3973
    %v4122 = vsel %vm4074, %v3977, %v4121
    %v4123 = vsel %vm4076, %v3979, %v4122
    %v4124 = vsel %vm4078, %v3981, %v4123
    %v4125 = vsel %vm4080, %v3983, %v4124
    %v4126 = vsel %vm4082, %v3985, %v4125
    %v4127 = vsel %vm4084, %v3987, %v4126
    %v4128 = vsel %vm4072, %v3991, %v3989
    %v4129 = vsel %vm4074, %v3993, %v4128
    %v4130 = vsel %vm4076, %v3995, %v4129
    %v4131 = vsel %vm4078, %v3997, %v4130
    %v4132 = vsel %vm4080, %v3999, %v4131
    %v4133 = vsel %vm4082, %v4001, %v4132
    %v4134 = vsel %vm4084, %v4003, %v4133
    %v4135 = vsel %vm266, %v4085, 0
    %v4137 = vsel %vm266, %v4092, 0
    %v4139 = vsel %vm266, %v4099, 0
    %v4141 = vsel %vm266, %v4106, 0
    %v4143 = vsel %vm266, %v4113, 0
    %v4145 = vsel %vm266, %v4120, 0
    %v4147 = vsel %vm266, %v4127, 0
    %v4149 = vsel %vm266, %v4134, 0
    %4151 = vmatprep.subr.mxu0 0.0
    %4152 = vmatpush1.msra.mxu0 0.0
    %4153 = vmatprep.subr.mxu0 0.0
    %4154 = vmatpush1.msra.mxu0 0.0
    %4155 = vmatprep.subr.mxu0 0.0
    %4156 = vmatpush1.msra.mxu0 0.0
    %4157 = vmatprep.subr.mxu0 0.0
    %4158 = vmatpush1.msra.mxu0 0.0
    %4159 = vmatprep.subr.mxu0 0.0
    %4160 = vmatpush1.msra.mxu0 0.0
    %4161 = vmatprep.subr.mxu0 0.0
    %4162 = vmatpush1.msra.mxu0 0.0
    %4163 = vmatprep.subr.mxu0 0.0
    %4164 = vmatpush1.msra.mxu0 0.0
    %4165 = vmatprep.subr.mxu0 0.0
    %4166 = vmatpush1.msra.mxu0 0.0
    %4167 = vmatprep.subr.mxu0 0.0
    %4168 = vmatpush1.msra.mxu0 0.0
    %4169 = vmatprep.subr.mxu0 0.0
    %4170 = vmatpush1.msra.mxu0 0.0
    %4171 = vmatprep.subr.mxu0 0.0
    %4172 = vmatpush1.msra.mxu0 0.0
    %4173 = vmatprep.subr.mxu0 0.0
    %4174 = vmatpush1.msra.mxu0 0.0
    %4175 = vmatprep.subr.mxu0 0.0
    %4176 = vmatpush1.msra.mxu0 %v4007
    %4177 = vmatprep.subr.mxu0 0.0
    %4178 = vmatpush1.msra.mxu0 %v4006
    %4179 = vmatprep.subr.mxu0 0.0
    %4180 = vmatpush1.msra.mxu0 %v4005
    %4181 = vmatprep.subr.mxu0 0.0
    %4182 = vmatpush1.msra.mxu0 %v4004
    %4183 = vmatprep.subr.mxu0 0.0
    %4184 = vmatpush2.msra.mxu0 0.0
    %4185 = vmatprep.subr.mxu0 0.0
    %4186 = vmatpush2.msra.mxu0 0.0
    %4187 = vmatprep.subr.mxu0 0.0
    %4188 = vmatpush2.msra.mxu0 0.0
    %4189 = vmatprep.subr.mxu0 0.0
    %4190 = vmatpush2.msra.mxu0 0.0
    %4191 = vmatprep.subr.mxu0 0.0
    %4192 = vmatpush2.msra.mxu0 0.0
    %4193 = vmatprep.subr.mxu0 0.0
    %4194 = vmatpush2.msra.mxu0 0.0
    %4195 = vmatprep.subr.mxu0 0.0
    %4196 = vmatpush2.msra.mxu0 0.0
    %4197 = vmatprep.subr.mxu0 0.0
    %4198 = vmatpush2.msra.mxu0 0.0
    %4199 = vmatprep.subr.mxu0 0.0
    %4200 = vmatpush2.msra.mxu0 0.0
    %4201 = vmatprep.subr.mxu0 0.0
    %4202 = vmatpush2.msra.mxu0 0.0
    %4203 = vmatprep.subr.mxu0 0.0
    %4204 = vmatpush2.msra.mxu0 0.0
    %4205 = vmatprep.subr.mxu0 0.0
    %4206 = vmatpush2.msra.mxu0 0.0
    %4207 = vmatprep.subr.mxu0 0.0
    %4208 = vmatpush2.msra.mxu0 0.0
    %4209 = vmatprep.subr.mxu0 0.0
    %4210 = vmatpush2.msra.mxu0 0.0
    %4211 = vmatprep.subr.mxu0 0.0
    %4212 = vmatpush2.msra.mxu0 0.0
    %4213 = vmatprep.subr.mxu0 0.0
    %4214 = vmatpush2.msra.mxu0 0.0
    %4215 = vmatprep.mubr.f32.mxu0 0.0
    %4216 = vmatmul.mubr.f32.gmra.mxu0 %v4135
    %v4217 = vpop.f32.mrf.mxu0
    %v4218 = vadd.f32 0.0, %v4217
    %v4219 = vpop.f32.mrf.mxu0
    %4220 = vmatprep.mubr.f32.mxu0 0.0
    %4221 = vmatmul.mubr.f32.gmra.mxu0 %v4137
    %v4222 = vpop.f32.mrf.mxu0
    %v4223 = vadd.f32 0.0, %v4222
    %v4224 = vpop.f32.mrf.mxu0
    %4225 = vmatprep.mubr.f32.mxu0 0.0
    %4226 = vmatmul.mubr.f32.gmra.mxu0 %v4139
    %v4227 = vpop.f32.mrf.mxu0
    %v4228 = vadd.f32 0.0, %v4227
    %v4229 = vpop.f32.mrf.mxu0
    %4230 = vmatprep.mubr.f32.mxu0 0.0
    %4231 = vmatmul.mubr.f32.gmra.mxu0 %v4141
    %v4232 = vpop.f32.mrf.mxu0
    %v4233 = vadd.f32 0.0, %v4232
    %v4234 = vpop.f32.mrf.mxu0
    %4235 = vmatprep.mubr.f32.mxu0 0.0
    %4236 = vmatmul.mubr.f32.gmra.mxu0 %v4143
    %v4237 = vpop.f32.mrf.mxu0
    %v4238 = vadd.f32 0.0, %v4237
    %v4239 = vpop.f32.mrf.mxu0
    %4240 = vmatprep.mubr.f32.mxu0 0.0
    %4241 = vmatmul.mubr.f32.gmra.mxu0 %v4145
    %v4242 = vpop.f32.mrf.mxu0
    %v4243 = vadd.f32 0.0, %v4242
    %v4244 = vpop.f32.mrf.mxu0
    %4245 = vmatprep.mubr.f32.mxu0 0.0
    %4246 = vmatmul.mubr.f32.gmra.mxu0 %v4147
    %v4247 = vpop.f32.mrf.mxu0
    %v4248 = vadd.f32 0.0, %v4247
    %v4249 = vpop.f32.mrf.mxu0
    %4250 = vmatprep.mubr.f32.mxu0 0.0
    %4251 = vmatmul.mubr.f32.gmra.mxu0 %v4149
    %v4252 = vpop.f32.mrf.mxu0
    %v4253 = vadd.f32 0.0, %v4252
    %v4254 = vpop.f32.mrf.mxu0
    %4255 = vdwg.mxu0
    %v4256 = vadd.f32 %v358, %v4218
    %v4257 = vadd.f32 %v363, %v4223
    %v4258 = vadd.f32 %v368, %v4228
    %v4259 = vadd.f32 %v373, %v4233
    %v4260 = vadd.f32 %v378, %v4238
    %v4261 = vadd.f32 %v383, %v4243
    %v4262 = vadd.f32 %v388, %v4248
    %v4263 = vadd.f32 %v393, %v4253
    %v4264 = vld [vmem:[%s14] sm:$0x1]
    %v4266 = vlaneseq
    %v4267 = vshrl.u32 %v4266, 7
    %v4268 = vsub.s32 0, %v4267
    %v4269 = vrot.slane %v4264, %v4268
    %v4271 = vadd.f32 %v4256, %v4269
    %v4272 = vadd.f32 %v4257, %v4269
    %v4273 = vadd.f32 %v4258, %v4269
    %v4274 = vadd.f32 %v4259, %v4269
    %v4275 = vadd.f32 %v4260, %v4269
    %v4276 = vadd.f32 %v4261, %v4269
    %v4277 = vadd.f32 %v4262, %v4269
    %v4278 = vadd.f32 %v4263, %v4269
    %v4279 = vld [vmem:[%s15] sm:$0x1]
    %v4280 = vld [vmem:[%s16] sm:$0x1]
    %v4281 = vsel %vm266, %v4271, 0.0
    %4282 = vadd.xlane.f32.xlu0 %v4281
    %v4283 = vpop.xlane.xlu0 %4282
    %v4284 = vsel %vm266, %v4272, 0.0
    %4285 = vadd.xlane.f32.xlu0 %v4284
    %v4286 = vpop.xlane.xlu0 %4285
    %v4287 = vsel %vm266, %v4273, 0.0
    %4288 = vadd.xlane.f32.xlu0 %v4287
    %v4289 = vpop.xlane.xlu0 %4288
    %v4290 = vsel %vm266, %v4274, 0.0
    %4291 = vadd.xlane.f32.xlu0 %v4290
    %v4292 = vpop.xlane.xlu0 %4291
    %v4293 = vsel %vm266, %v4275, 0.0
    %4294 = vadd.xlane.f32.xlu0 %v4293
    %v4295 = vpop.xlane.xlu0 %4294
    %v4296 = vsel %vm266, %v4276, 0.0
    %4297 = vadd.xlane.f32.xlu0 %v4296
    %v4298 = vpop.xlane.xlu0 %4297
    %v4299 = vsel %vm266, %v4277, 0.0
    %4300 = vadd.xlane.f32.xlu0 %v4299
    %v4301 = vpop.xlane.xlu0 %4300
    %v4302 = vsel %vm266, %v4278, 0.0
    %4303 = vadd.xlane.f32.xlu0 %v4302
    %v4304 = vpop.xlane.xlu0 %4303
    %v4305 = vmul.f32 %v4283, %v426
    %v4306 = vmul.f32 %v4286, %v426
    %v4307 = vmul.f32 %v4289, %v426
    %v4308 = vmul.f32 %v4292, %v426
    %v4309 = vmul.f32 %v4295, %v426
    %v4310 = vmul.f32 %v4298, %v426
    %v4311 = vmul.f32 %v4301, %v426
    %v4312 = vmul.f32 %v4304, %v426
    %v4313 = vsub.f32 %v4271, %v4305
    %v4314 = vsub.f32 %v4272, %v4306
    %v4315 = vsub.f32 %v4273, %v4307
    %v4316 = vsub.f32 %v4274, %v4308
    %v4317 = vsub.f32 %v4275, %v4309
    %v4318 = vsub.f32 %v4276, %v4310
    %v4319 = vsub.f32 %v4277, %v4311
    %v4320 = vsub.f32 %v4278, %v4312
    %v4321 = vmul.f32 %v4313, %v4313
    %v4322 = vmul.f32 %v4314, %v4314
    %v4323 = vmul.f32 %v4315, %v4315
    %v4324 = vmul.f32 %v4316, %v4316
    %v4325 = vmul.f32 %v4317, %v4317
    %v4326 = vmul.f32 %v4318, %v4318
    %v4327 = vmul.f32 %v4319, %v4319
    %v4328 = vmul.f32 %v4320, %v4320
    %v4329 = vsel %vm266, %v4321, 0.0
    %4330 = vadd.xlane.f32.xlu0 %v4329
    %v4331 = vpop.xlane.xlu0 %4330
    %v4332 = vsel %vm266, %v4322, 0.0
    %4333 = vadd.xlane.f32.xlu0 %v4332
    %v4334 = vpop.xlane.xlu0 %4333
    %v4335 = vsel %vm266, %v4323, 0.0
    %4336 = vadd.xlane.f32.xlu0 %v4335
    %v4337 = vpop.xlane.xlu0 %4336
    %v4338 = vsel %vm266, %v4324, 0.0
    %4339 = vadd.xlane.f32.xlu0 %v4338
    %v4340 = vpop.xlane.xlu0 %4339
    %v4341 = vsel %vm266, %v4325, 0.0
    %4342 = vadd.xlane.f32.xlu0 %v4341
    %v4343 = vpop.xlane.xlu0 %4342
    %v4344 = vsel %vm266, %v4326, 0.0
    %4345 = vadd.xlane.f32.xlu0 %v4344
    %v4346 = vpop.xlane.xlu0 %4345
    %v4347 = vsel %vm266, %v4327, 0.0
    %4348 = vadd.xlane.f32.xlu0 %v4347
    %v4349 = vpop.xlane.xlu0 %4348
    %v4350 = vsel %vm266, %v4328, 0.0
    %4351 = vadd.xlane.f32.xlu0 %v4350
    %v4352 = vpop.xlane.xlu0 %4351
    %v4353 = vmul.f32 %v4331, %v426
    %v4354 = vmul.f32 %v4334, %v426
    %v4355 = vmul.f32 %v4337, %v426
    %v4356 = vmul.f32 %v4340, %v426
    %v4357 = vmul.f32 %v4343, %v426
    %v4358 = vmul.f32 %v4346, %v426
    %v4359 = vmul.f32 %v4349, %v426
    %v4360 = vmul.f32 %v4352, %v426
    %v4361 = vadd.f32 %v4353, 1e-05
    %v4362 = vadd.f32 %v4354, 1e-05
    %v4363 = vadd.f32 %v4355, 1e-05
    %v4364 = vadd.f32 %v4356, 1e-05
    %v4365 = vadd.f32 %v4357, 1e-05
    %v4366 = vadd.f32 %v4358, 1e-05
    %v4367 = vadd.f32 %v4359, 1e-05
    %v4368 = vadd.f32 %v4360, 1e-05
    %v4369 = vrsqrt.pop %v4361
    %v4370 = vrsqrt.pop %v4362
    %v4371 = vrsqrt.pop %v4363
    %v4372 = vrsqrt.pop %v4364
    %v4373 = vrsqrt.pop %v4365
    %v4374 = vrsqrt.pop %v4366
    %v4375 = vrsqrt.pop %v4367
    %v4376 = vrsqrt.pop %v4368
    %v4377 = vmul.f32 %v4313, %v4369
    %v4378 = vmul.f32 %v4314, %v4370
    %v4379 = vmul.f32 %v4315, %v4371
    %v4380 = vmul.f32 %v4316, %v4372
    %v4381 = vmul.f32 %v4317, %v4373
    %v4382 = vmul.f32 %v4318, %v4374
    %v4383 = vmul.f32 %v4319, %v4375
    %v4384 = vmul.f32 %v4320, %v4376
    %v4386 = vlaneseq
    %v4387 = vshrl.u32 %v4386, 7
    %v4388 = vsub.s32 0, %v4387
    %v4389 = vrot.slane %v4279, %v4388
    %v4391 = vmul.f32 %v4377, %v4389
    %v4392 = vmul.f32 %v4378, %v4389
    %v4393 = vmul.f32 %v4379, %v4389
    %v4394 = vmul.f32 %v4380, %v4389
    %v4395 = vmul.f32 %v4381, %v4389
    %v4396 = vmul.f32 %v4382, %v4389
    %v4397 = vmul.f32 %v4383, %v4389
    %v4398 = vmul.f32 %v4384, %v4389
    %v4400 = vlaneseq
    %v4401 = vshrl.u32 %v4400, 7
    %v4402 = vsub.s32 0, %v4401
    %v4403 = vrot.slane %v4280, %v4402
    %v4405 = vadd.f32 %v4391, %v4403
    %v4406 = vadd.f32 %v4392, %v4403
    %v4407 = vadd.f32 %v4393, %v4403
    %v4408 = vadd.f32 %v4394, %v4403
    %v4409 = vadd.f32 %v4395, %v4403
    %v4410 = vadd.f32 %v4396, %v4403
    %v4411 = vadd.f32 %v4397, %v4403
    %v4412 = vadd.f32 %v4398, %v4403
    %v4413 = vld [vmem:[%s17] sm:$0xff]
    %v4414 = vld [vmem:[%s17 + $0x8] sm:$0xff]
    %v4415 = vld [vmem:[%s17 + $0x10] sm:$0xff]
    %v4416 = vld [vmem:[%s17 + $0x18] sm:$0xff]
    %v4417 = vld [vmem:[%s18] sm:$0x1]
    %v4419 = vlaneseq
    %v4420 = vshrl.u32 %v4419, 7
    %v4421 = vsub.s32 0, %v4420
    %v4422 = vrot.slane %v4417, %v4421
    %v4425 = vsel %vm266, %v4405, 0
    %v4428 = vsel %vm266, %v4406, 0
    %v4431 = vsel %vm266, %v4407, 0
    %v4434 = vsel %vm266, %v4408, 0
    %v4437 = vsel %vm266, %v4409, 0
    %v4440 = vsel %vm266, %v4410, 0
    %v4443 = vsel %vm266, %v4411, 0
    %v4446 = vsel %vm266, %v4412, 0
    %4448 = vmatprep.subr.mxu0 0.0
    %4449 = vmatpush1.msra.mxu0 0.0
    %4450 = vmatprep.subr.mxu0 0.0
    %4451 = vmatpush1.msra.mxu0 0.0
    %4452 = vmatprep.subr.mxu0 0.0
    %4453 = vmatpush1.msra.mxu0 0.0
    %4454 = vmatprep.subr.mxu0 0.0
    %4455 = vmatpush1.msra.mxu0 0.0
    %4456 = vmatprep.subr.mxu0 0.0
    %4457 = vmatpush1.msra.mxu0 0.0
    %4458 = vmatprep.subr.mxu0 0.0
    %4459 = vmatpush1.msra.mxu0 0.0
    %4460 = vmatprep.subr.mxu0 0.0
    %4461 = vmatpush1.msra.mxu0 0.0
    %4462 = vmatprep.subr.mxu0 0.0
    %4463 = vmatpush1.msra.mxu0 0.0
    %4464 = vmatprep.subr.mxu0 0.0
    %4465 = vmatpush1.msra.mxu0 0.0
    %4466 = vmatprep.subr.mxu0 0.0
    %4467 = vmatpush1.msra.mxu0 0.0
    %4468 = vmatprep.subr.mxu0 0.0
    %4469 = vmatpush1.msra.mxu0 0.0
    %4470 = vmatprep.subr.mxu0 0.0
    %4471 = vmatpush1.msra.mxu0 0.0
    %4472 = vmatprep.subr.mxu0 0.0
    %4473 = vmatpush1.msra.mxu0 %v4416
    %4474 = vmatprep.subr.mxu0 0.0
    %4475 = vmatpush1.msra.mxu0 %v4415
    %4476 = vmatprep.subr.mxu0 0.0
    %4477 = vmatpush1.msra.mxu0 %v4414
    %4478 = vmatprep.subr.mxu0 0.0
    %4479 = vmatpush1.msra.mxu0 %v4413
    %4480 = vmatprep.subr.mxu0 0.0
    %4481 = vmatpush2.msra.mxu0 0.0
    %4482 = vmatprep.subr.mxu0 0.0
    %4483 = vmatpush2.msra.mxu0 0.0
    %4484 = vmatprep.subr.mxu0 0.0
    %4485 = vmatpush2.msra.mxu0 0.0
    %4486 = vmatprep.subr.mxu0 0.0
    %4487 = vmatpush2.msra.mxu0 0.0
    %4488 = vmatprep.subr.mxu0 0.0
    %4489 = vmatpush2.msra.mxu0 0.0
    %4490 = vmatprep.subr.mxu0 0.0
    %4491 = vmatpush2.msra.mxu0 0.0
    %4492 = vmatprep.subr.mxu0 0.0
    %4493 = vmatpush2.msra.mxu0 0.0
    %4494 = vmatprep.subr.mxu0 0.0
    %4495 = vmatpush2.msra.mxu0 0.0
    %4496 = vmatprep.subr.mxu0 0.0
    %4497 = vmatpush2.msra.mxu0 0.0
    %4498 = vmatprep.subr.mxu0 0.0
    %4499 = vmatpush2.msra.mxu0 0.0
    %4500 = vmatprep.subr.mxu0 0.0
    %4501 = vmatpush2.msra.mxu0 0.0
    %4502 = vmatprep.subr.mxu0 0.0
    %4503 = vmatpush2.msra.mxu0 0.0
    %4504 = vmatprep.subr.mxu0 0.0
    %4505 = vmatpush2.msra.mxu0 0.0
    %4506 = vmatprep.subr.mxu0 0.0
    %4507 = vmatpush2.msra.mxu0 0.0
    %4508 = vmatprep.subr.mxu0 0.0
    %4509 = vmatpush2.msra.mxu0 0.0
    %4510 = vmatprep.subr.mxu0 0.0
    %4511 = vmatpush2.msra.mxu0 0.0
    %4512 = vmatprep.mubr.f32.mxu0 0.0
    %4513 = vmatmul.mubr.f32.gmra.mxu0 %v4425
    %v4514 = vpop.f32.mrf.mxu0
    %v4515 = vadd.f32 %v4422, %v4514
    %v4516 = vpop.f32.mrf.mxu0
    %4517 = vmatprep.mubr.f32.mxu0 0.0
    %4518 = vmatmul.mubr.f32.gmra.mxu0 %v4428
    %v4519 = vpop.f32.mrf.mxu0
    %v4520 = vadd.f32 %v4422, %v4519
    %v4521 = vpop.f32.mrf.mxu0
    %4522 = vmatprep.mubr.f32.mxu0 0.0
    %4523 = vmatmul.mubr.f32.gmra.mxu0 %v4431
    %v4524 = vpop.f32.mrf.mxu0
    %v4525 = vadd.f32 %v4422, %v4524
    %v4526 = vpop.f32.mrf.mxu0
    %4527 = vmatprep.mubr.f32.mxu0 0.0
    %4528 = vmatmul.mubr.f32.gmra.mxu0 %v4434
    %v4529 = vpop.f32.mrf.mxu0
    %v4530 = vadd.f32 %v4422, %v4529
    %v4531 = vpop.f32.mrf.mxu0
    %4532 = vmatprep.mubr.f32.mxu0 0.0
    %4533 = vmatmul.mubr.f32.gmra.mxu0 %v4437
    %v4534 = vpop.f32.mrf.mxu0
    %v4535 = vadd.f32 %v4422, %v4534
    %v4536 = vpop.f32.mrf.mxu0
    %4537 = vmatprep.mubr.f32.mxu0 0.0
    %4538 = vmatmul.mubr.f32.gmra.mxu0 %v4440
    %v4539 = vpop.f32.mrf.mxu0
    %v4540 = vadd.f32 %v4422, %v4539
    %v4541 = vpop.f32.mrf.mxu0
    %4542 = vmatprep.mubr.f32.mxu0 0.0
    %4543 = vmatmul.mubr.f32.gmra.mxu0 %v4443
    %v4544 = vpop.f32.mrf.mxu0
    %v4545 = vadd.f32 %v4422, %v4544
    %v4546 = vpop.f32.mrf.mxu0
    %4547 = vmatprep.mubr.f32.mxu0 0.0
    %4548 = vmatmul.mubr.f32.gmra.mxu0 %v4446
    %v4549 = vpop.f32.mrf.mxu0
    %v4550 = vadd.f32 %v4422, %v4549
    %v4551 = vpop.f32.mrf.mxu0
    %4552 = vdwg.mxu0
    %v4553 = vmul.f32 %v4515, 0.5
    %v4554 = vmul.f32 %v4520, 0.5
    %v4555 = vmul.f32 %v4525, 0.5
    %v4556 = vmul.f32 %v4530, 0.5
    %v4557 = vmul.f32 %v4535, 0.5
    %v4558 = vmul.f32 %v4540, 0.5
    %v4559 = vmul.f32 %v4545, 0.5
    %v4560 = vmul.f32 %v4550, 0.5
    %v4561 = vmul.f32 %v4515, 0.70710677
    %v4562 = vmul.f32 %v4520, 0.70710677
    %v4563 = vmul.f32 %v4525, 0.70710677
    %v4564 = vmul.f32 %v4530, 0.70710677
    %v4565 = vmul.f32 %v4535, 0.70710677
    %v4566 = vmul.f32 %v4540, 0.70710677
    %v4567 = vmul.f32 %v4545, 0.70710677
    %v4568 = vmul.f32 %v4550, 0.70710677
    %v4569 = vand.u32 2147483647, %v4561
    %v4570 = vand.u32 2147483647, %v4562
    %v4571 = vand.u32 2147483647, %v4563
    %v4572 = vand.u32 2147483647, %v4564
    %v4573 = vand.u32 2147483647, %v4565
    %v4574 = vand.u32 2147483647, %v4566
    %v4575 = vand.u32 2147483647, %v4567
    %v4576 = vand.u32 2147483647, %v4568
    %v4577 = vmul.f32 %v4569, 0.3275911
    %v4578 = vmul.f32 %v4570, 0.3275911
    %v4579 = vmul.f32 %v4571, 0.3275911
    %v4580 = vmul.f32 %v4572, 0.3275911
    %v4581 = vmul.f32 %v4573, 0.3275911
    %v4582 = vmul.f32 %v4574, 0.3275911
    %v4583 = vmul.f32 %v4575, 0.3275911
    %v4584 = vmul.f32 %v4576, 0.3275911
    %v4585 = vadd.f32 %v4577, 1.0
    %v4586 = vadd.f32 %v4578, 1.0
    %v4587 = vadd.f32 %v4579, 1.0
    %v4588 = vadd.f32 %v4580, 1.0
    %v4589 = vadd.f32 %v4581, 1.0
    %v4590 = vadd.f32 %v4582, 1.0
    %v4591 = vadd.f32 %v4583, 1.0
    %v4592 = vadd.f32 %v4584, 1.0
    %v4593 = vrcp.pop %v4585
    %v4594 = vmul.f32 1.0, %v4593
    %v4595 = vrcp.pop %v4586
    %v4596 = vmul.f32 1.0, %v4595
    %v4597 = vrcp.pop %v4587
    %v4598 = vmul.f32 1.0, %v4597
    %v4599 = vrcp.pop %v4588
    %v4600 = vmul.f32 1.0, %v4599
    %v4601 = vrcp.pop %v4589
    %v4602 = vmul.f32 1.0, %v4601
    %v4603 = vrcp.pop %v4590
    %v4604 = vmul.f32 1.0, %v4603
    %v4605 = vrcp.pop %v4591
    %v4606 = vmul.f32 1.0, %v4605
    %v4607 = vrcp.pop %v4592
    %v4608 = vmul.f32 1.0, %v4607
    %v4609 = vmul.f32 %v4594, 1.0614054
    %v4610 = vmul.f32 %v4596, 1.0614054
    %v4611 = vmul.f32 %v4598, 1.0614054
    %v4612 = vmul.f32 %v4600, 1.0614054
    %v4613 = vmul.f32 %v4602, 1.0614054
    %v4614 = vmul.f32 %v4604, 1.0614054
    %v4615 = vmul.f32 %v4606, 1.0614054
    %v4616 = vmul.f32 %v4608, 1.0614054
    %v4617 = vadd.f32 %v4609, -1.4531521
    %v4618 = vadd.f32 %v4610, -1.4531521
    %v4619 = vadd.f32 %v4611, -1.4531521
    %v4620 = vadd.f32 %v4612, -1.4531521
    %v4621 = vadd.f32 %v4613, -1.4531521
    %v4622 = vadd.f32 %v4614, -1.4531521
    %v4623 = vadd.f32 %v4615, -1.4531521
    %v4624 = vadd.f32 %v4616, -1.4531521
    %v4625 = vmul.f32 %v4617, %v4594
    %v4626 = vmul.f32 %v4618, %v4596
    %v4627 = vmul.f32 %v4619, %v4598
    %v4628 = vmul.f32 %v4620, %v4600
    %v4629 = vmul.f32 %v4621, %v4602
    %v4630 = vmul.f32 %v4622, %v4604
    %v4631 = vmul.f32 %v4623, %v4606
    %v4632 = vmul.f32 %v4624, %v4608
    %v4633 = vadd.f32 %v4625, 1.4214138
    %v4634 = vadd.f32 %v4626, 1.4214138
    %v4635 = vadd.f32 %v4627, 1.4214138
    %v4636 = vadd.f32 %v4628, 1.4214138
    %v4637 = vadd.f32 %v4629, 1.4214138
    %v4638 = vadd.f32 %v4630, 1.4214138
    %v4639 = vadd.f32 %v4631, 1.4214138
    %v4640 = vadd.f32 %v4632, 1.4214138
    %v4641 = vmul.f32 %v4633, %v4594
    %v4642 = vmul.f32 %v4634, %v4596
    %v4643 = vmul.f32 %v4635, %v4598
    %v4644 = vmul.f32 %v4636, %v4600
    %v4645 = vmul.f32 %v4637, %v4602
    %v4646 = vmul.f32 %v4638, %v4604
    %v4647 = vmul.f32 %v4639, %v4606
    %v4648 = vmul.f32 %v4640, %v4608
    %v4649 = vadd.f32 %v4641, -0.28449672
    %v4650 = vadd.f32 %v4642, -0.28449672
    %v4651 = vadd.f32 %v4643, -0.28449672
    %v4652 = vadd.f32 %v4644, -0.28449672
    %v4653 = vadd.f32 %v4645, -0.28449672
    %v4654 = vadd.f32 %v4646, -0.28449672
    %v4655 = vadd.f32 %v4647, -0.28449672
    %v4656 = vadd.f32 %v4648, -0.28449672
    %v4657 = vmul.f32 %v4649, %v4594
    %v4658 = vmul.f32 %v4650, %v4596
    %v4659 = vmul.f32 %v4651, %v4598
    %v4660 = vmul.f32 %v4652, %v4600
    %v4661 = vmul.f32 %v4653, %v4602
    %v4662 = vmul.f32 %v4654, %v4604
    %v4663 = vmul.f32 %v4655, %v4606
    %v4664 = vmul.f32 %v4656, %v4608
    %v4665 = vadd.f32 %v4657, 0.2548296
    %v4666 = vadd.f32 %v4658, 0.2548296
    %v4667 = vadd.f32 %v4659, 0.2548296
    %v4668 = vadd.f32 %v4660, 0.2548296
    %v4669 = vadd.f32 %v4661, 0.2548296
    %v4670 = vadd.f32 %v4662, 0.2548296
    %v4671 = vadd.f32 %v4663, 0.2548296
    %v4672 = vadd.f32 %v4664, 0.2548296
    %v4673 = vmul.f32 %v4665, %v4594
    %v4674 = vmul.f32 %v4666, %v4596
    %v4675 = vmul.f32 %v4667, %v4598
    %v4676 = vmul.f32 %v4668, %v4600
    %v4677 = vmul.f32 %v4669, %v4602
    %v4678 = vmul.f32 %v4670, %v4604
    %v4679 = vmul.f32 %v4671, %v4606
    %v4680 = vmul.f32 %v4672, %v4608
    %v4681 = vsub.f32 0.0, %v4569
    %v4682 = vsub.f32 0.0, %v4570
    %v4683 = vsub.f32 0.0, %v4571
    %v4684 = vsub.f32 0.0, %v4572
    %v4685 = vsub.f32 0.0, %v4573
    %v4686 = vsub.f32 0.0, %v4574
    %v4687 = vsub.f32 0.0, %v4575
    %v4688 = vsub.f32 0.0, %v4576
    %v4689 = vmul.f32 %v4681, %v4569
    %v4690 = vmul.f32 %v4682, %v4570
    %v4691 = vmul.f32 %v4683, %v4571
    %v4692 = vmul.f32 %v4684, %v4572
    %v4693 = vmul.f32 %v4685, %v4573
    %v4694 = vmul.f32 %v4686, %v4574
    %v4695 = vmul.f32 %v4687, %v4575
    %v4696 = vmul.f32 %v4688, %v4576
    %v4697 = vmul.f32 %v4689, 1.442695
    %v4698 = vpow.pop %v4697
    %v4699 = vmul.f32 %v4690, 1.442695
    %v4700 = vpow.pop %v4699
    %v4701 = vmul.f32 %v4691, 1.442695
    %v4702 = vpow.pop %v4701
    %v4703 = vmul.f32 %v4692, 1.442695
    %v4704 = vpow.pop %v4703
    %v4705 = vmul.f32 %v4693, 1.442695
    %v4706 = vpow.pop %v4705
    %v4707 = vmul.f32 %v4694, 1.442695
    %v4708 = vpow.pop %v4707
    %v4709 = vmul.f32 %v4695, 1.442695
    %v4710 = vpow.pop %v4709
    %v4711 = vmul.f32 %v4696, 1.442695
    %v4712 = vpow.pop %v4711
    %v4713 = vmul.f32 %v4673, %v4698
    %v4714 = vmul.f32 %v4674, %v4700
    %v4715 = vmul.f32 %v4675, %v4702
    %v4716 = vmul.f32 %v4676, %v4704
    %v4717 = vmul.f32 %v4677, %v4706
    %v4718 = vmul.f32 %v4678, %v4708
    %v4719 = vmul.f32 %v4679, %v4710
    %v4720 = vmul.f32 %v4680, %v4712
    %v4721 = vsub.f32 1.0, %v4713
    %v4722 = vsub.f32 1.0, %v4714
    %v4723 = vsub.f32 1.0, %v4715
    %v4724 = vsub.f32 1.0, %v4716
    %v4725 = vsub.f32 1.0, %v4717
    %v4726 = vsub.f32 1.0, %v4718
    %v4727 = vsub.f32 1.0, %v4719
    %v4728 = vsub.f32 1.0, %v4720
    %vm4729 = vcmp.ge.f32.partialorder %v4561, 0.0
    %vm4730 = vcmp.ge.f32.partialorder %v4562, 0.0
    %vm4731 = vcmp.ge.f32.partialorder %v4563, 0.0
    %vm4732 = vcmp.ge.f32.partialorder %v4564, 0.0
    %vm4733 = vcmp.ge.f32.partialorder %v4565, 0.0
    %vm4734 = vcmp.ge.f32.partialorder %v4566, 0.0
    %vm4735 = vcmp.ge.f32.partialorder %v4567, 0.0
    %vm4736 = vcmp.ge.f32.partialorder %v4568, 0.0
    %v4737 = vsub.f32 0.0, %v4721
    %v4738 = vsub.f32 0.0, %v4722
    %v4739 = vsub.f32 0.0, %v4723
    %v4740 = vsub.f32 0.0, %v4724
    %v4741 = vsub.f32 0.0, %v4725
    %v4742 = vsub.f32 0.0, %v4726
    %v4743 = vsub.f32 0.0, %v4727
    %v4744 = vsub.f32 0.0, %v4728
    %v4745 = vsel %vm4729, %v4721, %v4737
    %v4746 = vsel %vm4730, %v4722, %v4738
    %v4747 = vsel %vm4731, %v4723, %v4739
    %v4748 = vsel %vm4732, %v4724, %v4740
    %v4749 = vsel %vm4733, %v4725, %v4741
    %v4750 = vsel %vm4734, %v4726, %v4742
    %v4751 = vsel %vm4735, %v4727, %v4743
    %v4752 = vsel %vm4736, %v4728, %v4744
    %v4753 = vadd.f32 %v4745, 1.0
    %v4754 = vadd.f32 %v4746, 1.0
    %v4755 = vadd.f32 %v4747, 1.0
    %v4756 = vadd.f32 %v4748, 1.0
    %v4757 = vadd.f32 %v4749, 1.0
    %v4758 = vadd.f32 %v4750, 1.0
    %v4759 = vadd.f32 %v4751, 1.0
    %v4760 = vadd.f32 %v4752, 1.0
    %v4761 = vmul.f32 %v4553, %v4753
    %v4762 = vmul.f32 %v4554, %v4754
    %v4763 = vmul.f32 %v4555, %v4755
    %v4764 = vmul.f32 %v4556, %v4756
    %v4765 = vmul.f32 %v4557, %v4757
    %v4766 = vmul.f32 %v4558, %v4758
    %v4767 = vmul.f32 %v4559, %v4759
    %v4768 = vmul.f32 %v4560, %v4760
    %v4769 = vld [vmem:[%s19] sm:$0xff]
    %v4770 = vld [vmem:[%s19 + $0x8] sm:$0xff]
    %v4771 = vld [vmem:[%s19 + $0x10] sm:$0xff]
    %v4772 = vld [vmem:[%s19 + $0x18] sm:$0xff]
    %v4773 = vld [vmem:[%s19 + $0x20] sm:$0xff]
    %v4774 = vld [vmem:[%s19 + $0x28] sm:$0xff]
    %v4775 = vld [vmem:[%s19 + $0x30] sm:$0xff]
    %v4776 = vld [vmem:[%s19 + $0x38] sm:$0xff]
    %v4777 = vld [vmem:[%s19 + $0x40] sm:$0xff]
    %v4778 = vld [vmem:[%s19 + $0x48] sm:$0xff]
    %v4779 = vld [vmem:[%s19 + $0x50] sm:$0xff]
    %v4780 = vld [vmem:[%s19 + $0x58] sm:$0xff]
    %v4781 = vld [vmem:[%s19 + $0x60] sm:$0xff]
    %v4782 = vld [vmem:[%s19 + $0x68] sm:$0xff]
    %v4783 = vld [vmem:[%s19 + $0x70] sm:$0xff]
    %v4784 = vld [vmem:[%s19 + $0x78] sm:$0xff]
    %4785 = vmatprep.subr.mxu0 0.0
    %4786 = vmatpush1.msra.mxu0 %v4784
    %4787 = vmatprep.subr.mxu0 0.0
    %4788 = vmatpush1.msra.mxu0 %v4783
    %4789 = vmatprep.subr.mxu0 0.0
    %4790 = vmatpush1.msra.mxu0 %v4782
    %4791 = vmatprep.subr.mxu0 0.0
    %4792 = vmatpush1.msra.mxu0 %v4781
    %4793 = vmatprep.subr.mxu0 0.0
    %4794 = vmatpush1.msra.mxu0 %v4780
    %4795 = vmatprep.subr.mxu0 0.0
    %4796 = vmatpush1.msra.mxu0 %v4779
    %4797 = vmatprep.subr.mxu0 0.0
    %4798 = vmatpush1.msra.mxu0 %v4778
    %4799 = vmatprep.subr.mxu0 0.0
    %4800 = vmatpush1.msra.mxu0 %v4777
    %4801 = vmatprep.subr.mxu0 0.0
    %4802 = vmatpush1.msra.mxu0 %v4776
    %4803 = vmatprep.subr.mxu0 0.0
    %4804 = vmatpush1.msra.mxu0 %v4775
    %4805 = vmatprep.subr.mxu0 0.0
    %4806 = vmatpush1.msra.mxu0 %v4774
    %4807 = vmatprep.subr.mxu0 0.0
    %4808 = vmatpush1.msra.mxu0 %v4773
    %4809 = vmatprep.subr.mxu0 0.0
    %4810 = vmatpush1.msra.mxu0 %v4772
    %4811 = vmatprep.subr.mxu0 0.0
    %4812 = vmatpush1.msra.mxu0 %v4771
    %4813 = vmatprep.subr.mxu0 0.0
    %4814 = vmatpush1.msra.mxu0 %v4770
    %4815 = vmatprep.subr.mxu0 0.0
    %4816 = vmatpush1.msra.mxu0 %v4769
    %4817 = vmatprep.subr.mxu0 0.0
    %4818 = vmatpush2.msra.mxu0 0.0
    %4819 = vmatprep.subr.mxu0 0.0
    %4820 = vmatpush2.msra.mxu0 0.0
    %4821 = vmatprep.subr.mxu0 0.0
    %4822 = vmatpush2.msra.mxu0 0.0
    %4823 = vmatprep.subr.mxu0 0.0
    %4824 = vmatpush2.msra.mxu0 0.0
    %4825 = vmatprep.subr.mxu0 0.0
    %4826 = vmatpush2.msra.mxu0 0.0
    %4827 = vmatprep.subr.mxu0 0.0
    %4828 = vmatpush2.msra.mxu0 0.0
    %4829 = vmatprep.subr.mxu0 0.0
    %4830 = vmatpush2.msra.mxu0 0.0
    %4831 = vmatprep.subr.mxu0 0.0
    %4832 = vmatpush2.msra.mxu0 0.0
    %4833 = vmatprep.subr.mxu0 0.0
    %4834 = vmatpush2.msra.mxu0 0.0
    %4835 = vmatprep.subr.mxu0 0.0
    %4836 = vmatpush2.msra.mxu0 0.0
    %4837 = vmatprep.subr.mxu0 0.0
    %4838 = vmatpush2.msra.mxu0 0.0
    %4839 = vmatprep.subr.mxu0 0.0
    %4840 = vmatpush2.msra.mxu0 0.0
    %4841 = vmatprep.subr.mxu0 0.0
    %4842 = vmatpush2.msra.mxu0 0.0
    %4843 = vmatprep.subr.mxu0 0.0
    %4844 = vmatpush2.msra.mxu0 0.0
    %4845 = vmatprep.subr.mxu0 0.0
    %4846 = vmatpush2.msra.mxu0 0.0
    %4847 = vmatprep.subr.mxu0 0.0
    %4848 = vmatpush2.msra.mxu0 0.0
    %4849 = vmatprep.mubr.f32.mxu0 0.0
    %4850 = vmatmul.mubr.f32.gmra.mxu0 %v4761
    %v4851 = vpop.f32.mrf.mxu0
    %v4852 = vadd.f32 0.0, %v4851
    %v4853 = vpop.f32.mrf.mxu0
    %4854 = vmatprep.mubr.f32.mxu0 0.0
    %4855 = vmatmul.mubr.f32.gmra.mxu0 %v4762
    %v4856 = vpop.f32.mrf.mxu0
    %v4857 = vadd.f32 0.0, %v4856
    %v4858 = vpop.f32.mrf.mxu0
    %4859 = vmatprep.mubr.f32.mxu0 0.0
    %4860 = vmatmul.mubr.f32.gmra.mxu0 %v4763
    %v4861 = vpop.f32.mrf.mxu0
    %v4862 = vadd.f32 0.0, %v4861
    %v4863 = vpop.f32.mrf.mxu0
    %4864 = vmatprep.mubr.f32.mxu0 0.0
    %4865 = vmatmul.mubr.f32.gmra.mxu0 %v4764
    %v4866 = vpop.f32.mrf.mxu0
    %v4867 = vadd.f32 0.0, %v4866
    %v4868 = vpop.f32.mrf.mxu0
    %4869 = vmatprep.mubr.f32.mxu0 0.0
    %4870 = vmatmul.mubr.f32.gmra.mxu0 %v4765
    %v4871 = vpop.f32.mrf.mxu0
    %v4872 = vadd.f32 0.0, %v4871
    %v4873 = vpop.f32.mrf.mxu0
    %4874 = vmatprep.mubr.f32.mxu0 0.0
    %4875 = vmatmul.mubr.f32.gmra.mxu0 %v4766
    %v4876 = vpop.f32.mrf.mxu0
    %v4877 = vadd.f32 0.0, %v4876
    %v4878 = vpop.f32.mrf.mxu0
    %4879 = vmatprep.mubr.f32.mxu0 0.0
    %4880 = vmatmul.mubr.f32.gmra.mxu0 %v4767
    %v4881 = vpop.f32.mrf.mxu0
    %v4882 = vadd.f32 0.0, %v4881
    %v4883 = vpop.f32.mrf.mxu0
    %4884 = vmatprep.mubr.f32.mxu0 0.0
    %4885 = vmatmul.mubr.f32.gmra.mxu0 %v4768
    %v4886 = vpop.f32.mrf.mxu0
    %v4887 = vadd.f32 0.0, %v4886
    %v4888 = vpop.f32.mrf.mxu0
    %4889 = vdwg.mxu0
    %v4890 = vadd.f32 %v4271, %v4852
    %v4891 = vadd.f32 %v4272, %v4857
    %v4892 = vadd.f32 %v4273, %v4862
    %v4893 = vadd.f32 %v4274, %v4867
    %v4894 = vadd.f32 %v4275, %v4872
    %v4895 = vadd.f32 %v4276, %v4877
    %v4896 = vadd.f32 %v4277, %v4882
    %v4897 = vadd.f32 %v4278, %v4887
    %v4898 = vld [vmem:[%s20] sm:$0x1]
    %v4900 = vlaneseq
    %v4901 = vshrl.u32 %v4900, 7
    %v4902 = vsub.s32 0, %v4901
    %v4903 = vrot.slane %v4898, %v4902
    %v4905 = vadd.f32 %v4890, %v4903
    %v4906 = vadd.f32 %v4891, %v4903
    %v4907 = vadd.f32 %v4892, %v4903
    %v4908 = vadd.f32 %v4893, %v4903
    %v4909 = vadd.f32 %v4894, %v4903
    %v4910 = vadd.f32 %v4895, %v4903
    %v4911 = vadd.f32 %v4896, %v4903
    %v4912 = vadd.f32 %v4897, %v4903
    %s4913 = scalar_lea.vmem %s5, 1
    %v4914 = vld [vmem:[%s4913] sm:$0x1]
    %s4915 = scalar_lea.vmem %s6, 1
    %v4916 = vld [vmem:[%s4915] sm:$0x1]
    %v4917 = vsel %vm266, %v4905, 0.0
    %4918 = vadd.xlane.f32.xlu0 %v4917
    %v4919 = vpop.xlane.xlu0 %4918
    %v4920 = vsel %vm266, %v4906, 0.0
    %4921 = vadd.xlane.f32.xlu0 %v4920
    %v4922 = vpop.xlane.xlu0 %4921
    %v4923 = vsel %vm266, %v4907, 0.0
    %4924 = vadd.xlane.f32.xlu0 %v4923
    %v4925 = vpop.xlane.xlu0 %4924
    %v4926 = vsel %vm266, %v4908, 0.0
    %4927 = vadd.xlane.f32.xlu0 %v4926
    %v4928 = vpop.xlane.xlu0 %4927
    %v4929 = vsel %vm266, %v4909, 0.0
    %4930 = vadd.xlane.f32.xlu0 %v4929
    %v4931 = vpop.xlane.xlu0 %4930
    %v4932 = vsel %vm266, %v4910, 0.0
    %4933 = vadd.xlane.f32.xlu0 %v4932
    %v4934 = vpop.xlane.xlu0 %4933
    %v4935 = vsel %vm266, %v4911, 0.0
    %4936 = vadd.xlane.f32.xlu0 %v4935
    %v4937 = vpop.xlane.xlu0 %4936
    %v4938 = vsel %vm266, %v4912, 0.0
    %4939 = vadd.xlane.f32.xlu0 %v4938
    %v4940 = vpop.xlane.xlu0 %4939
    %v4941 = vmul.f32 %v4919, %v426
    %v4942 = vmul.f32 %v4922, %v426
    %v4943 = vmul.f32 %v4925, %v426
    %v4944 = vmul.f32 %v4928, %v426
    %v4945 = vmul.f32 %v4931, %v426
    %v4946 = vmul.f32 %v4934, %v426
    %v4947 = vmul.f32 %v4937, %v426
    %v4948 = vmul.f32 %v4940, %v426
    %v4949 = vsub.f32 %v4905, %v4941
    %v4950 = vsub.f32 %v4906, %v4942
    %v4951 = vsub.f32 %v4907, %v4943
    %v4952 = vsub.f32 %v4908, %v4944
    %v4953 = vsub.f32 %v4909, %v4945
    %v4954 = vsub.f32 %v4910, %v4946
    %v4955 = vsub.f32 %v4911, %v4947
    %v4956 = vsub.f32 %v4912, %v4948
    %v4957 = vmul.f32 %v4949, %v4949
    %v4958 = vmul.f32 %v4950, %v4950
    %v4959 = vmul.f32 %v4951, %v4951
    %v4960 = vmul.f32 %v4952, %v4952
    %v4961 = vmul.f32 %v4953, %v4953
    %v4962 = vmul.f32 %v4954, %v4954
    %v4963 = vmul.f32 %v4955, %v4955
    %v4964 = vmul.f32 %v4956, %v4956
    %v4965 = vsel %vm266, %v4957, 0.0
    %4966 = vadd.xlane.f32.xlu0 %v4965
    %v4967 = vpop.xlane.xlu0 %4966
    %v4968 = vsel %vm266, %v4958, 0.0
    %4969 = vadd.xlane.f32.xlu0 %v4968
    %v4970 = vpop.xlane.xlu0 %4969
    %v4971 = vsel %vm266, %v4959, 0.0
    %4972 = vadd.xlane.f32.xlu0 %v4971
    %v4973 = vpop.xlane.xlu0 %4972
    %v4974 = vsel %vm266, %v4960, 0.0
    %4975 = vadd.xlane.f32.xlu0 %v4974
    %v4976 = vpop.xlane.xlu0 %4975
    %v4977 = vsel %vm266, %v4961, 0.0
    %4978 = vadd.xlane.f32.xlu0 %v4977
    %v4979 = vpop.xlane.xlu0 %4978
    %v4980 = vsel %vm266, %v4962, 0.0
    %4981 = vadd.xlane.f32.xlu0 %v4980
    %v4982 = vpop.xlane.xlu0 %4981
    %v4983 = vsel %vm266, %v4963, 0.0
    %4984 = vadd.xlane.f32.xlu0 %v4983
    %v4985 = vpop.xlane.xlu0 %4984
    %v4986 = vsel %vm266, %v4964, 0.0
    %4987 = vadd.xlane.f32.xlu0 %v4986
    %v4988 = vpop.xlane.xlu0 %4987
    %v4989 = vmul.f32 %v4967, %v426
    %v4990 = vmul.f32 %v4970, %v426
    %v4991 = vmul.f32 %v4973, %v426
    %v4992 = vmul.f32 %v4976, %v426
    %v4993 = vmul.f32 %v4979, %v426
    %v4994 = vmul.f32 %v4982, %v426
    %v4995 = vmul.f32 %v4985, %v426
    %v4996 = vmul.f32 %v4988, %v426
    %v4997 = vadd.f32 %v4989, 1e-05
    %v4998 = vadd.f32 %v4990, 1e-05
    %v4999 = vadd.f32 %v4991, 1e-05
    %v5000 = vadd.f32 %v4992, 1e-05
    %v5001 = vadd.f32 %v4993, 1e-05
    %v5002 = vadd.f32 %v4994, 1e-05
    %v5003 = vadd.f32 %v4995, 1e-05
    %v5004 = vadd.f32 %v4996, 1e-05
    %v5005 = vrsqrt.pop %v4997
    %v5006 = vrsqrt.pop %v4998
    %v5007 = vrsqrt.pop %v4999
    %v5008 = vrsqrt.pop %v5000
    %v5009 = vrsqrt.pop %v5001
    %v5010 = vrsqrt.pop %v5002
    %v5011 = vrsqrt.pop %v5003
    %v5012 = vrsqrt.pop %v5004
    %v5013 = vmul.f32 %v4949, %v5005
    %v5014 = vmul.f32 %v4950, %v5006
    %v5015 = vmul.f32 %v4951, %v5007
    %v5016 = vmul.f32 %v4952, %v5008
    %v5017 = vmul.f32 %v4953, %v5009
    %v5018 = vmul.f32 %v4954, %v5010
    %v5019 = vmul.f32 %v4955, %v5011
    %v5020 = vmul.f32 %v4956, %v5012
    %v5022 = vlaneseq
    %v5023 = vshrl.u32 %v5022, 7
    %v5024 = vsub.s32 0, %v5023
    %v5025 = vrot.slane %v4914, %v5024
    %v5027 = vmul.f32 %v5013, %v5025
    %v5028 = vmul.f32 %v5014, %v5025
    %v5029 = vmul.f32 %v5015, %v5025
    %v5030 = vmul.f32 %v5016, %v5025
    %v5031 = vmul.f32 %v5017, %v5025
    %v5032 = vmul.f32 %v5018, %v5025
    %v5033 = vmul.f32 %v5019, %v5025
    %v5034 = vmul.f32 %v5020, %v5025
    %v5036 = vlaneseq
    %v5037 = vshrl.u32 %v5036, 7
    %v5038 = vsub.s32 0, %v5037
    %v5039 = vrot.slane %v4916, %v5038
    %v5041 = vadd.f32 %v5027, %v5039
    %v5042 = vadd.f32 %v5028, %v5039
    %v5043 = vadd.f32 %v5029, %v5039
    %v5044 = vadd.f32 %v5030, %v5039
    %v5045 = vadd.f32 %v5031, %v5039
    %v5046 = vadd.f32 %v5032, %v5039
    %v5047 = vadd.f32 %v5033, %v5039
    %v5048 = vadd.f32 %v5034, %v5039
    %s5049 = scalar_lea.vmem %s7, 32
    %v5050 = vld [vmem:[%s5049] sm:$0xff]
    %v5051 = vld [vmem:[%s5049 + $0x8] sm:$0xff]
    %v5052 = vld [vmem:[%s5049 + $0x10] sm:$0xff]
    %v5053 = vld [vmem:[%s5049 + $0x18] sm:$0xff]
    %s5054 = scalar_lea.vmem %s8, 1
    %v5055 = vld [vmem:[%s5054] sm:$0x1]
    %v5057 = vlaneseq
    %v5058 = vshrl.u32 %v5057, 7
    %v5059 = vsub.s32 0, %v5058
    %v5060 = vrot.slane %v5055, %v5059
    %v5063 = vsel %vm266, %v5041, 0
    %v5066 = vsel %vm266, %v5042, 0
    %v5069 = vsel %vm266, %v5043, 0
    %v5072 = vsel %vm266, %v5044, 0
    %v5075 = vsel %vm266, %v5045, 0
    %v5078 = vsel %vm266, %v5046, 0
    %v5081 = vsel %vm266, %v5047, 0
    %v5084 = vsel %vm266, %v5048, 0
    %5086 = vmatprep.subr.mxu0 0.0
    %5087 = vmatpush1.msra.mxu0 0.0
    %5088 = vmatprep.subr.mxu0 0.0
    %5089 = vmatpush1.msra.mxu0 0.0
    %5090 = vmatprep.subr.mxu0 0.0
    %5091 = vmatpush1.msra.mxu0 0.0
    %5092 = vmatprep.subr.mxu0 0.0
    %5093 = vmatpush1.msra.mxu0 0.0
    %5094 = vmatprep.subr.mxu0 0.0
    %5095 = vmatpush1.msra.mxu0 0.0
    %5096 = vmatprep.subr.mxu0 0.0
    %5097 = vmatpush1.msra.mxu0 0.0
    %5098 = vmatprep.subr.mxu0 0.0
    %5099 = vmatpush1.msra.mxu0 0.0
    %5100 = vmatprep.subr.mxu0 0.0
    %5101 = vmatpush1.msra.mxu0 0.0
    %5102 = vmatprep.subr.mxu0 0.0
    %5103 = vmatpush1.msra.mxu0 0.0
    %5104 = vmatprep.subr.mxu0 0.0
    %5105 = vmatpush1.msra.mxu0 0.0
    %5106 = vmatprep.subr.mxu0 0.0
    %5107 = vmatpush1.msra.mxu0 0.0
    %5108 = vmatprep.subr.mxu0 0.0
    %5109 = vmatpush1.msra.mxu0 0.0
    %5110 = vmatprep.subr.mxu0 0.0
    %5111 = vmatpush1.msra.mxu0 %v5053
    %5112 = vmatprep.subr.mxu0 0.0
    %5113 = vmatpush1.msra.mxu0 %v5052
    %5114 = vmatprep.subr.mxu0 0.0
    %5115 = vmatpush1.msra.mxu0 %v5051
    %5116 = vmatprep.subr.mxu0 0.0
    %5117 = vmatpush1.msra.mxu0 %v5050
    %5118 = vmatprep.subr.mxu0 0.0
    %5119 = vmatpush2.msra.mxu0 0.0
    %5120 = vmatprep.subr.mxu0 0.0
    %5121 = vmatpush2.msra.mxu0 0.0
    %5122 = vmatprep.subr.mxu0 0.0
    %5123 = vmatpush2.msra.mxu0 0.0
    %5124 = vmatprep.subr.mxu0 0.0
    %5125 = vmatpush2.msra.mxu0 0.0
    %5126 = vmatprep.subr.mxu0 0.0
    %5127 = vmatpush2.msra.mxu0 0.0
    %5128 = vmatprep.subr.mxu0 0.0
    %5129 = vmatpush2.msra.mxu0 0.0
    %5130 = vmatprep.subr.mxu0 0.0
    %5131 = vmatpush2.msra.mxu0 0.0
    %5132 = vmatprep.subr.mxu0 0.0
    %5133 = vmatpush2.msra.mxu0 0.0
    %5134 = vmatprep.subr.mxu0 0.0
    %5135 = vmatpush2.msra.mxu0 0.0
    %5136 = vmatprep.subr.mxu0 0.0
    %5137 = vmatpush2.msra.mxu0 0.0
    %5138 = vmatprep.subr.mxu0 0.0
    %5139 = vmatpush2.msra.mxu0 0.0
    %5140 = vmatprep.subr.mxu0 0.0
    %5141 = vmatpush2.msra.mxu0 0.0
    %5142 = vmatprep.subr.mxu0 0.0
    %5143 = vmatpush2.msra.mxu0 0.0
    %5144 = vmatprep.subr.mxu0 0.0
    %5145 = vmatpush2.msra.mxu0 0.0
    %5146 = vmatprep.subr.mxu0 0.0
    %5147 = vmatpush2.msra.mxu0 0.0
    %5148 = vmatprep.subr.mxu0 0.0
    %5149 = vmatpush2.msra.mxu0 0.0
    %5150 = vmatprep.mubr.f32.mxu0 0.0
    %5151 = vmatmul.mubr.f32.gmra.mxu0 %v5063
    %v5152 = vpop.f32.mrf.mxu0
    %v5153 = vadd.f32 %v5060, %v5152
    %v5154 = vpop.f32.mrf.mxu0
    %5155 = vmatprep.mubr.f32.mxu0 0.0
    %5156 = vmatmul.mubr.f32.gmra.mxu0 %v5066
    %v5157 = vpop.f32.mrf.mxu0
    %v5158 = vadd.f32 %v5060, %v5157
    %v5159 = vpop.f32.mrf.mxu0
    %5160 = vmatprep.mubr.f32.mxu0 0.0
    %5161 = vmatmul.mubr.f32.gmra.mxu0 %v5069
    %v5162 = vpop.f32.mrf.mxu0
    %v5163 = vadd.f32 %v5060, %v5162
    %v5164 = vpop.f32.mrf.mxu0
    %5165 = vmatprep.mubr.f32.mxu0 0.0
    %5166 = vmatmul.mubr.f32.gmra.mxu0 %v5072
    %v5167 = vpop.f32.mrf.mxu0
    %v5168 = vadd.f32 %v5060, %v5167
    %v5169 = vpop.f32.mrf.mxu0
    %5170 = vmatprep.mubr.f32.mxu0 0.0
    %5171 = vmatmul.mubr.f32.gmra.mxu0 %v5075
    %v5172 = vpop.f32.mrf.mxu0
    %v5173 = vadd.f32 %v5060, %v5172
    %v5174 = vpop.f32.mrf.mxu0
    %5175 = vmatprep.mubr.f32.mxu0 0.0
    %5176 = vmatmul.mubr.f32.gmra.mxu0 %v5078
    %v5177 = vpop.f32.mrf.mxu0
    %v5178 = vadd.f32 %v5060, %v5177
    %v5179 = vpop.f32.mrf.mxu0
    %5180 = vmatprep.mubr.f32.mxu0 0.0
    %5181 = vmatmul.mubr.f32.gmra.mxu0 %v5081
    %v5182 = vpop.f32.mrf.mxu0
    %v5183 = vadd.f32 %v5060, %v5182
    %v5184 = vpop.f32.mrf.mxu0
    %5185 = vmatprep.mubr.f32.mxu0 0.0
    %5186 = vmatmul.mubr.f32.gmra.mxu0 %v5084
    %v5187 = vpop.f32.mrf.mxu0
    %v5188 = vadd.f32 %v5060, %v5187
    %v5189 = vpop.f32.mrf.mxu0
    %5190 = vdwg.mxu0
    %s5191 = scalar_lea.vmem %s9, 32
    %v5192 = vld [vmem:[%s5191] sm:$0xff]
    %v5193 = vld [vmem:[%s5191 + $0x8] sm:$0xff]
    %v5194 = vld [vmem:[%s5191 + $0x10] sm:$0xff]
    %v5195 = vld [vmem:[%s5191 + $0x18] sm:$0xff]
    %s5196 = scalar_lea.vmem %s10, 1
    %v5197 = vld [vmem:[%s5196] sm:$0x1]
    %v5199 = vlaneseq
    %v5200 = vshrl.u32 %v5199, 7
    %v5201 = vsub.s32 0, %v5200
    %v5202 = vrot.slane %v5197, %v5201
    %5204 = vmatprep.subr.mxu0 0.0
    %5205 = vmatpush1.msra.mxu0 0.0
    %5206 = vmatprep.subr.mxu0 0.0
    %5207 = vmatpush1.msra.mxu0 0.0
    %5208 = vmatprep.subr.mxu0 0.0
    %5209 = vmatpush1.msra.mxu0 0.0
    %5210 = vmatprep.subr.mxu0 0.0
    %5211 = vmatpush1.msra.mxu0 0.0
    %5212 = vmatprep.subr.mxu0 0.0
    %5213 = vmatpush1.msra.mxu0 0.0
    %5214 = vmatprep.subr.mxu0 0.0
    %5215 = vmatpush1.msra.mxu0 0.0
    %5216 = vmatprep.subr.mxu0 0.0
    %5217 = vmatpush1.msra.mxu0 0.0
    %5218 = vmatprep.subr.mxu0 0.0
    %5219 = vmatpush1.msra.mxu0 0.0
    %5220 = vmatprep.subr.mxu0 0.0
    %5221 = vmatpush1.msra.mxu0 0.0
    %5222 = vmatprep.subr.mxu0 0.0
    %5223 = vmatpush1.msra.mxu0 0.0
    %5224 = vmatprep.subr.mxu0 0.0
    %5225 = vmatpush1.msra.mxu0 0.0
    %5226 = vmatprep.subr.mxu0 0.0
    %5227 = vmatpush1.msra.mxu0 0.0
    %5228 = vmatprep.subr.mxu0 0.0
    %5229 = vmatpush1.msra.mxu0 %v5195
    %5230 = vmatprep.subr.mxu0 0.0
    %5231 = vmatpush1.msra.mxu0 %v5194
    %5232 = vmatprep.subr.mxu0 0.0
    %5233 = vmatpush1.msra.mxu0 %v5193
    %5234 = vmatprep.subr.mxu0 0.0
    %5235 = vmatpush1.msra.mxu0 %v5192
    %5236 = vmatprep.subr.mxu0 0.0
    %5237 = vmatpush2.msra.mxu0 0.0
    %5238 = vmatprep.subr.mxu0 0.0
    %5239 = vmatpush2.msra.mxu0 0.0
    %5240 = vmatprep.subr.mxu0 0.0
    %5241 = vmatpush2.msra.mxu0 0.0
    %5242 = vmatprep.subr.mxu0 0.0
    %5243 = vmatpush2.msra.mxu0 0.0
    %5244 = vmatprep.subr.mxu0 0.0
    %5245 = vmatpush2.msra.mxu0 0.0
    %5246 = vmatprep.subr.mxu0 0.0
    %5247 = vmatpush2.msra.mxu0 0.0
    %5248 = vmatprep.subr.mxu0 0.0
    %5249 = vmatpush2.msra.mxu0 0.0
    %5250 = vmatprep.subr.mxu0 0.0
    %5251 = vmatpush2.msra.mxu0 0.0
    %5252 = vmatprep.subr.mxu0 0.0
    %5253 = vmatpush2.msra.mxu0 0.0
    %5254 = vmatprep.subr.mxu0 0.0
    %5255 = vmatpush2.msra.mxu0 0.0
    %5256 = vmatprep.subr.mxu0 0.0
    %5257 = vmatpush2.msra.mxu0 0.0
    %5258 = vmatprep.subr.mxu0 0.0
    %5259 = vmatpush2.msra.mxu0 0.0
    %5260 = vmatprep.subr.mxu0 0.0
    %5261 = vmatpush2.msra.mxu0 0.0
    %5262 = vmatprep.subr.mxu0 0.0
    %5263 = vmatpush2.msra.mxu0 0.0
    %5264 = vmatprep.subr.mxu0 0.0
    %5265 = vmatpush2.msra.mxu0 0.0
    %5266 = vmatprep.subr.mxu0 0.0
    %5267 = vmatpush2.msra.mxu0 0.0
    %5268 = vmatprep.mubr.f32.mxu0 0.0
    %5269 = vmatmul.mubr.f32.gmra.mxu0 %v5063
    %v5270 = vpop.f32.mrf.mxu0
    %v5271 = vadd.f32 %v5202, %v5270
    %v5272 = vpop.f32.mrf.mxu0
    %5273 = vmatprep.mubr.f32.mxu0 0.0
    %5274 = vmatmul.mubr.f32.gmra.mxu0 %v5066
    %v5275 = vpop.f32.mrf.mxu0
    %v5276 = vadd.f32 %v5202, %v5275
    %v5277 = vpop.f32.mrf.mxu0
    %5278 = vmatprep.mubr.f32.mxu0 0.0
    %5279 = vmatmul.mubr.f32.gmra.mxu0 %v5069
    %v5280 = vpop.f32.mrf.mxu0
    %v5281 = vadd.f32 %v5202, %v5280
    %v5282 = vpop.f32.mrf.mxu0
    %5283 = vmatprep.mubr.f32.mxu0 0.0
    %5284 = vmatmul.mubr.f32.gmra.mxu0 %v5072
    %v5285 = vpop.f32.mrf.mxu0
    %v5286 = vadd.f32 %v5202, %v5285
    %v5287 = vpop.f32.mrf.mxu0
    %5288 = vmatprep.mubr.f32.mxu0 0.0
    %5289 = vmatmul.mubr.f32.gmra.mxu0 %v5075
    %v5290 = vpop.f32.mrf.mxu0
    %v5291 = vadd.f32 %v5202, %v5290
    %v5292 = vpop.f32.mrf.mxu0
    %5293 = vmatprep.mubr.f32.mxu0 0.0
    %5294 = vmatmul.mubr.f32.gmra.mxu0 %v5078
    %v5295 = vpop.f32.mrf.mxu0
    %v5296 = vadd.f32 %v5202, %v5295
    %v5297 = vpop.f32.mrf.mxu0
    %5298 = vmatprep.mubr.f32.mxu0 0.0
    %5299 = vmatmul.mubr.f32.gmra.mxu0 %v5081
    %v5300 = vpop.f32.mrf.mxu0
    %v5301 = vadd.f32 %v5202, %v5300
    %v5302 = vpop.f32.mrf.mxu0
    %5303 = vmatprep.mubr.f32.mxu0 0.0
    %5304 = vmatmul.mubr.f32.gmra.mxu0 %v5084
    %v5305 = vpop.f32.mrf.mxu0
    %v5306 = vadd.f32 %v5202, %v5305
    %v5307 = vpop.f32.mrf.mxu0
    %5308 = vdwg.mxu0
    %s5309 = scalar_lea.vmem %s11, 32
    %v5310 = vld [vmem:[%s5309] sm:$0xff]
    %v5311 = vld [vmem:[%s5309 + $0x8] sm:$0xff]
    %v5312 = vld [vmem:[%s5309 + $0x10] sm:$0xff]
    %v5313 = vld [vmem:[%s5309 + $0x18] sm:$0xff]
    %s5314 = scalar_lea.vmem %s12, 1
    %v5315 = vld [vmem:[%s5314] sm:$0x1]
    %v5317 = vlaneseq
    %v5318 = vshrl.u32 %v5317, 7
    %v5319 = vsub.s32 0, %v5318
    %v5320 = vrot.slane %v5315, %v5319
    %5322 = vmatprep.subr.mxu0 0.0
    %5323 = vmatpush1.msra.mxu0 0.0
    %5324 = vmatprep.subr.mxu0 0.0
    %5325 = vmatpush1.msra.mxu0 0.0
    %5326 = vmatprep.subr.mxu0 0.0
    %5327 = vmatpush1.msra.mxu0 0.0
    %5328 = vmatprep.subr.mxu0 0.0
    %5329 = vmatpush1.msra.mxu0 0.0
    %5330 = vmatprep.subr.mxu0 0.0
    %5331 = vmatpush1.msra.mxu0 0.0
    %5332 = vmatprep.subr.mxu0 0.0
    %5333 = vmatpush1.msra.mxu0 0.0
    %5334 = vmatprep.subr.mxu0 0.0
    %5335 = vmatpush1.msra.mxu0 0.0
    %5336 = vmatprep.subr.mxu0 0.0
    %5337 = vmatpush1.msra.mxu0 0.0
    %5338 = vmatprep.subr.mxu0 0.0
    %5339 = vmatpush1.msra.mxu0 0.0
    %5340 = vmatprep.subr.mxu0 0.0
    %5341 = vmatpush1.msra.mxu0 0.0
    %5342 = vmatprep.subr.mxu0 0.0
    %5343 = vmatpush1.msra.mxu0 0.0
    %5344 = vmatprep.subr.mxu0 0.0
    %5345 = vmatpush1.msra.mxu0 0.0
    %5346 = vmatprep.subr.mxu0 0.0
    %5347 = vmatpush1.msra.mxu0 %v5313
    %5348 = vmatprep.subr.mxu0 0.0
    %5349 = vmatpush1.msra.mxu0 %v5312
    %5350 = vmatprep.subr.mxu0 0.0
    %5351 = vmatpush1.msra.mxu0 %v5311
    %5352 = vmatprep.subr.mxu0 0.0
    %5353 = vmatpush1.msra.mxu0 %v5310
    %5354 = vmatprep.subr.mxu0 0.0
    %5355 = vmatpush2.msra.mxu0 0.0
    %5356 = vmatprep.subr.mxu0 0.0
    %5357 = vmatpush2.msra.mxu0 0.0
    %5358 = vmatprep.subr.mxu0 0.0
    %5359 = vmatpush2.msra.mxu0 0.0
    %5360 = vmatprep.subr.mxu0 0.0
    %5361 = vmatpush2.msra.mxu0 0.0
    %5362 = vmatprep.subr.mxu0 0.0
    %5363 = vmatpush2.msra.mxu0 0.0
    %5364 = vmatprep.subr.mxu0 0.0
    %5365 = vmatpush2.msra.mxu0 0.0
    %5366 = vmatprep.subr.mxu0 0.0
    %5367 = vmatpush2.msra.mxu0 0.0
    %5368 = vmatprep.subr.mxu0 0.0
    %5369 = vmatpush2.msra.mxu0 0.0
    %5370 = vmatprep.subr.mxu0 0.0
    %5371 = vmatpush2.msra.mxu0 0.0
    %5372 = vmatprep.subr.mxu0 0.0
    %5373 = vmatpush2.msra.mxu0 0.0
    %5374 = vmatprep.subr.mxu0 0.0
    %5375 = vmatpush2.msra.mxu0 0.0
    %5376 = vmatprep.subr.mxu0 0.0
    %5377 = vmatpush2.msra.mxu0 0.0
    %5378 = vmatprep.subr.mxu0 0.0
    %5379 = vmatpush2.msra.mxu0 0.0
    %5380 = vmatprep.subr.mxu0 0.0
    %5381 = vmatpush2.msra.mxu0 0.0
    %5382 = vmatprep.subr.mxu0 0.0
    %5383 = vmatpush2.msra.mxu0 0.0
    %5384 = vmatprep.subr.mxu0 0.0
    %5385 = vmatpush2.msra.mxu0 0.0
    %5386 = vmatprep.mubr.f32.mxu0 0.0
    %5387 = vmatmul.mubr.f32.gmra.mxu0 %v5063
    %v5388 = vpop.f32.mrf.mxu0
    %v5389 = vadd.f32 %v5320, %v5388
    %v5390 = vpop.f32.mrf.mxu0
    %5391 = vmatprep.mubr.f32.mxu0 0.0
    %5392 = vmatmul.mubr.f32.gmra.mxu0 %v5066
    %v5393 = vpop.f32.mrf.mxu0
    %v5394 = vadd.f32 %v5320, %v5393
    %v5395 = vpop.f32.mrf.mxu0
    %5396 = vmatprep.mubr.f32.mxu0 0.0
    %5397 = vmatmul.mubr.f32.gmra.mxu0 %v5069
    %v5398 = vpop.f32.mrf.mxu0
    %v5399 = vadd.f32 %v5320, %v5398
    %v5400 = vpop.f32.mrf.mxu0
    %5401 = vmatprep.mubr.f32.mxu0 0.0
    %5402 = vmatmul.mubr.f32.gmra.mxu0 %v5072
    %v5403 = vpop.f32.mrf.mxu0
    %v5404 = vadd.f32 %v5320, %v5403
    %v5405 = vpop.f32.mrf.mxu0
    %5406 = vmatprep.mubr.f32.mxu0 0.0
    %5407 = vmatmul.mubr.f32.gmra.mxu0 %v5075
    %v5408 = vpop.f32.mrf.mxu0
    %v5409 = vadd.f32 %v5320, %v5408
    %v5410 = vpop.f32.mrf.mxu0
    %5411 = vmatprep.mubr.f32.mxu0 0.0
    %5412 = vmatmul.mubr.f32.gmra.mxu0 %v5078
    %v5413 = vpop.f32.mrf.mxu0
    %v5414 = vadd.f32 %v5320, %v5413
    %v5415 = vpop.f32.mrf.mxu0
    %5416 = vmatprep.mubr.f32.mxu0 0.0
    %5417 = vmatmul.mubr.f32.gmra.mxu0 %v5081
    %v5418 = vpop.f32.mrf.mxu0
    %v5419 = vadd.f32 %v5320, %v5418
    %v5420 = vpop.f32.mrf.mxu0
    %5421 = vmatprep.mubr.f32.mxu0 0.0
    %5422 = vmatmul.mubr.f32.gmra.mxu0 %v5084
    %v5423 = vpop.f32.mrf.mxu0
    %v5424 = vadd.f32 %v5320, %v5423
    %v5425 = vpop.f32.mrf.mxu0
    %5426 = vdwg.mxu0
    %v5427 = vmul.f32 %v5153, 0.35355338
    %v5428 = vmul.f32 %v5158, 0.35355338
    %v5429 = vmul.f32 %v5163, 0.35355338
    %v5430 = vmul.f32 %v5168, 0.35355338
    %v5431 = vmul.f32 %v5173, 0.35355338
    %v5432 = vmul.f32 %v5178, 0.35355338
    %v5433 = vmul.f32 %v5183, 0.35355338
    %v5434 = vmul.f32 %v5188, 0.35355338
    %v5443 = vcombine.high %v5427, %v5427
    %v5445 = vunpack.c.l.s4 1966171168
    %v5446 = vunpack.c.0.s8 %v5445
    %v5447 = vlaneseq
    %v5448 = vshrl.u32 %v5447, 7
    %v5449 = vsub.s32 %v5446, %v5448
    %v5450 = vrot.slane %v5427, %v5449
    %v5452 = vunpack.c.l.s4 1966171168
    %v5453 = vunpack.c.0.s8 %v5452
    %v5454 = vlaneseq
    %v5455 = vshrl.u32 %v5454, 7
    %v5456 = vsub.s32 %v5453, %v5455
    %v5457 = vrot.slane %v5443, %v5456
    %v5458 = vcombine.high %v5450, %v5450
    %v5459 = vcombine.high %v5457, %v5457
    %v5461 = vunpack.c.l.s4 1966171168
    %v5462 = vunpack.c.0.s8 %v5461
    %v5463 = vlaneseq
    %v5464 = vshrl.u32 %v5463, 7
    %v5465 = vsub.s32 %v5462, %v5464
    %v5466 = vrot.slane %v5450, %v5465
    %v5468 = vunpack.c.l.s4 1966171168
    %v5469 = vunpack.c.0.s8 %v5468
    %v5470 = vlaneseq
    %v5471 = vshrl.u32 %v5470, 7
    %v5472 = vsub.s32 %v5469, %v5471
    %v5473 = vrot.slane %v5457, %v5472
    %v5475 = vunpack.c.l.s4 1966171168
    %v5476 = vunpack.c.0.s8 %v5475
    %v5477 = vlaneseq
    %v5478 = vshrl.u32 %v5477, 7
    %v5479 = vsub.s32 %v5476, %v5478
    %v5480 = vrot.slane %v5458, %v5479
    %v5482 = vunpack.c.l.s4 1966171168
    %v5483 = vunpack.c.0.s8 %v5482
    %v5484 = vlaneseq
    %v5485 = vshrl.u32 %v5484, 7
    %v5486 = vsub.s32 %v5483, %v5485
    %v5487 = vrot.slane %v5459, %v5486
    %v5488 = vcombine.high %v5466, %v5466
    %v5489 = vcombine.high %v5473, %v5473
    %v5490 = vcombine.high %v5480, %v5480
    %v5491 = vcombine.high %v5487, %v5487
    %v5492 = vcombine.high %v5428, %v5428
    %v5494 = vunpack.c.l.s4 1966171168
    %v5495 = vunpack.c.0.s8 %v5494
    %v5496 = vlaneseq
    %v5497 = vshrl.u32 %v5496, 7
    %v5498 = vsub.s32 %v5495, %v5497
    %v5499 = vrot.slane %v5428, %v5498
    %v5501 = vunpack.c.l.s4 1966171168
    %v5502 = vunpack.c.0.s8 %v5501
    %v5503 = vlaneseq
    %v5504 = vshrl.u32 %v5503, 7
    %v5505 = vsub.s32 %v5502, %v5504
    %v5506 = vrot.slane %v5492, %v5505
    %v5507 = vcombine.high %v5499, %v5499
    %v5508 = vcombine.high %v5506, %v5506
    %v5510 = vunpack.c.l.s4 1966171168
    %v5511 = vunpack.c.0.s8 %v5510
    %v5512 = vlaneseq
    %v5513 = vshrl.u32 %v5512, 7
    %v5514 = vsub.s32 %v5511, %v5513
    %v5515 = vrot.slane %v5499, %v5514
    %v5517 = vunpack.c.l.s4 1966171168
    %v5518 = vunpack.c.0.s8 %v5517
    %v5519 = vlaneseq
    %v5520 = vshrl.u32 %v5519, 7
    %v5521 = vsub.s32 %v5518, %v5520
    %v5522 = vrot.slane %v5506, %v5521
    %v5524 = vunpack.c.l.s4 1966171168
    %v5525 = vunpack.c.0.s8 %v5524
    %v5526 = vlaneseq
    %v5527 = vshrl.u32 %v5526, 7
    %v5528 = vsub.s32 %v5525, %v5527
    %v5529 = vrot.slane %v5507, %v5528
    %v5531 = vunpack.c.l.s4 1966171168
    %v5532 = vunpack.c.0.s8 %v5531
    %v5533 = vlaneseq
    %v5534 = vshrl.u32 %v5533, 7
    %v5535 = vsub.s32 %v5532, %v5534
    %v5536 = vrot.slane %v5508, %v5535
    %v5537 = vcombine.high %v5515, %v5515
    %v5538 = vcombine.high %v5522, %v5522
    %v5539 = vcombine.high %v5529, %v5529
    %v5540 = vcombine.high %v5536, %v5536
    %v5541 = vcombine.high %v5429, %v5429
    %v5543 = vunpack.c.l.s4 1966171168
    %v5544 = vunpack.c.0.s8 %v5543
    %v5545 = vlaneseq
    %v5546 = vshrl.u32 %v5545, 7
    %v5547 = vsub.s32 %v5544, %v5546
    %v5548 = vrot.slane %v5429, %v5547
    %v5550 = vunpack.c.l.s4 1966171168
    %v5551 = vunpack.c.0.s8 %v5550
    %v5552 = vlaneseq
    %v5553 = vshrl.u32 %v5552, 7
    %v5554 = vsub.s32 %v5551, %v5553
    %v5555 = vrot.slane %v5541, %v5554
    %v5556 = vcombine.high %v5548, %v5548
    %v5557 = vcombine.high %v5555, %v5555
    %v5559 = vunpack.c.l.s4 1966171168
    %v5560 = vunpack.c.0.s8 %v5559
    %v5561 = vlaneseq
    %v5562 = vshrl.u32 %v5561, 7
    %v5563 = vsub.s32 %v5560, %v5562
    %v5564 = vrot.slane %v5548, %v5563
    %v5566 = vunpack.c.l.s4 1966171168
    %v5567 = vunpack.c.0.s8 %v5566
    %v5568 = vlaneseq
    %v5569 = vshrl.u32 %v5568, 7
    %v5570 = vsub.s32 %v5567, %v5569
    %v5571 = vrot.slane %v5555, %v5570
    %v5573 = vunpack.c.l.s4 1966171168
    %v5574 = vunpack.c.0.s8 %v5573
    %v5575 = vlaneseq
    %v5576 = vshrl.u32 %v5575, 7
    %v5577 = vsub.s32 %v5574, %v5576
    %v5578 = vrot.slane %v5556, %v5577
    %v5580 = vunpack.c.l.s4 1966171168
    %v5581 = vunpack.c.0.s8 %v5580
    %v5582 = vlaneseq
    %v5583 = vshrl.u32 %v5582, 7
    %v5584 = vsub.s32 %v5581, %v5583
    %v5585 = vrot.slane %v5557, %v5584
    %v5586 = vcombine.high %v5564, %v5564
    %v5587 = vcombine.high %v5571, %v5571
    %v5588 = vcombine.high %v5578, %v5578
    %v5589 = vcombine.high %v5585, %v5585
    %v5590 = vcombine.high %v5430, %v5430
    %v5592 = vunpack.c.l.s4 1966171168
    %v5593 = vunpack.c.0.s8 %v5592
    %v5594 = vlaneseq
    %v5595 = vshrl.u32 %v5594, 7
    %v5596 = vsub.s32 %v5593, %v5595
    %v5597 = vrot.slane %v5430, %v5596
    %v5599 = vunpack.c.l.s4 1966171168
    %v5600 = vunpack.c.0.s8 %v5599
    %v5601 = vlaneseq
    %v5602 = vshrl.u32 %v5601, 7
    %v5603 = vsub.s32 %v5600, %v5602
    %v5604 = vrot.slane %v5590, %v5603
    %v5605 = vcombine.high %v5597, %v5597
    %v5606 = vcombine.high %v5604, %v5604
    %v5608 = vunpack.c.l.s4 1966171168
    %v5609 = vunpack.c.0.s8 %v5608
    %v5610 = vlaneseq
    %v5611 = vshrl.u32 %v5610, 7
    %v5612 = vsub.s32 %v5609, %v5611
    %v5613 = vrot.slane %v5597, %v5612
    %v5615 = vunpack.c.l.s4 1966171168
    %v5616 = vunpack.c.0.s8 %v5615
    %v5617 = vlaneseq
    %v5618 = vshrl.u32 %v5617, 7
    %v5619 = vsub.s32 %v5616, %v5618
    %v5620 = vrot.slane %v5604, %v5619
    %v5622 = vunpack.c.l.s4 1966171168
    %v5623 = vunpack.c.0.s8 %v5622
    %v5624 = vlaneseq
    %v5625 = vshrl.u32 %v5624, 7
    %v5626 = vsub.s32 %v5623, %v5625
    %v5627 = vrot.slane %v5605, %v5626
    %v5629 = vunpack.c.l.s4 1966171168
    %v5630 = vunpack.c.0.s8 %v5629
    %v5631 = vlaneseq
    %v5632 = vshrl.u32 %v5631, 7
    %v5633 = vsub.s32 %v5630, %v5632
    %v5634 = vrot.slane %v5606, %v5633
    %v5635 = vcombine.high %v5613, %v5613
    %v5636 = vcombine.high %v5620, %v5620
    %v5637 = vcombine.high %v5627, %v5627
    %v5638 = vcombine.high %v5634, %v5634
    %v5639 = vcombine.high %v5431, %v5431
    %v5641 = vunpack.c.l.s4 1966171168
    %v5642 = vunpack.c.0.s8 %v5641
    %v5643 = vlaneseq
    %v5644 = vshrl.u32 %v5643, 7
    %v5645 = vsub.s32 %v5642, %v5644
    %v5646 = vrot.slane %v5431, %v5645
    %v5648 = vunpack.c.l.s4 1966171168
    %v5649 = vunpack.c.0.s8 %v5648
    %v5650 = vlaneseq
    %v5651 = vshrl.u32 %v5650, 7
    %v5652 = vsub.s32 %v5649, %v5651
    %v5653 = vrot.slane %v5639, %v5652
    %v5654 = vcombine.high %v5646, %v5646
    %v5655 = vcombine.high %v5653, %v5653
    %v5657 = vunpack.c.l.s4 1966171168
    %v5658 = vunpack.c.0.s8 %v5657
    %v5659 = vlaneseq
    %v5660 = vshrl.u32 %v5659, 7
    %v5661 = vsub.s32 %v5658, %v5660
    %v5662 = vrot.slane %v5646, %v5661
    %v5664 = vunpack.c.l.s4 1966171168
    %v5665 = vunpack.c.0.s8 %v5664
    %v5666 = vlaneseq
    %v5667 = vshrl.u32 %v5666, 7
    %v5668 = vsub.s32 %v5665, %v5667
    %v5669 = vrot.slane %v5653, %v5668
    %v5671 = vunpack.c.l.s4 1966171168
    %v5672 = vunpack.c.0.s8 %v5671
    %v5673 = vlaneseq
    %v5674 = vshrl.u32 %v5673, 7
    %v5675 = vsub.s32 %v5672, %v5674
    %v5676 = vrot.slane %v5654, %v5675
    %v5678 = vunpack.c.l.s4 1966171168
    %v5679 = vunpack.c.0.s8 %v5678
    %v5680 = vlaneseq
    %v5681 = vshrl.u32 %v5680, 7
    %v5682 = vsub.s32 %v5679, %v5681
    %v5683 = vrot.slane %v5655, %v5682
    %v5684 = vcombine.high %v5662, %v5662
    %v5685 = vcombine.high %v5669, %v5669
    %v5686 = vcombine.high %v5676, %v5676
    %v5687 = vcombine.high %v5683, %v5683
    %v5688 = vcombine.high %v5432, %v5432
    %v5690 = vunpack.c.l.s4 1966171168
    %v5691 = vunpack.c.0.s8 %v5690
    %v5692 = vlaneseq
    %v5693 = vshrl.u32 %v5692, 7
    %v5694 = vsub.s32 %v5691, %v5693
    %v5695 = vrot.slane %v5432, %v5694
    %v5697 = vunpack.c.l.s4 1966171168
    %v5698 = vunpack.c.0.s8 %v5697
    %v5699 = vlaneseq
    %v5700 = vshrl.u32 %v5699, 7
    %v5701 = vsub.s32 %v5698, %v5700
    %v5702 = vrot.slane %v5688, %v5701
    %v5703 = vcombine.high %v5695, %v5695
    %v5704 = vcombine.high %v5702, %v5702
    %v5706 = vunpack.c.l.s4 1966171168
    %v5707 = vunpack.c.0.s8 %v5706
    %v5708 = vlaneseq
    %v5709 = vshrl.u32 %v5708, 7
    %v5710 = vsub.s32 %v5707, %v5709
    %v5711 = vrot.slane %v5695, %v5710
    %v5713 = vunpack.c.l.s4 1966171168
    %v5714 = vunpack.c.0.s8 %v5713
    %v5715 = vlaneseq
    %v5716 = vshrl.u32 %v5715, 7
    %v5717 = vsub.s32 %v5714, %v5716
    %v5718 = vrot.slane %v5702, %v5717
    %v5720 = vunpack.c.l.s4 1966171168
    %v5721 = vunpack.c.0.s8 %v5720
    %v5722 = vlaneseq
    %v5723 = vshrl.u32 %v5722, 7
    %v5724 = vsub.s32 %v5721, %v5723
    %v5725 = vrot.slane %v5703, %v5724
    %v5727 = vunpack.c.l.s4 1966171168
    %v5728 = vunpack.c.0.s8 %v5727
    %v5729 = vlaneseq
    %v5730 = vshrl.u32 %v5729, 7
    %v5731 = vsub.s32 %v5728, %v5730
    %v5732 = vrot.slane %v5704, %v5731
    %v5733 = vcombine.high %v5711, %v5711
    %v5734 = vcombine.high %v5718, %v5718
    %v5735 = vcombine.high %v5725, %v5725
    %v5736 = vcombine.high %v5732, %v5732
    %v5737 = vcombine.high %v5433, %v5433
    %v5739 = vunpack.c.l.s4 1966171168
    %v5740 = vunpack.c.0.s8 %v5739
    %v5741 = vlaneseq
    %v5742 = vshrl.u32 %v5741, 7
    %v5743 = vsub.s32 %v5740, %v5742
    %v5744 = vrot.slane %v5433, %v5743
    %v5746 = vunpack.c.l.s4 1966171168
    %v5747 = vunpack.c.0.s8 %v5746
    %v5748 = vlaneseq
    %v5749 = vshrl.u32 %v5748, 7
    %v5750 = vsub.s32 %v5747, %v5749
    %v5751 = vrot.slane %v5737, %v5750
    %v5752 = vcombine.high %v5744, %v5744
    %v5753 = vcombine.high %v5751, %v5751
    %v5755 = vunpack.c.l.s4 1966171168
    %v5756 = vunpack.c.0.s8 %v5755
    %v5757 = vlaneseq
    %v5758 = vshrl.u32 %v5757, 7
    %v5759 = vsub.s32 %v5756, %v5758
    %v5760 = vrot.slane %v5744, %v5759
    %v5762 = vunpack.c.l.s4 1966171168
    %v5763 = vunpack.c.0.s8 %v5762
    %v5764 = vlaneseq
    %v5765 = vshrl.u32 %v5764, 7
    %v5766 = vsub.s32 %v5763, %v5765
    %v5767 = vrot.slane %v5751, %v5766
    %v5769 = vunpack.c.l.s4 1966171168
    %v5770 = vunpack.c.0.s8 %v5769
    %v5771 = vlaneseq
    %v5772 = vshrl.u32 %v5771, 7
    %v5773 = vsub.s32 %v5770, %v5772
    %v5774 = vrot.slane %v5752, %v5773
    %v5776 = vunpack.c.l.s4 1966171168
    %v5777 = vunpack.c.0.s8 %v5776
    %v5778 = vlaneseq
    %v5779 = vshrl.u32 %v5778, 7
    %v5780 = vsub.s32 %v5777, %v5779
    %v5781 = vrot.slane %v5753, %v5780
    %v5782 = vcombine.high %v5760, %v5760
    %v5783 = vcombine.high %v5767, %v5767
    %v5784 = vcombine.high %v5774, %v5774
    %v5785 = vcombine.high %v5781, %v5781
    %v5786 = vcombine.high %v5434, %v5434
    %v5788 = vunpack.c.l.s4 1966171168
    %v5789 = vunpack.c.0.s8 %v5788
    %v5790 = vlaneseq
    %v5791 = vshrl.u32 %v5790, 7
    %v5792 = vsub.s32 %v5789, %v5791
    %v5793 = vrot.slane %v5434, %v5792
    %v5795 = vunpack.c.l.s4 1966171168
    %v5796 = vunpack.c.0.s8 %v5795
    %v5797 = vlaneseq
    %v5798 = vshrl.u32 %v5797, 7
    %v5799 = vsub.s32 %v5796, %v5798
    %v5800 = vrot.slane %v5786, %v5799
    %v5801 = vcombine.high %v5793, %v5793
    %v5802 = vcombine.high %v5800, %v5800
    %v5804 = vunpack.c.l.s4 1966171168
    %v5805 = vunpack.c.0.s8 %v5804
    %v5806 = vlaneseq
    %v5807 = vshrl.u32 %v5806, 7
    %v5808 = vsub.s32 %v5805, %v5807
    %v5809 = vrot.slane %v5793, %v5808
    %v5811 = vunpack.c.l.s4 1966171168
    %v5812 = vunpack.c.0.s8 %v5811
    %v5813 = vlaneseq
    %v5814 = vshrl.u32 %v5813, 7
    %v5815 = vsub.s32 %v5812, %v5814
    %v5816 = vrot.slane %v5800, %v5815
    %v5818 = vunpack.c.l.s4 1966171168
    %v5819 = vunpack.c.0.s8 %v5818
    %v5820 = vlaneseq
    %v5821 = vshrl.u32 %v5820, 7
    %v5822 = vsub.s32 %v5819, %v5821
    %v5823 = vrot.slane %v5801, %v5822
    %v5825 = vunpack.c.l.s4 1966171168
    %v5826 = vunpack.c.0.s8 %v5825
    %v5827 = vlaneseq
    %v5828 = vshrl.u32 %v5827, 7
    %v5829 = vsub.s32 %v5826, %v5828
    %v5830 = vrot.slane %v5802, %v5829
    %v5831 = vcombine.high %v5809, %v5809
    %v5832 = vcombine.high %v5816, %v5816
    %v5833 = vcombine.high %v5823, %v5823
    %v5834 = vcombine.high %v5830, %v5830
    %v5835 = vlaneseq
    %v5836 = vshrl.u32 %v5835, 7
    %v5837 = vsub.s32 0, %v5836
    %v5838 = vrot.slane %v5466, %v5837
    %v5839 = vlaneseq
    %v5840 = vshrl.u32 %v5839, 7
    %v5841 = vsub.s32 0, %v5840
    %v5842 = vrot.slane %v5480, %v5841
    %v5843 = vlaneseq
    %v5844 = vshrl.u32 %v5843, 7
    %v5845 = vsub.s32 0, %v5844
    %v5846 = vrot.slane %v5488, %v5845
    %v5847 = vlaneseq
    %v5848 = vshrl.u32 %v5847, 7
    %v5849 = vsub.s32 0, %v5848
    %v5850 = vrot.slane %v5490, %v5849
    %v5851 = vlaneseq
    %v5852 = vshrl.u32 %v5851, 7
    %v5853 = vsub.s32 0, %v5852
    %v5854 = vrot.slane %v5473, %v5853
    %v5855 = vlaneseq
    %v5856 = vshrl.u32 %v5855, 7
    %v5857 = vsub.s32 0, %v5856
    %v5858 = vrot.slane %v5487, %v5857
    %v5859 = vlaneseq
    %v5860 = vshrl.u32 %v5859, 7
    %v5861 = vsub.s32 0, %v5860
    %v5862 = vrot.slane %v5489, %v5861
    %v5863 = vlaneseq
    %v5864 = vshrl.u32 %v5863, 7
    %v5865 = vsub.s32 0, %v5864
    %v5866 = vrot.slane %v5491, %v5865
    %v5867 = vlaneseq
    %v5868 = vshrl.u32 %v5867, 7
    %v5869 = vsub.s32 0, %v5868
    %v5870 = vrot.slane %v5515, %v5869
    %v5871 = vlaneseq
    %v5872 = vshrl.u32 %v5871, 7
    %v5873 = vsub.s32 0, %v5872
    %v5874 = vrot.slane %v5529, %v5873
    %v5875 = vlaneseq
    %v5876 = vshrl.u32 %v5875, 7
    %v5877 = vsub.s32 0, %v5876
    %v5878 = vrot.slane %v5537, %v5877
    %v5879 = vlaneseq
    %v5880 = vshrl.u32 %v5879, 7
    %v5881 = vsub.s32 0, %v5880
    %v5882 = vrot.slane %v5539, %v5881
    %v5883 = vlaneseq
    %v5884 = vshrl.u32 %v5883, 7
    %v5885 = vsub.s32 0, %v5884
    %v5886 = vrot.slane %v5522, %v5885
    %v5887 = vlaneseq
    %v5888 = vshrl.u32 %v5887, 7
    %v5889 = vsub.s32 0, %v5888
    %v5890 = vrot.slane %v5536, %v5889
    %v5891 = vlaneseq
    %v5892 = vshrl.u32 %v5891, 7
    %v5893 = vsub.s32 0, %v5892
    %v5894 = vrot.slane %v5538, %v5893
    %v5895 = vlaneseq
    %v5896 = vshrl.u32 %v5895, 7
    %v5897 = vsub.s32 0, %v5896
    %v5898 = vrot.slane %v5540, %v5897
    %v5899 = vlaneseq
    %v5900 = vshrl.u32 %v5899, 7
    %v5901 = vsub.s32 0, %v5900
    %v5902 = vrot.slane %v5564, %v5901
    %v5903 = vlaneseq
    %v5904 = vshrl.u32 %v5903, 7
    %v5905 = vsub.s32 0, %v5904
    %v5906 = vrot.slane %v5578, %v5905
    %v5907 = vlaneseq
    %v5908 = vshrl.u32 %v5907, 7
    %v5909 = vsub.s32 0, %v5908
    %v5910 = vrot.slane %v5586, %v5909
    %v5911 = vlaneseq
    %v5912 = vshrl.u32 %v5911, 7
    %v5913 = vsub.s32 0, %v5912
    %v5914 = vrot.slane %v5588, %v5913
    %v5915 = vlaneseq
    %v5916 = vshrl.u32 %v5915, 7
    %v5917 = vsub.s32 0, %v5916
    %v5918 = vrot.slane %v5571, %v5917
    %v5919 = vlaneseq
    %v5920 = vshrl.u32 %v5919, 7
    %v5921 = vsub.s32 0, %v5920
    %v5922 = vrot.slane %v5585, %v5921
    %v5923 = vlaneseq
    %v5924 = vshrl.u32 %v5923, 7
    %v5925 = vsub.s32 0, %v5924
    %v5926 = vrot.slane %v5587, %v5925
    %v5927 = vlaneseq
    %v5928 = vshrl.u32 %v5927, 7
    %v5929 = vsub.s32 0, %v5928
    %v5930 = vrot.slane %v5589, %v5929
    %v5931 = vlaneseq
    %v5932 = vshrl.u32 %v5931, 7
    %v5933 = vsub.s32 0, %v5932
    %v5934 = vrot.slane %v5613, %v5933
    %v5935 = vlaneseq
    %v5936 = vshrl.u32 %v5935, 7
    %v5937 = vsub.s32 0, %v5936
    %v5938 = vrot.slane %v5627, %v5937
    %v5939 = vlaneseq
    %v5940 = vshrl.u32 %v5939, 7
    %v5941 = vsub.s32 0, %v5940
    %v5942 = vrot.slane %v5635, %v5941
    %v5943 = vlaneseq
    %v5944 = vshrl.u32 %v5943, 7
    %v5945 = vsub.s32 0, %v5944
    %v5946 = vrot.slane %v5637, %v5945
    %v5947 = vlaneseq
    %v5948 = vshrl.u32 %v5947, 7
    %v5949 = vsub.s32 0, %v5948
    %v5950 = vrot.slane %v5620, %v5949
    %v5951 = vlaneseq
    %v5952 = vshrl.u32 %v5951, 7
    %v5953 = vsub.s32 0, %v5952
    %v5954 = vrot.slane %v5634, %v5953
    %v5955 = vlaneseq
    %v5956 = vshrl.u32 %v5955, 7
    %v5957 = vsub.s32 0, %v5956
    %v5958 = vrot.slane %v5636, %v5957
    %v5959 = vlaneseq
    %v5960 = vshrl.u32 %v5959, 7
    %v5961 = vsub.s32 0, %v5960
    %v5962 = vrot.slane %v5638, %v5961
    %v5963 = vlaneseq
    %v5964 = vshrl.u32 %v5963, 7
    %v5965 = vsub.s32 0, %v5964
    %v5966 = vrot.slane %v5662, %v5965
    %v5967 = vlaneseq
    %v5968 = vshrl.u32 %v5967, 7
    %v5969 = vsub.s32 0, %v5968
    %v5970 = vrot.slane %v5676, %v5969
    %v5971 = vlaneseq
    %v5972 = vshrl.u32 %v5971, 7
    %v5973 = vsub.s32 0, %v5972
    %v5974 = vrot.slane %v5684, %v5973
    %v5975 = vlaneseq
    %v5976 = vshrl.u32 %v5975, 7
    %v5977 = vsub.s32 0, %v5976
    %v5978 = vrot.slane %v5686, %v5977
    %v5979 = vlaneseq
    %v5980 = vshrl.u32 %v5979, 7
    %v5981 = vsub.s32 0, %v5980
    %v5982 = vrot.slane %v5669, %v5981
    %v5983 = vlaneseq
    %v5984 = vshrl.u32 %v5983, 7
    %v5985 = vsub.s32 0, %v5984
    %v5986 = vrot.slane %v5683, %v5985
    %v5987 = vlaneseq
    %v5988 = vshrl.u32 %v5987, 7
    %v5989 = vsub.s32 0, %v5988
    %v5990 = vrot.slane %v5685, %v5989
    %v5991 = vlaneseq
    %v5992 = vshrl.u32 %v5991, 7
    %v5993 = vsub.s32 0, %v5992
    %v5994 = vrot.slane %v5687, %v5993
    %v5995 = vlaneseq
    %v5996 = vshrl.u32 %v5995, 7
    %v5997 = vsub.s32 0, %v5996
    %v5998 = vrot.slane %v5711, %v5997
    %v5999 = vlaneseq
    %v6000 = vshrl.u32 %v5999, 7
    %v6001 = vsub.s32 0, %v6000
    %v6002 = vrot.slane %v5725, %v6001
    %v6003 = vlaneseq
    %v6004 = vshrl.u32 %v6003, 7
    %v6005 = vsub.s32 0, %v6004
    %v6006 = vrot.slane %v5733, %v6005
    %v6007 = vlaneseq
    %v6008 = vshrl.u32 %v6007, 7
    %v6009 = vsub.s32 0, %v6008
    %v6010 = vrot.slane %v5735, %v6009
    %v6011 = vlaneseq
    %v6012 = vshrl.u32 %v6011, 7
    %v6013 = vsub.s32 0, %v6012
    %v6014 = vrot.slane %v5718, %v6013
    %v6015 = vlaneseq
    %v6016 = vshrl.u32 %v6015, 7
    %v6017 = vsub.s32 0, %v6016
    %v6018 = vrot.slane %v5732, %v6017
    %v6019 = vlaneseq
    %v6020 = vshrl.u32 %v6019, 7
    %v6021 = vsub.s32 0, %v6020
    %v6022 = vrot.slane %v5734, %v6021
    %v6023 = vlaneseq
    %v6024 = vshrl.u32 %v6023, 7
    %v6025 = vsub.s32 0, %v6024
    %v6026 = vrot.slane %v5736, %v6025
    %v6027 = vlaneseq
    %v6028 = vshrl.u32 %v6027, 7
    %v6029 = vsub.s32 0, %v6028
    %v6030 = vrot.slane %v5760, %v6029
    %v6031 = vlaneseq
    %v6032 = vshrl.u32 %v6031, 7
    %v6033 = vsub.s32 0, %v6032
    %v6034 = vrot.slane %v5774, %v6033
    %v6035 = vlaneseq
    %v6036 = vshrl.u32 %v6035, 7
    %v6037 = vsub.s32 0, %v6036
    %v6038 = vrot.slane %v5782, %v6037
    %v6039 = vlaneseq
    %v6040 = vshrl.u32 %v6039, 7
    %v6041 = vsub.s32 0, %v6040
    %v6042 = vrot.slane %v5784, %v6041
    %v6043 = vlaneseq
    %v6044 = vshrl.u32 %v6043, 7
    %v6045 = vsub.s32 0, %v6044
    %v6046 = vrot.slane %v5767, %v6045
    %v6047 = vlaneseq
    %v6048 = vshrl.u32 %v6047, 7
    %v6049 = vsub.s32 0, %v6048
    %v6050 = vrot.slane %v5781, %v6049
    %v6051 = vlaneseq
    %v6052 = vshrl.u32 %v6051, 7
    %v6053 = vsub.s32 0, %v6052
    %v6054 = vrot.slane %v5783, %v6053
    %v6055 = vlaneseq
    %v6056 = vshrl.u32 %v6055, 7
    %v6057 = vsub.s32 0, %v6056
    %v6058 = vrot.slane %v5785, %v6057
    %v6059 = vlaneseq
    %v6060 = vshrl.u32 %v6059, 7
    %v6061 = vsub.s32 0, %v6060
    %v6062 = vrot.slane %v5809, %v6061
    %v6063 = vlaneseq
    %v6064 = vshrl.u32 %v6063, 7
    %v6065 = vsub.s32 0, %v6064
    %v6066 = vrot.slane %v5823, %v6065
    %v6067 = vlaneseq
    %v6068 = vshrl.u32 %v6067, 7
    %v6069 = vsub.s32 0, %v6068
    %v6070 = vrot.slane %v5831, %v6069
    %v6071 = vlaneseq
    %v6072 = vshrl.u32 %v6071, 7
    %v6073 = vsub.s32 0, %v6072
    %v6074 = vrot.slane %v5833, %v6073
    %v6075 = vlaneseq
    %v6076 = vshrl.u32 %v6075, 7
    %v6077 = vsub.s32 0, %v6076
    %v6078 = vrot.slane %v5816, %v6077
    %v6079 = vlaneseq
    %v6080 = vshrl.u32 %v6079, 7
    %v6081 = vsub.s32 0, %v6080
    %v6082 = vrot.slane %v5830, %v6081
    %v6083 = vlaneseq
    %v6084 = vshrl.u32 %v6083, 7
    %v6085 = vsub.s32 0, %v6084
    %v6086 = vrot.slane %v5832, %v6085
    %v6087 = vlaneseq
    %v6088 = vshrl.u32 %v6087, 7
    %v6089 = vsub.s32 0, %v6088
    %v6090 = vrot.slane %v5834, %v6089
    %v6155 = vmul.f32 %v5838, %v5271
    %v6156 = vmul.f32 %v5842, %v5271
    %v6157 = vmul.f32 %v5846, %v5271
    %v6158 = vmul.f32 %v5850, %v5271
    %v6159 = vmul.f32 %v5854, %v5271
    %v6160 = vmul.f32 %v5858, %v5271
    %v6161 = vmul.f32 %v5862, %v5271
    %v6162 = vmul.f32 %v5866, %v5271
    %v6163 = vmul.f32 %v5870, %v5276
    %v6164 = vmul.f32 %v5874, %v5276
    %v6165 = vmul.f32 %v5878, %v5276
    %v6166 = vmul.f32 %v5882, %v5276
    %v6167 = vmul.f32 %v5886, %v5276
    %v6168 = vmul.f32 %v5890, %v5276
    %v6169 = vmul.f32 %v5894, %v5276
    %v6170 = vmul.f32 %v5898, %v5276
    %v6171 = vmul.f32 %v5902, %v5281
    %v6172 = vmul.f32 %v5906, %v5281
    %v6173 = vmul.f32 %v5910, %v5281
    %v6174 = vmul.f32 %v5914, %v5281
    %v6175 = vmul.f32 %v5918, %v5281
    %v6176 = vmul.f32 %v5922, %v5281
    %v6177 = vmul.f32 %v5926, %v5281
    %v6178 = vmul.f32 %v5930, %v5281
    %v6179 = vmul.f32 %v5934, %v5286
    %v6180 = vmul.f32 %v5938, %v5286
    %v6181 = vmul.f32 %v5942, %v5286
    %v6182 = vmul.f32 %v5946, %v5286
    %v6183 = vmul.f32 %v5950, %v5286
    %v6184 = vmul.f32 %v5954, %v5286
    %v6185 = vmul.f32 %v5958, %v5286
    %v6186 = vmul.f32 %v5962, %v5286
    %v6187 = vmul.f32 %v5966, %v5291
    %v6188 = vmul.f32 %v5970, %v5291
    %v6189 = vmul.f32 %v5974, %v5291
    %v6190 = vmul.f32 %v5978, %v5291
    %v6191 = vmul.f32 %v5982, %v5291
    %v6192 = vmul.f32 %v5986, %v5291
    %v6193 = vmul.f32 %v5990, %v5291
    %v6194 = vmul.f32 %v5994, %v5291
    %v6195 = vmul.f32 %v5998, %v5296
    %v6196 = vmul.f32 %v6002, %v5296
    %v6197 = vmul.f32 %v6006, %v5296
    %v6198 = vmul.f32 %v6010, %v5296
    %v6199 = vmul.f32 %v6014, %v5296
    %v6200 = vmul.f32 %v6018, %v5296
    %v6201 = vmul.f32 %v6022, %v5296
    %v6202 = vmul.f32 %v6026, %v5296
    %v6203 = vmul.f32 %v6030, %v5301
    %v6204 = vmul.f32 %v6034, %v5301
    %v6205 = vmul.f32 %v6038, %v5301
    %v6206 = vmul.f32 %v6042, %v5301
    %v6207 = vmul.f32 %v6046, %v5301
    %v6208 = vmul.f32 %v6050, %v5301
    %v6209 = vmul.f32 %v6054, %v5301
    %v6210 = vmul.f32 %v6058, %v5301
    %v6211 = vmul.f32 %v6062, %v5306
    %v6212 = vmul.f32 %v6066, %v5306
    %v6213 = vmul.f32 %v6070, %v5306
    %v6214 = vmul.f32 %v6074, %v5306
    %v6215 = vmul.f32 %v6078, %v5306
    %v6216 = vmul.f32 %v6082, %v5306
    %v6217 = vmul.f32 %v6086, %v5306
    %v6218 = vmul.f32 %v6090, %v5306
    %v6220 = vsel %vm266, %v6155, 0
    %v6223 = vsel %vm266, %v6156, 0
    %v6226 = vsel %vm266, %v6157, 0
    %v6229 = vsel %vm266, %v6158, 0
    %v6232 = vsel %vm266, %v6159, 0
    %v6235 = vsel %vm266, %v6160, 0
    %v6238 = vsel %vm266, %v6161, 0
    %v6241 = vsel %vm266, %v6162, 0
    %v6244 = vsel %vm266, %v6163, 0
    %v6247 = vsel %vm266, %v6164, 0
    %v6250 = vsel %vm266, %v6165, 0
    %v6253 = vsel %vm266, %v6166, 0
    %v6256 = vsel %vm266, %v6167, 0
    %v6259 = vsel %vm266, %v6168, 0
    %v6262 = vsel %vm266, %v6169, 0
    %v6265 = vsel %vm266, %v6170, 0
    %v6268 = vsel %vm266, %v6171, 0
    %v6271 = vsel %vm266, %v6172, 0
    %v6274 = vsel %vm266, %v6173, 0
    %v6277 = vsel %vm266, %v6174, 0
    %v6280 = vsel %vm266, %v6175, 0
    %v6283 = vsel %vm266, %v6176, 0
    %v6286 = vsel %vm266, %v6177, 0
    %v6289 = vsel %vm266, %v6178, 0
    %v6292 = vsel %vm266, %v6179, 0
    %v6295 = vsel %vm266, %v6180, 0
    %v6298 = vsel %vm266, %v6181, 0
    %v6301 = vsel %vm266, %v6182, 0
    %v6304 = vsel %vm266, %v6183, 0
    %v6307 = vsel %vm266, %v6184, 0
    %v6310 = vsel %vm266, %v6185, 0
    %v6313 = vsel %vm266, %v6186, 0
    %v6316 = vsel %vm266, %v6187, 0
    %v6319 = vsel %vm266, %v6188, 0
    %v6322 = vsel %vm266, %v6189, 0
    %v6325 = vsel %vm266, %v6190, 0
    %v6328 = vsel %vm266, %v6191, 0
    %v6331 = vsel %vm266, %v6192, 0
    %v6334 = vsel %vm266, %v6193, 0
    %v6337 = vsel %vm266, %v6194, 0
    %v6340 = vsel %vm266, %v6195, 0
    %v6343 = vsel %vm266, %v6196, 0
    %v6346 = vsel %vm266, %v6197, 0
    %v6349 = vsel %vm266, %v6198, 0
    %v6352 = vsel %vm266, %v6199, 0
    %v6355 = vsel %vm266, %v6200, 0
    %v6358 = vsel %vm266, %v6201, 0
    %v6361 = vsel %vm266, %v6202, 0
    %v6364 = vsel %vm266, %v6203, 0
    %v6367 = vsel %vm266, %v6204, 0
    %v6370 = vsel %vm266, %v6205, 0
    %v6373 = vsel %vm266, %v6206, 0
    %v6376 = vsel %vm266, %v6207, 0
    %v6379 = vsel %vm266, %v6208, 0
    %v6382 = vsel %vm266, %v6209, 0
    %v6385 = vsel %vm266, %v6210, 0
    %v6388 = vsel %vm266, %v6211, 0
    %v6391 = vsel %vm266, %v6212, 0
    %v6394 = vsel %vm266, %v6213, 0
    %v6397 = vsel %vm266, %v6214, 0
    %v6400 = vsel %vm266, %v6215, 0
    %v6403 = vsel %vm266, %v6216, 0
    %v6406 = vsel %vm266, %v6217, 0
    %v6409 = vsel %vm266, %v6218, 0
    %6411 = vmatprep.subr.mxu0 0.0
    %6412 = vmatpush1.msra.mxu0 0.0
    %6413 = vmatprep.subr.mxu0 0.0
    %6414 = vmatpush1.msra.mxu0 0.0
    %6415 = vmatprep.subr.mxu0 0.0
    %6416 = vmatpush1.msra.mxu0 0.0
    %6417 = vmatprep.subr.mxu0 0.0
    %6418 = vmatpush1.msra.mxu0 0.0
    %6419 = vmatprep.subr.mxu0 0.0
    %6420 = vmatpush1.msra.mxu0 0.0
    %6421 = vmatprep.subr.mxu0 0.0
    %6422 = vmatpush1.msra.mxu0 0.0
    %6423 = vmatprep.subr.mxu0 0.0
    %6424 = vmatpush1.msra.mxu0 0.0
    %6425 = vmatprep.subr.mxu0 0.0
    %6426 = vmatpush1.msra.mxu0 0.0
    %6427 = vmatprep.subr.mxu0 0.0
    %6428 = vmatpush1.msra.mxu0 0.0
    %6429 = vmatprep.subr.mxu0 0.0
    %6430 = vmatpush1.msra.mxu0 0.0
    %6431 = vmatprep.subr.mxu0 0.0
    %6432 = vmatpush1.msra.mxu0 0.0
    %6433 = vmatprep.subr.mxu0 0.0
    %6434 = vmatpush1.msra.mxu0 0.0
    %6435 = vmatprep.subr.mxu0 0.0
    %6436 = vmatpush1.msra.mxu0 %v399
    %6437 = vmatprep.subr.mxu0 0.0
    %6438 = vmatpush1.msra.mxu0 %v398
    %6439 = vmatprep.subr.mxu0 0.0
    %6440 = vmatpush1.msra.mxu0 %v397
    %6441 = vmatprep.subr.mxu0 0.0
    %6442 = vmatpush1.msra.mxu0 %v396
    %6443 = vmatprep.subr.mxu0 0.0
    %6444 = vmatpush2.msra.mxu0 0.0
    %6445 = vmatprep.subr.mxu0 0.0
    %6446 = vmatpush2.msra.mxu0 0.0
    %6447 = vmatprep.subr.mxu0 0.0
    %6448 = vmatpush2.msra.mxu0 0.0
    %6449 = vmatprep.subr.mxu0 0.0
    %6450 = vmatpush2.msra.mxu0 0.0
    %6451 = vmatprep.subr.mxu0 0.0
    %6452 = vmatpush2.msra.mxu0 0.0
    %6453 = vmatprep.subr.mxu0 0.0
    %6454 = vmatpush2.msra.mxu0 0.0
    %6455 = vmatprep.subr.mxu0 0.0
    %6456 = vmatpush2.msra.mxu0 0.0
    %6457 = vmatprep.subr.mxu0 0.0
    %6458 = vmatpush2.msra.mxu0 0.0
    %6459 = vmatprep.subr.mxu0 0.0
    %6460 = vmatpush2.msra.mxu0 0.0
    %6461 = vmatprep.subr.mxu0 0.0
    %6462 = vmatpush2.msra.mxu0 0.0
    %6463 = vmatprep.subr.mxu0 0.0
    %6464 = vmatpush2.msra.mxu0 0.0
    %6465 = vmatprep.subr.mxu0 0.0
    %6466 = vmatpush2.msra.mxu0 0.0
    %6467 = vmatprep.subr.mxu0 0.0
    %6468 = vmatpush2.msra.mxu0 0.0
    %6469 = vmatprep.subr.mxu0 0.0
    %6470 = vmatpush2.msra.mxu0 0.0
    %6471 = vmatprep.subr.mxu0 0.0
    %6472 = vmatpush2.msra.mxu0 0.0
    %6473 = vmatprep.subr.mxu0 0.0
    %6474 = vmatpush2.msra.mxu0 0.0
    %6475 = vmatprep.mubr.f32.mxu0 0.0
    %6476 = vmatmul.mubr.f32.gmra.mxu0 %v6220
    %v6477 = vpop.f32.mrf.mxu0
    %v6478 = vadd.f32 0.0, %v6477
    %v6479 = vpop.f32.mrf.mxu0
    %6480 = vmatprep.mubr.f32.mxu0 0.0
    %6481 = vmatmul.mubr.f32.gmra.mxu0 %v6223
    %v6482 = vpop.f32.mrf.mxu0
    %v6483 = vadd.f32 0.0, %v6482
    %v6484 = vpop.f32.mrf.mxu0
    %6485 = vmatprep.mubr.f32.mxu0 0.0
    %6486 = vmatmul.mubr.f32.gmra.mxu0 %v6226
    %v6487 = vpop.f32.mrf.mxu0
    %v6488 = vadd.f32 0.0, %v6487
    %v6489 = vpop.f32.mrf.mxu0
    %6490 = vmatprep.mubr.f32.mxu0 0.0
    %6491 = vmatmul.mubr.f32.gmra.mxu0 %v6229
    %v6492 = vpop.f32.mrf.mxu0
    %v6493 = vadd.f32 0.0, %v6492
    %v6494 = vpop.f32.mrf.mxu0
    %6495 = vmatprep.mubr.f32.mxu0 0.0
    %6496 = vmatmul.mubr.f32.gmra.mxu0 %v6232
    %v6497 = vpop.f32.mrf.mxu0
    %v6498 = vadd.f32 0.0, %v6497
    %v6499 = vpop.f32.mrf.mxu0
    %6500 = vmatprep.mubr.f32.mxu0 0.0
    %6501 = vmatmul.mubr.f32.gmra.mxu0 %v6235
    %v6502 = vpop.f32.mrf.mxu0
    %v6503 = vadd.f32 0.0, %v6502
    %v6504 = vpop.f32.mrf.mxu0
    %6505 = vmatprep.mubr.f32.mxu0 0.0
    %6506 = vmatmul.mubr.f32.gmra.mxu0 %v6238
    %v6507 = vpop.f32.mrf.mxu0
    %v6508 = vadd.f32 0.0, %v6507
    %v6509 = vpop.f32.mrf.mxu0
    %6510 = vmatprep.mubr.f32.mxu0 0.0
    %6511 = vmatmul.mubr.f32.gmra.mxu0 %v6241
    %v6512 = vpop.f32.mrf.mxu0
    %v6513 = vadd.f32 0.0, %v6512
    %v6514 = vpop.f32.mrf.mxu0
    %6515 = vmatprep.mubr.f32.mxu0 0.0
    %6516 = vmatmul.mubr.f32.gmra.mxu0 %v6244
    %v6517 = vpop.f32.mrf.mxu0
    %v6518 = vadd.f32 0.0, %v6517
    %v6519 = vpop.f32.mrf.mxu0
    %6520 = vmatprep.mubr.f32.mxu0 0.0
    %6521 = vmatmul.mubr.f32.gmra.mxu0 %v6247
    %v6522 = vpop.f32.mrf.mxu0
    %v6523 = vadd.f32 0.0, %v6522
    %v6524 = vpop.f32.mrf.mxu0
    %6525 = vmatprep.mubr.f32.mxu0 0.0
    %6526 = vmatmul.mubr.f32.gmra.mxu0 %v6250
    %v6527 = vpop.f32.mrf.mxu0
    %v6528 = vadd.f32 0.0, %v6527
    %v6529 = vpop.f32.mrf.mxu0
    %6530 = vmatprep.mubr.f32.mxu0 0.0
    %6531 = vmatmul.mubr.f32.gmra.mxu0 %v6253
    %v6532 = vpop.f32.mrf.mxu0
    %v6533 = vadd.f32 0.0, %v6532
    %v6534 = vpop.f32.mrf.mxu0
    %6535 = vmatprep.mubr.f32.mxu0 0.0
    %6536 = vmatmul.mubr.f32.gmra.mxu0 %v6256
    %v6537 = vpop.f32.mrf.mxu0
    %v6538 = vadd.f32 0.0, %v6537
    %v6539 = vpop.f32.mrf.mxu0
    %6540 = vmatprep.mubr.f32.mxu0 0.0
    %6541 = vmatmul.mubr.f32.gmra.mxu0 %v6259
    %v6542 = vpop.f32.mrf.mxu0
    %v6543 = vadd.f32 0.0, %v6542
    %v6544 = vpop.f32.mrf.mxu0
    %6545 = vmatprep.mubr.f32.mxu0 0.0
    %6546 = vmatmul.mubr.f32.gmra.mxu0 %v6262
    %v6547 = vpop.f32.mrf.mxu0
    %v6548 = vadd.f32 0.0, %v6547
    %v6549 = vpop.f32.mrf.mxu0
    %6550 = vmatprep.mubr.f32.mxu0 0.0
    %6551 = vmatmul.mubr.f32.gmra.mxu0 %v6265
    %v6552 = vpop.f32.mrf.mxu0
    %v6553 = vadd.f32 0.0, %v6552
    %v6554 = vpop.f32.mrf.mxu0
    %6555 = vmatprep.mubr.f32.mxu0 0.0
    %6556 = vmatmul.mubr.f32.gmra.mxu0 %v6268
    %v6557 = vpop.f32.mrf.mxu0
    %v6558 = vadd.f32 0.0, %v6557
    %v6559 = vpop.f32.mrf.mxu0
    %6560 = vmatprep.mubr.f32.mxu0 0.0
    %6561 = vmatmul.mubr.f32.gmra.mxu0 %v6271
    %v6562 = vpop.f32.mrf.mxu0
    %v6563 = vadd.f32 0.0, %v6562
    %v6564 = vpop.f32.mrf.mxu0
    %6565 = vmatprep.mubr.f32.mxu0 0.0
    %6566 = vmatmul.mubr.f32.gmra.mxu0 %v6274
    %v6567 = vpop.f32.mrf.mxu0
    %v6568 = vadd.f32 0.0, %v6567
    %v6569 = vpop.f32.mrf.mxu0
    %6570 = vmatprep.mubr.f32.mxu0 0.0
    %6571 = vmatmul.mubr.f32.gmra.mxu0 %v6277
    %v6572 = vpop.f32.mrf.mxu0
    %v6573 = vadd.f32 0.0, %v6572
    %v6574 = vpop.f32.mrf.mxu0
    %6575 = vmatprep.mubr.f32.mxu0 0.0
    %6576 = vmatmul.mubr.f32.gmra.mxu0 %v6280
    %v6577 = vpop.f32.mrf.mxu0
    %v6578 = vadd.f32 0.0, %v6577
    %v6579 = vpop.f32.mrf.mxu0
    %6580 = vmatprep.mubr.f32.mxu0 0.0
    %6581 = vmatmul.mubr.f32.gmra.mxu0 %v6283
    %v6582 = vpop.f32.mrf.mxu0
    %v6583 = vadd.f32 0.0, %v6582
    %v6584 = vpop.f32.mrf.mxu0
    %6585 = vmatprep.mubr.f32.mxu0 0.0
    %6586 = vmatmul.mubr.f32.gmra.mxu0 %v6286
    %v6587 = vpop.f32.mrf.mxu0
    %v6588 = vadd.f32 0.0, %v6587
    %v6589 = vpop.f32.mrf.mxu0
    %6590 = vmatprep.mubr.f32.mxu0 0.0
    %6591 = vmatmul.mubr.f32.gmra.mxu0 %v6289
    %v6592 = vpop.f32.mrf.mxu0
    %v6593 = vadd.f32 0.0, %v6592
    %v6594 = vpop.f32.mrf.mxu0
    %6595 = vmatprep.mubr.f32.mxu0 0.0
    %6596 = vmatmul.mubr.f32.gmra.mxu0 %v6292
    %v6597 = vpop.f32.mrf.mxu0
    %v6598 = vadd.f32 0.0, %v6597
    %v6599 = vpop.f32.mrf.mxu0
    %6600 = vmatprep.mubr.f32.mxu0 0.0
    %6601 = vmatmul.mubr.f32.gmra.mxu0 %v6295
    %v6602 = vpop.f32.mrf.mxu0
    %v6603 = vadd.f32 0.0, %v6602
    %v6604 = vpop.f32.mrf.mxu0
    %6605 = vmatprep.mubr.f32.mxu0 0.0
    %6606 = vmatmul.mubr.f32.gmra.mxu0 %v6298
    %v6607 = vpop.f32.mrf.mxu0
    %v6608 = vadd.f32 0.0, %v6607
    %v6609 = vpop.f32.mrf.mxu0
    %6610 = vmatprep.mubr.f32.mxu0 0.0
    %6611 = vmatmul.mubr.f32.gmra.mxu0 %v6301
    %v6612 = vpop.f32.mrf.mxu0
    %v6613 = vadd.f32 0.0, %v6612
    %v6614 = vpop.f32.mrf.mxu0
    %6615 = vmatprep.mubr.f32.mxu0 0.0
    %6616 = vmatmul.mubr.f32.gmra.mxu0 %v6304
    %v6617 = vpop.f32.mrf.mxu0
    %v6618 = vadd.f32 0.0, %v6617
    %v6619 = vpop.f32.mrf.mxu0
    %6620 = vmatprep.mubr.f32.mxu0 0.0
    %6621 = vmatmul.mubr.f32.gmra.mxu0 %v6307
    %v6622 = vpop.f32.mrf.mxu0
    %v6623 = vadd.f32 0.0, %v6622
    %v6624 = vpop.f32.mrf.mxu0
    %6625 = vmatprep.mubr.f32.mxu0 0.0
    %6626 = vmatmul.mubr.f32.gmra.mxu0 %v6310
    %v6627 = vpop.f32.mrf.mxu0
    %v6628 = vadd.f32 0.0, %v6627
    %v6629 = vpop.f32.mrf.mxu0
    %6630 = vmatprep.mubr.f32.mxu0 0.0
    %6631 = vmatmul.mubr.f32.gmra.mxu0 %v6313
    %v6632 = vpop.f32.mrf.mxu0
    %v6633 = vadd.f32 0.0, %v6632
    %v6634 = vpop.f32.mrf.mxu0
    %6635 = vmatprep.mubr.f32.mxu0 0.0
    %6636 = vmatmul.mubr.f32.gmra.mxu0 %v6316
    %v6637 = vpop.f32.mrf.mxu0
    %v6638 = vadd.f32 0.0, %v6637
    %v6639 = vpop.f32.mrf.mxu0
    %6640 = vmatprep.mubr.f32.mxu0 0.0
    %6641 = vmatmul.mubr.f32.gmra.mxu0 %v6319
    %v6642 = vpop.f32.mrf.mxu0
    %v6643 = vadd.f32 0.0, %v6642
    %v6644 = vpop.f32.mrf.mxu0
    %6645 = vmatprep.mubr.f32.mxu0 0.0
    %6646 = vmatmul.mubr.f32.gmra.mxu0 %v6322
    %v6647 = vpop.f32.mrf.mxu0
    %v6648 = vadd.f32 0.0, %v6647
    %v6649 = vpop.f32.mrf.mxu0
    %6650 = vmatprep.mubr.f32.mxu0 0.0
    %6651 = vmatmul.mubr.f32.gmra.mxu0 %v6325
    %v6652 = vpop.f32.mrf.mxu0
    %v6653 = vadd.f32 0.0, %v6652
    %v6654 = vpop.f32.mrf.mxu0
    %6655 = vmatprep.mubr.f32.mxu0 0.0
    %6656 = vmatmul.mubr.f32.gmra.mxu0 %v6328
    %v6657 = vpop.f32.mrf.mxu0
    %v6658 = vadd.f32 0.0, %v6657
    %v6659 = vpop.f32.mrf.mxu0
    %6660 = vmatprep.mubr.f32.mxu0 0.0
    %6661 = vmatmul.mubr.f32.gmra.mxu0 %v6331
    %v6662 = vpop.f32.mrf.mxu0
    %v6663 = vadd.f32 0.0, %v6662
    %v6664 = vpop.f32.mrf.mxu0
    %6665 = vmatprep.mubr.f32.mxu0 0.0
    %6666 = vmatmul.mubr.f32.gmra.mxu0 %v6334
    %v6667 = vpop.f32.mrf.mxu0
    %v6668 = vadd.f32 0.0, %v6667
    %v6669 = vpop.f32.mrf.mxu0
    %6670 = vmatprep.mubr.f32.mxu0 0.0
    %6671 = vmatmul.mubr.f32.gmra.mxu0 %v6337
    %v6672 = vpop.f32.mrf.mxu0
    %v6673 = vadd.f32 0.0, %v6672
    %v6674 = vpop.f32.mrf.mxu0
    %6675 = vmatprep.mubr.f32.mxu0 0.0
    %6676 = vmatmul.mubr.f32.gmra.mxu0 %v6340
    %v6677 = vpop.f32.mrf.mxu0
    %v6678 = vadd.f32 0.0, %v6677
    %v6679 = vpop.f32.mrf.mxu0
    %6680 = vmatprep.mubr.f32.mxu0 0.0
    %6681 = vmatmul.mubr.f32.gmra.mxu0 %v6343
    %v6682 = vpop.f32.mrf.mxu0
    %v6683 = vadd.f32 0.0, %v6682
    %v6684 = vpop.f32.mrf.mxu0
    %6685 = vmatprep.mubr.f32.mxu0 0.0
    %6686 = vmatmul.mubr.f32.gmra.mxu0 %v6346
    %v6687 = vpop.f32.mrf.mxu0
    %v6688 = vadd.f32 0.0, %v6687
    %v6689 = vpop.f32.mrf.mxu0
    %6690 = vmatprep.mubr.f32.mxu0 0.0
    %6691 = vmatmul.mubr.f32.gmra.mxu0 %v6349
    %v6692 = vpop.f32.mrf.mxu0
    %v6693 = vadd.f32 0.0, %v6692
    %v6694 = vpop.f32.mrf.mxu0
    %6695 = vmatprep.mubr.f32.mxu0 0.0
    %6696 = vmatmul.mubr.f32.gmra.mxu0 %v6352
    %v6697 = vpop.f32.mrf.mxu0
    %v6698 = vadd.f32 0.0, %v6697
    %v6699 = vpop.f32.mrf.mxu0
    %6700 = vmatprep.mubr.f32.mxu0 0.0
    %6701 = vmatmul.mubr.f32.gmra.mxu0 %v6355
    %v6702 = vpop.f32.mrf.mxu0
    %v6703 = vadd.f32 0.0, %v6702
    %v6704 = vpop.f32.mrf.mxu0
    %6705 = vmatprep.mubr.f32.mxu0 0.0
    %6706 = vmatmul.mubr.f32.gmra.mxu0 %v6358
    %v6707 = vpop.f32.mrf.mxu0
    %v6708 = vadd.f32 0.0, %v6707
    %v6709 = vpop.f32.mrf.mxu0
    %6710 = vmatprep.mubr.f32.mxu0 0.0
    %6711 = vmatmul.mubr.f32.gmra.mxu0 %v6361
    %v6712 = vpop.f32.mrf.mxu0
    %v6713 = vadd.f32 0.0, %v6712
    %v6714 = vpop.f32.mrf.mxu0
    %6715 = vmatprep.mubr.f32.mxu0 0.0
    %6716 = vmatmul.mubr.f32.gmra.mxu0 %v6364
    %v6717 = vpop.f32.mrf.mxu0
    %v6718 = vadd.f32 0.0, %v6717
    %v6719 = vpop.f32.mrf.mxu0
    %6720 = vmatprep.mubr.f32.mxu0 0.0
    %6721 = vmatmul.mubr.f32.gmra.mxu0 %v6367
    %v6722 = vpop.f32.mrf.mxu0
    %v6723 = vadd.f32 0.0, %v6722
    %v6724 = vpop.f32.mrf.mxu0
    %6725 = vmatprep.mubr.f32.mxu0 0.0
    %6726 = vmatmul.mubr.f32.gmra.mxu0 %v6370
    %v6727 = vpop.f32.mrf.mxu0
    %v6728 = vadd.f32 0.0, %v6727
    %v6729 = vpop.f32.mrf.mxu0
    %6730 = vmatprep.mubr.f32.mxu0 0.0
    %6731 = vmatmul.mubr.f32.gmra.mxu0 %v6373
    %v6732 = vpop.f32.mrf.mxu0
    %v6733 = vadd.f32 0.0, %v6732
    %v6734 = vpop.f32.mrf.mxu0
    %6735 = vmatprep.mubr.f32.mxu0 0.0
    %6736 = vmatmul.mubr.f32.gmra.mxu0 %v6376
    %v6737 = vpop.f32.mrf.mxu0
    %v6738 = vadd.f32 0.0, %v6737
    %v6739 = vpop.f32.mrf.mxu0
    %6740 = vmatprep.mubr.f32.mxu0 0.0
    %6741 = vmatmul.mubr.f32.gmra.mxu0 %v6379
    %v6742 = vpop.f32.mrf.mxu0
    %v6743 = vadd.f32 0.0, %v6742
    %v6744 = vpop.f32.mrf.mxu0
    %6745 = vmatprep.mubr.f32.mxu0 0.0
    %6746 = vmatmul.mubr.f32.gmra.mxu0 %v6382
    %v6747 = vpop.f32.mrf.mxu0
    %v6748 = vadd.f32 0.0, %v6747
    %v6749 = vpop.f32.mrf.mxu0
    %6750 = vmatprep.mubr.f32.mxu0 0.0
    %6751 = vmatmul.mubr.f32.gmra.mxu0 %v6385
    %v6752 = vpop.f32.mrf.mxu0
    %v6753 = vadd.f32 0.0, %v6752
    %v6754 = vpop.f32.mrf.mxu0
    %6755 = vmatprep.mubr.f32.mxu0 0.0
    %6756 = vmatmul.mubr.f32.gmra.mxu0 %v6388
    %v6757 = vpop.f32.mrf.mxu0
    %v6758 = vadd.f32 0.0, %v6757
    %v6759 = vpop.f32.mrf.mxu0
    %6760 = vmatprep.mubr.f32.mxu0 0.0
    %6761 = vmatmul.mubr.f32.gmra.mxu0 %v6391
    %v6762 = vpop.f32.mrf.mxu0
    %v6763 = vadd.f32 0.0, %v6762
    %v6764 = vpop.f32.mrf.mxu0
    %6765 = vmatprep.mubr.f32.mxu0 0.0
    %6766 = vmatmul.mubr.f32.gmra.mxu0 %v6394
    %v6767 = vpop.f32.mrf.mxu0
    %v6768 = vadd.f32 0.0, %v6767
    %v6769 = vpop.f32.mrf.mxu0
    %6770 = vmatprep.mubr.f32.mxu0 0.0
    %6771 = vmatmul.mubr.f32.gmra.mxu0 %v6397
    %v6772 = vpop.f32.mrf.mxu0
    %v6773 = vadd.f32 0.0, %v6772
    %v6774 = vpop.f32.mrf.mxu0
    %6775 = vmatprep.mubr.f32.mxu0 0.0
    %6776 = vmatmul.mubr.f32.gmra.mxu0 %v6400
    %v6777 = vpop.f32.mrf.mxu0
    %v6778 = vadd.f32 0.0, %v6777
    %v6779 = vpop.f32.mrf.mxu0
    %6780 = vmatprep.mubr.f32.mxu0 0.0
    %6781 = vmatmul.mubr.f32.gmra.mxu0 %v6403
    %v6782 = vpop.f32.mrf.mxu0
    %v6783 = vadd.f32 0.0, %v6782
    %v6784 = vpop.f32.mrf.mxu0
    %6785 = vmatprep.mubr.f32.mxu0 0.0
    %6786 = vmatmul.mubr.f32.gmra.mxu0 %v6406
    %v6787 = vpop.f32.mrf.mxu0
    %v6788 = vadd.f32 0.0, %v6787
    %v6789 = vpop.f32.mrf.mxu0
    %6790 = vmatprep.mubr.f32.mxu0 0.0
    %6791 = vmatmul.mubr.f32.gmra.mxu0 %v6409
    %v6792 = vpop.f32.mrf.mxu0
    %v6793 = vadd.f32 0.0, %v6792
    %v6794 = vpop.f32.mrf.mxu0
    %6795 = vdwg.mxu0
    %v6796 = vsel %vm266, %v6478, -inf
    %v6797 = vrot.slane %v6796, 4
    %v6798 = vmax.f32 %v6796, %v6797
    %v6799 = vrot.slane %v6798, 2
    %v6800 = vmax.f32 %v6798, %v6799
    %v6801 = vrot.slane %v6800, 1
    %v6802 = vmax.f32 %v6800, %v6801
    %v6803 = vsel %vm266, %v6483, -inf
    %v6804 = vrot.slane %v6803, 4
    %v6805 = vmax.f32 %v6803, %v6804
    %v6806 = vrot.slane %v6805, 2
    %v6807 = vmax.f32 %v6805, %v6806
    %v6808 = vrot.slane %v6807, 1
    %v6809 = vmax.f32 %v6807, %v6808
    %v6810 = vsel %vm266, %v6488, -inf
    %v6811 = vrot.slane %v6810, 4
    %v6812 = vmax.f32 %v6810, %v6811
    %v6813 = vrot.slane %v6812, 2
    %v6814 = vmax.f32 %v6812, %v6813
    %v6815 = vrot.slane %v6814, 1
    %v6816 = vmax.f32 %v6814, %v6815
    %v6817 = vsel %vm266, %v6493, -inf
    %v6818 = vrot.slane %v6817, 4
    %v6819 = vmax.f32 %v6817, %v6818
    %v6820 = vrot.slane %v6819, 2
    %v6821 = vmax.f32 %v6819, %v6820
    %v6822 = vrot.slane %v6821, 1
    %v6823 = vmax.f32 %v6821, %v6822
    %v6824 = vsel %vm266, %v6498, -inf
    %v6825 = vrot.slane %v6824, 4
    %v6826 = vmax.f32 %v6824, %v6825
    %v6827 = vrot.slane %v6826, 2
    %v6828 = vmax.f32 %v6826, %v6827
    %v6829 = vrot.slane %v6828, 1
    %v6830 = vmax.f32 %v6828, %v6829
    %v6831 = vsel %vm266, %v6503, -inf
    %v6832 = vrot.slane %v6831, 4
    %v6833 = vmax.f32 %v6831, %v6832
    %v6834 = vrot.slane %v6833, 2
    %v6835 = vmax.f32 %v6833, %v6834
    %v6836 = vrot.slane %v6835, 1
    %v6837 = vmax.f32 %v6835, %v6836
    %v6838 = vsel %vm266, %v6508, -inf
    %v6839 = vrot.slane %v6838, 4
    %v6840 = vmax.f32 %v6838, %v6839
    %v6841 = vrot.slane %v6840, 2
    %v6842 = vmax.f32 %v6840, %v6841
    %v6843 = vrot.slane %v6842, 1
    %v6844 = vmax.f32 %v6842, %v6843
    %v6845 = vsel %vm266, %v6513, -inf
    %v6846 = vrot.slane %v6845, 4
    %v6847 = vmax.f32 %v6845, %v6846
    %v6848 = vrot.slane %v6847, 2
    %v6849 = vmax.f32 %v6847, %v6848
    %v6850 = vrot.slane %v6849, 1
    %v6851 = vmax.f32 %v6849, %v6850
    %v6852 = vsel %vm266, %v6518, -inf
    %v6853 = vrot.slane %v6852, 4
    %v6854 = vmax.f32 %v6852, %v6853
    %v6855 = vrot.slane %v6854, 2
    %v6856 = vmax.f32 %v6854, %v6855
    %v6857 = vrot.slane %v6856, 1
    %v6858 = vmax.f32 %v6856, %v6857
    %v6859 = vsel %vm266, %v6523, -inf
    %v6860 = vrot.slane %v6859, 4
    %v6861 = vmax.f32 %v6859, %v6860
    %v6862 = vrot.slane %v6861, 2
    %v6863 = vmax.f32 %v6861, %v6862
    %v6864 = vrot.slane %v6863, 1
    %v6865 = vmax.f32 %v6863, %v6864
    %v6866 = vsel %vm266, %v6528, -inf
    %v6867 = vrot.slane %v6866, 4
    %v6868 = vmax.f32 %v6866, %v6867
    %v6869 = vrot.slane %v6868, 2
    %v6870 = vmax.f32 %v6868, %v6869
    %v6871 = vrot.slane %v6870, 1
    %v6872 = vmax.f32 %v6870, %v6871
    %v6873 = vsel %vm266, %v6533, -inf
    %v6874 = vrot.slane %v6873, 4
    %v6875 = vmax.f32 %v6873, %v6874
    %v6876 = vrot.slane %v6875, 2
    %v6877 = vmax.f32 %v6875, %v6876
    %v6878 = vrot.slane %v6877, 1
    %v6879 = vmax.f32 %v6877, %v6878
    %v6880 = vsel %vm266, %v6538, -inf
    %v6881 = vrot.slane %v6880, 4
    %v6882 = vmax.f32 %v6880, %v6881
    %v6883 = vrot.slane %v6882, 2
    %v6884 = vmax.f32 %v6882, %v6883
    %v6885 = vrot.slane %v6884, 1
    %v6886 = vmax.f32 %v6884, %v6885
    %v6887 = vsel %vm266, %v6543, -inf
    %v6888 = vrot.slane %v6887, 4
    %v6889 = vmax.f32 %v6887, %v6888
    %v6890 = vrot.slane %v6889, 2
    %v6891 = vmax.f32 %v6889, %v6890
    %v6892 = vrot.slane %v6891, 1
    %v6893 = vmax.f32 %v6891, %v6892
    %v6894 = vsel %vm266, %v6548, -inf
    %v6895 = vrot.slane %v6894, 4
    %v6896 = vmax.f32 %v6894, %v6895
    %v6897 = vrot.slane %v6896, 2
    %v6898 = vmax.f32 %v6896, %v6897
    %v6899 = vrot.slane %v6898, 1
    %v6900 = vmax.f32 %v6898, %v6899
    %v6901 = vsel %vm266, %v6553, -inf
    %v6902 = vrot.slane %v6901, 4
    %v6903 = vmax.f32 %v6901, %v6902
    %v6904 = vrot.slane %v6903, 2
    %v6905 = vmax.f32 %v6903, %v6904
    %v6906 = vrot.slane %v6905, 1
    %v6907 = vmax.f32 %v6905, %v6906
    %v6908 = vsel %vm266, %v6558, -inf
    %v6909 = vrot.slane %v6908, 4
    %v6910 = vmax.f32 %v6908, %v6909
    %v6911 = vrot.slane %v6910, 2
    %v6912 = vmax.f32 %v6910, %v6911
    %v6913 = vrot.slane %v6912, 1
    %v6914 = vmax.f32 %v6912, %v6913
    %v6915 = vsel %vm266, %v6563, -inf
    %v6916 = vrot.slane %v6915, 4
    %v6917 = vmax.f32 %v6915, %v6916
    %v6918 = vrot.slane %v6917, 2
    %v6919 = vmax.f32 %v6917, %v6918
    %v6920 = vrot.slane %v6919, 1
    %v6921 = vmax.f32 %v6919, %v6920
    %v6922 = vsel %vm266, %v6568, -inf
    %v6923 = vrot.slane %v6922, 4
    %v6924 = vmax.f32 %v6922, %v6923
    %v6925 = vrot.slane %v6924, 2
    %v6926 = vmax.f32 %v6924, %v6925
    %v6927 = vrot.slane %v6926, 1
    %v6928 = vmax.f32 %v6926, %v6927
    %v6929 = vsel %vm266, %v6573, -inf
    %v6930 = vrot.slane %v6929, 4
    %v6931 = vmax.f32 %v6929, %v6930
    %v6932 = vrot.slane %v6931, 2
    %v6933 = vmax.f32 %v6931, %v6932
    %v6934 = vrot.slane %v6933, 1
    %v6935 = vmax.f32 %v6933, %v6934
    %v6936 = vsel %vm266, %v6578, -inf
    %v6937 = vrot.slane %v6936, 4
    %v6938 = vmax.f32 %v6936, %v6937
    %v6939 = vrot.slane %v6938, 2
    %v6940 = vmax.f32 %v6938, %v6939
    %v6941 = vrot.slane %v6940, 1
    %v6942 = vmax.f32 %v6940, %v6941
    %v6943 = vsel %vm266, %v6583, -inf
    %v6944 = vrot.slane %v6943, 4
    %v6945 = vmax.f32 %v6943, %v6944
    %v6946 = vrot.slane %v6945, 2
    %v6947 = vmax.f32 %v6945, %v6946
    %v6948 = vrot.slane %v6947, 1
    %v6949 = vmax.f32 %v6947, %v6948
    %v6950 = vsel %vm266, %v6588, -inf
    %v6951 = vrot.slane %v6950, 4
    %v6952 = vmax.f32 %v6950, %v6951
    %v6953 = vrot.slane %v6952, 2
    %v6954 = vmax.f32 %v6952, %v6953
    %v6955 = vrot.slane %v6954, 1
    %v6956 = vmax.f32 %v6954, %v6955
    %v6957 = vsel %vm266, %v6593, -inf
    %v6958 = vrot.slane %v6957, 4
    %v6959 = vmax.f32 %v6957, %v6958
    %v6960 = vrot.slane %v6959, 2
    %v6961 = vmax.f32 %v6959, %v6960
    %v6962 = vrot.slane %v6961, 1
    %v6963 = vmax.f32 %v6961, %v6962
    %v6964 = vsel %vm266, %v6598, -inf
    %v6965 = vrot.slane %v6964, 4
    %v6966 = vmax.f32 %v6964, %v6965
    %v6967 = vrot.slane %v6966, 2
    %v6968 = vmax.f32 %v6966, %v6967
    %v6969 = vrot.slane %v6968, 1
    %v6970 = vmax.f32 %v6968, %v6969
    %v6971 = vsel %vm266, %v6603, -inf
    %v6972 = vrot.slane %v6971, 4
    %v6973 = vmax.f32 %v6971, %v6972
    %v6974 = vrot.slane %v6973, 2
    %v6975 = vmax.f32 %v6973, %v6974
    %v6976 = vrot.slane %v6975, 1
    %v6977 = vmax.f32 %v6975, %v6976
    %v6978 = vsel %vm266, %v6608, -inf
    %v6979 = vrot.slane %v6978, 4
    %v6980 = vmax.f32 %v6978, %v6979
    %v6981 = vrot.slane %v6980, 2
    %v6982 = vmax.f32 %v6980, %v6981
    %v6983 = vrot.slane %v6982, 1
    %v6984 = vmax.f32 %v6982, %v6983
    %v6985 = vsel %vm266, %v6613, -inf
    %v6986 = vrot.slane %v6985, 4
    %v6987 = vmax.f32 %v6985, %v6986
    %v6988 = vrot.slane %v6987, 2
    %v6989 = vmax.f32 %v6987, %v6988
    %v6990 = vrot.slane %v6989, 1
    %v6991 = vmax.f32 %v6989, %v6990
    %v6992 = vsel %vm266, %v6618, -inf
    %v6993 = vrot.slane %v6992, 4
    %v6994 = vmax.f32 %v6992, %v6993
    %v6995 = vrot.slane %v6994, 2
    %v6996 = vmax.f32 %v6994, %v6995
    %v6997 = vrot.slane %v6996, 1
    %v6998 = vmax.f32 %v6996, %v6997
    %v6999 = vsel %vm266, %v6623, -inf
    %v7000 = vrot.slane %v6999, 4
    %v7001 = vmax.f32 %v6999, %v7000
    %v7002 = vrot.slane %v7001, 2
    %v7003 = vmax.f32 %v7001, %v7002
    %v7004 = vrot.slane %v7003, 1
    %v7005 = vmax.f32 %v7003, %v7004
    %v7006 = vsel %vm266, %v6628, -inf
    %v7007 = vrot.slane %v7006, 4
    %v7008 = vmax.f32 %v7006, %v7007
    %v7009 = vrot.slane %v7008, 2
    %v7010 = vmax.f32 %v7008, %v7009
    %v7011 = vrot.slane %v7010, 1
    %v7012 = vmax.f32 %v7010, %v7011
    %v7013 = vsel %vm266, %v6633, -inf
    %v7014 = vrot.slane %v7013, 4
    %v7015 = vmax.f32 %v7013, %v7014
    %v7016 = vrot.slane %v7015, 2
    %v7017 = vmax.f32 %v7015, %v7016
    %v7018 = vrot.slane %v7017, 1
    %v7019 = vmax.f32 %v7017, %v7018
    %v7020 = vsel %vm266, %v6638, -inf
    %v7021 = vrot.slane %v7020, 4
    %v7022 = vmax.f32 %v7020, %v7021
    %v7023 = vrot.slane %v7022, 2
    %v7024 = vmax.f32 %v7022, %v7023
    %v7025 = vrot.slane %v7024, 1
    %v7026 = vmax.f32 %v7024, %v7025
    %v7027 = vsel %vm266, %v6643, -inf
    %v7028 = vrot.slane %v7027, 4
    %v7029 = vmax.f32 %v7027, %v7028
    %v7030 = vrot.slane %v7029, 2
    %v7031 = vmax.f32 %v7029, %v7030
    %v7032 = vrot.slane %v7031, 1
    %v7033 = vmax.f32 %v7031, %v7032
    %v7034 = vsel %vm266, %v6648, -inf
    %v7035 = vrot.slane %v7034, 4
    %v7036 = vmax.f32 %v7034, %v7035
    %v7037 = vrot.slane %v7036, 2
    %v7038 = vmax.f32 %v7036, %v7037
    %v7039 = vrot.slane %v7038, 1
    %v7040 = vmax.f32 %v7038, %v7039
    %v7041 = vsel %vm266, %v6653, -inf
    %v7042 = vrot.slane %v7041, 4
    %v7043 = vmax.f32 %v7041, %v7042
    %v7044 = vrot.slane %v7043, 2
    %v7045 = vmax.f32 %v7043, %v7044
    %v7046 = vrot.slane %v7045, 1
    %v7047 = vmax.f32 %v7045, %v7046
    %v7048 = vsel %vm266, %v6658, -inf
    %v7049 = vrot.slane %v7048, 4
    %v7050 = vmax.f32 %v7048, %v7049
    %v7051 = vrot.slane %v7050, 2
    %v7052 = vmax.f32 %v7050, %v7051
    %v7053 = vrot.slane %v7052, 1
    %v7054 = vmax.f32 %v7052, %v7053
    %v7055 = vsel %vm266, %v6663, -inf
    %v7056 = vrot.slane %v7055, 4
    %v7057 = vmax.f32 %v7055, %v7056
    %v7058 = vrot.slane %v7057, 2
    %v7059 = vmax.f32 %v7057, %v7058
    %v7060 = vrot.slane %v7059, 1
    %v7061 = vmax.f32 %v7059, %v7060
    %v7062 = vsel %vm266, %v6668, -inf
    %v7063 = vrot.slane %v7062, 4
    %v7064 = vmax.f32 %v7062, %v7063
    %v7065 = vrot.slane %v7064, 2
    %v7066 = vmax.f32 %v7064, %v7065
    %v7067 = vrot.slane %v7066, 1
    %v7068 = vmax.f32 %v7066, %v7067
    %v7069 = vsel %vm266, %v6673, -inf
    %v7070 = vrot.slane %v7069, 4
    %v7071 = vmax.f32 %v7069, %v7070
    %v7072 = vrot.slane %v7071, 2
    %v7073 = vmax.f32 %v7071, %v7072
    %v7074 = vrot.slane %v7073, 1
    %v7075 = vmax.f32 %v7073, %v7074
    %v7076 = vsel %vm266, %v6678, -inf
    %v7077 = vrot.slane %v7076, 4
    %v7078 = vmax.f32 %v7076, %v7077
    %v7079 = vrot.slane %v7078, 2
    %v7080 = vmax.f32 %v7078, %v7079
    %v7081 = vrot.slane %v7080, 1
    %v7082 = vmax.f32 %v7080, %v7081
    %v7083 = vsel %vm266, %v6683, -inf
    %v7084 = vrot.slane %v7083, 4
    %v7085 = vmax.f32 %v7083, %v7084
    %v7086 = vrot.slane %v7085, 2
    %v7087 = vmax.f32 %v7085, %v7086
    %v7088 = vrot.slane %v7087, 1
    %v7089 = vmax.f32 %v7087, %v7088
    %v7090 = vsel %vm266, %v6688, -inf
    %v7091 = vrot.slane %v7090, 4
    %v7092 = vmax.f32 %v7090, %v7091
    %v7093 = vrot.slane %v7092, 2
    %v7094 = vmax.f32 %v7092, %v7093
    %v7095 = vrot.slane %v7094, 1
    %v7096 = vmax.f32 %v7094, %v7095
    %v7097 = vsel %vm266, %v6693, -inf
    %v7098 = vrot.slane %v7097, 4
    %v7099 = vmax.f32 %v7097, %v7098
    %v7100 = vrot.slane %v7099, 2
    %v7101 = vmax.f32 %v7099, %v7100
    %v7102 = vrot.slane %v7101, 1
    %v7103 = vmax.f32 %v7101, %v7102
    %v7104 = vsel %vm266, %v6698, -inf
    %v7105 = vrot.slane %v7104, 4
    %v7106 = vmax.f32 %v7104, %v7105
    %v7107 = vrot.slane %v7106, 2
    %v7108 = vmax.f32 %v7106, %v7107
    %v7109 = vrot.slane %v7108, 1
    %v7110 = vmax.f32 %v7108, %v7109
    %v7111 = vsel %vm266, %v6703, -inf
    %v7112 = vrot.slane %v7111, 4
    %v7113 = vmax.f32 %v7111, %v7112
    %v7114 = vrot.slane %v7113, 2
    %v7115 = vmax.f32 %v7113, %v7114
    %v7116 = vrot.slane %v7115, 1
    %v7117 = vmax.f32 %v7115, %v7116
    %v7118 = vsel %vm266, %v6708, -inf
    %v7119 = vrot.slane %v7118, 4
    %v7120 = vmax.f32 %v7118, %v7119
    %v7121 = vrot.slane %v7120, 2
    %v7122 = vmax.f32 %v7120, %v7121
    %v7123 = vrot.slane %v7122, 1
    %v7124 = vmax.f32 %v7122, %v7123
    %v7125 = vsel %vm266, %v6713, -inf
    %v7126 = vrot.slane %v7125, 4
    %v7127 = vmax.f32 %v7125, %v7126
    %v7128 = vrot.slane %v7127, 2
    %v7129 = vmax.f32 %v7127, %v7128
    %v7130 = vrot.slane %v7129, 1
    %v7131 = vmax.f32 %v7129, %v7130
    %v7132 = vsel %vm266, %v6718, -inf
    %v7133 = vrot.slane %v7132, 4
    %v7134 = vmax.f32 %v7132, %v7133
    %v7135 = vrot.slane %v7134, 2
    %v7136 = vmax.f32 %v7134, %v7135
    %v7137 = vrot.slane %v7136, 1
    %v7138 = vmax.f32 %v7136, %v7137
    %v7139 = vsel %vm266, %v6723, -inf
    %v7140 = vrot.slane %v7139, 4
    %v7141 = vmax.f32 %v7139, %v7140
    %v7142 = vrot.slane %v7141, 2
    %v7143 = vmax.f32 %v7141, %v7142
    %v7144 = vrot.slane %v7143, 1
    %v7145 = vmax.f32 %v7143, %v7144
    %v7146 = vsel %vm266, %v6728, -inf
    %v7147 = vrot.slane %v7146, 4
    %v7148 = vmax.f32 %v7146, %v7147
    %v7149 = vrot.slane %v7148, 2
    %v7150 = vmax.f32 %v7148, %v7149
    %v7151 = vrot.slane %v7150, 1
    %v7152 = vmax.f32 %v7150, %v7151
    %v7153 = vsel %vm266, %v6733, -inf
    %v7154 = vrot.slane %v7153, 4
    %v7155 = vmax.f32 %v7153, %v7154
    %v7156 = vrot.slane %v7155, 2
    %v7157 = vmax.f32 %v7155, %v7156
    %v7158 = vrot.slane %v7157, 1
    %v7159 = vmax.f32 %v7157, %v7158
    %v7160 = vsel %vm266, %v6738, -inf
    %v7161 = vrot.slane %v7160, 4
    %v7162 = vmax.f32 %v7160, %v7161
    %v7163 = vrot.slane %v7162, 2
    %v7164 = vmax.f32 %v7162, %v7163
    %v7165 = vrot.slane %v7164, 1
    %v7166 = vmax.f32 %v7164, %v7165
    %v7167 = vsel %vm266, %v6743, -inf
    %v7168 = vrot.slane %v7167, 4
    %v7169 = vmax.f32 %v7167, %v7168
    %v7170 = vrot.slane %v7169, 2
    %v7171 = vmax.f32 %v7169, %v7170
    %v7172 = vrot.slane %v7171, 1
    %v7173 = vmax.f32 %v7171, %v7172
    %v7174 = vsel %vm266, %v6748, -inf
    %v7175 = vrot.slane %v7174, 4
    %v7176 = vmax.f32 %v7174, %v7175
    %v7177 = vrot.slane %v7176, 2
    %v7178 = vmax.f32 %v7176, %v7177
    %v7179 = vrot.slane %v7178, 1
    %v7180 = vmax.f32 %v7178, %v7179
    %v7181 = vsel %vm266, %v6753, -inf
    %v7182 = vrot.slane %v7181, 4
    %v7183 = vmax.f32 %v7181, %v7182
    %v7184 = vrot.slane %v7183, 2
    %v7185 = vmax.f32 %v7183, %v7184
    %v7186 = vrot.slane %v7185, 1
    %v7187 = vmax.f32 %v7185, %v7186
    %v7188 = vsel %vm266, %v6758, -inf
    %v7189 = vrot.slane %v7188, 4
    %v7190 = vmax.f32 %v7188, %v7189
    %v7191 = vrot.slane %v7190, 2
    %v7192 = vmax.f32 %v7190, %v7191
    %v7193 = vrot.slane %v7192, 1
    %v7194 = vmax.f32 %v7192, %v7193
    %v7195 = vsel %vm266, %v6763, -inf
    %v7196 = vrot.slane %v7195, 4
    %v7197 = vmax.f32 %v7195, %v7196
    %v7198 = vrot.slane %v7197, 2
    %v7199 = vmax.f32 %v7197, %v7198
    %v7200 = vrot.slane %v7199, 1
    %v7201 = vmax.f32 %v7199, %v7200
    %v7202 = vsel %vm266, %v6768, -inf
    %v7203 = vrot.slane %v7202, 4
    %v7204 = vmax.f32 %v7202, %v7203
    %v7205 = vrot.slane %v7204, 2
    %v7206 = vmax.f32 %v7204, %v7205
    %v7207 = vrot.slane %v7206, 1
    %v7208 = vmax.f32 %v7206, %v7207
    %v7209 = vsel %vm266, %v6773, -inf
    %v7210 = vrot.slane %v7209, 4
    %v7211 = vmax.f32 %v7209, %v7210
    %v7212 = vrot.slane %v7211, 2
    %v7213 = vmax.f32 %v7211, %v7212
    %v7214 = vrot.slane %v7213, 1
    %v7215 = vmax.f32 %v7213, %v7214
    %v7216 = vsel %vm266, %v6778, -inf
    %v7217 = vrot.slane %v7216, 4
    %v7218 = vmax.f32 %v7216, %v7217
    %v7219 = vrot.slane %v7218, 2
    %v7220 = vmax.f32 %v7218, %v7219
    %v7221 = vrot.slane %v7220, 1
    %v7222 = vmax.f32 %v7220, %v7221
    %v7223 = vsel %vm266, %v6783, -inf
    %v7224 = vrot.slane %v7223, 4
    %v7225 = vmax.f32 %v7223, %v7224
    %v7226 = vrot.slane %v7225, 2
    %v7227 = vmax.f32 %v7225, %v7226
    %v7228 = vrot.slane %v7227, 1
    %v7229 = vmax.f32 %v7227, %v7228
    %v7230 = vsel %vm266, %v6788, -inf
    %v7231 = vrot.slane %v7230, 4
    %v7232 = vmax.f32 %v7230, %v7231
    %v7233 = vrot.slane %v7232, 2
    %v7234 = vmax.f32 %v7232, %v7233
    %v7235 = vrot.slane %v7234, 1
    %v7236 = vmax.f32 %v7234, %v7235
    %v7237 = vsel %vm266, %v6793, -inf
    %v7238 = vrot.slane %v7237, 4
    %v7239 = vmax.f32 %v7237, %v7238
    %v7240 = vrot.slane %v7239, 2
    %v7241 = vmax.f32 %v7239, %v7240
    %v7242 = vrot.slane %v7241, 1
    %v7243 = vmax.f32 %v7241, %v7242
    %v7244 = vsub.f32 %v6478, %v6802
    %v7245 = vsub.f32 %v6483, %v6809
    %v7246 = vsub.f32 %v6488, %v6816
    %v7247 = vsub.f32 %v6493, %v6823
    %v7248 = vsub.f32 %v6498, %v6830
    %v7249 = vsub.f32 %v6503, %v6837
    %v7250 = vsub.f32 %v6508, %v6844
    %v7251 = vsub.f32 %v6513, %v6851
    %v7252 = vsub.f32 %v6518, %v6858
    %v7253 = vsub.f32 %v6523, %v6865
    %v7254 = vsub.f32 %v6528, %v6872
    %v7255 = vsub.f32 %v6533, %v6879
    %v7256 = vsub.f32 %v6538, %v6886
    %v7257 = vsub.f32 %v6543, %v6893
    %v7258 = vsub.f32 %v6548, %v6900
    %v7259 = vsub.f32 %v6553, %v6907
    %v7260 = vsub.f32 %v6558, %v6914
    %v7261 = vsub.f32 %v6563, %v6921
    %v7262 = vsub.f32 %v6568, %v6928
    %v7263 = vsub.f32 %v6573, %v6935
    %v7264 = vsub.f32 %v6578, %v6942
    %v7265 = vsub.f32 %v6583, %v6949
    %v7266 = vsub.f32 %v6588, %v6956
    %v7267 = vsub.f32 %v6593, %v6963
    %v7268 = vsub.f32 %v6598, %v6970
    %v7269 = vsub.f32 %v6603, %v6977
    %v7270 = vsub.f32 %v6608, %v6984
    %v7271 = vsub.f32 %v6613, %v6991
    %v7272 = vsub.f32 %v6618, %v6998
    %v7273 = vsub.f32 %v6623, %v7005
    %v7274 = vsub.f32 %v6628, %v7012
    %v7275 = vsub.f32 %v6633, %v7019
    %v7276 = vsub.f32 %v6638, %v7026
    %v7277 = vsub.f32 %v6643, %v7033
    %v7278 = vsub.f32 %v6648, %v7040
    %v7279 = vsub.f32 %v6653, %v7047
    %v7280 = vsub.f32 %v6658, %v7054
    %v7281 = vsub.f32 %v6663, %v7061
    %v7282 = vsub.f32 %v6668, %v7068
    %v7283 = vsub.f32 %v6673, %v7075
    %v7284 = vsub.f32 %v6678, %v7082
    %v7285 = vsub.f32 %v6683, %v7089
    %v7286 = vsub.f32 %v6688, %v7096
    %v7287 = vsub.f32 %v6693, %v7103
    %v7288 = vsub.f32 %v6698, %v7110
    %v7289 = vsub.f32 %v6703, %v7117
    %v7290 = vsub.f32 %v6708, %v7124
    %v7291 = vsub.f32 %v6713, %v7131
    %v7292 = vsub.f32 %v6718, %v7138
    %v7293 = vsub.f32 %v6723, %v7145
    %v7294 = vsub.f32 %v6728, %v7152
    %v7295 = vsub.f32 %v6733, %v7159
    %v7296 = vsub.f32 %v6738, %v7166
    %v7297 = vsub.f32 %v6743, %v7173
    %v7298 = vsub.f32 %v6748, %v7180
    %v7299 = vsub.f32 %v6753, %v7187
    %v7300 = vsub.f32 %v6758, %v7194
    %v7301 = vsub.f32 %v6763, %v7201
    %v7302 = vsub.f32 %v6768, %v7208
    %v7303 = vsub.f32 %v6773, %v7215
    %v7304 = vsub.f32 %v6778, %v7222
    %v7305 = vsub.f32 %v6783, %v7229
    %v7306 = vsub.f32 %v6788, %v7236
    %v7307 = vsub.f32 %v6793, %v7243
    %v7308 = vmul.f32 %v7244, 1.442695
    %v7309 = vpow.pop %v7308
    %v7310 = vmul.f32 %v7245, 1.442695
    %v7311 = vpow.pop %v7310
    %v7312 = vmul.f32 %v7246, 1.442695
    %v7313 = vpow.pop %v7312
    %v7314 = vmul.f32 %v7247, 1.442695
    %v7315 = vpow.pop %v7314
    %v7316 = vmul.f32 %v7248, 1.442695
    %v7317 = vpow.pop %v7316
    %v7318 = vmul.f32 %v7249, 1.442695
    %v7319 = vpow.pop %v7318
    %v7320 = vmul.f32 %v7250, 1.442695
    %v7321 = vpow.pop %v7320
    %v7322 = vmul.f32 %v7251, 1.442695
    %v7323 = vpow.pop %v7322
    %v7324 = vmul.f32 %v7252, 1.442695
    %v7325 = vpow.pop %v7324
    %v7326 = vmul.f32 %v7253, 1.442695
    %v7327 = vpow.pop %v7326
    %v7328 = vmul.f32 %v7254, 1.442695
    %v7329 = vpow.pop %v7328
    %v7330 = vmul.f32 %v7255, 1.442695
    %v7331 = vpow.pop %v7330
    %v7332 = vmul.f32 %v7256, 1.442695
    %v7333 = vpow.pop %v7332
    %v7334 = vmul.f32 %v7257, 1.442695
    %v7335 = vpow.pop %v7334
    %v7336 = vmul.f32 %v7258, 1.442695
    %v7337 = vpow.pop %v7336
    %v7338 = vmul.f32 %v7259, 1.442695
    %v7339 = vpow.pop %v7338
    %v7340 = vmul.f32 %v7260, 1.442695
    %v7341 = vpow.pop %v7340
    %v7342 = vmul.f32 %v7261, 1.442695
    %v7343 = vpow.pop %v7342
    %v7344 = vmul.f32 %v7262, 1.442695
    %v7345 = vpow.pop %v7344
    %v7346 = vmul.f32 %v7263, 1.442695
    %v7347 = vpow.pop %v7346
    %v7348 = vmul.f32 %v7264, 1.442695
    %v7349 = vpow.pop %v7348
    %v7350 = vmul.f32 %v7265, 1.442695
    %v7351 = vpow.pop %v7350
    %v7352 = vmul.f32 %v7266, 1.442695
    %v7353 = vpow.pop %v7352
    %v7354 = vmul.f32 %v7267, 1.442695
    %v7355 = vpow.pop %v7354
    %v7356 = vmul.f32 %v7268, 1.442695
    %v7357 = vpow.pop %v7356
    %v7358 = vmul.f32 %v7269, 1.442695
    %v7359 = vpow.pop %v7358
    %v7360 = vmul.f32 %v7270, 1.442695
    %v7361 = vpow.pop %v7360
    %v7362 = vmul.f32 %v7271, 1.442695
    %v7363 = vpow.pop %v7362
    %v7364 = vmul.f32 %v7272, 1.442695
    %v7365 = vpow.pop %v7364
    %v7366 = vmul.f32 %v7273, 1.442695
    %v7367 = vpow.pop %v7366
    %v7368 = vmul.f32 %v7274, 1.442695
    %v7369 = vpow.pop %v7368
    %v7370 = vmul.f32 %v7275, 1.442695
    %v7371 = vpow.pop %v7370
    %v7372 = vmul.f32 %v7276, 1.442695
    %v7373 = vpow.pop %v7372
    %v7374 = vmul.f32 %v7277, 1.442695
    %v7375 = vpow.pop %v7374
    %v7376 = vmul.f32 %v7278, 1.442695
    %v7377 = vpow.pop %v7376
    %v7378 = vmul.f32 %v7279, 1.442695
    %v7379 = vpow.pop %v7378
    %v7380 = vmul.f32 %v7280, 1.442695
    %v7381 = vpow.pop %v7380
    %v7382 = vmul.f32 %v7281, 1.442695
    %v7383 = vpow.pop %v7382
    %v7384 = vmul.f32 %v7282, 1.442695
    %v7385 = vpow.pop %v7384
    %v7386 = vmul.f32 %v7283, 1.442695
    %v7387 = vpow.pop %v7386
    %v7388 = vmul.f32 %v7284, 1.442695
    %v7389 = vpow.pop %v7388
    %v7390 = vmul.f32 %v7285, 1.442695
    %v7391 = vpow.pop %v7390
    %v7392 = vmul.f32 %v7286, 1.442695
    %v7393 = vpow.pop %v7392
    %v7394 = vmul.f32 %v7287, 1.442695
    %v7395 = vpow.pop %v7394
    %v7396 = vmul.f32 %v7288, 1.442695
    %v7397 = vpow.pop %v7396
    %v7398 = vmul.f32 %v7289, 1.442695
    %v7399 = vpow.pop %v7398
    %v7400 = vmul.f32 %v7290, 1.442695
    %v7401 = vpow.pop %v7400
    %v7402 = vmul.f32 %v7291, 1.442695
    %v7403 = vpow.pop %v7402
    %v7404 = vmul.f32 %v7292, 1.442695
    %v7405 = vpow.pop %v7404
    %v7406 = vmul.f32 %v7293, 1.442695
    %v7407 = vpow.pop %v7406
    %v7408 = vmul.f32 %v7294, 1.442695
    %v7409 = vpow.pop %v7408
    %v7410 = vmul.f32 %v7295, 1.442695
    %v7411 = vpow.pop %v7410
    %v7412 = vmul.f32 %v7296, 1.442695
    %v7413 = vpow.pop %v7412
    %v7414 = vmul.f32 %v7297, 1.442695
    %v7415 = vpow.pop %v7414
    %v7416 = vmul.f32 %v7298, 1.442695
    %v7417 = vpow.pop %v7416
    %v7418 = vmul.f32 %v7299, 1.442695
    %v7419 = vpow.pop %v7418
    %v7420 = vmul.f32 %v7300, 1.442695
    %v7421 = vpow.pop %v7420
    %v7422 = vmul.f32 %v7301, 1.442695
    %v7423 = vpow.pop %v7422
    %v7424 = vmul.f32 %v7302, 1.442695
    %v7425 = vpow.pop %v7424
    %v7426 = vmul.f32 %v7303, 1.442695
    %v7427 = vpow.pop %v7426
    %v7428 = vmul.f32 %v7304, 1.442695
    %v7429 = vpow.pop %v7428
    %v7430 = vmul.f32 %v7305, 1.442695
    %v7431 = vpow.pop %v7430
    %v7432 = vmul.f32 %v7306, 1.442695
    %v7433 = vpow.pop %v7432
    %v7434 = vmul.f32 %v7307, 1.442695
    %v7435 = vpow.pop %v7434
    %v7436 = vsel %vm266, %v7309, 0.0
    %v7437 = vrot.slane %v7436, 4
    %v7438 = vadd.f32 %v7436, %v7437
    %v7439 = vrot.slane %v7438, 2
    %v7440 = vadd.f32 %v7438, %v7439
    %v7441 = vrot.slane %v7440, 1
    %v7442 = vadd.f32 %v7440, %v7441
    %v7443 = vsel %vm266, %v7311, 0.0
    %v7444 = vrot.slane %v7443, 4
    %v7445 = vadd.f32 %v7443, %v7444
    %v7446 = vrot.slane %v7445, 2
    %v7447 = vadd.f32 %v7445, %v7446
    %v7448 = vrot.slane %v7447, 1
    %v7449 = vadd.f32 %v7447, %v7448
    %v7450 = vsel %vm266, %v7313, 0.0
    %v7451 = vrot.slane %v7450, 4
    %v7452 = vadd.f32 %v7450, %v7451
    %v7453 = vrot.slane %v7452, 2
    %v7454 = vadd.f32 %v7452, %v7453
    %v7455 = vrot.slane %v7454, 1
    %v7456 = vadd.f32 %v7454, %v7455
    %v7457 = vsel %vm266, %v7315, 0.0
    %v7458 = vrot.slane %v7457, 4
    %v7459 = vadd.f32 %v7457, %v7458
    %v7460 = vrot.slane %v7459, 2
    %v7461 = vadd.f32 %v7459, %v7460
    %v7462 = vrot.slane %v7461, 1
    %v7463 = vadd.f32 %v7461, %v7462
    %v7464 = vsel %vm266, %v7317, 0.0
    %v7465 = vrot.slane %v7464, 4
    %v7466 = vadd.f32 %v7464, %v7465
    %v7467 = vrot.slane %v7466, 2
    %v7468 = vadd.f32 %v7466, %v7467
    %v7469 = vrot.slane %v7468, 1
    %v7470 = vadd.f32 %v7468, %v7469
    %v7471 = vsel %vm266, %v7319, 0.0
    %v7472 = vrot.slane %v7471, 4
    %v7473 = vadd.f32 %v7471, %v7472
    %v7474 = vrot.slane %v7473, 2
    %v7475 = vadd.f32 %v7473, %v7474
    %v7476 = vrot.slane %v7475, 1
    %v7477 = vadd.f32 %v7475, %v7476
    %v7478 = vsel %vm266, %v7321, 0.0
    %v7479 = vrot.slane %v7478, 4
    %v7480 = vadd.f32 %v7478, %v7479
    %v7481 = vrot.slane %v7480, 2
    %v7482 = vadd.f32 %v7480, %v7481
    %v7483 = vrot.slane %v7482, 1
    %v7484 = vadd.f32 %v7482, %v7483
    %v7485 = vsel %vm266, %v7323, 0.0
    %v7486 = vrot.slane %v7485, 4
    %v7487 = vadd.f32 %v7485, %v7486
    %v7488 = vrot.slane %v7487, 2
    %v7489 = vadd.f32 %v7487, %v7488
    %v7490 = vrot.slane %v7489, 1
    %v7491 = vadd.f32 %v7489, %v7490
    %v7492 = vsel %vm266, %v7325, 0.0
    %v7493 = vrot.slane %v7492, 4
    %v7494 = vadd.f32 %v7492, %v7493
    %v7495 = vrot.slane %v7494, 2
    %v7496 = vadd.f32 %v7494, %v7495
    %v7497 = vrot.slane %v7496, 1
    %v7498 = vadd.f32 %v7496, %v7497
    %v7499 = vsel %vm266, %v7327, 0.0
    %v7500 = vrot.slane %v7499, 4
    %v7501 = vadd.f32 %v7499, %v7500
    %v7502 = vrot.slane %v7501, 2
    %v7503 = vadd.f32 %v7501, %v7502
    %v7504 = vrot.slane %v7503, 1
    %v7505 = vadd.f32 %v7503, %v7504
    %v7506 = vsel %vm266, %v7329, 0.0
    %v7507 = vrot.slane %v7506, 4
    %v7508 = vadd.f32 %v7506, %v7507
    %v7509 = vrot.slane %v7508, 2
    %v7510 = vadd.f32 %v7508, %v7509
    %v7511 = vrot.slane %v7510, 1
    %v7512 = vadd.f32 %v7510, %v7511
    %v7513 = vsel %vm266, %v7331, 0.0
    %v7514 = vrot.slane %v7513, 4
    %v7515 = vadd.f32 %v7513, %v7514
    %v7516 = vrot.slane %v7515, 2
    %v7517 = vadd.f32 %v7515, %v7516
    %v7518 = vrot.slane %v7517, 1
    %v7519 = vadd.f32 %v7517, %v7518
    %v7520 = vsel %vm266, %v7333, 0.0
    %v7521 = vrot.slane %v7520, 4
    %v7522 = vadd.f32 %v7520, %v7521
    %v7523 = vrot.slane %v7522, 2
    %v7524 = vadd.f32 %v7522, %v7523
    %v7525 = vrot.slane %v7524, 1
    %v7526 = vadd.f32 %v7524, %v7525
    %v7527 = vsel %vm266, %v7335, 0.0
    %v7528 = vrot.slane %v7527, 4
    %v7529 = vadd.f32 %v7527, %v7528
    %v7530 = vrot.slane %v7529, 2
    %v7531 = vadd.f32 %v7529, %v7530
    %v7532 = vrot.slane %v7531, 1
    %v7533 = vadd.f32 %v7531, %v7532
    %v7534 = vsel %vm266, %v7337, 0.0
    %v7535 = vrot.slane %v7534, 4
    %v7536 = vadd.f32 %v7534, %v7535
    %v7537 = vrot.slane %v7536, 2
    %v7538 = vadd.f32 %v7536, %v7537
    %v7539 = vrot.slane %v7538, 1
    %v7540 = vadd.f32 %v7538, %v7539
    %v7541 = vsel %vm266, %v7339, 0.0
    %v7542 = vrot.slane %v7541, 4
    %v7543 = vadd.f32 %v7541, %v7542
    %v7544 = vrot.slane %v7543, 2
    %v7545 = vadd.f32 %v7543, %v7544
    %v7546 = vrot.slane %v7545, 1
    %v7547 = vadd.f32 %v7545, %v7546
    %v7548 = vsel %vm266, %v7341, 0.0
    %v7549 = vrot.slane %v7548, 4
    %v7550 = vadd.f32 %v7548, %v7549
    %v7551 = vrot.slane %v7550, 2
    %v7552 = vadd.f32 %v7550, %v7551
    %v7553 = vrot.slane %v7552, 1
    %v7554 = vadd.f32 %v7552, %v7553
    %v7555 = vsel %vm266, %v7343, 0.0
    %v7556 = vrot.slane %v7555, 4
    %v7557 = vadd.f32 %v7555, %v7556
    %v7558 = vrot.slane %v7557, 2
    %v7559 = vadd.f32 %v7557, %v7558
    %v7560 = vrot.slane %v7559, 1
    %v7561 = vadd.f32 %v7559, %v7560
    %v7562 = vsel %vm266, %v7345, 0.0
    %v7563 = vrot.slane %v7562, 4
    %v7564 = vadd.f32 %v7562, %v7563
    %v7565 = vrot.slane %v7564, 2
    %v7566 = vadd.f32 %v7564, %v7565
    %v7567 = vrot.slane %v7566, 1
    %v7568 = vadd.f32 %v7566, %v7567
    %v7569 = vsel %vm266, %v7347, 0.0
    %v7570 = vrot.slane %v7569, 4
    %v7571 = vadd.f32 %v7569, %v7570
    %v7572 = vrot.slane %v7571, 2
    %v7573 = vadd.f32 %v7571, %v7572
    %v7574 = vrot.slane %v7573, 1
    %v7575 = vadd.f32 %v7573, %v7574
    %v7576 = vsel %vm266, %v7349, 0.0
    %v7577 = vrot.slane %v7576, 4
    %v7578 = vadd.f32 %v7576, %v7577
    %v7579 = vrot.slane %v7578, 2
    %v7580 = vadd.f32 %v7578, %v7579
    %v7581 = vrot.slane %v7580, 1
    %v7582 = vadd.f32 %v7580, %v7581
    %v7583 = vsel %vm266, %v7351, 0.0
    %v7584 = vrot.slane %v7583, 4
    %v7585 = vadd.f32 %v7583, %v7584
    %v7586 = vrot.slane %v7585, 2
    %v7587 = vadd.f32 %v7585, %v7586
    %v7588 = vrot.slane %v7587, 1
    %v7589 = vadd.f32 %v7587, %v7588
    %v7590 = vsel %vm266, %v7353, 0.0
    %v7591 = vrot.slane %v7590, 4
    %v7592 = vadd.f32 %v7590, %v7591
    %v7593 = vrot.slane %v7592, 2
    %v7594 = vadd.f32 %v7592, %v7593
    %v7595 = vrot.slane %v7594, 1
    %v7596 = vadd.f32 %v7594, %v7595
    %v7597 = vsel %vm266, %v7355, 0.0
    %v7598 = vrot.slane %v7597, 4
    %v7599 = vadd.f32 %v7597, %v7598
    %v7600 = vrot.slane %v7599, 2
    %v7601 = vadd.f32 %v7599, %v7600
    %v7602 = vrot.slane %v7601, 1
    %v7603 = vadd.f32 %v7601, %v7602
    %v7604 = vsel %vm266, %v7357, 0.0
    %v7605 = vrot.slane %v7604, 4
    %v7606 = vadd.f32 %v7604, %v7605
    %v7607 = vrot.slane %v7606, 2
    %v7608 = vadd.f32 %v7606, %v7607
    %v7609 = vrot.slane %v7608, 1
    %v7610 = vadd.f32 %v7608, %v7609
    %v7611 = vsel %vm266, %v7359, 0.0
    %v7612 = vrot.slane %v7611, 4
    %v7613 = vadd.f32 %v7611, %v7612
    %v7614 = vrot.slane %v7613, 2
    %v7615 = vadd.f32 %v7613, %v7614
    %v7616 = vrot.slane %v7615, 1
    %v7617 = vadd.f32 %v7615, %v7616
    %v7618 = vsel %vm266, %v7361, 0.0
    %v7619 = vrot.slane %v7618, 4
    %v7620 = vadd.f32 %v7618, %v7619
    %v7621 = vrot.slane %v7620, 2
    %v7622 = vadd.f32 %v7620, %v7621
    %v7623 = vrot.slane %v7622, 1
    %v7624 = vadd.f32 %v7622, %v7623
    %v7625 = vsel %vm266, %v7363, 0.0
    %v7626 = vrot.slane %v7625, 4
    %v7627 = vadd.f32 %v7625, %v7626
    %v7628 = vrot.slane %v7627, 2
    %v7629 = vadd.f32 %v7627, %v7628
    %v7630 = vrot.slane %v7629, 1
    %v7631 = vadd.f32 %v7629, %v7630
    %v7632 = vsel %vm266, %v7365, 0.0
    %v7633 = vrot.slane %v7632, 4
    %v7634 = vadd.f32 %v7632, %v7633
    %v7635 = vrot.slane %v7634, 2
    %v7636 = vadd.f32 %v7634, %v7635
    %v7637 = vrot.slane %v7636, 1
    %v7638 = vadd.f32 %v7636, %v7637
    %v7639 = vsel %vm266, %v7367, 0.0
    %v7640 = vrot.slane %v7639, 4
    %v7641 = vadd.f32 %v7639, %v7640
    %v7642 = vrot.slane %v7641, 2
    %v7643 = vadd.f32 %v7641, %v7642
    %v7644 = vrot.slane %v7643, 1
    %v7645 = vadd.f32 %v7643, %v7644
    %v7646 = vsel %vm266, %v7369, 0.0
    %v7647 = vrot.slane %v7646, 4
    %v7648 = vadd.f32 %v7646, %v7647
    %v7649 = vrot.slane %v7648, 2
    %v7650 = vadd.f32 %v7648, %v7649
    %v7651 = vrot.slane %v7650, 1
    %v7652 = vadd.f32 %v7650, %v7651
    %v7653 = vsel %vm266, %v7371, 0.0
    %v7654 = vrot.slane %v7653, 4
    %v7655 = vadd.f32 %v7653, %v7654
    %v7656 = vrot.slane %v7655, 2
    %v7657 = vadd.f32 %v7655, %v7656
    %v7658 = vrot.slane %v7657, 1
    %v7659 = vadd.f32 %v7657, %v7658
    %v7660 = vsel %vm266, %v7373, 0.0
    %v7661 = vrot.slane %v7660, 4
    %v7662 = vadd.f32 %v7660, %v7661
    %v7663 = vrot.slane %v7662, 2
    %v7664 = vadd.f32 %v7662, %v7663
    %v7665 = vrot.slane %v7664, 1
    %v7666 = vadd.f32 %v7664, %v7665
    %v7667 = vsel %vm266, %v7375, 0.0
    %v7668 = vrot.slane %v7667, 4
    %v7669 = vadd.f32 %v7667, %v7668
    %v7670 = vrot.slane %v7669, 2
    %v7671 = vadd.f32 %v7669, %v7670
    %v7672 = vrot.slane %v7671, 1
    %v7673 = vadd.f32 %v7671, %v7672
    %v7674 = vsel %vm266, %v7377, 0.0
    %v7675 = vrot.slane %v7674, 4
    %v7676 = vadd.f32 %v7674, %v7675
    %v7677 = vrot.slane %v7676, 2
    %v7678 = vadd.f32 %v7676, %v7677
    %v7679 = vrot.slane %v7678, 1
    %v7680 = vadd.f32 %v7678, %v7679
    %v7681 = vsel %vm266, %v7379, 0.0
    %v7682 = vrot.slane %v7681, 4
    %v7683 = vadd.f32 %v7681, %v7682
    %v7684 = vrot.slane %v7683, 2
    %v7685 = vadd.f32 %v7683, %v7684
    %v7686 = vrot.slane %v7685, 1
    %v7687 = vadd.f32 %v7685, %v7686
    %v7688 = vsel %vm266, %v7381, 0.0
    %v7689 = vrot.slane %v7688, 4
    %v7690 = vadd.f32 %v7688, %v7689
    %v7691 = vrot.slane %v7690, 2
    %v7692 = vadd.f32 %v7690, %v7691
    %v7693 = vrot.slane %v7692, 1
    %v7694 = vadd.f32 %v7692, %v7693
    %v7695 = vsel %vm266, %v7383, 0.0
    %v7696 = vrot.slane %v7695, 4
    %v7697 = vadd.f32 %v7695, %v7696
    %v7698 = vrot.slane %v7697, 2
    %v7699 = vadd.f32 %v7697, %v7698
    %v7700 = vrot.slane %v7699, 1
    %v7701 = vadd.f32 %v7699, %v7700
    %v7702 = vsel %vm266, %v7385, 0.0
    %v7703 = vrot.slane %v7702, 4
    %v7704 = vadd.f32 %v7702, %v7703
    %v7705 = vrot.slane %v7704, 2
    %v7706 = vadd.f32 %v7704, %v7705
    %v7707 = vrot.slane %v7706, 1
    %v7708 = vadd.f32 %v7706, %v7707
    %v7709 = vsel %vm266, %v7387, 0.0
    %v7710 = vrot.slane %v7709, 4
    %v7711 = vadd.f32 %v7709, %v7710
    %v7712 = vrot.slane %v7711, 2
    %v7713 = vadd.f32 %v7711, %v7712
    %v7714 = vrot.slane %v7713, 1
    %v7715 = vadd.f32 %v7713, %v7714
    %v7716 = vsel %vm266, %v7389, 0.0
    %v7717 = vrot.slane %v7716, 4
    %v7718 = vadd.f32 %v7716, %v7717
    %v7719 = vrot.slane %v7718, 2
    %v7720 = vadd.f32 %v7718, %v7719
    %v7721 = vrot.slane %v7720, 1
    %v7722 = vadd.f32 %v7720, %v7721
    %v7723 = vsel %vm266, %v7391, 0.0
    %v7724 = vrot.slane %v7723, 4
    %v7725 = vadd.f32 %v7723, %v7724
    %v7726 = vrot.slane %v7725, 2
    %v7727 = vadd.f32 %v7725, %v7726
    %v7728 = vrot.slane %v7727, 1
    %v7729 = vadd.f32 %v7727, %v7728
    %v7730 = vsel %vm266, %v7393, 0.0
    %v7731 = vrot.slane %v7730, 4
    %v7732 = vadd.f32 %v7730, %v7731
    %v7733 = vrot.slane %v7732, 2
    %v7734 = vadd.f32 %v7732, %v7733
    %v7735 = vrot.slane %v7734, 1
    %v7736 = vadd.f32 %v7734, %v7735
    %v7737 = vsel %vm266, %v7395, 0.0
    %v7738 = vrot.slane %v7737, 4
    %v7739 = vadd.f32 %v7737, %v7738
    %v7740 = vrot.slane %v7739, 2
    %v7741 = vadd.f32 %v7739, %v7740
    %v7742 = vrot.slane %v7741, 1
    %v7743 = vadd.f32 %v7741, %v7742
    %v7744 = vsel %vm266, %v7397, 0.0
    %v7745 = vrot.slane %v7744, 4
    %v7746 = vadd.f32 %v7744, %v7745
    %v7747 = vrot.slane %v7746, 2
    %v7748 = vadd.f32 %v7746, %v7747
    %v7749 = vrot.slane %v7748, 1
    %v7750 = vadd.f32 %v7748, %v7749
    %v7751 = vsel %vm266, %v7399, 0.0
    %v7752 = vrot.slane %v7751, 4
    %v7753 = vadd.f32 %v7751, %v7752
    %v7754 = vrot.slane %v7753, 2
    %v7755 = vadd.f32 %v7753, %v7754
    %v7756 = vrot.slane %v7755, 1
    %v7757 = vadd.f32 %v7755, %v7756
    %v7758 = vsel %vm266, %v7401, 0.0
    %v7759 = vrot.slane %v7758, 4
    %v7760 = vadd.f32 %v7758, %v7759
    %v7761 = vrot.slane %v7760, 2
    %v7762 = vadd.f32 %v7760, %v7761
    %v7763 = vrot.slane %v7762, 1
    %v7764 = vadd.f32 %v7762, %v7763
    %v7765 = vsel %vm266, %v7403, 0.0
    %v7766 = vrot.slane %v7765, 4
    %v7767 = vadd.f32 %v7765, %v7766
    %v7768 = vrot.slane %v7767, 2
    %v7769 = vadd.f32 %v7767, %v7768
    %v7770 = vrot.slane %v7769, 1
    %v7771 = vadd.f32 %v7769, %v7770
    %v7772 = vsel %vm266, %v7405, 0.0
    %v7773 = vrot.slane %v7772, 4
    %v7774 = vadd.f32 %v7772, %v7773
    %v7775 = vrot.slane %v7774, 2
    %v7776 = vadd.f32 %v7774, %v7775
    %v7777 = vrot.slane %v7776, 1
    %v7778 = vadd.f32 %v7776, %v7777
    %v7779 = vsel %vm266, %v7407, 0.0
    %v7780 = vrot.slane %v7779, 4
    %v7781 = vadd.f32 %v7779, %v7780
    %v7782 = vrot.slane %v7781, 2
    %v7783 = vadd.f32 %v7781, %v7782
    %v7784 = vrot.slane %v7783, 1
    %v7785 = vadd.f32 %v7783, %v7784
    %v7786 = vsel %vm266, %v7409, 0.0
    %v7787 = vrot.slane %v7786, 4
    %v7788 = vadd.f32 %v7786, %v7787
    %v7789 = vrot.slane %v7788, 2
    %v7790 = vadd.f32 %v7788, %v7789
    %v7791 = vrot.slane %v7790, 1
    %v7792 = vadd.f32 %v7790, %v7791
    %v7793 = vsel %vm266, %v7411, 0.0
    %v7794 = vrot.slane %v7793, 4
    %v7795 = vadd.f32 %v7793, %v7794
    %v7796 = vrot.slane %v7795, 2
    %v7797 = vadd.f32 %v7795, %v7796
    %v7798 = vrot.slane %v7797, 1
    %v7799 = vadd.f32 %v7797, %v7798
    %v7800 = vsel %vm266, %v7413, 0.0
    %v7801 = vrot.slane %v7800, 4
    %v7802 = vadd.f32 %v7800, %v7801
    %v7803 = vrot.slane %v7802, 2
    %v7804 = vadd.f32 %v7802, %v7803
    %v7805 = vrot.slane %v7804, 1
    %v7806 = vadd.f32 %v7804, %v7805
    %v7807 = vsel %vm266, %v7415, 0.0
    %v7808 = vrot.slane %v7807, 4
    %v7809 = vadd.f32 %v7807, %v7808
    %v7810 = vrot.slane %v7809, 2
    %v7811 = vadd.f32 %v7809, %v7810
    %v7812 = vrot.slane %v7811, 1
    %v7813 = vadd.f32 %v7811, %v7812
    %v7814 = vsel %vm266, %v7417, 0.0
    %v7815 = vrot.slane %v7814, 4
    %v7816 = vadd.f32 %v7814, %v7815
    %v7817 = vrot.slane %v7816, 2
    %v7818 = vadd.f32 %v7816, %v7817
    %v7819 = vrot.slane %v7818, 1
    %v7820 = vadd.f32 %v7818, %v7819
    %v7821 = vsel %vm266, %v7419, 0.0
    %v7822 = vrot.slane %v7821, 4
    %v7823 = vadd.f32 %v7821, %v7822
    %v7824 = vrot.slane %v7823, 2
    %v7825 = vadd.f32 %v7823, %v7824
    %v7826 = vrot.slane %v7825, 1
    %v7827 = vadd.f32 %v7825, %v7826
    %v7828 = vsel %vm266, %v7421, 0.0
    %v7829 = vrot.slane %v7828, 4
    %v7830 = vadd.f32 %v7828, %v7829
    %v7831 = vrot.slane %v7830, 2
    %v7832 = vadd.f32 %v7830, %v7831
    %v7833 = vrot.slane %v7832, 1
    %v7834 = vadd.f32 %v7832, %v7833
    %v7835 = vsel %vm266, %v7423, 0.0
    %v7836 = vrot.slane %v7835, 4
    %v7837 = vadd.f32 %v7835, %v7836
    %v7838 = vrot.slane %v7837, 2
    %v7839 = vadd.f32 %v7837, %v7838
    %v7840 = vrot.slane %v7839, 1
    %v7841 = vadd.f32 %v7839, %v7840
    %v7842 = vsel %vm266, %v7425, 0.0
    %v7843 = vrot.slane %v7842, 4
    %v7844 = vadd.f32 %v7842, %v7843
    %v7845 = vrot.slane %v7844, 2
    %v7846 = vadd.f32 %v7844, %v7845
    %v7847 = vrot.slane %v7846, 1
    %v7848 = vadd.f32 %v7846, %v7847
    %v7849 = vsel %vm266, %v7427, 0.0
    %v7850 = vrot.slane %v7849, 4
    %v7851 = vadd.f32 %v7849, %v7850
    %v7852 = vrot.slane %v7851, 2
    %v7853 = vadd.f32 %v7851, %v7852
    %v7854 = vrot.slane %v7853, 1
    %v7855 = vadd.f32 %v7853, %v7854
    %v7856 = vsel %vm266, %v7429, 0.0
    %v7857 = vrot.slane %v7856, 4
    %v7858 = vadd.f32 %v7856, %v7857
    %v7859 = vrot.slane %v7858, 2
    %v7860 = vadd.f32 %v7858, %v7859
    %v7861 = vrot.slane %v7860, 1
    %v7862 = vadd.f32 %v7860, %v7861
    %v7863 = vsel %vm266, %v7431, 0.0
    %v7864 = vrot.slane %v7863, 4
    %v7865 = vadd.f32 %v7863, %v7864
    %v7866 = vrot.slane %v7865, 2
    %v7867 = vadd.f32 %v7865, %v7866
    %v7868 = vrot.slane %v7867, 1
    %v7869 = vadd.f32 %v7867, %v7868
    %v7870 = vsel %vm266, %v7433, 0.0
    %v7871 = vrot.slane %v7870, 4
    %v7872 = vadd.f32 %v7870, %v7871
    %v7873 = vrot.slane %v7872, 2
    %v7874 = vadd.f32 %v7872, %v7873
    %v7875 = vrot.slane %v7874, 1
    %v7876 = vadd.f32 %v7874, %v7875
    %v7877 = vsel %vm266, %v7435, 0.0
    %v7878 = vrot.slane %v7877, 4
    %v7879 = vadd.f32 %v7877, %v7878
    %v7880 = vrot.slane %v7879, 2
    %v7881 = vadd.f32 %v7879, %v7880
    %v7882 = vrot.slane %v7881, 1
    %v7883 = vadd.f32 %v7881, %v7882
    %v7884 = vmul.f32 %v7309, %v5389
    %v7885 = vmul.f32 %v7311, %v5389
    %v7886 = vmul.f32 %v7313, %v5389
    %v7887 = vmul.f32 %v7315, %v5389
    %v7888 = vmul.f32 %v7317, %v5389
    %v7889 = vmul.f32 %v7319, %v5389
    %v7890 = vmul.f32 %v7321, %v5389
    %v7891 = vmul.f32 %v7323, %v5389
    %v7892 = vmul.f32 %v7325, %v5394
    %v7893 = vmul.f32 %v7327, %v5394
    %v7894 = vmul.f32 %v7329, %v5394
    %v7895 = vmul.f32 %v7331, %v5394
    %v7896 = vmul.f32 %v7333, %v5394
    %v7897 = vmul.f32 %v7335, %v5394
    %v7898 = vmul.f32 %v7337, %v5394
    %v7899 = vmul.f32 %v7339, %v5394
    %v7900 = vmul.f32 %v7341, %v5399
    %v7901 = vmul.f32 %v7343, %v5399
    %v7902 = vmul.f32 %v7345, %v5399
    %v7903 = vmul.f32 %v7347, %v5399
    %v7904 = vmul.f32 %v7349, %v5399
    %v7905 = vmul.f32 %v7351, %v5399
    %v7906 = vmul.f32 %v7353, %v5399
    %v7907 = vmul.f32 %v7355, %v5399
    %v7908 = vmul.f32 %v7357, %v5404
    %v7909 = vmul.f32 %v7359, %v5404
    %v7910 = vmul.f32 %v7361, %v5404
    %v7911 = vmul.f32 %v7363, %v5404
    %v7912 = vmul.f32 %v7365, %v5404
    %v7913 = vmul.f32 %v7367, %v5404
    %v7914 = vmul.f32 %v7369, %v5404
    %v7915 = vmul.f32 %v7371, %v5404
    %v7916 = vmul.f32 %v7373, %v5409
    %v7917 = vmul.f32 %v7375, %v5409
    %v7918 = vmul.f32 %v7377, %v5409
    %v7919 = vmul.f32 %v7379, %v5409
    %v7920 = vmul.f32 %v7381, %v5409
    %v7921 = vmul.f32 %v7383, %v5409
    %v7922 = vmul.f32 %v7385, %v5409
    %v7923 = vmul.f32 %v7387, %v5409
    %v7924 = vmul.f32 %v7389, %v5414
    %v7925 = vmul.f32 %v7391, %v5414
    %v7926 = vmul.f32 %v7393, %v5414
    %v7927 = vmul.f32 %v7395, %v5414
    %v7928 = vmul.f32 %v7397, %v5414
    %v7929 = vmul.f32 %v7399, %v5414
    %v7930 = vmul.f32 %v7401, %v5414
    %v7931 = vmul.f32 %v7403, %v5414
    %v7932 = vmul.f32 %v7405, %v5419
    %v7933 = vmul.f32 %v7407, %v5419
    %v7934 = vmul.f32 %v7409, %v5419
    %v7935 = vmul.f32 %v7411, %v5419
    %v7936 = vmul.f32 %v7413, %v5419
    %v7937 = vmul.f32 %v7415, %v5419
    %v7938 = vmul.f32 %v7417, %v5419
    %v7939 = vmul.f32 %v7419, %v5419
    %v7940 = vmul.f32 %v7421, %v5424
    %v7941 = vmul.f32 %v7423, %v5424
    %v7942 = vmul.f32 %v7425, %v5424
    %v7943 = vmul.f32 %v7427, %v5424
    %v7944 = vmul.f32 %v7429, %v5424
    %v7945 = vmul.f32 %v7431, %v5424
    %v7946 = vmul.f32 %v7433, %v5424
    %v7947 = vmul.f32 %v7435, %v5424
    %v7948 = vsel %vm266, %v7884, 0.0
    %v7949 = vrot.slane %v7948, 4
    %v7950 = vadd.f32 %v7948, %v7949
    %v7951 = vrot.slane %v7950, 2
    %v7952 = vadd.f32 %v7950, %v7951
    %v7953 = vrot.slane %v7952, 1
    %v7954 = vadd.f32 %v7952, %v7953
    %v7955 = vsel %vm266, %v7885, 0.0
    %v7956 = vrot.slane %v7955, 4
    %v7957 = vadd.f32 %v7955, %v7956
    %v7958 = vrot.slane %v7957, 2
    %v7959 = vadd.f32 %v7957, %v7958
    %v7960 = vrot.slane %v7959, 1
    %v7961 = vadd.f32 %v7959, %v7960
    %v7962 = vsel %vm266, %v7886, 0.0
    %v7963 = vrot.slane %v7962, 4
    %v7964 = vadd.f32 %v7962, %v7963
    %v7965 = vrot.slane %v7964, 2
    %v7966 = vadd.f32 %v7964, %v7965
    %v7967 = vrot.slane %v7966, 1
    %v7968 = vadd.f32 %v7966, %v7967
    %v7969 = vsel %vm266, %v7887, 0.0
    %v7970 = vrot.slane %v7969, 4
    %v7971 = vadd.f32 %v7969, %v7970
    %v7972 = vrot.slane %v7971, 2
    %v7973 = vadd.f32 %v7971, %v7972
    %v7974 = vrot.slane %v7973, 1
    %v7975 = vadd.f32 %v7973, %v7974
    %v7976 = vsel %vm266, %v7888, 0.0
    %v7977 = vrot.slane %v7976, 4
    %v7978 = vadd.f32 %v7976, %v7977
    %v7979 = vrot.slane %v7978, 2
    %v7980 = vadd.f32 %v7978, %v7979
    %v7981 = vrot.slane %v7980, 1
    %v7982 = vadd.f32 %v7980, %v7981
    %v7983 = vsel %vm266, %v7889, 0.0
    %v7984 = vrot.slane %v7983, 4
    %v7985 = vadd.f32 %v7983, %v7984
    %v7986 = vrot.slane %v7985, 2
    %v7987 = vadd.f32 %v7985, %v7986
    %v7988 = vrot.slane %v7987, 1
    %v7989 = vadd.f32 %v7987, %v7988
    %v7990 = vsel %vm266, %v7890, 0.0
    %v7991 = vrot.slane %v7990, 4
    %v7992 = vadd.f32 %v7990, %v7991
    %v7993 = vrot.slane %v7992, 2
    %v7994 = vadd.f32 %v7992, %v7993
    %v7995 = vrot.slane %v7994, 1
    %v7996 = vadd.f32 %v7994, %v7995
    %v7997 = vsel %vm266, %v7891, 0.0
    %v7998 = vrot.slane %v7997, 4
    %v7999 = vadd.f32 %v7997, %v7998
    %v8000 = vrot.slane %v7999, 2
    %v8001 = vadd.f32 %v7999, %v8000
    %v8002 = vrot.slane %v8001, 1
    %v8003 = vadd.f32 %v8001, %v8002
    %v8004 = vsel %vm266, %v7892, 0.0
    %v8005 = vrot.slane %v8004, 4
    %v8006 = vadd.f32 %v8004, %v8005
    %v8007 = vrot.slane %v8006, 2
    %v8008 = vadd.f32 %v8006, %v8007
    %v8009 = vrot.slane %v8008, 1
    %v8010 = vadd.f32 %v8008, %v8009
    %v8011 = vsel %vm266, %v7893, 0.0
    %v8012 = vrot.slane %v8011, 4
    %v8013 = vadd.f32 %v8011, %v8012
    %v8014 = vrot.slane %v8013, 2
    %v8015 = vadd.f32 %v8013, %v8014
    %v8016 = vrot.slane %v8015, 1
    %v8017 = vadd.f32 %v8015, %v8016
    %v8018 = vsel %vm266, %v7894, 0.0
    %v8019 = vrot.slane %v8018, 4
    %v8020 = vadd.f32 %v8018, %v8019
    %v8021 = vrot.slane %v8020, 2
    %v8022 = vadd.f32 %v8020, %v8021
    %v8023 = vrot.slane %v8022, 1
    %v8024 = vadd.f32 %v8022, %v8023
    %v8025 = vsel %vm266, %v7895, 0.0
    %v8026 = vrot.slane %v8025, 4
    %v8027 = vadd.f32 %v8025, %v8026
    %v8028 = vrot.slane %v8027, 2
    %v8029 = vadd.f32 %v8027, %v8028
    %v8030 = vrot.slane %v8029, 1
    %v8031 = vadd.f32 %v8029, %v8030
    %v8032 = vsel %vm266, %v7896, 0.0
    %v8033 = vrot.slane %v8032, 4
    %v8034 = vadd.f32 %v8032, %v8033
    %v8035 = vrot.slane %v8034, 2
    %v8036 = vadd.f32 %v8034, %v8035
    %v8037 = vrot.slane %v8036, 1
    %v8038 = vadd.f32 %v8036, %v8037
    %v8039 = vsel %vm266, %v7897, 0.0
    %v8040 = vrot.slane %v8039, 4
    %v8041 = vadd.f32 %v8039, %v8040
    %v8042 = vrot.slane %v8041, 2
    %v8043 = vadd.f32 %v8041, %v8042
    %v8044 = vrot.slane %v8043, 1
    %v8045 = vadd.f32 %v8043, %v8044
    %v8046 = vsel %vm266, %v7898, 0.0
    %v8047 = vrot.slane %v8046, 4
    %v8048 = vadd.f32 %v8046, %v8047
    %v8049 = vrot.slane %v8048, 2
    %v8050 = vadd.f32 %v8048, %v8049
    %v8051 = vrot.slane %v8050, 1
    %v8052 = vadd.f32 %v8050, %v8051
    %v8053 = vsel %vm266, %v7899, 0.0
    %v8054 = vrot.slane %v8053, 4
    %v8055 = vadd.f32 %v8053, %v8054
    %v8056 = vrot.slane %v8055, 2
    %v8057 = vadd.f32 %v8055, %v8056
    %v8058 = vrot.slane %v8057, 1
    %v8059 = vadd.f32 %v8057, %v8058
    %v8060 = vsel %vm266, %v7900, 0.0
    %v8061 = vrot.slane %v8060, 4
    %v8062 = vadd.f32 %v8060, %v8061
    %v8063 = vrot.slane %v8062, 2
    %v8064 = vadd.f32 %v8062, %v8063
    %v8065 = vrot.slane %v8064, 1
    %v8066 = vadd.f32 %v8064, %v8065
    %v8067 = vsel %vm266, %v7901, 0.0
    %v8068 = vrot.slane %v8067, 4
    %v8069 = vadd.f32 %v8067, %v8068
    %v8070 = vrot.slane %v8069, 2
    %v8071 = vadd.f32 %v8069, %v8070
    %v8072 = vrot.slane %v8071, 1
    %v8073 = vadd.f32 %v8071, %v8072
    %v8074 = vsel %vm266, %v7902, 0.0
    %v8075 = vrot.slane %v8074, 4
    %v8076 = vadd.f32 %v8074, %v8075
    %v8077 = vrot.slane %v8076, 2
    %v8078 = vadd.f32 %v8076, %v8077
    %v8079 = vrot.slane %v8078, 1
    %v8080 = vadd.f32 %v8078, %v8079
    %v8081 = vsel %vm266, %v7903, 0.0
    %v8082 = vrot.slane %v8081, 4
    %v8083 = vadd.f32 %v8081, %v8082
    %v8084 = vrot.slane %v8083, 2
    %v8085 = vadd.f32 %v8083, %v8084
    %v8086 = vrot.slane %v8085, 1
    %v8087 = vadd.f32 %v8085, %v8086
    %v8088 = vsel %vm266, %v7904, 0.0
    %v8089 = vrot.slane %v8088, 4
    %v8090 = vadd.f32 %v8088, %v8089
    %v8091 = vrot.slane %v8090, 2
    %v8092 = vadd.f32 %v8090, %v8091
    %v8093 = vrot.slane %v8092, 1
    %v8094 = vadd.f32 %v8092, %v8093
    %v8095 = vsel %vm266, %v7905, 0.0
    %v8096 = vrot.slane %v8095, 4
    %v8097 = vadd.f32 %v8095, %v8096
    %v8098 = vrot.slane %v8097, 2
    %v8099 = vadd.f32 %v8097, %v8098
    %v8100 = vrot.slane %v8099, 1
    %v8101 = vadd.f32 %v8099, %v8100
    %v8102 = vsel %vm266, %v7906, 0.0
    %v8103 = vrot.slane %v8102, 4
    %v8104 = vadd.f32 %v8102, %v8103
    %v8105 = vrot.slane %v8104, 2
    %v8106 = vadd.f32 %v8104, %v8105
    %v8107 = vrot.slane %v8106, 1
    %v8108 = vadd.f32 %v8106, %v8107
    %v8109 = vsel %vm266, %v7907, 0.0
    %v8110 = vrot.slane %v8109, 4
    %v8111 = vadd.f32 %v8109, %v8110
    %v8112 = vrot.slane %v8111, 2
    %v8113 = vadd.f32 %v8111, %v8112
    %v8114 = vrot.slane %v8113, 1
    %v8115 = vadd.f32 %v8113, %v8114
    %v8116 = vsel %vm266, %v7908, 0.0
    %v8117 = vrot.slane %v8116, 4
    %v8118 = vadd.f32 %v8116, %v8117
    %v8119 = vrot.slane %v8118, 2
    %v8120 = vadd.f32 %v8118, %v8119
    %v8121 = vrot.slane %v8120, 1
    %v8122 = vadd.f32 %v8120, %v8121
    %v8123 = vsel %vm266, %v7909, 0.0
    %v8124 = vrot.slane %v8123, 4
    %v8125 = vadd.f32 %v8123, %v8124
    %v8126 = vrot.slane %v8125, 2
    %v8127 = vadd.f32 %v8125, %v8126
    %v8128 = vrot.slane %v8127, 1
    %v8129 = vadd.f32 %v8127, %v8128
    %v8130 = vsel %vm266, %v7910, 0.0
    %v8131 = vrot.slane %v8130, 4
    %v8132 = vadd.f32 %v8130, %v8131
    %v8133 = vrot.slane %v8132, 2
    %v8134 = vadd.f32 %v8132, %v8133
    %v8135 = vrot.slane %v8134, 1
    %v8136 = vadd.f32 %v8134, %v8135
    %v8137 = vsel %vm266, %v7911, 0.0
    %v8138 = vrot.slane %v8137, 4
    %v8139 = vadd.f32 %v8137, %v8138
    %v8140 = vrot.slane %v8139, 2
    %v8141 = vadd.f32 %v8139, %v8140
    %v8142 = vrot.slane %v8141, 1
    %v8143 = vadd.f32 %v8141, %v8142
    %v8144 = vsel %vm266, %v7912, 0.0
    %v8145 = vrot.slane %v8144, 4
    %v8146 = vadd.f32 %v8144, %v8145
    %v8147 = vrot.slane %v8146, 2
    %v8148 = vadd.f32 %v8146, %v8147
    %v8149 = vrot.slane %v8148, 1
    %v8150 = vadd.f32 %v8148, %v8149
    %v8151 = vsel %vm266, %v7913, 0.0
    %v8152 = vrot.slane %v8151, 4
    %v8153 = vadd.f32 %v8151, %v8152
    %v8154 = vrot.slane %v8153, 2
    %v8155 = vadd.f32 %v8153, %v8154
    %v8156 = vrot.slane %v8155, 1
    %v8157 = vadd.f32 %v8155, %v8156
    %v8158 = vsel %vm266, %v7914, 0.0
    %v8159 = vrot.slane %v8158, 4
    %v8160 = vadd.f32 %v8158, %v8159
    %v8161 = vrot.slane %v8160, 2
    %v8162 = vadd.f32 %v8160, %v8161
    %v8163 = vrot.slane %v8162, 1
    %v8164 = vadd.f32 %v8162, %v8163
    %v8165 = vsel %vm266, %v7915, 0.0
    %v8166 = vrot.slane %v8165, 4
    %v8167 = vadd.f32 %v8165, %v8166
    %v8168 = vrot.slane %v8167, 2
    %v8169 = vadd.f32 %v8167, %v8168
    %v8170 = vrot.slane %v8169, 1
    %v8171 = vadd.f32 %v8169, %v8170
    %v8172 = vsel %vm266, %v7916, 0.0
    %v8173 = vrot.slane %v8172, 4
    %v8174 = vadd.f32 %v8172, %v8173
    %v8175 = vrot.slane %v8174, 2
    %v8176 = vadd.f32 %v8174, %v8175
    %v8177 = vrot.slane %v8176, 1
    %v8178 = vadd.f32 %v8176, %v8177
    %v8179 = vsel %vm266, %v7917, 0.0
    %v8180 = vrot.slane %v8179, 4
    %v8181 = vadd.f32 %v8179, %v8180
    %v8182 = vrot.slane %v8181, 2
    %v8183 = vadd.f32 %v8181, %v8182
    %v8184 = vrot.slane %v8183, 1
    %v8185 = vadd.f32 %v8183, %v8184
    %v8186 = vsel %vm266, %v7918, 0.0
    %v8187 = vrot.slane %v8186, 4
    %v8188 = vadd.f32 %v8186, %v8187
    %v8189 = vrot.slane %v8188, 2
    %v8190 = vadd.f32 %v8188, %v8189
    %v8191 = vrot.slane %v8190, 1
    %v8192 = vadd.f32 %v8190, %v8191
    %v8193 = vsel %vm266, %v7919, 0.0
    %v8194 = vrot.slane %v8193, 4
    %v8195 = vadd.f32 %v8193, %v8194
    %v8196 = vrot.slane %v8195, 2
    %v8197 = vadd.f32 %v8195, %v8196
    %v8198 = vrot.slane %v8197, 1
    %v8199 = vadd.f32 %v8197, %v8198
    %v8200 = vsel %vm266, %v7920, 0.0
    %v8201 = vrot.slane %v8200, 4
    %v8202 = vadd.f32 %v8200, %v8201
    %v8203 = vrot.slane %v8202, 2
    %v8204 = vadd.f32 %v8202, %v8203
    %v8205 = vrot.slane %v8204, 1
    %v8206 = vadd.f32 %v8204, %v8205
    %v8207 = vsel %vm266, %v7921, 0.0
    %v8208 = vrot.slane %v8207, 4
    %v8209 = vadd.f32 %v8207, %v8208
    %v8210 = vrot.slane %v8209, 2
    %v8211 = vadd.f32 %v8209, %v8210
    %v8212 = vrot.slane %v8211, 1
    %v8213 = vadd.f32 %v8211, %v8212
    %v8214 = vsel %vm266, %v7922, 0.0
    %v8215 = vrot.slane %v8214, 4
    %v8216 = vadd.f32 %v8214, %v8215
    %v8217 = vrot.slane %v8216, 2
    %v8218 = vadd.f32 %v8216, %v8217
    %v8219 = vrot.slane %v8218, 1
    %v8220 = vadd.f32 %v8218, %v8219
    %v8221 = vsel %vm266, %v7923, 0.0
    %v8222 = vrot.slane %v8221, 4
    %v8223 = vadd.f32 %v8221, %v8222
    %v8224 = vrot.slane %v8223, 2
    %v8225 = vadd.f32 %v8223, %v8224
    %v8226 = vrot.slane %v8225, 1
    %v8227 = vadd.f32 %v8225, %v8226
    %v8228 = vsel %vm266, %v7924, 0.0
    %v8229 = vrot.slane %v8228, 4
    %v8230 = vadd.f32 %v8228, %v8229
    %v8231 = vrot.slane %v8230, 2
    %v8232 = vadd.f32 %v8230, %v8231
    %v8233 = vrot.slane %v8232, 1
    %v8234 = vadd.f32 %v8232, %v8233
    %v8235 = vsel %vm266, %v7925, 0.0
    %v8236 = vrot.slane %v8235, 4
    %v8237 = vadd.f32 %v8235, %v8236
    %v8238 = vrot.slane %v8237, 2
    %v8239 = vadd.f32 %v8237, %v8238
    %v8240 = vrot.slane %v8239, 1
    %v8241 = vadd.f32 %v8239, %v8240
    %v8242 = vsel %vm266, %v7926, 0.0
    %v8243 = vrot.slane %v8242, 4
    %v8244 = vadd.f32 %v8242, %v8243
    %v8245 = vrot.slane %v8244, 2
    %v8246 = vadd.f32 %v8244, %v8245
    %v8247 = vrot.slane %v8246, 1
    %v8248 = vadd.f32 %v8246, %v8247
    %v8249 = vsel %vm266, %v7927, 0.0
    %v8250 = vrot.slane %v8249, 4
    %v8251 = vadd.f32 %v8249, %v8250
    %v8252 = vrot.slane %v8251, 2
    %v8253 = vadd.f32 %v8251, %v8252
    %v8254 = vrot.slane %v8253, 1
    %v8255 = vadd.f32 %v8253, %v8254
    %v8256 = vsel %vm266, %v7928, 0.0
    %v8257 = vrot.slane %v8256, 4
    %v8258 = vadd.f32 %v8256, %v8257
    %v8259 = vrot.slane %v8258, 2
    %v8260 = vadd.f32 %v8258, %v8259
    %v8261 = vrot.slane %v8260, 1
    %v8262 = vadd.f32 %v8260, %v8261
    %v8263 = vsel %vm266, %v7929, 0.0
    %v8264 = vrot.slane %v8263, 4
    %v8265 = vadd.f32 %v8263, %v8264
    %v8266 = vrot.slane %v8265, 2
    %v8267 = vadd.f32 %v8265, %v8266
    %v8268 = vrot.slane %v8267, 1
    %v8269 = vadd.f32 %v8267, %v8268
    %v8270 = vsel %vm266, %v7930, 0.0
    %v8271 = vrot.slane %v8270, 4
    %v8272 = vadd.f32 %v8270, %v8271
    %v8273 = vrot.slane %v8272, 2
    %v8274 = vadd.f32 %v8272, %v8273
    %v8275 = vrot.slane %v8274, 1
    %v8276 = vadd.f32 %v8274, %v8275
    %v8277 = vsel %vm266, %v7931, 0.0
    %v8278 = vrot.slane %v8277, 4
    %v8279 = vadd.f32 %v8277, %v8278
    %v8280 = vrot.slane %v8279, 2
    %v8281 = vadd.f32 %v8279, %v8280
    %v8282 = vrot.slane %v8281, 1
    %v8283 = vadd.f32 %v8281, %v8282
    %v8284 = vsel %vm266, %v7932, 0.0
    %v8285 = vrot.slane %v8284, 4
    %v8286 = vadd.f32 %v8284, %v8285
    %v8287 = vrot.slane %v8286, 2
    %v8288 = vadd.f32 %v8286, %v8287
    %v8289 = vrot.slane %v8288, 1
    %v8290 = vadd.f32 %v8288, %v8289
    %v8291 = vsel %vm266, %v7933, 0.0
    %v8292 = vrot.slane %v8291, 4
    %v8293 = vadd.f32 %v8291, %v8292
    %v8294 = vrot.slane %v8293, 2
    %v8295 = vadd.f32 %v8293, %v8294
    %v8296 = vrot.slane %v8295, 1
    %v8297 = vadd.f32 %v8295, %v8296
    %v8298 = vsel %vm266, %v7934, 0.0
    %v8299 = vrot.slane %v8298, 4
    %v8300 = vadd.f32 %v8298, %v8299
    %v8301 = vrot.slane %v8300, 2
    %v8302 = vadd.f32 %v8300, %v8301
    %v8303 = vrot.slane %v8302, 1
    %v8304 = vadd.f32 %v8302, %v8303
    %v8305 = vsel %vm266, %v7935, 0.0
    %v8306 = vrot.slane %v8305, 4
    %v8307 = vadd.f32 %v8305, %v8306
    %v8308 = vrot.slane %v8307, 2
    %v8309 = vadd.f32 %v8307, %v8308
    %v8310 = vrot.slane %v8309, 1
    %v8311 = vadd.f32 %v8309, %v8310
    %v8312 = vsel %vm266, %v7936, 0.0
    %v8313 = vrot.slane %v8312, 4
    %v8314 = vadd.f32 %v8312, %v8313
    %v8315 = vrot.slane %v8314, 2
    %v8316 = vadd.f32 %v8314, %v8315
    %v8317 = vrot.slane %v8316, 1
    %v8318 = vadd.f32 %v8316, %v8317
    %v8319 = vsel %vm266, %v7937, 0.0
    %v8320 = vrot.slane %v8319, 4
    %v8321 = vadd.f32 %v8319, %v8320
    %v8322 = vrot.slane %v8321, 2
    %v8323 = vadd.f32 %v8321, %v8322
    %v8324 = vrot.slane %v8323, 1
    %v8325 = vadd.f32 %v8323, %v8324
    %v8326 = vsel %vm266, %v7938, 0.0
    %v8327 = vrot.slane %v8326, 4
    %v8328 = vadd.f32 %v8326, %v8327
    %v8329 = vrot.slane %v8328, 2
    %v8330 = vadd.f32 %v8328, %v8329
    %v8331 = vrot.slane %v8330, 1
    %v8332 = vadd.f32 %v8330, %v8331
    %v8333 = vsel %vm266, %v7939, 0.0
    %v8334 = vrot.slane %v8333, 4
    %v8335 = vadd.f32 %v8333, %v8334
    %v8336 = vrot.slane %v8335, 2
    %v8337 = vadd.f32 %v8335, %v8336
    %v8338 = vrot.slane %v8337, 1
    %v8339 = vadd.f32 %v8337, %v8338
    %v8340 = vsel %vm266, %v7940, 0.0
    %v8341 = vrot.slane %v8340, 4
    %v8342 = vadd.f32 %v8340, %v8341
    %v8343 = vrot.slane %v8342, 2
    %v8344 = vadd.f32 %v8342, %v8343
    %v8345 = vrot.slane %v8344, 1
    %v8346 = vadd.f32 %v8344, %v8345
    %v8347 = vsel %vm266, %v7941, 0.0
    %v8348 = vrot.slane %v8347, 4
    %v8349 = vadd.f32 %v8347, %v8348
    %v8350 = vrot.slane %v8349, 2
    %v8351 = vadd.f32 %v8349, %v8350
    %v8352 = vrot.slane %v8351, 1
    %v8353 = vadd.f32 %v8351, %v8352
    %v8354 = vsel %vm266, %v7942, 0.0
    %v8355 = vrot.slane %v8354, 4
    %v8356 = vadd.f32 %v8354, %v8355
    %v8357 = vrot.slane %v8356, 2
    %v8358 = vadd.f32 %v8356, %v8357
    %v8359 = vrot.slane %v8358, 1
    %v8360 = vadd.f32 %v8358, %v8359
    %v8361 = vsel %vm266, %v7943, 0.0
    %v8362 = vrot.slane %v8361, 4
    %v8363 = vadd.f32 %v8361, %v8362
    %v8364 = vrot.slane %v8363, 2
    %v8365 = vadd.f32 %v8363, %v8364
    %v8366 = vrot.slane %v8365, 1
    %v8367 = vadd.f32 %v8365, %v8366
    %v8368 = vsel %vm266, %v7944, 0.0
    %v8369 = vrot.slane %v8368, 4
    %v8370 = vadd.f32 %v8368, %v8369
    %v8371 = vrot.slane %v8370, 2
    %v8372 = vadd.f32 %v8370, %v8371
    %v8373 = vrot.slane %v8372, 1
    %v8374 = vadd.f32 %v8372, %v8373
    %v8375 = vsel %vm266, %v7945, 0.0
    %v8376 = vrot.slane %v8375, 4
    %v8377 = vadd.f32 %v8375, %v8376
    %v8378 = vrot.slane %v8377, 2
    %v8379 = vadd.f32 %v8377, %v8378
    %v8380 = vrot.slane %v8379, 1
    %v8381 = vadd.f32 %v8379, %v8380
    %v8382 = vsel %vm266, %v7946, 0.0
    %v8383 = vrot.slane %v8382, 4
    %v8384 = vadd.f32 %v8382, %v8383
    %v8385 = vrot.slane %v8384, 2
    %v8386 = vadd.f32 %v8384, %v8385
    %v8387 = vrot.slane %v8386, 1
    %v8388 = vadd.f32 %v8386, %v8387
    %v8389 = vsel %vm266, %v7947, 0.0
    %v8390 = vrot.slane %v8389, 4
    %v8391 = vadd.f32 %v8389, %v8390
    %v8392 = vrot.slane %v8391, 2
    %v8393 = vadd.f32 %v8391, %v8392
    %v8394 = vrot.slane %v8393, 1
    %v8395 = vadd.f32 %v8393, %v8394
    %v8396 = vrcp.pop %v7442
    %v8397 = vmul.f32 %v7954, %v8396
    %v8398 = vrcp.pop %v7449
    %v8399 = vmul.f32 %v7961, %v8398
    %v8400 = vrcp.pop %v7456
    %v8401 = vmul.f32 %v7968, %v8400
    %v8402 = vrcp.pop %v7463
    %v8403 = vmul.f32 %v7975, %v8402
    %v8404 = vrcp.pop %v7470
    %v8405 = vmul.f32 %v7982, %v8404
    %v8406 = vrcp.pop %v7477
    %v8407 = vmul.f32 %v7989, %v8406
    %v8408 = vrcp.pop %v7484
    %v8409 = vmul.f32 %v7996, %v8408
    %v8410 = vrcp.pop %v7491
    %v8411 = vmul.f32 %v8003, %v8410
    %v8412 = vrcp.pop %v7498
    %v8413 = vmul.f32 %v8010, %v8412
    %v8414 = vrcp.pop %v7505
    %v8415 = vmul.f32 %v8017, %v8414
    %v8416 = vrcp.pop %v7512
    %v8417 = vmul.f32 %v8024, %v8416
    %v8418 = vrcp.pop %v7519
    %v8419 = vmul.f32 %v8031, %v8418
    %v8420 = vrcp.pop %v7526
    %v8421 = vmul.f32 %v8038, %v8420
    %v8422 = vrcp.pop %v7533
    %v8423 = vmul.f32 %v8045, %v8422
    %v8424 = vrcp.pop %v7540
    %v8425 = vmul.f32 %v8052, %v8424
    %v8426 = vrcp.pop %v7547
    %v8427 = vmul.f32 %v8059, %v8426
    %v8428 = vrcp.pop %v7554
    %v8429 = vmul.f32 %v8066, %v8428
    %v8430 = vrcp.pop %v7561
    %v8431 = vmul.f32 %v8073, %v8430
    %v8432 = vrcp.pop %v7568
    %v8433 = vmul.f32 %v8080, %v8432
    %v8434 = vrcp.pop %v7575
    %v8435 = vmul.f32 %v8087, %v8434
    %v8436 = vrcp.pop %v7582
    %v8437 = vmul.f32 %v8094, %v8436
    %v8438 = vrcp.pop %v7589
    %v8439 = vmul.f32 %v8101, %v8438
    %v8440 = vrcp.pop %v7596
    %v8441 = vmul.f32 %v8108, %v8440
    %v8442 = vrcp.pop %v7603
    %v8443 = vmul.f32 %v8115, %v8442
    %v8444 = vrcp.pop %v7610
    %v8445 = vmul.f32 %v8122, %v8444
    %v8446 = vrcp.pop %v7617
    %v8447 = vmul.f32 %v8129, %v8446
    %v8448 = vrcp.pop %v7624
    %v8449 = vmul.f32 %v8136, %v8448
    %v8450 = vrcp.pop %v7631
    %v8451 = vmul.f32 %v8143, %v8450
    %v8452 = vrcp.pop %v7638
    %v8453 = vmul.f32 %v8150, %v8452
    %v8454 = vrcp.pop %v7645
    %v8455 = vmul.f32 %v8157, %v8454
    %v8456 = vrcp.pop %v7652
    %v8457 = vmul.f32 %v8164, %v8456
    %v8458 = vrcp.pop %v7659
    %v8459 = vmul.f32 %v8171, %v8458
    %v8460 = vrcp.pop %v7666
    %v8461 = vmul.f32 %v8178, %v8460
    %v8462 = vrcp.pop %v7673
    %v8463 = vmul.f32 %v8185, %v8462
    %v8464 = vrcp.pop %v7680
    %v8465 = vmul.f32 %v8192, %v8464
    %v8466 = vrcp.pop %v7687
    %v8467 = vmul.f32 %v8199, %v8466
    %v8468 = vrcp.pop %v7694
    %v8469 = vmul.f32 %v8206, %v8468
    %v8470 = vrcp.pop %v7701
    %v8471 = vmul.f32 %v8213, %v8470
    %v8472 = vrcp.pop %v7708
    %v8473 = vmul.f32 %v8220, %v8472
    %v8474 = vrcp.pop %v7715
    %v8475 = vmul.f32 %v8227, %v8474
    %v8476 = vrcp.pop %v7722
    %v8477 = vmul.f32 %v8234, %v8476
    %v8478 = vrcp.pop %v7729
    %v8479 = vmul.f32 %v8241, %v8478
    %v8480 = vrcp.pop %v7736
    %v8481 = vmul.f32 %v8248, %v8480
    %v8482 = vrcp.pop %v7743
    %v8483 = vmul.f32 %v8255, %v8482
    %v8484 = vrcp.pop %v7750
    %v8485 = vmul.f32 %v8262, %v8484
    %v8486 = vrcp.pop %v7757
    %v8487 = vmul.f32 %v8269, %v8486
    %v8488 = vrcp.pop %v7764
    %v8489 = vmul.f32 %v8276, %v8488
    %v8490 = vrcp.pop %v7771
    %v8491 = vmul.f32 %v8283, %v8490
    %v8492 = vrcp.pop %v7778
    %v8493 = vmul.f32 %v8290, %v8492
    %v8494 = vrcp.pop %v7785
    %v8495 = vmul.f32 %v8297, %v8494
    %v8496 = vrcp.pop %v7792
    %v8497 = vmul.f32 %v8304, %v8496
    %v8498 = vrcp.pop %v7799
    %v8499 = vmul.f32 %v8311, %v8498
    %v8500 = vrcp.pop %v7806
    %v8501 = vmul.f32 %v8318, %v8500
    %v8502 = vrcp.pop %v7813
    %v8503 = vmul.f32 %v8325, %v8502
    %v8504 = vrcp.pop %v7820
    %v8505 = vmul.f32 %v8332, %v8504
    %v8506 = vrcp.pop %v7827
    %v8507 = vmul.f32 %v8339, %v8506
    %v8508 = vrcp.pop %v7834
    %v8509 = vmul.f32 %v8346, %v8508
    %v8510 = vrcp.pop %v7841
    %v8511 = vmul.f32 %v8353, %v8510
    %v8512 = vrcp.pop %v7848
    %v8513 = vmul.f32 %v8360, %v8512
    %v8514 = vrcp.pop %v7855
    %v8515 = vmul.f32 %v8367, %v8514
    %v8516 = vrcp.pop %v7862
    %v8517 = vmul.f32 %v8374, %v8516
    %v8518 = vrcp.pop %v7869
    %v8519 = vmul.f32 %v8381, %v8518
    %v8520 = vrcp.pop %v7876
    %v8521 = vmul.f32 %v8388, %v8520
    %v8522 = vrcp.pop %v7883
    %v8523 = vmul.f32 %v8395, %v8522
    %s8524 = scalar_lea.vmem %s13, 32
    %v8525 = vld [vmem:[%s8524] sm:$0xff]
    %v8526 = vld [vmem:[%s8524 + $0x8] sm:$0xff]
    %v8527 = vld [vmem:[%s8524 + $0x10] sm:$0xff]
    %v8528 = vld [vmem:[%s8524 + $0x18] sm:$0xff]
    %v8593 = vsel %vm4072, %v8399, %v8397
    %v8594 = vsel %vm4074, %v8401, %v8593
    %v8595 = vsel %vm4076, %v8403, %v8594
    %v8596 = vsel %vm4078, %v8405, %v8595
    %v8597 = vsel %vm4080, %v8407, %v8596
    %v8598 = vsel %vm4082, %v8409, %v8597
    %v8599 = vsel %vm4084, %v8411, %v8598
    %v8600 = vsel %vm4072, %v8415, %v8413
    %v8601 = vsel %vm4074, %v8417, %v8600
    %v8602 = vsel %vm4076, %v8419, %v8601
    %v8603 = vsel %vm4078, %v8421, %v8602
    %v8604 = vsel %vm4080, %v8423, %v8603
    %v8605 = vsel %vm4082, %v8425, %v8604
    %v8606 = vsel %vm4084, %v8427, %v8605
    %v8607 = vsel %vm4072, %v8431, %v8429
    %v8608 = vsel %vm4074, %v8433, %v8607
    %v8609 = vsel %vm4076, %v8435, %v8608
    %v8610 = vsel %vm4078, %v8437, %v8609
    %v8611 = vsel %vm4080, %v8439, %v8610
    %v8612 = vsel %vm4082, %v8441, %v8611
    %v8613 = vsel %vm4084, %v8443, %v8612
    %v8614 = vsel %vm4072, %v8447, %v8445
    %v8615 = vsel %vm4074, %v8449, %v8614
    %v8616 = vsel %vm4076, %v8451, %v8615
    %v8617 = vsel %vm4078, %v8453, %v8616
    %v8618 = vsel %vm4080, %v8455, %v8617
    %v8619 = vsel %vm4082, %v8457, %v8618
    %v8620 = vsel %vm4084, %v8459, %v8619
    %v8621 = vsel %vm4072, %v8463, %v8461
    %v8622 = vsel %vm4074, %v8465, %v8621
    %v8623 = vsel %vm4076, %v8467, %v8622
    %v8624 = vsel %vm4078, %v8469, %v8623
    %v8625 = vsel %vm4080, %v8471, %v8624
    %v8626 = vsel %vm4082, %v8473, %v8625
    %v8627 = vsel %vm4084, %v8475, %v8626
    %v8628 = vsel %vm4072, %v8479, %v8477
    %v8629 = vsel %vm4074, %v8481, %v8628
    %v8630 = vsel %vm4076, %v8483, %v8629
    %v8631 = vsel %vm4078, %v8485, %v8630
    %v8632 = vsel %vm4080, %v8487, %v8631
    %v8633 = vsel %vm4082, %v8489, %v8632
    %v8634 = vsel %vm4084, %v8491, %v8633
    %v8635 = vsel %vm4072, %v8495, %v8493
    %v8636 = vsel %vm4074, %v8497, %v8635
    %v8637 = vsel %vm4076, %v8499, %v8636
    %v8638 = vsel %vm4078, %v8501, %v8637
    %v8639 = vsel %vm4080, %v8503, %v8638
    %v8640 = vsel %vm4082, %v8505, %v8639
    %v8641 = vsel %vm4084, %v8507, %v8640
    %v8642 = vsel %vm4072, %v8511, %v8509
    %v8643 = vsel %vm4074, %v8513, %v8642
    %v8644 = vsel %vm4076, %v8515, %v8643
    %v8645 = vsel %vm4078, %v8517, %v8644
    %v8646 = vsel %vm4080, %v8519, %v8645
    %v8647 = vsel %vm4082, %v8521, %v8646
    %v8648 = vsel %vm4084, %v8523, %v8647
    %v8649 = vsel %vm266, %v8599, 0
    %v8651 = vsel %vm266, %v8606, 0
    %v8653 = vsel %vm266, %v8613, 0
    %v8655 = vsel %vm266, %v8620, 0
    %v8657 = vsel %vm266, %v8627, 0
    %v8659 = vsel %vm266, %v8634, 0
    %v8661 = vsel %vm266, %v8641, 0
    %v8663 = vsel %vm266, %v8648, 0
    %8665 = vmatprep.subr.mxu0 0.0
    %8666 = vmatpush1.msra.mxu0 0.0
    %8667 = vmatprep.subr.mxu0 0.0
    %8668 = vmatpush1.msra.mxu0 0.0
    %8669 = vmatprep.subr.mxu0 0.0
    %8670 = vmatpush1.msra.mxu0 0.0
    %8671 = vmatprep.subr.mxu0 0.0
    %8672 = vmatpush1.msra.mxu0 0.0
    %8673 = vmatprep.subr.mxu0 0.0
    %8674 = vmatpush1.msra.mxu0 0.0
    %8675 = vmatprep.subr.mxu0 0.0
    %8676 = vmatpush1.msra.mxu0 0.0
    %8677 = vmatprep.subr.mxu0 0.0
    %8678 = vmatpush1.msra.mxu0 0.0
    %8679 = vmatprep.subr.mxu0 0.0
    %8680 = vmatpush1.msra.mxu0 0.0
    %8681 = vmatprep.subr.mxu0 0.0
    %8682 = vmatpush1.msra.mxu0 0.0
    %8683 = vmatprep.subr.mxu0 0.0
    %8684 = vmatpush1.msra.mxu0 0.0
    %8685 = vmatprep.subr.mxu0 0.0
    %8686 = vmatpush1.msra.mxu0 0.0
    %8687 = vmatprep.subr.mxu0 0.0
    %8688 = vmatpush1.msra.mxu0 0.0
    %8689 = vmatprep.subr.mxu0 0.0
    %8690 = vmatpush1.msra.mxu0 %v8528
    %8691 = vmatprep.subr.mxu0 0.0
    %8692 = vmatpush1.msra.mxu0 %v8527
    %8693 = vmatprep.subr.mxu0 0.0
    %8694 = vmatpush1.msra.mxu0 %v8526
    %8695 = vmatprep.subr.mxu0 0.0
    %8696 = vmatpush1.msra.mxu0 %v8525
    %8697 = vmatprep.subr.mxu0 0.0
    %8698 = vmatpush2.msra.mxu0 0.0
    %8699 = vmatprep.subr.mxu0 0.0
    %8700 = vmatpush2.msra.mxu0 0.0
    %8701 = vmatprep.subr.mxu0 0.0
    %8702 = vmatpush2.msra.mxu0 0.0
    %8703 = vmatprep.subr.mxu0 0.0
    %8704 = vmatpush2.msra.mxu0 0.0
    %8705 = vmatprep.subr.mxu0 0.0
    %8706 = vmatpush2.msra.mxu0 0.0
    %8707 = vmatprep.subr.mxu0 0.0
    %8708 = vmatpush2.msra.mxu0 0.0
    %8709 = vmatprep.subr.mxu0 0.0
    %8710 = vmatpush2.msra.mxu0 0.0
    %8711 = vmatprep.subr.mxu0 0.0
    %8712 = vmatpush2.msra.mxu0 0.0
    %8713 = vmatprep.subr.mxu0 0.0
    %8714 = vmatpush2.msra.mxu0 0.0
    %8715 = vmatprep.subr.mxu0 0.0
    %8716 = vmatpush2.msra.mxu0 0.0
    %8717 = vmatprep.subr.mxu0 0.0
    %8718 = vmatpush2.msra.mxu0 0.0
    %8719 = vmatprep.subr.mxu0 0.0
    %8720 = vmatpush2.msra.mxu0 0.0
    %8721 = vmatprep.subr.mxu0 0.0
    %8722 = vmatpush2.msra.mxu0 0.0
    %8723 = vmatprep.subr.mxu0 0.0
    %8724 = vmatpush2.msra.mxu0 0.0
    %8725 = vmatprep.subr.mxu0 0.0
    %8726 = vmatpush2.msra.mxu0 0.0
    %8727 = vmatprep.subr.mxu0 0.0
    %8728 = vmatpush2.msra.mxu0 0.0
    %8729 = vmatprep.mubr.f32.mxu0 0.0
    %8730 = vmatmul.mubr.f32.gmra.mxu0 %v8649
    %v8731 = vpop.f32.mrf.mxu0
    %v8732 = vadd.f32 0.0, %v8731
    %v8733 = vpop.f32.mrf.mxu0
    %8734 = vmatprep.mubr.f32.mxu0 0.0
    %8735 = vmatmul.mubr.f32.gmra.mxu0 %v8651
    %v8736 = vpop.f32.mrf.mxu0
    %v8737 = vadd.f32 0.0, %v8736
    %v8738 = vpop.f32.mrf.mxu0
    %8739 = vmatprep.mubr.f32.mxu0 0.0
    %8740 = vmatmul.mubr.f32.gmra.mxu0 %v8653
    %v8741 = vpop.f32.mrf.mxu0
    %v8742 = vadd.f32 0.0, %v8741
    %v8743 = vpop.f32.mrf.mxu0
    %8744 = vmatprep.mubr.f32.mxu0 0.0
    %8745 = vmatmul.mubr.f32.gmra.mxu0 %v8655
    %v8746 = vpop.f32.mrf.mxu0
    %v8747 = vadd.f32 0.0, %v8746
    %v8748 = vpop.f32.mrf.mxu0
    %8749 = vmatprep.mubr.f32.mxu0 0.0
    %8750 = vmatmul.mubr.f32.gmra.mxu0 %v8657
    %v8751 = vpop.f32.mrf.mxu0
    %v8752 = vadd.f32 0.0, %v8751
    %v8753 = vpop.f32.mrf.mxu0
    %8754 = vmatprep.mubr.f32.mxu0 0.0
    %8755 = vmatmul.mubr.f32.gmra.mxu0 %v8659
    %v8756 = vpop.f32.mrf.mxu0
    %v8757 = vadd.f32 0.0, %v8756
    %v8758 = vpop.f32.mrf.mxu0
    %8759 = vmatprep.mubr.f32.mxu0 0.0
    %8760 = vmatmul.mubr.f32.gmra.mxu0 %v8661
    %v8761 = vpop.f32.mrf.mxu0
    %v8762 = vadd.f32 0.0, %v8761
    %v8763 = vpop.f32.mrf.mxu0
    %8764 = vmatprep.mubr.f32.mxu0 0.0
    %8765 = vmatmul.mubr.f32.gmra.mxu0 %v8663
    %v8766 = vpop.f32.mrf.mxu0
    %v8767 = vadd.f32 0.0, %v8766
    %v8768 = vpop.f32.mrf.mxu0
    %8769 = vdwg.mxu0
    %v8770 = vadd.f32 %v4905, %v8732
    %v8771 = vadd.f32 %v4906, %v8737
    %v8772 = vadd.f32 %v4907, %v8742
    %v8773 = vadd.f32 %v4908, %v8747
    %v8774 = vadd.f32 %v4909, %v8752
    %v8775 = vadd.f32 %v4910, %v8757
    %v8776 = vadd.f32 %v4911, %v8762
    %v8777 = vadd.f32 %v4912, %v8767
    %s8778 = scalar_lea.vmem %s14, 1
    %v8779 = vld [vmem:[%s8778] sm:$0x1]
    %v8781 = vlaneseq
    %v8782 = vshrl.u32 %v8781, 7
    %v8783 = vsub.s32 0, %v8782
    %v8784 = vrot.slane %v8779, %v8783
    %v8786 = vadd.f32 %v8770, %v8784
    %v8787 = vadd.f32 %v8771, %v8784
    %v8788 = vadd.f32 %v8772, %v8784
    %v8789 = vadd.f32 %v8773, %v8784
    %v8790 = vadd.f32 %v8774, %v8784
    %v8791 = vadd.f32 %v8775, %v8784
    %v8792 = vadd.f32 %v8776, %v8784
    %v8793 = vadd.f32 %v8777, %v8784
    %s8794 = scalar_lea.vmem %s15, 1
    %v8795 = vld [vmem:[%s8794] sm:$0x1]
    %s8796 = scalar_lea.vmem %s16, 1
    %v8797 = vld [vmem:[%s8796] sm:$0x1]
    %v8798 = vsel %vm266, %v8786, 0.0
    %8799 = vadd.xlane.f32.xlu0 %v8798
    %v8800 = vpop.xlane.xlu0 %8799
    %v8801 = vsel %vm266, %v8787, 0.0
    %8802 = vadd.xlane.f32.xlu0 %v8801
    %v8803 = vpop.xlane.xlu0 %8802
    %v8804 = vsel %vm266, %v8788, 0.0
    %8805 = vadd.xlane.f32.xlu0 %v8804
    %v8806 = vpop.xlane.xlu0 %8805
    %v8807 = vsel %vm266, %v8789, 0.0
    %8808 = vadd.xlane.f32.xlu0 %v8807
    %v8809 = vpop.xlane.xlu0 %8808
    %v8810 = vsel %vm266, %v8790, 0.0
    %8811 = vadd.xlane.f32.xlu0 %v8810
    %v8812 = vpop.xlane.xlu0 %8811
    %v8813 = vsel %vm266, %v8791, 0.0
    %8814 = vadd.xlane.f32.xlu0 %v8813
    %v8815 = vpop.xlane.xlu0 %8814
    %v8816 = vsel %vm266, %v8792, 0.0
    %8817 = vadd.xlane.f32.xlu0 %v8816
    %v8818 = vpop.xlane.xlu0 %8817
    %v8819 = vsel %vm266, %v8793, 0.0
    %8820 = vadd.xlane.f32.xlu0 %v8819
    %v8821 = vpop.xlane.xlu0 %8820
    %v8822 = vmul.f32 %v8800, %v426
    %v8823 = vmul.f32 %v8803, %v426
    %v8824 = vmul.f32 %v8806, %v426
    %v8825 = vmul.f32 %v8809, %v426
    %v8826 = vmul.f32 %v8812, %v426
    %v8827 = vmul.f32 %v8815, %v426
    %v8828 = vmul.f32 %v8818, %v426
    %v8829 = vmul.f32 %v8821, %v426
    %v8830 = vsub.f32 %v8786, %v8822
    %v8831 = vsub.f32 %v8787, %v8823
    %v8832 = vsub.f32 %v8788, %v8824
    %v8833 = vsub.f32 %v8789, %v8825
    %v8834 = vsub.f32 %v8790, %v8826
    %v8835 = vsub.f32 %v8791, %v8827
    %v8836 = vsub.f32 %v8792, %v8828
    %v8837 = vsub.f32 %v8793, %v8829
    %v8838 = vmul.f32 %v8830, %v8830
    %v8839 = vmul.f32 %v8831, %v8831
    %v8840 = vmul.f32 %v8832, %v8832
    %v8841 = vmul.f32 %v8833, %v8833
    %v8842 = vmul.f32 %v8834, %v8834
    %v8843 = vmul.f32 %v8835, %v8835
    %v8844 = vmul.f32 %v8836, %v8836
    %v8845 = vmul.f32 %v8837, %v8837
    %v8846 = vsel %vm266, %v8838, 0.0
    %8847 = vadd.xlane.f32.xlu0 %v8846
    %v8848 = vpop.xlane.xlu0 %8847
    %v8849 = vsel %vm266, %v8839, 0.0
    %8850 = vadd.xlane.f32.xlu0 %v8849
    %v8851 = vpop.xlane.xlu0 %8850
    %v8852 = vsel %vm266, %v8840, 0.0
    %8853 = vadd.xlane.f32.xlu0 %v8852
    %v8854 = vpop.xlane.xlu0 %8853
    %v8855 = vsel %vm266, %v8841, 0.0
    %8856 = vadd.xlane.f32.xlu0 %v8855
    %v8857 = vpop.xlane.xlu0 %8856
    %v8858 = vsel %vm266, %v8842, 0.0
    %8859 = vadd.xlane.f32.xlu0 %v8858
    %v8860 = vpop.xlane.xlu0 %8859
    %v8861 = vsel %vm266, %v8843, 0.0
    %8862 = vadd.xlane.f32.xlu0 %v8861
    %v8863 = vpop.xlane.xlu0 %8862
    %v8864 = vsel %vm266, %v8844, 0.0
    %8865 = vadd.xlane.f32.xlu0 %v8864
    %v8866 = vpop.xlane.xlu0 %8865
    %v8867 = vsel %vm266, %v8845, 0.0
    %8868 = vadd.xlane.f32.xlu0 %v8867
    %v8869 = vpop.xlane.xlu0 %8868
    %v8870 = vmul.f32 %v8848, %v426
    %v8871 = vmul.f32 %v8851, %v426
    %v8872 = vmul.f32 %v8854, %v426
    %v8873 = vmul.f32 %v8857, %v426
    %v8874 = vmul.f32 %v8860, %v426
    %v8875 = vmul.f32 %v8863, %v426
    %v8876 = vmul.f32 %v8866, %v426
    %v8877 = vmul.f32 %v8869, %v426
    %v8878 = vadd.f32 %v8870, 1e-05
    %v8879 = vadd.f32 %v8871, 1e-05
    %v8880 = vadd.f32 %v8872, 1e-05
    %v8881 = vadd.f32 %v8873, 1e-05
    %v8882 = vadd.f32 %v8874, 1e-05
    %v8883 = vadd.f32 %v8875, 1e-05
    %v8884 = vadd.f32 %v8876, 1e-05
    %v8885 = vadd.f32 %v8877, 1e-05
    %v8886 = vrsqrt.pop %v8878
    %v8887 = vrsqrt.pop %v8879
    %v8888 = vrsqrt.pop %v8880
    %v8889 = vrsqrt.pop %v8881
    %v8890 = vrsqrt.pop %v8882
    %v8891 = vrsqrt.pop %v8883
    %v8892 = vrsqrt.pop %v8884
    %v8893 = vrsqrt.pop %v8885
    %v8894 = vmul.f32 %v8830, %v8886
    %v8895 = vmul.f32 %v8831, %v8887
    %v8896 = vmul.f32 %v8832, %v8888
    %v8897 = vmul.f32 %v8833, %v8889
    %v8898 = vmul.f32 %v8834, %v8890
    %v8899 = vmul.f32 %v8835, %v8891
    %v8900 = vmul.f32 %v8836, %v8892
    %v8901 = vmul.f32 %v8837, %v8893
    %v8903 = vlaneseq
    %v8904 = vshrl.u32 %v8903, 7
    %v8905 = vsub.s32 0, %v8904
    %v8906 = vrot.slane %v8795, %v8905
    %v8908 = vmul.f32 %v8894, %v8906
    %v8909 = vmul.f32 %v8895, %v8906
    %v8910 = vmul.f32 %v8896, %v8906
    %v8911 = vmul.f32 %v8897, %v8906
    %v8912 = vmul.f32 %v8898, %v8906
    %v8913 = vmul.f32 %v8899, %v8906
    %v8914 = vmul.f32 %v8900, %v8906
    %v8915 = vmul.f32 %v8901, %v8906
    %v8917 = vlaneseq
    %v8918 = vshrl.u32 %v8917, 7
    %v8919 = vsub.s32 0, %v8918
    %v8920 = vrot.slane %v8797, %v8919
    %v8922 = vadd.f32 %v8908, %v8920
    %v8923 = vadd.f32 %v8909, %v8920
    %v8924 = vadd.f32 %v8910, %v8920
    %v8925 = vadd.f32 %v8911, %v8920
    %v8926 = vadd.f32 %v8912, %v8920
    %v8927 = vadd.f32 %v8913, %v8920
    %v8928 = vadd.f32 %v8914, %v8920
    %v8929 = vadd.f32 %v8915, %v8920
    %s8930 = scalar_lea.vmem %s17, 32
    %v8931 = vld [vmem:[%s8930] sm:$0xff]
    %v8932 = vld [vmem:[%s8930 + $0x8] sm:$0xff]
    %v8933 = vld [vmem:[%s8930 + $0x10] sm:$0xff]
    %v8934 = vld [vmem:[%s8930 + $0x18] sm:$0xff]
    %s8935 = scalar_lea.vmem %s18, 1
    %v8936 = vld [vmem:[%s8935] sm:$0x1]
    %v8938 = vlaneseq
    %v8939 = vshrl.u32 %v8938, 7
    %v8940 = vsub.s32 0, %v8939
    %v8941 = vrot.slane %v8936, %v8940
    %v8944 = vsel %vm266, %v8922, 0
    %v8947 = vsel %vm266, %v8923, 0
    %v8950 = vsel %vm266, %v8924, 0
    %v8953 = vsel %vm266, %v8925, 0
    %v8956 = vsel %vm266, %v8926, 0
    %v8959 = vsel %vm266, %v8927, 0
    %v8962 = vsel %vm266, %v8928, 0
    %v8965 = vsel %vm266, %v8929, 0
    %8967 = vmatprep.subr.mxu0 0.0
    %8968 = vmatpush1.msra.mxu0 0.0
    %8969 = vmatprep.subr.mxu0 0.0
    %8970 = vmatpush1.msra.mxu0 0.0
    %8971 = vmatprep.subr.mxu0 0.0
    %8972 = vmatpush1.msra.mxu0 0.0
    %8973 = vmatprep.subr.mxu0 0.0
    %8974 = vmatpush1.msra.mxu0 0.0
    %8975 = vmatprep.subr.mxu0 0.0
    %8976 = vmatpush1.msra.mxu0 0.0
    %8977 = vmatprep.subr.mxu0 0.0
    %8978 = vmatpush1.msra.mxu0 0.0
    %8979 = vmatprep.subr.mxu0 0.0
    %8980 = vmatpush1.msra.mxu0 0.0
    %8981 = vmatprep.subr.mxu0 0.0
    %8982 = vmatpush1.msra.mxu0 0.0
    %8983 = vmatprep.subr.mxu0 0.0
    %8984 = vmatpush1.msra.mxu0 0.0
    %8985 = vmatprep.subr.mxu0 0.0
    %8986 = vmatpush1.msra.mxu0 0.0
    %8987 = vmatprep.subr.mxu0 0.0
    %8988 = vmatpush1.msra.mxu0 0.0
    %8989 = vmatprep.subr.mxu0 0.0
    %8990 = vmatpush1.msra.mxu0 0.0
    %8991 = vmatprep.subr.mxu0 0.0
    %8992 = vmatpush1.msra.mxu0 %v8934
    %8993 = vmatprep.subr.mxu0 0.0
    %8994 = vmatpush1.msra.mxu0 %v8933
    %8995 = vmatprep.subr.mxu0 0.0
    %8996 = vmatpush1.msra.mxu0 %v8932
    %8997 = vmatprep.subr.mxu0 0.0
    %8998 = vmatpush1.msra.mxu0 %v8931
    %8999 = vmatprep.subr.mxu0 0.0
    %9000 = vmatpush2.msra.mxu0 0.0
    %9001 = vmatprep.subr.mxu0 0.0
    %9002 = vmatpush2.msra.mxu0 0.0
    %9003 = vmatprep.subr.mxu0 0.0
    %9004 = vmatpush2.msra.mxu0 0.0
    %9005 = vmatprep.subr.mxu0 0.0
    %9006 = vmatpush2.msra.mxu0 0.0
    %9007 = vmatprep.subr.mxu0 0.0
    %9008 = vmatpush2.msra.mxu0 0.0
    %9009 = vmatprep.subr.mxu0 0.0
    %9010 = vmatpush2.msra.mxu0 0.0
    %9011 = vmatprep.subr.mxu0 0.0
    %9012 = vmatpush2.msra.mxu0 0.0
    %9013 = vmatprep.subr.mxu0 0.0
    %9014 = vmatpush2.msra.mxu0 0.0
    %9015 = vmatprep.subr.mxu0 0.0
    %9016 = vmatpush2.msra.mxu0 0.0
    %9017 = vmatprep.subr.mxu0 0.0
    %9018 = vmatpush2.msra.mxu0 0.0
    %9019 = vmatprep.subr.mxu0 0.0
    %9020 = vmatpush2.msra.mxu0 0.0
    %9021 = vmatprep.subr.mxu0 0.0
    %9022 = vmatpush2.msra.mxu0 0.0
    %9023 = vmatprep.subr.mxu0 0.0
    %9024 = vmatpush2.msra.mxu0 0.0
    %9025 = vmatprep.subr.mxu0 0.0
    %9026 = vmatpush2.msra.mxu0 0.0
    %9027 = vmatprep.subr.mxu0 0.0
    %9028 = vmatpush2.msra.mxu0 0.0
    %9029 = vmatprep.subr.mxu0 0.0
    %9030 = vmatpush2.msra.mxu0 0.0
    %9031 = vmatprep.mubr.f32.mxu0 0.0
    %9032 = vmatmul.mubr.f32.gmra.mxu0 %v8944
    %v9033 = vpop.f32.mrf.mxu0
    %v9034 = vadd.f32 %v8941, %v9033
    %v9035 = vpop.f32.mrf.mxu0
    %9036 = vmatprep.mubr.f32.mxu0 0.0
    %9037 = vmatmul.mubr.f32.gmra.mxu0 %v8947
    %v9038 = vpop.f32.mrf.mxu0
    %v9039 = vadd.f32 %v8941, %v9038
    %v9040 = vpop.f32.mrf.mxu0
    %9041 = vmatprep.mubr.f32.mxu0 0.0
    %9042 = vmatmul.mubr.f32.gmra.mxu0 %v8950
    %v9043 = vpop.f32.mrf.mxu0
    %v9044 = vadd.f32 %v8941, %v9043
    %v9045 = vpop.f32.mrf.mxu0
    %9046 = vmatprep.mubr.f32.mxu0 0.0
    %9047 = vmatmul.mubr.f32.gmra.mxu0 %v8953
    %v9048 = vpop.f32.mrf.mxu0
    %v9049 = vadd.f32 %v8941, %v9048
    %v9050 = vpop.f32.mrf.mxu0
    %9051 = vmatprep.mubr.f32.mxu0 0.0
    %9052 = vmatmul.mubr.f32.gmra.mxu0 %v8956
    %v9053 = vpop.f32.mrf.mxu0
    %v9054 = vadd.f32 %v8941, %v9053
    %v9055 = vpop.f32.mrf.mxu0
    %9056 = vmatprep.mubr.f32.mxu0 0.0
    %9057 = vmatmul.mubr.f32.gmra.mxu0 %v8959
    %v9058 = vpop.f32.mrf.mxu0
    %v9059 = vadd.f32 %v8941, %v9058
    %v9060 = vpop.f32.mrf.mxu0
    %9061 = vmatprep.mubr.f32.mxu0 0.0
    %9062 = vmatmul.mubr.f32.gmra.mxu0 %v8962
    %v9063 = vpop.f32.mrf.mxu0
    %v9064 = vadd.f32 %v8941, %v9063
    %v9065 = vpop.f32.mrf.mxu0
    %9066 = vmatprep.mubr.f32.mxu0 0.0
    %9067 = vmatmul.mubr.f32.gmra.mxu0 %v8965
    %v9068 = vpop.f32.mrf.mxu0
    %v9069 = vadd.f32 %v8941, %v9068
    %v9070 = vpop.f32.mrf.mxu0
    %9071 = vdwg.mxu0
    %v9072 = vmul.f32 %v9034, 0.5
    %v9073 = vmul.f32 %v9039, 0.5
    %v9074 = vmul.f32 %v9044, 0.5
    %v9075 = vmul.f32 %v9049, 0.5
    %v9076 = vmul.f32 %v9054, 0.5
    %v9077 = vmul.f32 %v9059, 0.5
    %v9078 = vmul.f32 %v9064, 0.5
    %v9079 = vmul.f32 %v9069, 0.5
    %v9080 = vmul.f32 %v9034, 0.70710677
    %v9081 = vmul.f32 %v9039, 0.70710677
    %v9082 = vmul.f32 %v9044, 0.70710677
    %v9083 = vmul.f32 %v9049, 0.70710677
    %v9084 = vmul.f32 %v9054, 0.70710677
    %v9085 = vmul.f32 %v9059, 0.70710677
    %v9086 = vmul.f32 %v9064, 0.70710677
    %v9087 = vmul.f32 %v9069, 0.70710677
    %v9088 = vand.u32 2147483647, %v9080
    %v9089 = vand.u32 2147483647, %v9081
    %v9090 = vand.u32 2147483647, %v9082
    %v9091 = vand.u32 2147483647, %v9083
    %v9092 = vand.u32 2147483647, %v9084
    %v9093 = vand.u32 2147483647, %v9085
    %v9094 = vand.u32 2147483647, %v9086
    %v9095 = vand.u32 2147483647, %v9087
    %v9096 = vmul.f32 %v9088, 0.3275911
    %v9097 = vmul.f32 %v9089, 0.3275911
    %v9098 = vmul.f32 %v9090, 0.3275911
    %v9099 = vmul.f32 %v9091, 0.3275911
    %v9100 = vmul.f32 %v9092, 0.3275911
    %v9101 = vmul.f32 %v9093, 0.3275911
    %v9102 = vmul.f32 %v9094, 0.3275911
    %v9103 = vmul.f32 %v9095, 0.3275911
    %v9104 = vadd.f32 %v9096, 1.0
    %v9105 = vadd.f32 %v9097, 1.0
    %v9106 = vadd.f32 %v9098, 1.0
    %v9107 = vadd.f32 %v9099, 1.0
    %v9108 = vadd.f32 %v9100, 1.0
    %v9109 = vadd.f32 %v9101, 1.0
    %v9110 = vadd.f32 %v9102, 1.0
    %v9111 = vadd.f32 %v9103, 1.0
    %v9112 = vrcp.pop %v9104
    %v9113 = vmul.f32 1.0, %v9112
    %v9114 = vrcp.pop %v9105
    %v9115 = vmul.f32 1.0, %v9114
    %v9116 = vrcp.pop %v9106
    %v9117 = vmul.f32 1.0, %v9116
    %v9118 = vrcp.pop %v9107
    %v9119 = vmul.f32 1.0, %v9118
    %v9120 = vrcp.pop %v9108
    %v9121 = vmul.f32 1.0, %v9120
    %v9122 = vrcp.pop %v9109
    %v9123 = vmul.f32 1.0, %v9122
    %v9124 = vrcp.pop %v9110
    %v9125 = vmul.f32 1.0, %v9124
    %v9126 = vrcp.pop %v9111
    %v9127 = vmul.f32 1.0, %v9126
    %v9128 = vmul.f32 %v9113, 1.0614054
    %v9129 = vmul.f32 %v9115, 1.0614054
    %v9130 = vmul.f32 %v9117, 1.0614054
    %v9131 = vmul.f32 %v9119, 1.0614054
    %v9132 = vmul.f32 %v9121, 1.0614054
    %v9133 = vmul.f32 %v9123, 1.0614054
    %v9134 = vmul.f32 %v9125, 1.0614054
    %v9135 = vmul.f32 %v9127, 1.0614054
    %v9136 = vadd.f32 %v9128, -1.4531521
    %v9137 = vadd.f32 %v9129, -1.4531521
    %v9138 = vadd.f32 %v9130, -1.4531521
    %v9139 = vadd.f32 %v9131, -1.4531521
    %v9140 = vadd.f32 %v9132, -1.4531521
    %v9141 = vadd.f32 %v9133, -1.4531521
    %v9142 = vadd.f32 %v9134, -1.4531521
    %v9143 = vadd.f32 %v9135, -1.4531521
    %v9144 = vmul.f32 %v9136, %v9113
    %v9145 = vmul.f32 %v9137, %v9115
    %v9146 = vmul.f32 %v9138, %v9117
    %v9147 = vmul.f32 %v9139, %v9119
    %v9148 = vmul.f32 %v9140, %v9121
    %v9149 = vmul.f32 %v9141, %v9123
    %v9150 = vmul.f32 %v9142, %v9125
    %v9151 = vmul.f32 %v9143, %v9127
    %v9152 = vadd.f32 %v9144, 1.4214138
    %v9153 = vadd.f32 %v9145, 1.4214138
    %v9154 = vadd.f32 %v9146, 1.4214138
    %v9155 = vadd.f32 %v9147, 1.4214138
    %v9156 = vadd.f32 %v9148, 1.4214138
    %v9157 = vadd.f32 %v9149, 1.4214138
    %v9158 = vadd.f32 %v9150, 1.4214138
    %v9159 = vadd.f32 %v9151, 1.4214138
    %v9160 = vmul.f32 %v9152, %v9113
    %v9161 = vmul.f32 %v9153, %v9115
    %v9162 = vmul.f32 %v9154, %v9117
    %v9163 = vmul.f32 %v9155, %v9119
    %v9164 = vmul.f32 %v9156, %v9121
    %v9165 = vmul.f32 %v9157, %v9123
    %v9166 = vmul.f32 %v9158, %v9125
    %v9167 = vmul.f32 %v9159, %v9127
    %v9168 = vadd.f32 %v9160, -0.28449672
    %v9169 = vadd.f32 %v9161, -0.28449672
    %v9170 = vadd.f32 %v9162, -0.28449672
    %v9171 = vadd.f32 %v9163, -0.28449672
    %v9172 = vadd.f32 %v9164, -0.28449672
    %v9173 = vadd.f32 %v9165, -0.28449672
    %v9174 = vadd.f32 %v9166, -0.28449672
    %v9175 = vadd.f32 %v9167, -0.28449672
    %v9176 = vmul.f32 %v9168, %v9113
    %v9177 = vmul.f32 %v9169, %v9115
    %v9178 = vmul.f32 %v9170, %v9117
    %v9179 = vmul.f32 %v9171, %v9119
    %v9180 = vmul.f32 %v9172, %v9121
    %v9181 = vmul.f32 %v9173, %v9123
    %v9182 = vmul.f32 %v9174, %v9125
    %v9183 = vmul.f32 %v9175, %v9127
    %v9184 = vadd.f32 %v9176, 0.2548296
    %v9185 = vadd.f32 %v9177, 0.2548296
    %v9186 = vadd.f32 %v9178, 0.2548296
    %v9187 = vadd.f32 %v9179, 0.2548296
    %v9188 = vadd.f32 %v9180, 0.2548296
    %v9189 = vadd.f32 %v9181, 0.2548296
    %v9190 = vadd.f32 %v9182, 0.2548296
    %v9191 = vadd.f32 %v9183, 0.2548296
    %v9192 = vmul.f32 %v9184, %v9113
    %v9193 = vmul.f32 %v9185, %v9115
    %v9194 = vmul.f32 %v9186, %v9117
    %v9195 = vmul.f32 %v9187, %v9119
    %v9196 = vmul.f32 %v9188, %v9121
    %v9197 = vmul.f32 %v9189, %v9123
    %v9198 = vmul.f32 %v9190, %v9125
    %v9199 = vmul.f32 %v9191, %v9127
    %v9200 = vsub.f32 0.0, %v9088
    %v9201 = vsub.f32 0.0, %v9089
    %v9202 = vsub.f32 0.0, %v9090
    %v9203 = vsub.f32 0.0, %v9091
    %v9204 = vsub.f32 0.0, %v9092
    %v9205 = vsub.f32 0.0, %v9093
    %v9206 = vsub.f32 0.0, %v9094
    %v9207 = vsub.f32 0.0, %v9095
    %v9208 = vmul.f32 %v9200, %v9088
    %v9209 = vmul.f32 %v9201, %v9089
    %v9210 = vmul.f32 %v9202, %v9090
    %v9211 = vmul.f32 %v9203, %v9091
    %v9212 = vmul.f32 %v9204, %v9092
    %v9213 = vmul.f32 %v9205, %v9093
    %v9214 = vmul.f32 %v9206, %v9094
    %v9215 = vmul.f32 %v9207, %v9095
    %v9216 = vmul.f32 %v9208, 1.442695
    %v9217 = vpow.pop %v9216
    %v9218 = vmul.f32 %v9209, 1.442695
    %v9219 = vpow.pop %v9218
    %v9220 = vmul.f32 %v9210, 1.442695
    %v9221 = vpow.pop %v9220
    %v9222 = vmul.f32 %v9211, 1.442695
    %v9223 = vpow.pop %v9222
    %v9224 = vmul.f32 %v9212, 1.442695
    %v9225 = vpow.pop %v9224
    %v9226 = vmul.f32 %v9213, 1.442695
    %v9227 = vpow.pop %v9226
    %v9228 = vmul.f32 %v9214, 1.442695
    %v9229 = vpow.pop %v9228
    %v9230 = vmul.f32 %v9215, 1.442695
    %v9231 = vpow.pop %v9230
    %v9232 = vmul.f32 %v9192, %v9217
    %v9233 = vmul.f32 %v9193, %v9219
    %v9234 = vmul.f32 %v9194, %v9221
    %v9235 = vmul.f32 %v9195, %v9223
    %v9236 = vmul.f32 %v9196, %v9225
    %v9237 = vmul.f32 %v9197, %v9227
    %v9238 = vmul.f32 %v9198, %v9229
    %v9239 = vmul.f32 %v9199, %v9231
    %v9240 = vsub.f32 1.0, %v9232
    %v9241 = vsub.f32 1.0, %v9233
    %v9242 = vsub.f32 1.0, %v9234
    %v9243 = vsub.f32 1.0, %v9235
    %v9244 = vsub.f32 1.0, %v9236
    %v9245 = vsub.f32 1.0, %v9237
    %v9246 = vsub.f32 1.0, %v9238
    %v9247 = vsub.f32 1.0, %v9239
    %vm9248 = vcmp.ge.f32.partialorder %v9080, 0.0
    %vm9249 = vcmp.ge.f32.partialorder %v9081, 0.0
    %vm9250 = vcmp.ge.f32.partialorder %v9082, 0.0
    %vm9251 = vcmp.ge.f32.partialorder %v9083, 0.0
    %vm9252 = vcmp.ge.f32.partialorder %v9084, 0.0
    %vm9253 = vcmp.ge.f32.partialorder %v9085, 0.0
    %vm9254 = vcmp.ge.f32.partialorder %v9086, 0.0
    %vm9255 = vcmp.ge.f32.partialorder %v9087, 0.0
    %v9256 = vsub.f32 0.0, %v9240
    %v9257 = vsub.f32 0.0, %v9241
    %v9258 = vsub.f32 0.0, %v9242
    %v9259 = vsub.f32 0.0, %v9243
    %v9260 = vsub.f32 0.0, %v9244
    %v9261 = vsub.f32 0.0, %v9245
    %v9262 = vsub.f32 0.0, %v9246
    %v9263 = vsub.f32 0.0, %v9247
    %v9264 = vsel %vm9248, %v9240, %v9256
    %v9265 = vsel %vm9249, %v9241, %v9257
    %v9266 = vsel %vm9250, %v9242, %v9258
    %v9267 = vsel %vm9251, %v9243, %v9259
    %v9268 = vsel %vm9252, %v9244, %v9260
    %v9269 = vsel %vm9253, %v9245, %v9261
    %v9270 = vsel %vm9254, %v9246, %v9262
    %v9271 = vsel %vm9255, %v9247, %v9263
    %v9272 = vadd.f32 %v9264, 1.0
    %v9273 = vadd.f32 %v9265, 1.0
    %v9274 = vadd.f32 %v9266, 1.0
    %v9275 = vadd.f32 %v9267, 1.0
    %v9276 = vadd.f32 %v9268, 1.0
    %v9277 = vadd.f32 %v9269, 1.0
    %v9278 = vadd.f32 %v9270, 1.0
    %v9279 = vadd.f32 %v9271, 1.0
    %v9280 = vmul.f32 %v9072, %v9272
    %v9281 = vmul.f32 %v9073, %v9273
    %v9282 = vmul.f32 %v9074, %v9274
    %v9283 = vmul.f32 %v9075, %v9275
    %v9284 = vmul.f32 %v9076, %v9276
    %v9285 = vmul.f32 %v9077, %v9277
    %v9286 = vmul.f32 %v9078, %v9278
    %v9287 = vmul.f32 %v9079, %v9279
    %s9288 = scalar_lea.vmem %s19, 128
    %v9289 = vld [vmem:[%s9288] sm:$0xff]
    %v9290 = vld [vmem:[%s9288 + $0x8] sm:$0xff]
    %v9291 = vld [vmem:[%s9288 + $0x10] sm:$0xff]
    %v9292 = vld [vmem:[%s9288 + $0x18] sm:$0xff]
    %v9293 = vld [vmem:[%s9288 + $0x20] sm:$0xff]
    %v9294 = vld [vmem:[%s9288 + $0x28] sm:$0xff]
    %v9295 = vld [vmem:[%s9288 + $0x30] sm:$0xff]
    %v9296 = vld [vmem:[%s9288 + $0x38] sm:$0xff]
    %v9297 = vld [vmem:[%s9288 + $0x40] sm:$0xff]
    %v9298 = vld [vmem:[%s9288 + $0x48] sm:$0xff]
    %v9299 = vld [vmem:[%s9288 + $0x50] sm:$0xff]
    %v9300 = vld [vmem:[%s9288 + $0x58] sm:$0xff]
    %v9301 = vld [vmem:[%s9288 + $0x60] sm:$0xff]
    %v9302 = vld [vmem:[%s9288 + $0x68] sm:$0xff]
    %v9303 = vld [vmem:[%s9288 + $0x70] sm:$0xff]
    %v9304 = vld [vmem:[%s9288 + $0x78] sm:$0xff]
    %9305 = vmatprep.subr.mxu0 0.0
    %9306 = vmatpush1.msra.mxu0 %v9304
    %9307 = vmatprep.subr.mxu0 0.0
    %9308 = vmatpush1.msra.mxu0 %v9303
    %9309 = vmatprep.subr.mxu0 0.0
    %9310 = vmatpush1.msra.mxu0 %v9302
    %9311 = vmatprep.subr.mxu0 0.0
    %9312 = vmatpush1.msra.mxu0 %v9301
    %9313 = vmatprep.subr.mxu0 0.0
    %9314 = vmatpush1.msra.mxu0 %v9300
    %9315 = vmatprep.subr.mxu0 0.0
    %9316 = vmatpush1.msra.mxu0 %v9299
    %9317 = vmatprep.subr.mxu0 0.0
    %9318 = vmatpush1.msra.mxu0 %v9298
    %9319 = vmatprep.subr.mxu0 0.0
    %9320 = vmatpush1.msra.mxu0 %v9297
    %9321 = vmatprep.subr.mxu0 0.0
    %9322 = vmatpush1.msra.mxu0 %v9296
    %9323 = vmatprep.subr.mxu0 0.0
    %9324 = vmatpush1.msra.mxu0 %v9295
    %9325 = vmatprep.subr.mxu0 0.0
    %9326 = vmatpush1.msra.mxu0 %v9294
    %9327 = vmatprep.subr.mxu0 0.0
    %9328 = vmatpush1.msra.mxu0 %v9293
    %9329 = vmatprep.subr.mxu0 0.0
    %9330 = vmatpush1.msra.mxu0 %v9292
    %9331 = vmatprep.subr.mxu0 0.0
    %9332 = vmatpush1.msra.mxu0 %v9291
    %9333 = vmatprep.subr.mxu0 0.0
    %9334 = vmatpush1.msra.mxu0 %v9290
    %9335 = vmatprep.subr.mxu0 0.0
    %9336 = vmatpush1.msra.mxu0 %v9289
    %9337 = vmatprep.subr.mxu0 0.0
    %9338 = vmatpush2.msra.mxu0 0.0
    %9339 = vmatprep.subr.mxu0 0.0
    %9340 = vmatpush2.msra.mxu0 0.0
    %9341 = vmatprep.subr.mxu0 0.0
    %9342 = vmatpush2.msra.mxu0 0.0
    %9343 = vmatprep.subr.mxu0 0.0
    %9344 = vmatpush2.msra.mxu0 0.0
    %9345 = vmatprep.subr.mxu0 0.0
    %9346 = vmatpush2.msra.mxu0 0.0
    %9347 = vmatprep.subr.mxu0 0.0
    %9348 = vmatpush2.msra.mxu0 0.0
    %9349 = vmatprep.subr.mxu0 0.0
    %9350 = vmatpush2.msra.mxu0 0.0
    %9351 = vmatprep.subr.mxu0 0.0
    %9352 = vmatpush2.msra.mxu0 0.0
    %9353 = vmatprep.subr.mxu0 0.0
    %9354 = vmatpush2.msra.mxu0 0.0
    %9355 = vmatprep.subr.mxu0 0.0
    %9356 = vmatpush2.msra.mxu0 0.0
    %9357 = vmatprep.subr.mxu0 0.0
    %9358 = vmatpush2.msra.mxu0 0.0
    %9359 = vmatprep.subr.mxu0 0.0
    %9360 = vmatpush2.msra.mxu0 0.0
    %9361 = vmatprep.subr.mxu0 0.0
    %9362 = vmatpush2.msra.mxu0 0.0
    %9363 = vmatprep.subr.mxu0 0.0
    %9364 = vmatpush2.msra.mxu0 0.0
    %9365 = vmatprep.subr.mxu0 0.0
    %9366 = vmatpush2.msra.mxu0 0.0
    %9367 = vmatprep.subr.mxu0 0.0
    %9368 = vmatpush2.msra.mxu0 0.0
    %9369 = vmatprep.mubr.f32.mxu0 0.0
    %9370 = vmatmul.mubr.f32.gmra.mxu0 %v9280
    %v9371 = vpop.f32.mrf.mxu0
    %v9372 = vadd.f32 0.0, %v9371
    %v9373 = vpop.f32.mrf.mxu0
    %9374 = vmatprep.mubr.f32.mxu0 0.0
    %9375 = vmatmul.mubr.f32.gmra.mxu0 %v9281
    %v9376 = vpop.f32.mrf.mxu0
    %v9377 = vadd.f32 0.0, %v9376
    %v9378 = vpop.f32.mrf.mxu0
    %9379 = vmatprep.mubr.f32.mxu0 0.0
    %9380 = vmatmul.mubr.f32.gmra.mxu0 %v9282
    %v9381 = vpop.f32.mrf.mxu0
    %v9382 = vadd.f32 0.0, %v9381
    %v9383 = vpop.f32.mrf.mxu0
    %9384 = vmatprep.mubr.f32.mxu0 0.0
    %9385 = vmatmul.mubr.f32.gmra.mxu0 %v9283
    %v9386 = vpop.f32.mrf.mxu0
    %v9387 = vadd.f32 0.0, %v9386
    %v9388 = vpop.f32.mrf.mxu0
    %9389 = vmatprep.mubr.f32.mxu0 0.0
    %9390 = vmatmul.mubr.f32.gmra.mxu0 %v9284
    %v9391 = vpop.f32.mrf.mxu0
    %v9392 = vadd.f32 0.0, %v9391
    %v9393 = vpop.f32.mrf.mxu0
    %9394 = vmatprep.mubr.f32.mxu0 0.0
    %9395 = vmatmul.mubr.f32.gmra.mxu0 %v9285
    %v9396 = vpop.f32.mrf.mxu0
    %v9397 = vadd.f32 0.0, %v9396
    %v9398 = vpop.f32.mrf.mxu0
    %9399 = vmatprep.mubr.f32.mxu0 0.0
    %9400 = vmatmul.mubr.f32.gmra.mxu0 %v9286
    %v9401 = vpop.f32.mrf.mxu0
    %v9402 = vadd.f32 0.0, %v9401
    %v9403 = vpop.f32.mrf.mxu0
    %9404 = vmatprep.mubr.f32.mxu0 0.0
    %9405 = vmatmul.mubr.f32.gmra.mxu0 %v9287
    %v9406 = vpop.f32.mrf.mxu0
    %v9407 = vadd.f32 0.0, %v9406
    %v9408 = vpop.f32.mrf.mxu0
    %9409 = vdwg.mxu0
    %v9410 = vadd.f32 %v8786, %v9372
    %v9411 = vadd.f32 %v8787, %v9377
    %v9412 = vadd.f32 %v8788, %v9382
    %v9413 = vadd.f32 %v8789, %v9387
    %v9414 = vadd.f32 %v8790, %v9392
    %v9415 = vadd.f32 %v8791, %v9397
    %v9416 = vadd.f32 %v8792, %v9402
    %v9417 = vadd.f32 %v8793, %v9407
    %s9418 = scalar_lea.vmem %s20, 1
    %v9419 = vld [vmem:[%s9418] sm:$0x1]
    %v9421 = vlaneseq
    %v9422 = vshrl.u32 %v9421, 7
    %v9423 = vsub.s32 0, %v9422
    %v9424 = vrot.slane %v9419, %v9423
    %v9426 = vadd.f32 %v9410, %v9424
    %v9427 = vadd.f32 %v9411, %v9424
    %v9428 = vadd.f32 %v9412, %v9424
    %v9429 = vadd.f32 %v9413, %v9424
    %v9430 = vadd.f32 %v9414, %v9424
    %v9431 = vadd.f32 %v9415, %v9424
    %v9432 = vadd.f32 %v9416, %v9424
    %v9433 = vadd.f32 %v9417, %v9424
    %v9434 = vld [vmem:[%s22] sm:$0x1]
    %v9435 = vld [vmem:[%s23] sm:$0x1]
    %v9436 = vsel %vm266, %v9426, 0.0
    %9437 = vadd.xlane.f32.xlu0 %v9436
    %v9438 = vpop.xlane.xlu0 %9437
    %v9439 = vsel %vm266, %v9427, 0.0
    %9440 = vadd.xlane.f32.xlu0 %v9439
    %v9441 = vpop.xlane.xlu0 %9440
    %v9442 = vsel %vm266, %v9428, 0.0
    %9443 = vadd.xlane.f32.xlu0 %v9442
    %v9444 = vpop.xlane.xlu0 %9443
    %v9445 = vsel %vm266, %v9429, 0.0
    %9446 = vadd.xlane.f32.xlu0 %v9445
    %v9447 = vpop.xlane.xlu0 %9446
    %v9448 = vsel %vm266, %v9430, 0.0
    %9449 = vadd.xlane.f32.xlu0 %v9448
    %v9450 = vpop.xlane.xlu0 %9449
    %v9451 = vsel %vm266, %v9431, 0.0
    %9452 = vadd.xlane.f32.xlu0 %v9451
    %v9453 = vpop.xlane.xlu0 %9452
    %v9454 = vsel %vm266, %v9432, 0.0
    %9455 = vadd.xlane.f32.xlu0 %v9454
    %v9456 = vpop.xlane.xlu0 %9455
    %v9457 = vsel %vm266, %v9433, 0.0
    %9458 = vadd.xlane.f32.xlu0 %v9457
    %v9459 = vpop.xlane.xlu0 %9458
    %v9460 = vmul.f32 %v9438, %v426
    %v9461 = vmul.f32 %v9441, %v426
    %v9462 = vmul.f32 %v9444, %v426
    %v9463 = vmul.f32 %v9447, %v426
    %v9464 = vmul.f32 %v9450, %v426
    %v9465 = vmul.f32 %v9453, %v426
    %v9466 = vmul.f32 %v9456, %v426
    %v9467 = vmul.f32 %v9459, %v426
    %v9468 = vsub.f32 %v9426, %v9460
    %v9469 = vsub.f32 %v9427, %v9461
    %v9470 = vsub.f32 %v9428, %v9462
    %v9471 = vsub.f32 %v9429, %v9463
    %v9472 = vsub.f32 %v9430, %v9464
    %v9473 = vsub.f32 %v9431, %v9465
    %v9474 = vsub.f32 %v9432, %v9466
    %v9475 = vsub.f32 %v9433, %v9467
    %v9476 = vmul.f32 %v9468, %v9468
    %v9477 = vmul.f32 %v9469, %v9469
    %v9478 = vmul.f32 %v9470, %v9470
    %v9479 = vmul.f32 %v9471, %v9471
    %v9480 = vmul.f32 %v9472, %v9472
    %v9481 = vmul.f32 %v9473, %v9473
    %v9482 = vmul.f32 %v9474, %v9474
    %v9483 = vmul.f32 %v9475, %v9475
    %v9484 = vsel %vm266, %v9476, 0.0
    %9485 = vadd.xlane.f32.xlu0 %v9484
    %v9486 = vpop.xlane.xlu0 %9485
    %v9487 = vsel %vm266, %v9477, 0.0
    %9488 = vadd.xlane.f32.xlu0 %v9487
    %v9489 = vpop.xlane.xlu0 %9488
    %v9490 = vsel %vm266, %v9478, 0.0
    %9491 = vadd.xlane.f32.xlu0 %v9490
    %v9492 = vpop.xlane.xlu0 %9491
    %v9493 = vsel %vm266, %v9479, 0.0
    %9494 = vadd.xlane.f32.xlu0 %v9493
    %v9495 = vpop.xlane.xlu0 %9494
    %v9496 = vsel %vm266, %v9480, 0.0
    %9497 = vadd.xlane.f32.xlu0 %v9496
    %v9498 = vpop.xlane.xlu0 %9497
    %v9499 = vsel %vm266, %v9481, 0.0
    %9500 = vadd.xlane.f32.xlu0 %v9499
    %v9501 = vpop.xlane.xlu0 %9500
    %v9502 = vsel %vm266, %v9482, 0.0
    %9503 = vadd.xlane.f32.xlu0 %v9502
    %v9504 = vpop.xlane.xlu0 %9503
    %v9505 = vsel %vm266, %v9483, 0.0
    %9506 = vadd.xlane.f32.xlu0 %v9505
    %v9507 = vpop.xlane.xlu0 %9506
    %v9508 = vmul.f32 %v9486, %v426
    %v9509 = vmul.f32 %v9489, %v426
    %v9510 = vmul.f32 %v9492, %v426
    %v9511 = vmul.f32 %v9495, %v426
    %v9512 = vmul.f32 %v9498, %v426
    %v9513 = vmul.f32 %v9501, %v426
    %v9514 = vmul.f32 %v9504, %v426
    %v9515 = vmul.f32 %v9507, %v426
    %v9516 = vadd.f32 %v9508, 1e-05
    %v9517 = vadd.f32 %v9509, 1e-05
    %v9518 = vadd.f32 %v9510, 1e-05
    %v9519 = vadd.f32 %v9511, 1e-05
    %v9520 = vadd.f32 %v9512, 1e-05
    %v9521 = vadd.f32 %v9513, 1e-05
    %v9522 = vadd.f32 %v9514, 1e-05
    %v9523 = vadd.f32 %v9515, 1e-05
    %v9524 = vrsqrt.pop %v9516
    %v9525 = vrsqrt.pop %v9517
    %v9526 = vrsqrt.pop %v9518
    %v9527 = vrsqrt.pop %v9519
    %v9528 = vrsqrt.pop %v9520
    %v9529 = vrsqrt.pop %v9521
    %v9530 = vrsqrt.pop %v9522
    %v9531 = vrsqrt.pop %v9523
    %v9532 = vmul.f32 %v9468, %v9524
    %v9533 = vmul.f32 %v9469, %v9525
    %v9534 = vmul.f32 %v9470, %v9526
    %v9535 = vmul.f32 %v9471, %v9527
    %v9536 = vmul.f32 %v9472, %v9528
    %v9537 = vmul.f32 %v9473, %v9529
    %v9538 = vmul.f32 %v9474, %v9530
    %v9539 = vmul.f32 %v9475, %v9531
    %v9541 = vlaneseq
    %v9542 = vshrl.u32 %v9541, 7
    %v9543 = vsub.s32 0, %v9542
    %v9544 = vrot.slane %v9434, %v9543
    %v9546 = vmul.f32 %v9532, %v9544
    %v9547 = vmul.f32 %v9533, %v9544
    %v9548 = vmul.f32 %v9534, %v9544
    %v9549 = vmul.f32 %v9535, %v9544
    %v9550 = vmul.f32 %v9536, %v9544
    %v9551 = vmul.f32 %v9537, %v9544
    %v9552 = vmul.f32 %v9538, %v9544
    %v9553 = vmul.f32 %v9539, %v9544
    %v9555 = vlaneseq
    %v9556 = vshrl.u32 %v9555, 7
    %v9557 = vsub.s32 0, %v9556
    %v9558 = vrot.slane %v9435, %v9557
    %v9560 = vadd.f32 %v9546, %v9558
    %v9561 = vadd.f32 %v9547, %v9558
    %v9562 = vadd.f32 %v9548, %v9558
    %v9563 = vadd.f32 %v9549, %v9558
    %v9564 = vadd.f32 %v9550, %v9558
    %v9565 = vadd.f32 %v9551, %v9558
    %v9566 = vadd.f32 %v9552, %v9558
    %v9567 = vadd.f32 %v9553, %v9558
    %v9568 = vadd.f32 %v9560, %v9564
    %v9569 = vadd.f32 %v9561, %v9565
    %v9570 = vadd.f32 %v9562, %v9566
    %v9571 = vadd.f32 %v9563, %v9567
    %v9572 = vadd.f32 %v9568, %v9570
    %v9573 = vadd.f32 %v9569, %v9571
    %v9574 = vadd.f32 %v9572, %v9573
    %v9575 = vmul.f32 %v9574, 0.125
    %9576 = vst.msk [vmem:[#allocation2] sm:$0xff] %vm266, %v9575
    // Predicated region
    $region98: #{vision_transformer.1} parent=1 // pred_check
      _
    $region99: #{vision_transformer.1} parent=1 // pred_check_branch
      %9578 = sbr.rel (0) target = $region101
    $region100: #{vision_transformer.1} parent=1 // pred_region
      %s9580 = ssub.s32 128, 128
      %9581 = vsyncadd [#allocation3], %s9580
      %s9583 = sshll.u32 [#allocation2], 4
      %s9584 = int_to_ptr.vmem [resolvable:$true] %s9583
      %9586 = dma.vmem_to_hbm [thread:$0]  %s9584, 128, %s24, [#allocation3]
    $region101: #{vision_transformer.1} parent=1 // pred_fallthru
      _
    // Predicated region
    $region102: #{vision_transformer.1} parent=1 // pred_check
      _
    $region103: #{vision_transformer.1} parent=1 // pred_check_branch
      %9588 = sbr.rel (0) target = $region105
    $region104: #{vision_transformer.1} parent=1 // pred_region
      %9589 = dma.done [#allocation3], 128
    $region105: #{vision_transformer.1} parent=1 // pred_fallthru
      _
    %9590 = vsyncpa [#allocation3], 1

</llo_original>
